<compile_context>
chip_gen: v5e
topology: v5e:2x2
jax: 0.10.0
libtpu: 0.0.40
codegen_flags: <defaults>
</compile_context>

<pallas_src>
import jax
import jax.numpy as jnp
import numpy as np
from jax import lax
from jax.experimental import pallas as pl
from jax.experimental.pallas import tpu as pltpu

C1 = 10   # conv1 output channels (fixed by the module)
C2 = 1    # conv2 output channels (fixed by the module)

MAX_TB = 256   # batch-tile cap (per-tile input block = TB*nin*L*4 B, double-buffered)


def _convnet_kernel(xf_ref, w1big_ref, w2big_ref, wfcT_ref, beff_ref, out_ref):
    nout = out_ref.shape[1]
    wp = w1big_ref.shape[1] // 2     # per-phase lane width (multiple of 128)

    # conv1 at the surviving positions only, both max-pool1 phases fused into ONE
    # MXU dot. Lane layout of y: [0,wp) = phase a (conv1 position 4n),
    # [wp,2wp) = phase b (position 4n+1); within a phase, lane = o*L3 + n (zero-padded).
    y = jnp.dot(xf_ref[...], w1big_ref[...],
                preferred_element_type=jnp.float32,
                precision=lax.Precision.HIGHEST)          # (TB, 2*wp)

    # Fused max-pool1 + conv2 stride-2 subsample: 128-aligned lane halves -> pure
    # vreg selection, no XLU work. (Biases are folded into beff on the host.)
    a = jnp.maximum(y[:, :wp], y[:, wp:])                 # (TB, wp)

    # conv2 (10 -> 1) + max-pool2 pair reordering as one small MXU dot:
    # z[:, par*nout + q] = conv2 output at position n = 2q + par.
    z = jnp.dot(a, w2big_ref[...],
                preferred_element_type=jnp.float32,
                precision=lax.Precision.HIGHEST)          # (TB, 2*nout)

    # max-pool2: the two parities are contiguous lane halves.
    p = jnp.maximum(z[:, :nout], z[:, nout:])             # (TB, nout)

    # fc + folded bias + sigmoid, lane-major (TB, nout) output slab.
    f = jnp.dot(p, wfcT_ref[...],
                preferred_element_type=jnp.float32,
                precision=lax.Precision.HIGHEST)          # (TB, nout)
    out_ref[...] = jax.nn.sigmoid(f + beff_ref[...]).astype(out_ref.dtype)


def _build_weight_mats(w1, b1, w2, b2, wfc, bfc, nin, L, nout):
    """Parameter-only algebra (independent of the batch): fold the conv pipeline's
    structure into three dense matrices + one bias row."""
    L3 = L // 8                                   # conv2 output length
    wp = 128 * pl.cdiv(C1 * L3, 128)              # per-phase lane width, 128-aligned
    hi = lax.Precision.HIGHEST                    # keep folded weights at f32 fidelity

    # conv1 "select + weight": row = c*L + t, col = phase*wp + o*L3 + n,
    # value = w1[o, c, k] iff t == 8n + 2*phase + k   (survivor positions only).
    t = jnp.arange(L)
    pos = (8 * jnp.arange(L3)[None, :, None]
           + 2 * jnp.arange(2)[:, None, None]
           + jnp.arange(2)[None, None, :])                            # (2, L3, 2)
    sel = (t[:, None, None, None] == pos[None]).astype(jnp.float32)   # (L, 2, L3, 2)
    core = jnp.einsum('tpnk,ock->ctpon', sel, w1, precision=hi)       # (nin, L, 2, C1, L3)
    core = core.reshape(nin * L, 2, C1 * L3)
    w1big = jnp.pad(core, ((0, 0), (0, 0), (0, wp - C1 * L3))).reshape(nin * L, 2 * wp)

    # conv2 (10->1) fused with max-pool2's pair reordering:
    # w2big[o*L3 + 2q + par, par*nout + q] = w2[o]; zero elsewhere (incl. padded rows).
    w2vec = w2.reshape(C1)
    r = jnp.arange(wp)
    tgt = (jnp.arange(C1)[:, None, None] * L3
           + 2 * jnp.arange(nout)[None, None, :]
           + jnp.arange(2)[None, :, None])                            # (C1, 2, nout)
    sel2 = (r[:, None, None, None] == tgt[None]).astype(jnp.float32)  # (wp, C1, 2, nout)
    w2big = jnp.einsum('ropq,o->rpq', sel2, w2vec, precision=hi).reshape(wp, 2 * nout)

    # fc weights (transposed) + one effective bias: conv1/conv2 biases commute with
    # both max-pools and collapse into the fc bias.
    wfcT = wfc.T
    c0 = jnp.sum(w2vec * b1) + b2[0]
    beff = (bfc + c0 * jnp.sum(wfc, axis=1)).reshape(1, nout)
    return w1big, w2big, wfcT, beff, wp


def conv_network(x, w1, b1, w2, b2, wfc, bfc):
    """x: (B, nin, L) float32; params in PyTorch Conv1d/Linear layouts.
    Returns (B, nout) float32, matching ConvNetwork.forward."""
    B, nin, L = x.shape
    nout = wfc.shape[0]
    if L % 16 != 0 or L // 16 != nout:
        raise ValueError(f"ConvNetwork requires L % 16 == 0 and L // 16 == nout "
                         f"(got L={L}, nout={nout})")

    # --- batch tile: multiple of 8 (sublane), >=2 grid steps (v7x megacore), and a
    # double-buffered input block under ~8 MiB (safe vs v5e's 16 MiB scoped VMEM). ---
    vmem_tb_cap = max(8, ((8 << 20) // (2 * nin * L * 4)) // 8 * 8)
    TB = min(MAX_TB, vmem_tb_cap, max(8, 8 * ((B + 15) // 16)))
    steps = max(2, pl.cdiv(B, TB))            # >= 2 so both v7x TensorCores get work
    B_pad = steps * TB

    # --- host-side prep: explicit zero batch padding + a free reshape.
    # No im2col / transpose pass over x.
    xp = x if B_pad == B else jnp.pad(x, ((0, B_pad - B), (0, 0), (0, 0)))
    xf = xp.reshape(B_pad, nin * L)

    w1big, w2big, wfcT, beff, wp = _build_weight_mats(w1, b1, w2, b2, wfc, bfc,
                                                      nin, L, nout)

    out = pl.pallas_call(
        _convnet_kernel,
        out_shape=jax.ShapeDtypeStruct((B_pad, nout), jnp.float32),
        grid_spec=pltpu.PrefetchScalarGridSpec(
            num_scalar_prefetch=0,
            grid=(steps,),
            in_specs=[
                pl.BlockSpec((TB, nin * L), lambda i: (i, 0)),      # batch tile of x
                pl.BlockSpec((nin * L, 2 * wp), lambda i: (0, 0)),  # conv1 select+weight
                pl.BlockSpec((wp, 2 * nout), lambda i: (0, 0)),     # conv2 (+pool2 reorder)
                pl.BlockSpec((nout, nout), lambda i: (0, 0)),       # fc weights (transposed)
                pl.BlockSpec((1, nout), lambda i: (0, 0)),          # effective fc bias
            ],
            out_specs=pl.BlockSpec((TB, nout), lambda i: (i, 0)),
        ),
        compiler_params=pltpu.CompilerParams(
            dimension_semantics=("parallel",)),   # batch tiles are independent
    )(xf, w1big, w2big, wfcT, beff)
    return out[:B]


def _reference(x, w1, b1, w2, b2, wfc, bfc):
    """Pure numpy (float64) replica of the PyTorch forward pass."""
    x, w1, b1, w2, b2, wfc, bfc = (np.asarray(a, np.float64)
                                   for a in (x, w1, b1, w2, b2, wfc, bfc))
    B, nin, L = x.shape
    L1 = L // 2
    xr = x.reshape(B, nin, L1, 2)
    y1 = np.einsum('bclk,ock->bol', xr, w1) + b1[None, :, None]          # conv1
    y1 = np.max(y1.reshape(B, C1, L1 // 2, 2), axis=-1)                  # max-pool1
    y2 = np.einsum('bcl,oc->bol', y1[:, :, ::2], w2[:, :, 0]) + b2[None, :, None]  # conv2
    L3 = y2.shape[-1]
    y2 = np.max(y2.reshape(B, C2, L3 // 2, 2), axis=-1)                  # max-pool2
    z = np.einsum('bcn,mn->bcm', y2, wfc) + bfc                          # fc
    y = 1.0 / (1.0 + np.exp(-z))                                         # sigmoid
    return y.reshape(B, -1)


if __name__ == "__main__":
    B, nin, L, nout = 4, 4, 128, 8   # ConvNetwork requires L == 16 * nout
    key = jax.random.PRNGKey(0)
    k1, k2, k3, k4, k5, k6, kx = jax.random.split(key, 7)

    w1 = jax.random.normal(k1, (C1, nin, 2), jnp.float32) * 0.3
    b1 = jax.random.normal(k2, (C1,), jnp.float32) * 0.1
    w2 = jax.random.normal(k3, (C2, C1, 1), jnp.float32) * 0.3
    b2 = jax.random.normal(k4, (C2,), jnp.float32) * 0.1
    wfc = jax.random.normal(k5, (nout, nout), jnp.float32) * 0.3
    bfc = jax.random.normal(k6, (nout,), jnp.float32) * 0.1
    x = jax.random.normal(kx, (B, nin, L), jnp.float32)

    out = jax.jit(conv_network)(x, w1, b1, w2, b2, wfc, bfc)
    out = jax.block_until_ready(out)

    ref = _reference(x, w1, b1, w2, b2, wfc, bfc)
    np.testing.assert_allclose(np.asarray(out), ref, rtol=5e-3, atol=5e-3)
    print("KERNEL_OK")
</pallas_src>

<mosaic_0001>
module attributes {stable_mosaic.version = 11 : i64} {
  func.func @_convnet_kernel(%arg0: i32, %arg1: memref<8x512xf32, #tpu.memory_space<vmem>>, %arg2: memref<512x512xf32, #tpu.memory_space<vmem>>, %arg3: memref<256x16xf32, #tpu.memory_space<vmem>>, %arg4: memref<8x8xf32, #tpu.memory_space<vmem>>, %arg5: memref<1x8xf32, #tpu.memory_space<vmem>>, %arg6: memref<8x8xf32, #tpu.memory_space<vmem>>) attributes {dimension_semantics = [#tpu.dimension_semantics<parallel>], iteration_bounds = array<i64: 2>, scalar_prefetch = 0 : i64, scratch_operands = 0 : i64, tpu.core_type = #tpu.core_type<tc>, window_params = [{transform_indices = @transform_0, window_bounds = array<i64: 8, 512>}, {pipeline_mode = #tpu.pipeline_mode<synchronous>, transform_indices = @transform_1, window_bounds = array<i64: 512, 512>}, {pipeline_mode = #tpu.pipeline_mode<synchronous>, transform_indices = @transform_2, window_bounds = array<i64: 256, 16>}, {pipeline_mode = #tpu.pipeline_mode<synchronous>, transform_indices = @transform_3, window_bounds = array<i64: 8, 8>}, {pipeline_mode = #tpu.pipeline_mode<synchronous>, transform_indices = @transform_4, window_bounds = array<i64: 1, 8>}, {transform_indices = @transform_5, window_bounds = array<i64: 8, 8>}]} {
    %c0 = arith.constant 0 : index
    %c0_0 = arith.constant 0 : index
    %0 = vector.load %arg1[%c0, %c0_0] : memref<8x512xf32, #tpu.memory_space<vmem>>, vector<8x512xf32>
    %c0_1 = arith.constant 0 : index
    %c0_2 = arith.constant 0 : index
    %1 = vector.load %arg2[%c0_1, %c0_2] : memref<512x512xf32, #tpu.memory_space<vmem>>, vector<512x512xf32>
    %cst = arith.constant dense<0.000000e+00> : vector<8x512xf32>
    %2 = tpu.matmul %0, %1, %cst {dimension_numbers = #tpu.dot_dimension_numbers<[1], [0], [0], [1], [0, 0, 1, 1], [], []>, precision = #tpu.contract_precision<fp32>} : vector<8x512xf32>, vector<512x512xf32>, vector<8x512xf32> -> vector<8x512xf32>
    %3 = vector.extract_strided_slice %2 {offsets = [0, 0], sizes = [8, 256], strides = [1, 1]} : vector<8x512xf32> to vector<8x256xf32>
    %4 = vector.extract_strided_slice %2 {offsets = [0, 256], sizes = [8, 256], strides = [1, 1]} : vector<8x512xf32> to vector<8x256xf32>
    %5 = arith.maximumf %3, %4 : vector<8x256xf32>
    %c0_3 = arith.constant 0 : index
    %c0_4 = arith.constant 0 : index
    %6 = vector.load %arg3[%c0_3, %c0_4] : memref<256x16xf32, #tpu.memory_space<vmem>>, vector<256x16xf32>
    %cst_5 = arith.constant dense<0.000000e+00> : vector<8x16xf32>
    %7 = tpu.matmul %5, %6, %cst_5 {dimension_numbers = #tpu.dot_dimension_numbers<[1], [0], [0], [1], [0, 0, 1, 1], [], []>, precision = #tpu.contract_precision<fp32>} : vector<8x256xf32>, vector<256x16xf32>, vector<8x16xf32> -> vector<8x16xf32>
    %8 = vector.extract_strided_slice %7 {offsets = [0, 0], sizes = [8, 8], strides = [1, 1]} : vector<8x16xf32> to vector<8x8xf32>
    %9 = vector.extract_strided_slice %7 {offsets = [0, 8], sizes = [8, 8], strides = [1, 1]} : vector<8x16xf32> to vector<8x8xf32>
    %10 = arith.maximumf %8, %9 : vector<8x8xf32>
    %c0_6 = arith.constant 0 : index
    %c0_7 = arith.constant 0 : index
    %11 = vector.load %arg4[%c0_6, %c0_7] : memref<8x8xf32, #tpu.memory_space<vmem>>, vector<8x8xf32>
    %cst_8 = arith.constant dense<0.000000e+00> : vector<8x8xf32>
    %12 = tpu.matmul %10, %11, %cst_8 {dimension_numbers = #tpu.dot_dimension_numbers<[1], [0], [0], [1], [0, 0, 1, 1], [], []>, precision = #tpu.contract_precision<fp32>} : vector<8x8xf32>, vector<8x8xf32>, vector<8x8xf32> -> vector<8x8xf32>
    %c0_9 = arith.constant 0 : index
    %c0_10 = arith.constant 0 : index
    %13 = vector.load %arg5[%c0_9, %c0_10] : memref<1x8xf32, #tpu.memory_space<vmem>>, vector<1x8xf32>
    %14 = vector.broadcast %13 : vector<1x8xf32> to vector<8x8xf32>
    %15 = arith.addf %12, %14 : vector<8x8xf32>
    %16 = arith.negf %15 : vector<8x8xf32>
    %17 = math.exp %16 : vector<8x8xf32>
    %cst_11 = arith.constant 1.000000e+00 : f32
    %18 = vector.broadcast %cst_11 : f32 to vector<8x8xf32>
    %19 = arith.addf %18, %17 : vector<8x8xf32>
    %20 = arith.divf %18, %19 : vector<8x8xf32>
    %c0_12 = arith.constant 0 : index
    %c0_13 = arith.constant 0 : index
    %21 = vector.load %arg6[%c0_12, %c0_13] : memref<8x8xf32, #tpu.memory_space<vmem>>, vector<8x8xf32>
    tpu.vector_store %arg6[%c0_12, %c0_13], %20 {strides = array<i32>} : memref<8x8xf32, #tpu.memory_space<vmem>>, vector<8x8xf32>,
    return
  }
  func.func @transform_0(%arg0: i32) -> (i32, i32) {
    %c0_i32 = arith.constant 0 : i32
    %c0_i32_0 = arith.constant 0 : i32
    return %arg0, %c0_i32 : i32, i32
  }
  func.func @transform_1(%arg0: i32) -> (i32, i32) {
    %c0_i32 = arith.constant 0 : i32
    %c0_i32_0 = arith.constant 0 : i32
    %c0_i32_1 = arith.constant 0 : i32
    return %c0_i32, %c0_i32_0 : i32, i32
  }
  func.func @transform_2(%arg0: i32) -> (i32, i32) {
    %c0_i32 = arith.constant 0 : i32
    %c0_i32_0 = arith.constant 0 : i32
    %c0_i32_1 = arith.constant 0 : i32
    return %c0_i32, %c0_i32_0 : i32, i32
  }
  func.func @transform_3(%arg0: i32) -> (i32, i32) {
    %c0_i32 = arith.constant 0 : i32
    %c0_i32_0 = arith.constant 0 : i32
    %c0_i32_1 = arith.constant 0 : i32
    return %c0_i32, %c0_i32_0 : i32, i32
  }
  func.func @transform_4(%arg0: i32) -> (i32, i32) {
    %c0_i32 = arith.constant 0 : i32
    %c0_i32_0 = arith.constant 0 : i32
    %c0_i32_1 = arith.constant 0 : i32
    return %c0_i32, %c0_i32_0 : i32, i32
  }
  func.func @transform_5(%arg0: i32) -> (i32, i32) {
    %c0_i32 = arith.constant 0 : i32
    %c0_i32_0 = arith.constant 0 : i32
    return %arg0, %c0_i32 : i32, i32
  }
}

</mosaic_0001>

<llo_original>
// kernel: conv_network.1
$region0: #{conv_network.1}
  #allocation0 [shape = 'u32[]', space=smem, size = 0x4, offset = 0x4, fixed_abs, tag = 'smem constant byte address 0x4 - core index']
  #allocation1 [shape = 'u32[72,128]{1,0:T(1,128)}', space=vmem, size = 0x9000, scoped, tag = 'internal scratch']
  %s0 = inlined_call_operand.vmem [shape: f32[16,512], index: 0, kind: input, shape index: {}]
  %s1 = inlined_call_operand.vmem [shape: f32[512,512], index: 1, kind: input, shape index: {}]
  %s2 = inlined_call_operand.vmem [shape: f32[256,16], index: 2, kind: input, shape index: {}]
  %s3 = inlined_call_operand.vmem [shape: f32[8,8], index: 3, kind: input, shape index: {}]
  %s4 = inlined_call_operand.vmem [shape: f32[1,8], index: 4, kind: input, shape index: {}]
  %s5 = inlined_call_operand.vmem [shape: f32[16,8], index: 5, kind: output, shape index: {}]
  %s6 = sld [smem:[#allocation0]]
  $region53: #{conv_network.1} parent=0
    _
  %s8 = ssub.s32 1, %s6
  %s9 = scalar_select 0, %s8, %s6
  loop: start=0, step=1, limit=4
  $region2: #{conv_network.1} parent=0 // loop_pre_header
    _
  $region3: #{conv_network.1} parent=0 // loop_header
    %s11 = sphi 0, %s15
    %p12 = scmp.ge.s32.totalorder %s11, 4
    %s21 = sphi 0, %s23
    %s24 = sphi 0, %s21
    %s25 = sphi 0, %s24
    %s41 = sphi 0, %s25
    %s45 = sphi 0, %s45
    %s47 = sphi 0, %s45
    %s48 = sphi 0, %s47
    %s62 = sphi 0, %s48
    %s66 = sphi 0, %s66
    %s68 = sphi 0, %s66
    %s69 = sphi 0, %s68
    %s83 = sphi 0, %s69
    %s87 = sphi 0, %s87
    %s89 = sphi 0, %s87
    %s90 = sphi 0, %s89
    %s104 = sphi 0, %s90
    %s108 = sphi 0, %s108
    %s110 = sphi 0, %s108
    %s111 = sphi 0, %s110
    %s125 = sphi 0, %s111
    %s131 = sphi 0, %s133
    %s134 = sphi 0, %s131
    %s135 = sphi 0, %s134
    %s151 = sphi 0, %s135
  $region4: #{conv_network.1} parent=0 // loop_header_branch
    %14 = sbr.rel (%p12) target = $region8
  $region5: #{conv_network.1} parent=0 // loop_body
    %s16 = ssub.s32 %s11, 1
    %s17 = ssub.s32 %s11, 2
    %s18 = sadd.s32 %s11, 1
    %s19 = ssub.s32 %s11, %s18
    %p20 = scmp.eq.s32.totalorder %s19, 0
    %s22 = sadd.s32 %s21, 1
    %s23 = scalar_select %p20, %s21, %s22
    %p26 = pneg %p20
    %p27 = scmp.eq.s32.totalorder %s11, 1
    %p28 = por %p26, %p27
    %p29 = scmp.ne.s32.totalorder %s21, %s24
    %p30 = scmp.eq.s32.totalorder %s11, 0
    %p31 = por %p29, %p30
    %p32 = scmp.ne.s32.totalorder %s21, %s24
    %p33 = scmp.eq.s32.totalorder %s16, 1
    %p34 = por %p32, %p33
    %p35 = scmp.ne.s32.totalorder %s24, %s25
    %p36 = scmp.eq.s32.totalorder %s16, 0
    %p37 = por %p35, %p36
    %p38 = scmp.ne.s32.totalorder %s24, %s25
    %p39 = scmp.eq.s32.totalorder %s17, 1
    %p40 = por %p38, %p39
    %p42 = scmp.ne.s32.totalorder %s25, %s41
    %p43 = scmp.eq.s32.totalorder %s17, 0
    %p44 = por %p42, %p43
    %s46 = sadd.s32 %s45, 1
    %p49 = scmp.eq.s32.totalorder %s11, 1
    %p50 = scmp.ne.s32.totalorder %s45, %s47
    %p51 = scmp.eq.s32.totalorder %s11, 0
    %p52 = por %p50, %p51
    %p53 = scmp.ne.s32.totalorder %s45, %s47
    %p54 = scmp.eq.s32.totalorder %s16, 1
    %p55 = por %p53, %p54
    %p56 = scmp.ne.s32.totalorder %s47, %s48
    %p57 = scmp.eq.s32.totalorder %s16, 0
    %p58 = por %p56, %p57
    %p59 = scmp.ne.s32.totalorder %s47, %s48
    %p60 = scmp.eq.s32.totalorder %s17, 1
    %p61 = por %p59, %p60
    %p63 = scmp.ne.s32.totalorder %s48, %s62
    %p64 = scmp.eq.s32.totalorder %s17, 0
    %p65 = por %p63, %p64
    %s67 = sadd.s32 %s66, 1
    %p70 = scmp.eq.s32.totalorder %s11, 1
    %p71 = scmp.ne.s32.totalorder %s66, %s68
    %p72 = scmp.eq.s32.totalorder %s11, 0
    %p73 = por %p71, %p72
    %p74 = scmp.ne.s32.totalorder %s66, %s68
    %p75 = scmp.eq.s32.totalorder %s16, 1
    %p76 = por %p74, %p75
    %p77 = scmp.ne.s32.totalorder %s68, %s69
    %p78 = scmp.eq.s32.totalorder %s16, 0
    %p79 = por %p77, %p78
    %p80 = scmp.ne.s32.totalorder %s68, %s69
    %p81 = scmp.eq.s32.totalorder %s17, 1
    %p82 = por %p80, %p81
    %p84 = scmp.ne.s32.totalorder %s69, %s83
    %p85 = scmp.eq.s32.totalorder %s17, 0
    %p86 = por %p84, %p85
    %s88 = sadd.s32 %s87, 1
    %p91 = scmp.eq.s32.totalorder %s11, 1
    %p92 = scmp.ne.s32.totalorder %s87, %s89
    %p93 = scmp.eq.s32.totalorder %s11, 0
    %p94 = por %p92, %p93
    %p95 = scmp.ne.s32.totalorder %s87, %s89
    %p96 = scmp.eq.s32.totalorder %s16, 1
    %p97 = por %p95, %p96
    %p98 = scmp.ne.s32.totalorder %s89, %s90
    %p99 = scmp.eq.s32.totalorder %s16, 0
    %p100 = por %p98, %p99
    %p101 = scmp.ne.s32.totalorder %s89, %s90
    %p102 = scmp.eq.s32.totalorder %s17, 1
    %p103 = por %p101, %p102
    %p105 = scmp.ne.s32.totalorder %s90, %s104
    %p106 = scmp.eq.s32.totalorder %s17, 0
    %p107 = por %p105, %p106
    %s109 = sadd.s32 %s108, 1
    %p112 = scmp.eq.s32.totalorder %s11, 1
    %p113 = scmp.ne.s32.totalorder %s108, %s110
    %p114 = scmp.eq.s32.totalorder %s11, 0
    %p115 = por %p113, %p114
    %p116 = scmp.ne.s32.totalorder %s108, %s110
    %p117 = scmp.eq.s32.totalorder %s16, 1
    %p118 = por %p116, %p117
    %p119 = scmp.ne.s32.totalorder %s110, %s111
    %p120 = scmp.eq.s32.totalorder %s16, 0
    %p121 = por %p119, %p120
    %p122 = scmp.ne.s32.totalorder %s110, %s111
    %p123 = scmp.eq.s32.totalorder %s17, 1
    %p124 = por %p122, %p123
    %p126 = scmp.ne.s32.totalorder %s111, %s125
    %p127 = scmp.eq.s32.totalorder %s17, 0
    %p128 = por %p126, %p127
    %s129 = ssub.s32 %s11, %s18
    %p130 = scmp.eq.s32.totalorder %s129, 0
    %s132 = sadd.s32 %s131, 1
    %s133 = scalar_select %p130, %s131, %s132
    %p136 = pneg %p130
    %p137 = scmp.eq.s32.totalorder %s11, 1
    %p138 = por %p136, %p137
    %p139 = scmp.ne.s32.totalorder %s131, %s134
    %p140 = scmp.eq.s32.totalorder %s11, 0
    %p141 = por %p139, %p140
    %p142 = scmp.ne.s32.totalorder %s131, %s134
    %p143 = scmp.eq.s32.totalorder %s16, 1
    %p144 = por %p142, %p143
    %p145 = scmp.ne.s32.totalorder %s134, %s135
    %p146 = scmp.eq.s32.totalorder %s16, 0
    %p147 = por %p145, %p146
    %p148 = scmp.ne.s32.totalorder %s134, %s135
    %p149 = scmp.eq.s32.totalorder %s17, 1
    %p150 = por %p148, %p149
    %p152 = scmp.ne.s32.totalorder %s135, %s151
    %p153 = scmp.eq.s32.totalorder %s17, 0
    %p154 = por %p152, %p153
    %p155 = scmp.le.s32.totalorder 1, %s11
    %p156 = scmp.lt.s32.totalorder %s11, 3
    %p157 = pnand %p155, %p156
    %p158 = pneg %p157
    // Predicated region
    $region9: #{conv_network.1} parent=5 // pred_check
      _
    $region10: #{conv_network.1} parent=5 // pred_check_branch
      %160 = sbr.rel (%p157) target = $region12
    $region11: #{conv_network.1} parent=5 // pred_region
      %s161 = ssub.s32 %s11, 1
      // Predicated region
      $region13: #{conv_network.1} parent=11 // pred_check
        %p162 = pneg %p58
      $region14: #{conv_network.1} parent=11 // pred_check_branch
        %164 = sbr.rel (%p162) target = $region16
      $region15: #{conv_network.1} parent=11 // pred_region
        _
      $region16: #{conv_network.1} parent=11 // pred_fallthru
        _
      // Predicated region
      $region17: #{conv_network.1} parent=11 // pred_check
        %p165 = pneg %p79
      $region18: #{conv_network.1} parent=11 // pred_check_branch
        %167 = sbr.rel (%p165) target = $region20
      $region19: #{conv_network.1} parent=11 // pred_region
        _
      $region20: #{conv_network.1} parent=11 // pred_fallthru
        _
      // Predicated region
      $region21: #{conv_network.1} parent=11 // pred_check
        %p168 = pneg %p100
      $region22: #{conv_network.1} parent=11 // pred_check_branch
        %170 = sbr.rel (%p168) target = $region24
      $region23: #{conv_network.1} parent=11 // pred_region
        _
      $region24: #{conv_network.1} parent=11 // pred_fallthru
        _
      // Predicated region
      $region25: #{conv_network.1} parent=11 // pred_check
        %p171 = pneg %p121
      $region26: #{conv_network.1} parent=11 // pred_check_branch
        %173 = sbr.rel (%p171) target = $region28
      $region27: #{conv_network.1} parent=11 // pred_region
        _
      $region28: #{conv_network.1} parent=11 // pred_fallthru
        _
    $region12: #{conv_network.1} parent=5 // pred_fallthru
      _
    %p174 = scmp.lt.s32.totalorder %s11, 2
    // Predicated region
    $region29: #{conv_network.1} parent=5 // pred_check
      %p175 = pneg %p174
    $region30: #{conv_network.1} parent=5 // pred_check_branch
      %177 = sbr.rel (%p175) target = $region32
    $region31: #{conv_network.1} parent=5 // pred_region
      // Predicated region
      $region33: #{conv_network.1} parent=31 // pred_check
        %p178 = pneg %p31
      $region34: #{conv_network.1} parent=31 // pred_check_branch
        %180 = sbr.rel (%p178) target = $region36
      $region35: #{conv_network.1} parent=31 // pred_region
        %p181 = scmp.lt.s32.totalorder %s11, 1
        %s182 = scalar_select %p181, %s11, 1
        %s183 = smul.addr %s182, 4
        %s184 = smul.addr %s183, 8
        %s185 = scalar_lea.vmem %s0, %s184
      $region36: #{conv_network.1} parent=31 // pred_fallthru
        _
    $region32: #{conv_network.1} parent=5 // pred_fallthru
      _
    %p186 = scmp.le.s32.totalorder 1, %s11
    %p187 = scmp.lt.s32.totalorder %s11, 3
    %p188 = pnand %p186, %p187
    %p189 = pneg %p188
    // Predicated region
    $region37: #{conv_network.1} parent=5 // pred_check
      _
    $region38: #{conv_network.1} parent=5 // pred_check_branch
      %191 = sbr.rel (%p188) target = $region40
    $region39: #{conv_network.1} parent=5 // pred_region
      %s192 = ssub.s32 %s11, 1
      %p193 = scmp.lt.s32.totalorder %s16, 1
      %s194 = scalar_select %p193, %s16, 1
      %s195 = smul.addr %s194, 4
      %s196 = smul.addr %s195, 8
      %s197 = scalar_lea.vmem %s0, %s196
      %p198 = pneg %p37
      %p199 = pneg %p34
      %p200 = pneg %p58
      %p201 = pneg %p55
      %p202 = pneg %p79
      %p203 = pneg %p76
      %p204 = pneg %p100
      %p205 = pneg %p97
      %p206 = pneg %p121
      %p207 = pneg %p118
      %p208 = pneg %p147
      %p209 = pneg %p144
      %p210 = scmp.lt.s32.totalorder %s16, 1
      %s211 = scalar_select %p210, %s16, 1
      %s212 = smul.addr %s211, 8
      %s213 = scalar_lea.vmem %s5, %s212
      %p214 = scmp.lt.s32.totalorder %s16, 1
      %s215 = scalar_select %p214, %s16, 1
      %s216 = smul.addr %s215, 4
      %s217 = smul.addr %s216, 8
      %s218 = scalar_lea.vmem %s0, %s217
      %p219 = scmp.lt.s32.totalorder %s16, 1
      %s220 = scalar_select %p219, %s16, 1
      %s221 = smul.addr %s220, 8
      %s222 = scalar_lea.vmem %s5, %s221
      %v223 = vld [vmem:[%s218] sm:$0xff]
      %v224 = vld [vmem:[%s218 + $0x8] sm:$0xff]
      %v225 = vld [vmem:[%s218 + $0x10] sm:$0xff]
      %v226 = vld [vmem:[%s218 + $0x18] sm:$0xff]
      %v227 = vld [vmem:[%s1] sm:$0xff]
      %v228 = vld [vmem:[%s1 + $0x8] sm:$0xff]
      %v229 = vld [vmem:[%s1 + $0x10] sm:$0xff]
      %v230 = vld [vmem:[%s1 + $0x18] sm:$0xff]
      %v231 = vld [vmem:[%s1 + $0x20] sm:$0xff]
      %v232 = vld [vmem:[%s1 + $0x28] sm:$0xff]
      %v233 = vld [vmem:[%s1 + $0x30] sm:$0xff]
      %v234 = vld [vmem:[%s1 + $0x38] sm:$0xff]
      %v235 = vld [vmem:[%s1 + $0x40] sm:$0xff]
      %v236 = vld [vmem:[%s1 + $0x48] sm:$0xff]
      %v237 = vld [vmem:[%s1 + $0x50] sm:$0xff]
      %v238 = vld [vmem:[%s1 + $0x58] sm:$0xff]
      %v239 = vld [vmem:[%s1 + $0x60] sm:$0xff]
      %v240 = vld [vmem:[%s1 + $0x68] sm:$0xff]
      %v241 = vld [vmem:[%s1 + $0x70] sm:$0xff]
      %v242 = vld [vmem:[%s1 + $0x78] sm:$0xff]
      %v243 = vld [vmem:[%s1 + $0x80] sm:$0xff]
      %v244 = vld [vmem:[%s1 + $0x88] sm:$0xff]
      %v245 = vld [vmem:[%s1 + $0x90] sm:$0xff]
      %v246 = vld [vmem:[%s1 + $0x98] sm:$0xff]
      %v247 = vld [vmem:[%s1 + $0xa0] sm:$0xff]
      %v248 = vld [vmem:[%s1 + $0xa8] sm:$0xff]
      %v249 = vld [vmem:[%s1 + $0xb0] sm:$0xff]
      %v250 = vld [vmem:[%s1 + $0xb8] sm:$0xff]
      %v251 = vld [vmem:[%s1 + $0xc0] sm:$0xff]
      %v252 = vld [vmem:[%s1 + $0xc8] sm:$0xff]
      %v253 = vld [vmem:[%s1 + $0xd0] sm:$0xff]
      %v254 = vld [vmem:[%s1 + $0xd8] sm:$0xff]
      %v255 = vld [vmem:[%s1 + $0xe0] sm:$0xff]
      %v256 = vld [vmem:[%s1 + $0xe8] sm:$0xff]
      %v257 = vld [vmem:[%s1 + $0xf0] sm:$0xff]
      %v258 = vld [vmem:[%s1 + $0xf8] sm:$0xff]
      %v259 = vld [vmem:[%s1 + $0x100] sm:$0xff]
      %v260 = vld [vmem:[%s1 + $0x108] sm:$0xff]
      %v261 = vld [vmem:[%s1 + $0x110] sm:$0xff]
      %v262 = vld [vmem:[%s1 + $0x118] sm:$0xff]
      %v263 = vld [vmem:[%s1 + $0x120] sm:$0xff]
      %v264 = vld [vmem:[%s1 + $0x128] sm:$0xff]
      %v265 = vld [vmem:[%s1 + $0x130] sm:$0xff]
      %v266 = vld [vmem:[%s1 + $0x138] sm:$0xff]
      %v267 = vld [vmem:[%s1 + $0x140] sm:$0xff]
      %v268 = vld [vmem:[%s1 + $0x148] sm:$0xff]
      %v269 = vld [vmem:[%s1 + $0x150] sm:$0xff]
      %v270 = vld [vmem:[%s1 + $0x158] sm:$0xff]
      %v271 = vld [vmem:[%s1 + $0x160] sm:$0xff]
      %v272 = vld [vmem:[%s1 + $0x168] sm:$0xff]
      %v273 = vld [vmem:[%s1 + $0x170] sm:$0xff]
      %v274 = vld [vmem:[%s1 + $0x178] sm:$0xff]
      %v275 = vld [vmem:[%s1 + $0x180] sm:$0xff]
      %v276 = vld [vmem:[%s1 + $0x188] sm:$0xff]
      %v277 = vld [vmem:[%s1 + $0x190] sm:$0xff]
      %v278 = vld [vmem:[%s1 + $0x198] sm:$0xff]
      %v279 = vld [vmem:[%s1 + $0x1a0] sm:$0xff]
      %v280 = vld [vmem:[%s1 + $0x1a8] sm:$0xff]
      %v281 = vld [vmem:[%s1 + $0x1b0] sm:$0xff]
      %v282 = vld [vmem:[%s1 + $0x1b8] sm:$0xff]
      %v283 = vld [vmem:[%s1 + $0x1c0] sm:$0xff]
      %v284 = vld [vmem:[%s1 + $0x1c8] sm:$0xff]
      %v285 = vld [vmem:[%s1 + $0x1d0] sm:$0xff]
      %v286 = vld [vmem:[%s1 + $0x1d8] sm:$0xff]
      %v287 = vld [vmem:[%s1 + $0x1e0] sm:$0xff]
      %v288 = vld [vmem:[%s1 + $0x1e8] sm:$0xff]
      %v289 = vld [vmem:[%s1 + $0x1f0] sm:$0xff]
      %v290 = vld [vmem:[%s1 + $0x1f8] sm:$0xff]
      %v291 = vld [vmem:[%s1 + $0x200] sm:$0xff]
      %v292 = vld [vmem:[%s1 + $0x208] sm:$0xff]
      %v293 = vld [vmem:[%s1 + $0x210] sm:$0xff]
      %v294 = vld [vmem:[%s1 + $0x218] sm:$0xff]
      %v295 = vld [vmem:[%s1 + $0x220] sm:$0xff]
      %v296 = vld [vmem:[%s1 + $0x228] sm:$0xff]
      %v297 = vld [vmem:[%s1 + $0x230] sm:$0xff]
      %v298 = vld [vmem:[%s1 + $0x238] sm:$0xff]
      %v299 = vld [vmem:[%s1 + $0x240] sm:$0xff]
      %v300 = vld [vmem:[%s1 + $0x248] sm:$0xff]
      %v301 = vld [vmem:[%s1 + $0x250] sm:$0xff]
      %v302 = vld [vmem:[%s1 + $0x258] sm:$0xff]
      %v303 = vld [vmem:[%s1 + $0x260] sm:$0xff]
      %v304 = vld [vmem:[%s1 + $0x268] sm:$0xff]
      %v305 = vld [vmem:[%s1 + $0x270] sm:$0xff]
      %v306 = vld [vmem:[%s1 + $0x278] sm:$0xff]
      %v307 = vld [vmem:[%s1 + $0x280] sm:$0xff]
      %v308 = vld [vmem:[%s1 + $0x288] sm:$0xff]
      %v309 = vld [vmem:[%s1 + $0x290] sm:$0xff]
      %v310 = vld [vmem:[%s1 + $0x298] sm:$0xff]
      %v311 = vld [vmem:[%s1 + $0x2a0] sm:$0xff]
      %v312 = vld [vmem:[%s1 + $0x2a8] sm:$0xff]
      %v313 = vld [vmem:[%s1 + $0x2b0] sm:$0xff]
      %v314 = vld [vmem:[%s1 + $0x2b8] sm:$0xff]
      %v315 = vld [vmem:[%s1 + $0x2c0] sm:$0xff]
      %v316 = vld [vmem:[%s1 + $0x2c8] sm:$0xff]
      %v317 = vld [vmem:[%s1 + $0x2d0] sm:$0xff]
      %v318 = vld [vmem:[%s1 + $0x2d8] sm:$0xff]
      %v319 = vld [vmem:[%s1 + $0x2e0] sm:$0xff]
      %v320 = vld [vmem:[%s1 + $0x2e8] sm:$0xff]
      %v321 = vld [vmem:[%s1 + $0x2f0] sm:$0xff]
      %v322 = vld [vmem:[%s1 + $0x2f8] sm:$0xff]
      %v323 = vld [vmem:[%s1 + $0x300] sm:$0xff]
      %v324 = vld [vmem:[%s1 + $0x308] sm:$0xff]
      %v325 = vld [vmem:[%s1 + $0x310] sm:$0xff]
      %v326 = vld [vmem:[%s1 + $0x318] sm:$0xff]
      %v327 = vld [vmem:[%s1 + $0x320] sm:$0xff]
      %v328 = vld [vmem:[%s1 + $0x328] sm:$0xff]
      %v329 = vld [vmem:[%s1 + $0x330] sm:$0xff]
      %v330 = vld [vmem:[%s1 + $0x338] sm:$0xff]
      %v331 = vld [vmem:[%s1 + $0x340] sm:$0xff]
      %v332 = vld [vmem:[%s1 + $0x348] sm:$0xff]
      %v333 = vld [vmem:[%s1 + $0x350] sm:$0xff]
      %v334 = vld [vmem:[%s1 + $0x358] sm:$0xff]
      %v335 = vld [vmem:[%s1 + $0x360] sm:$0xff]
      %v336 = vld [vmem:[%s1 + $0x368] sm:$0xff]
      %v337 = vld [vmem:[%s1 + $0x370] sm:$0xff]
      %v338 = vld [vmem:[%s1 + $0x378] sm:$0xff]
      %v339 = vld [vmem:[%s1 + $0x380] sm:$0xff]
      %v340 = vld [vmem:[%s1 + $0x388] sm:$0xff]
      %v341 = vld [vmem:[%s1 + $0x390] sm:$0xff]
      %v342 = vld [vmem:[%s1 + $0x398] sm:$0xff]
      %v343 = vld [vmem:[%s1 + $0x3a0] sm:$0xff]
      %v344 = vld [vmem:[%s1 + $0x3a8] sm:$0xff]
      %v345 = vld [vmem:[%s1 + $0x3b0] sm:$0xff]
      %v346 = vld [vmem:[%s1 + $0x3b8] sm:$0xff]
      %v347 = vld [vmem:[%s1 + $0x3c0] sm:$0xff]
      %v348 = vld [vmem:[%s1 + $0x3c8] sm:$0xff]
      %v349 = vld [vmem:[%s1 + $0x3d0] sm:$0xff]
      %v350 = vld [vmem:[%s1 + $0x3d8] sm:$0xff]
      %v351 = vld [vmem:[%s1 + $0x3e0] sm:$0xff]
      %v352 = vld [vmem:[%s1 + $0x3e8] sm:$0xff]
      %v353 = vld [vmem:[%s1 + $0x3f0] sm:$0xff]
      %v354 = vld [vmem:[%s1 + $0x3f8] sm:$0xff]
      %v355 = vld [vmem:[%s1 + $0x400] sm:$0xff]
      %v356 = vld [vmem:[%s1 + $0x408] sm:$0xff]
      %v357 = vld [vmem:[%s1 + $0x410] sm:$0xff]
      %v358 = vld [vmem:[%s1 + $0x418] sm:$0xff]
      %v359 = vld [vmem:[%s1 + $0x420] sm:$0xff]
      %v360 = vld [vmem:[%s1 + $0x428] sm:$0xff]
      %v361 = vld [vmem:[%s1 + $0x430] sm:$0xff]
      %v362 = vld [vmem:[%s1 + $0x438] sm:$0xff]
      %v363 = vld [vmem:[%s1 + $0x440] sm:$0xff]
      %v364 = vld [vmem:[%s1 + $0x448] sm:$0xff]
      %v365 = vld [vmem:[%s1 + $0x450] sm:$0xff]
      %v366 = vld [vmem:[%s1 + $0x458] sm:$0xff]
      %v367 = vld [vmem:[%s1 + $0x460] sm:$0xff]
      %v368 = vld [vmem:[%s1 + $0x468] sm:$0xff]
      %v369 = vld [vmem:[%s1 + $0x470] sm:$0xff]
      %v370 = vld [vmem:[%s1 + $0x478] sm:$0xff]
      %v371 = vld [vmem:[%s1 + $0x480] sm:$0xff]
      %v372 = vld [vmem:[%s1 + $0x488] sm:$0xff]
      %v373 = vld [vmem:[%s1 + $0x490] sm:$0xff]
      %v374 = vld [vmem:[%s1 + $0x498] sm:$0xff]
      %v375 = vld [vmem:[%s1 + $0x4a0] sm:$0xff]
      %v376 = vld [vmem:[%s1 + $0x4a8] sm:$0xff]
      %v377 = vld [vmem:[%s1 + $0x4b0] sm:$0xff]
      %v378 = vld [vmem:[%s1 + $0x4b8] sm:$0xff]
      %v379 = vld [vmem:[%s1 + $0x4c0] sm:$0xff]
      %v380 = vld [vmem:[%s1 + $0x4c8] sm:$0xff]
      %v381 = vld [vmem:[%s1 + $0x4d0] sm:$0xff]
      %v382 = vld [vmem:[%s1 + $0x4d8] sm:$0xff]
      %v383 = vld [vmem:[%s1 + $0x4e0] sm:$0xff]
      %v384 = vld [vmem:[%s1 + $0x4e8] sm:$0xff]
      %v385 = vld [vmem:[%s1 + $0x4f0] sm:$0xff]
      %v386 = vld [vmem:[%s1 + $0x4f8] sm:$0xff]
      %v387 = vld [vmem:[%s1 + $0x500] sm:$0xff]
      %v388 = vld [vmem:[%s1 + $0x508] sm:$0xff]
      %v389 = vld [vmem:[%s1 + $0x510] sm:$0xff]
      %v390 = vld [vmem:[%s1 + $0x518] sm:$0xff]
      %v391 = vld [vmem:[%s1 + $0x520] sm:$0xff]
      %v392 = vld [vmem:[%s1 + $0x528] sm:$0xff]
      %v393 = vld [vmem:[%s1 + $0x530] sm:$0xff]
      %v394 = vld [vmem:[%s1 + $0x538] sm:$0xff]
      %v395 = vld [vmem:[%s1 + $0x540] sm:$0xff]
      %v396 = vld [vmem:[%s1 + $0x548] sm:$0xff]
      %v397 = vld [vmem:[%s1 + $0x550] sm:$0xff]
      %v398 = vld [vmem:[%s1 + $0x558] sm:$0xff]
      %v399 = vld [vmem:[%s1 + $0x560] sm:$0xff]
      %v400 = vld [vmem:[%s1 + $0x568] sm:$0xff]
      %v401 = vld [vmem:[%s1 + $0x570] sm:$0xff]
      %v402 = vld [vmem:[%s1 + $0x578] sm:$0xff]
      %v403 = vld [vmem:[%s1 + $0x580] sm:$0xff]
      %v404 = vld [vmem:[%s1 + $0x588] sm:$0xff]
      %v405 = vld [vmem:[%s1 + $0x590] sm:$0xff]
      %v406 = vld [vmem:[%s1 + $0x598] sm:$0xff]
      %v407 = vld [vmem:[%s1 + $0x5a0] sm:$0xff]
      %v408 = vld [vmem:[%s1 + $0x5a8] sm:$0xff]
      %v409 = vld [vmem:[%s1 + $0x5b0] sm:$0xff]
      %v410 = vld [vmem:[%s1 + $0x5b8] sm:$0xff]
      %v411 = vld [vmem:[%s1 + $0x5c0] sm:$0xff]
      %v412 = vld [vmem:[%s1 + $0x5c8] sm:$0xff]
      %v413 = vld [vmem:[%s1 + $0x5d0] sm:$0xff]
      %v414 = vld [vmem:[%s1 + $0x5d8] sm:$0xff]
      %v415 = vld [vmem:[%s1 + $0x5e0] sm:$0xff]
      %v416 = vld [vmem:[%s1 + $0x5e8] sm:$0xff]
      %v417 = vld [vmem:[%s1 + $0x5f0] sm:$0xff]
      %v418 = vld [vmem:[%s1 + $0x5f8] sm:$0xff]
      %v419 = vld [vmem:[%s1 + $0x600] sm:$0xff]
      %v420 = vld [vmem:[%s1 + $0x608] sm:$0xff]
      %v421 = vld [vmem:[%s1 + $0x610] sm:$0xff]
      %v422 = vld [vmem:[%s1 + $0x618] sm:$0xff]
      %v423 = vld [vmem:[%s1 + $0x620] sm:$0xff]
      %v424 = vld [vmem:[%s1 + $0x628] sm:$0xff]
      %v425 = vld [vmem:[%s1 + $0x630] sm:$0xff]
      %v426 = vld [vmem:[%s1 + $0x638] sm:$0xff]
      %v427 = vld [vmem:[%s1 + $0x640] sm:$0xff]
      %v428 = vld [vmem:[%s1 + $0x648] sm:$0xff]
      %v429 = vld [vmem:[%s1 + $0x650] sm:$0xff]
      %v430 = vld [vmem:[%s1 + $0x658] sm:$0xff]
      %v431 = vld [vmem:[%s1 + $0x660] sm:$0xff]
      %v432 = vld [vmem:[%s1 + $0x668] sm:$0xff]
      %v433 = vld [vmem:[%s1 + $0x670] sm:$0xff]
      %v434 = vld [vmem:[%s1 + $0x678] sm:$0xff]
      %v435 = vld [vmem:[%s1 + $0x680] sm:$0xff]
      %v436 = vld [vmem:[%s1 + $0x688] sm:$0xff]
      %v437 = vld [vmem:[%s1 + $0x690] sm:$0xff]
      %v438 = vld [vmem:[%s1 + $0x698] sm:$0xff]
      %v439 = vld [vmem:[%s1 + $0x6a0] sm:$0xff]
      %v440 = vld [vmem:[%s1 + $0x6a8] sm:$0xff]
      %v441 = vld [vmem:[%s1 + $0x6b0] sm:$0xff]
      %v442 = vld [vmem:[%s1 + $0x6b8] sm:$0xff]
      %v443 = vld [vmem:[%s1 + $0x6c0] sm:$0xff]
      %v444 = vld [vmem:[%s1 + $0x6c8] sm:$0xff]
      %v445 = vld [vmem:[%s1 + $0x6d0] sm:$0xff]
      %v446 = vld [vmem:[%s1 + $0x6d8] sm:$0xff]
      %v447 = vld [vmem:[%s1 + $0x6e0] sm:$0xff]
      %v448 = vld [vmem:[%s1 + $0x6e8] sm:$0xff]
      %v449 = vld [vmem:[%s1 + $0x6f0] sm:$0xff]
      %v450 = vld [vmem:[%s1 + $0x6f8] sm:$0xff]
      %v451 = vld [vmem:[%s1 + $0x700] sm:$0xff]
      %v452 = vld [vmem:[%s1 + $0x708] sm:$0xff]
      %v453 = vld [vmem:[%s1 + $0x710] sm:$0xff]
      %v454 = vld [vmem:[%s1 + $0x718] sm:$0xff]
      %v455 = vld [vmem:[%s1 + $0x720] sm:$0xff]
      %v456 = vld [vmem:[%s1 + $0x728] sm:$0xff]
      %v457 = vld [vmem:[%s1 + $0x730] sm:$0xff]
      %v458 = vld [vmem:[%s1 + $0x738] sm:$0xff]
      %v459 = vld [vmem:[%s1 + $0x740] sm:$0xff]
      %v460 = vld [vmem:[%s1 + $0x748] sm:$0xff]
      %v461 = vld [vmem:[%s1 + $0x750] sm:$0xff]
      %v462 = vld [vmem:[%s1 + $0x758] sm:$0xff]
      %v463 = vld [vmem:[%s1 + $0x760] sm:$0xff]
      %v464 = vld [vmem:[%s1 + $0x768] sm:$0xff]
      %v465 = vld [vmem:[%s1 + $0x770] sm:$0xff]
      %v466 = vld [vmem:[%s1 + $0x778] sm:$0xff]
      %v467 = vld [vmem:[%s1 + $0x780] sm:$0xff]
      %v468 = vld [vmem:[%s1 + $0x788] sm:$0xff]
      %v469 = vld [vmem:[%s1 + $0x790] sm:$0xff]
      %v470 = vld [vmem:[%s1 + $0x798] sm:$0xff]
      %v471 = vld [vmem:[%s1 + $0x7a0] sm:$0xff]
      %v472 = vld [vmem:[%s1 + $0x7a8] sm:$0xff]
      %v473 = vld [vmem:[%s1 + $0x7b0] sm:$0xff]
      %v474 = vld [vmem:[%s1 + $0x7b8] sm:$0xff]
      %v475 = vld [vmem:[%s1 + $0x7c0] sm:$0xff]
      %v476 = vld [vmem:[%s1 + $0x7c8] sm:$0xff]
      %v477 = vld [vmem:[%s1 + $0x7d0] sm:$0xff]
      %v478 = vld [vmem:[%s1 + $0x7d8] sm:$0xff]
      %v479 = vld [vmem:[%s1 + $0x7e0] sm:$0xff]
      %v480 = vld [vmem:[%s1 + $0x7e8] sm:$0xff]
      %v481 = vld [vmem:[%s1 + $0x7f0] sm:$0xff]
      %v482 = vld [vmem:[%s1 + $0x7f8] sm:$0xff]
      %v483 = vand.u32 %v287, 4294901760
      %484 = vmatpush.msra.mxu0 %v483
      %v485 = vand.u32 %v283, 4294901760
      %486 = vmatpush.msra.mxu0 %v485
      %v487 = vand.u32 %v279, 4294901760
      %488 = vmatpush.msra.mxu0 %v487
      %v489 = vand.u32 %v275, 4294901760
      %490 = vmatpush.msra.mxu0 %v489
      %v491 = vand.u32 %v271, 4294901760
      %492 = vmatpush.msra.mxu0 %v491
      %v493 = vand.u32 %v267, 4294901760
      %494 = vmatpush.msra.mxu0 %v493
      %v495 = vand.u32 %v263, 4294901760
      %496 = vmatpush.msra.mxu0 %v495
      %v497 = vand.u32 %v259, 4294901760
      %498 = vmatpush.msra.mxu0 %v497
      %v499 = vand.u32 %v255, 4294901760
      %500 = vmatpush.msra.mxu0 %v499
      %v501 = vand.u32 %v251, 4294901760
      %502 = vmatpush.msra.mxu0 %v501
      %v503 = vand.u32 %v247, 4294901760
      %504 = vmatpush.msra.mxu0 %v503
      %v505 = vand.u32 %v243, 4294901760
      %506 = vmatpush.msra.mxu0 %v505
      %v507 = vand.u32 %v239, 4294901760
      %508 = vmatpush.msra.mxu0 %v507
      %v509 = vand.u32 %v235, 4294901760
      %510 = vmatpush.msra.mxu0 %v509
      %v511 = vand.u32 %v231, 4294901760
      %512 = vmatpush.msra.mxu0 %v511
      %v513 = vand.u32 %v227, 4294901760
      %514 = vmatpush.msra.mxu0 %v513
      %v515 = vand.u32 %v223, 4294901760
      %v516 = vsub.f32 %v223, %v515
      %v517 = vand.u32 %v516, 4294901760
      %v518 = vsub.f32 %v516, %v517
      %v519 = vand.u32 %v518, 4294901760
      %520 = vmatmul.f32.gmra.mxu0 %v519
      %v521 = vpop.f32.mrf.mxu0
      %v522 = vadd.f32 0.0, %v521
      %523 = vdwg.mxu0
      %v524 = vand.u32 %v287, 4294901760
      %v525 = vsub.f32 %v287, %v524
      %v526 = vand.u32 %v525, 4294901760
      %v527 = vsub.f32 %v525, %v526
      %v528 = vand.u32 %v527, 4294901760
      %529 = vmatpush.msra.mxu0 %v528
      %v530 = vand.u32 %v283, 4294901760
      %v531 = vsub.f32 %v283, %v530
      %v532 = vand.u32 %v531, 4294901760
      %v533 = vsub.f32 %v531, %v532
      %v534 = vand.u32 %v533, 4294901760
      %535 = vmatpush.msra.mxu0 %v534
      %v536 = vand.u32 %v279, 4294901760
      %v537 = vsub.f32 %v279, %v536
      %v538 = vand.u32 %v537, 4294901760
      %v539 = vsub.f32 %v537, %v538
      %v540 = vand.u32 %v539, 4294901760
      %541 = vmatpush.msra.mxu0 %v540
      %v542 = vand.u32 %v275, 4294901760
      %v543 = vsub.f32 %v275, %v542
      %v544 = vand.u32 %v543, 4294901760
      %v545 = vsub.f32 %v543, %v544
      %v546 = vand.u32 %v545, 4294901760
      %547 = vmatpush.msra.mxu0 %v546
      %v548 = vand.u32 %v271, 4294901760
      %v549 = vsub.f32 %v271, %v548
      %v550 = vand.u32 %v549, 4294901760
      %v551 = vsub.f32 %v549, %v550
      %v552 = vand.u32 %v551, 4294901760
      %553 = vmatpush.msra.mxu0 %v552
      %v554 = vand.u32 %v267, 4294901760
      %v555 = vsub.f32 %v267, %v554
      %v556 = vand.u32 %v555, 4294901760
      %v557 = vsub.f32 %v555, %v556
      %v558 = vand.u32 %v557, 4294901760
      %559 = vmatpush.msra.mxu0 %v558
      %v560 = vand.u32 %v263, 4294901760
      %v561 = vsub.f32 %v263, %v560
      %v562 = vand.u32 %v561, 4294901760
      %v563 = vsub.f32 %v561, %v562
      %v564 = vand.u32 %v563, 4294901760
      %565 = vmatpush.msra.mxu0 %v564
      %v566 = vand.u32 %v259, 4294901760
      %v567 = vsub.f32 %v259, %v566
      %v568 = vand.u32 %v567, 4294901760
      %v569 = vsub.f32 %v567, %v568
      %v570 = vand.u32 %v569, 4294901760
      %571 = vmatpush.msra.mxu0 %v570
      %v572 = vand.u32 %v255, 4294901760
      %v573 = vsub.f32 %v255, %v572
      %v574 = vand.u32 %v573, 4294901760
      %v575 = vsub.f32 %v573, %v574
      %v576 = vand.u32 %v575, 4294901760
      %577 = vmatpush.msra.mxu0 %v576
      %v578 = vand.u32 %v251, 4294901760
      %v579 = vsub.f32 %v251, %v578
      %v580 = vand.u32 %v579, 4294901760
      %v581 = vsub.f32 %v579, %v580
      %v582 = vand.u32 %v581, 4294901760
      %583 = vmatpush.msra.mxu0 %v582
      %v584 = vand.u32 %v247, 4294901760
      %v585 = vsub.f32 %v247, %v584
      %v586 = vand.u32 %v585, 4294901760
      %v587 = vsub.f32 %v585, %v586
      %v588 = vand.u32 %v587, 4294901760
      %589 = vmatpush.msra.mxu0 %v588
      %v590 = vand.u32 %v243, 4294901760
      %v591 = vsub.f32 %v243, %v590
      %v592 = vand.u32 %v591, 4294901760
      %v593 = vsub.f32 %v591, %v592
      %v594 = vand.u32 %v593, 4294901760
      %595 = vmatpush.msra.mxu0 %v594
      %v596 = vand.u32 %v239, 4294901760
      %v597 = vsub.f32 %v239, %v596
      %v598 = vand.u32 %v597, 4294901760
      %v599 = vsub.f32 %v597, %v598
      %v600 = vand.u32 %v599, 4294901760
      %601 = vmatpush.msra.mxu0 %v600
      %v602 = vand.u32 %v235, 4294901760
      %v603 = vsub.f32 %v235, %v602
      %v604 = vand.u32 %v603, 4294901760
      %v605 = vsub.f32 %v603, %v604
      %v606 = vand.u32 %v605, 4294901760
      %607 = vmatpush.msra.mxu0 %v606
      %v608 = vand.u32 %v231, 4294901760
      %v609 = vsub.f32 %v231, %v608
      %v610 = vand.u32 %v609, 4294901760
      %v611 = vsub.f32 %v609, %v610
      %v612 = vand.u32 %v611, 4294901760
      %613 = vmatpush.msra.mxu0 %v612
      %v614 = vand.u32 %v227, 4294901760
      %v615 = vsub.f32 %v227, %v614
      %v616 = vand.u32 %v615, 4294901760
      %v617 = vsub.f32 %v615, %v616
      %v618 = vand.u32 %v617, 4294901760
      %619 = vmatpush.msra.mxu0 %v618
      %v620 = vand.u32 %v223, 4294901760
      %621 = vmatmul.f32.gmra.mxu0 %v620
      %v622 = vpop.f32.mrf.mxu0
      %v623 = vadd.f32 %v522, %v622
      %624 = vdwg.mxu0
      %v625 = vand.u32 %v287, 4294901760
      %v626 = vsub.f32 %v287, %v625
      %627 = vmatpush.msra.mxu0 %v626
      %v628 = vand.u32 %v283, 4294901760
      %v629 = vsub.f32 %v283, %v628
      %630 = vmatpush.msra.mxu0 %v629
      %v631 = vand.u32 %v279, 4294901760
      %v632 = vsub.f32 %v279, %v631
      %633 = vmatpush.msra.mxu0 %v632
      %v634 = vand.u32 %v275, 4294901760
      %v635 = vsub.f32 %v275, %v634
      %636 = vmatpush.msra.mxu0 %v635
      %v637 = vand.u32 %v271, 4294901760
      %v638 = vsub.f32 %v271, %v637
      %639 = vmatpush.msra.mxu0 %v638
      %v640 = vand.u32 %v267, 4294901760
      %v641 = vsub.f32 %v267, %v640
      %642 = vmatpush.msra.mxu0 %v641
      %v643 = vand.u32 %v263, 4294901760
      %v644 = vsub.f32 %v263, %v643
      %645 = vmatpush.msra.mxu0 %v644
      %v646 = vand.u32 %v259, 4294901760
      %v647 = vsub.f32 %v259, %v646
      %648 = vmatpush.msra.mxu0 %v647
      %v649 = vand.u32 %v255, 4294901760
      %v650 = vsub.f32 %v255, %v649
      %651 = vmatpush.msra.mxu0 %v650
      %v652 = vand.u32 %v251, 4294901760
      %v653 = vsub.f32 %v251, %v652
      %654 = vmatpush.msra.mxu0 %v653
      %v655 = vand.u32 %v247, 4294901760
      %v656 = vsub.f32 %v247, %v655
      %657 = vmatpush.msra.mxu0 %v656
      %v658 = vand.u32 %v243, 4294901760
      %v659 = vsub.f32 %v243, %v658
      %660 = vmatpush.msra.mxu0 %v659
      %v661 = vand.u32 %v239, 4294901760
      %v662 = vsub.f32 %v239, %v661
      %663 = vmatpush.msra.mxu0 %v662
      %v664 = vand.u32 %v235, 4294901760
      %v665 = vsub.f32 %v235, %v664
      %666 = vmatpush.msra.mxu0 %v665
      %v667 = vand.u32 %v231, 4294901760
      %v668 = vsub.f32 %v231, %v667
      %669 = vmatpush.msra.mxu0 %v668
      %v670 = vand.u32 %v227, 4294901760
      %v671 = vsub.f32 %v227, %v670
      %672 = vmatpush.msra.mxu0 %v671
      %v673 = vand.u32 %v223, 4294901760
      %v674 = vsub.f32 %v223, %v673
      %675 = vmatmul.f32.gmra.mxu0 %v674
      %v676 = vpop.f32.mrf.mxu0
      %v677 = vadd.f32 %v623, %v676
      %678 = vdwg.mxu0
      %v679 = vand.u32 %v287, 4294901760
      %680 = vmatpush.msra.mxu0 %v679
      %v681 = vand.u32 %v283, 4294901760
      %682 = vmatpush.msra.mxu0 %v681
      %v683 = vand.u32 %v279, 4294901760
      %684 = vmatpush.msra.mxu0 %v683
      %v685 = vand.u32 %v275, 4294901760
      %686 = vmatpush.msra.mxu0 %v685
      %v687 = vand.u32 %v271, 4294901760
      %688 = vmatpush.msra.mxu0 %v687
      %v689 = vand.u32 %v267, 4294901760
      %690 = vmatpush.msra.mxu0 %v689
      %v691 = vand.u32 %v263, 4294901760
      %692 = vmatpush.msra.mxu0 %v691
      %v693 = vand.u32 %v259, 4294901760
      %694 = vmatpush.msra.mxu0 %v693
      %v695 = vand.u32 %v255, 4294901760
      %696 = vmatpush.msra.mxu0 %v695
      %v697 = vand.u32 %v251, 4294901760
      %698 = vmatpush.msra.mxu0 %v697
      %v699 = vand.u32 %v247, 4294901760
      %700 = vmatpush.msra.mxu0 %v699
      %v701 = vand.u32 %v243, 4294901760
      %702 = vmatpush.msra.mxu0 %v701
      %v703 = vand.u32 %v239, 4294901760
      %704 = vmatpush.msra.mxu0 %v703
      %v705 = vand.u32 %v235, 4294901760
      %706 = vmatpush.msra.mxu0 %v705
      %v707 = vand.u32 %v231, 4294901760
      %708 = vmatpush.msra.mxu0 %v707
      %v709 = vand.u32 %v227, 4294901760
      %710 = vmatpush.msra.mxu0 %v709
      %v711 = vand.u32 %v223, 4294901760
      %v712 = vsub.f32 %v223, %v711
      %v713 = vand.u32 %v712, 4294901760
      %714 = vmatmul.f32.gmra.mxu0 %v713
      %v715 = vpop.f32.mrf.mxu0
      %v716 = vadd.f32 %v677, %v715
      %717 = vdwg.mxu0
      %v718 = vand.u32 %v287, 4294901760
      %v719 = vsub.f32 %v287, %v718
      %v720 = vand.u32 %v719, 4294901760
      %721 = vmatpush.msra.mxu0 %v720
      %v722 = vand.u32 %v283, 4294901760
      %v723 = vsub.f32 %v283, %v722
      %v724 = vand.u32 %v723, 4294901760
      %725 = vmatpush.msra.mxu0 %v724
      %v726 = vand.u32 %v279, 4294901760
      %v727 = vsub.f32 %v279, %v726
      %v728 = vand.u32 %v727, 4294901760
      %729 = vmatpush.msra.mxu0 %v728
      %v730 = vand.u32 %v275, 4294901760
      %v731 = vsub.f32 %v275, %v730
      %v732 = vand.u32 %v731, 4294901760
      %733 = vmatpush.msra.mxu0 %v732
      %v734 = vand.u32 %v271, 4294901760
      %v735 = vsub.f32 %v271, %v734
      %v736 = vand.u32 %v735, 4294901760
      %737 = vmatpush.msra.mxu0 %v736
      %v738 = vand.u32 %v267, 4294901760
      %v739 = vsub.f32 %v267, %v738
      %v740 = vand.u32 %v739, 4294901760
      %741 = vmatpush.msra.mxu0 %v740
      %v742 = vand.u32 %v263, 4294901760
      %v743 = vsub.f32 %v263, %v742
      %v744 = vand.u32 %v743, 4294901760
      %745 = vmatpush.msra.mxu0 %v744
      %v746 = vand.u32 %v259, 4294901760
      %v747 = vsub.f32 %v259, %v746
      %v748 = vand.u32 %v747, 4294901760
      %749 = vmatpush.msra.mxu0 %v748
      %v750 = vand.u32 %v255, 4294901760
      %v751 = vsub.f32 %v255, %v750
      %v752 = vand.u32 %v751, 4294901760
      %753 = vmatpush.msra.mxu0 %v752
      %v754 = vand.u32 %v251, 4294901760
      %v755 = vsub.f32 %v251, %v754
      %v756 = vand.u32 %v755, 4294901760
      %757 = vmatpush.msra.mxu0 %v756
      %v758 = vand.u32 %v247, 4294901760
      %v759 = vsub.f32 %v247, %v758
      %v760 = vand.u32 %v759, 4294901760
      %761 = vmatpush.msra.mxu0 %v760
      %v762 = vand.u32 %v243, 4294901760
      %v763 = vsub.f32 %v243, %v762
      %v764 = vand.u32 %v763, 4294901760
      %765 = vmatpush.msra.mxu0 %v764
      %v766 = vand.u32 %v239, 4294901760
      %v767 = vsub.f32 %v239, %v766
      %v768 = vand.u32 %v767, 4294901760
      %769 = vmatpush.msra.mxu0 %v768
      %v770 = vand.u32 %v235, 4294901760
      %v771 = vsub.f32 %v235, %v770
      %v772 = vand.u32 %v771, 4294901760
      %773 = vmatpush.msra.mxu0 %v772
      %v774 = vand.u32 %v231, 4294901760
      %v775 = vsub.f32 %v231, %v774
      %v776 = vand.u32 %v775, 4294901760
      %777 = vmatpush.msra.mxu0 %v776
      %v778 = vand.u32 %v227, 4294901760
      %v779 = vsub.f32 %v227, %v778
      %v780 = vand.u32 %v779, 4294901760
      %781 = vmatpush.msra.mxu0 %v780
      %v782 = vand.u32 %v223, 4294901760
      %783 = vmatmul.f32.gmra.mxu0 %v782
      %v784 = vpop.f32.mrf.mxu0
      %v785 = vadd.f32 %v716, %v784
      %786 = vdwg.mxu0
      %v787 = vand.u32 %v287, 4294901760
      %788 = vmatpush.msra.mxu0 %v787
      %v789 = vand.u32 %v283, 4294901760
      %790 = vmatpush.msra.mxu0 %v789
      %v791 = vand.u32 %v279, 4294901760
      %792 = vmatpush.msra.mxu0 %v791
      %v793 = vand.u32 %v275, 4294901760
      %794 = vmatpush.msra.mxu0 %v793
      %v795 = vand.u32 %v271, 4294901760
      %796 = vmatpush.msra.mxu0 %v795
      %v797 = vand.u32 %v267, 4294901760
      %798 = vmatpush.msra.mxu0 %v797
      %v799 = vand.u32 %v263, 4294901760
      %800 = vmatpush.msra.mxu0 %v799
      %v801 = vand.u32 %v259, 4294901760
      %802 = vmatpush.msra.mxu0 %v801
      %v803 = vand.u32 %v255, 4294901760
      %804 = vmatpush.msra.mxu0 %v803
      %v805 = vand.u32 %v251, 4294901760
      %806 = vmatpush.msra.mxu0 %v805
      %v807 = vand.u32 %v247, 4294901760
      %808 = vmatpush.msra.mxu0 %v807
      %v809 = vand.u32 %v243, 4294901760
      %810 = vmatpush.msra.mxu0 %v809
      %v811 = vand.u32 %v239, 4294901760
      %812 = vmatpush.msra.mxu0 %v811
      %v813 = vand.u32 %v235, 4294901760
      %814 = vmatpush.msra.mxu0 %v813
      %v815 = vand.u32 %v231, 4294901760
      %816 = vmatpush.msra.mxu0 %v815
      %v817 = vand.u32 %v227, 4294901760
      %818 = vmatpush.msra.mxu0 %v817
      %v819 = vand.u32 %v223, 4294901760
      %820 = vmatmul.f32.gmra.mxu0 %v819
      %v821 = vpop.f32.mrf.mxu0
      %v822 = vadd.f32 %v785, %v821
      %823 = vdwg.mxu0
      %v824 = vand.u32 %v351, 4294901760
      %825 = vmatpush.msra.mxu0 %v824
      %v826 = vand.u32 %v347, 4294901760
      %827 = vmatpush.msra.mxu0 %v826
      %v828 = vand.u32 %v343, 4294901760
      %829 = vmatpush.msra.mxu0 %v828
      %v830 = vand.u32 %v339, 4294901760
      %831 = vmatpush.msra.mxu0 %v830
      %v832 = vand.u32 %v335, 4294901760
      %833 = vmatpush.msra.mxu0 %v832
      %v834 = vand.u32 %v331, 4294901760
      %835 = vmatpush.msra.mxu0 %v834
      %v836 = vand.u32 %v327, 4294901760
      %837 = vmatpush.msra.mxu0 %v836
      %v838 = vand.u32 %v323, 4294901760
      %839 = vmatpush.msra.mxu0 %v838
      %v840 = vand.u32 %v319, 4294901760
      %841 = vmatpush.msra.mxu0 %v840
      %v842 = vand.u32 %v315, 4294901760
      %843 = vmatpush.msra.mxu0 %v842
      %v844 = vand.u32 %v311, 4294901760
      %845 = vmatpush.msra.mxu0 %v844
      %v846 = vand.u32 %v307, 4294901760
      %847 = vmatpush.msra.mxu0 %v846
      %v848 = vand.u32 %v303, 4294901760
      %849 = vmatpush.msra.mxu0 %v848
      %v850 = vand.u32 %v299, 4294901760
      %851 = vmatpush.msra.mxu0 %v850
      %v852 = vand.u32 %v295, 4294901760
      %853 = vmatpush.msra.mxu0 %v852
      %v854 = vand.u32 %v291, 4294901760
      %855 = vmatpush.msra.mxu0 %v854
      %v856 = vand.u32 %v224, 4294901760
      %v857 = vsub.f32 %v224, %v856
      %v858 = vand.u32 %v857, 4294901760
      %v859 = vsub.f32 %v857, %v858
      %v860 = vand.u32 %v859, 4294901760
      %861 = vmatmul.f32.gmra.mxu0 %v860
      %v862 = vpop.f32.mrf.mxu0
      %v863 = vadd.f32 %v822, %v862
      %864 = vdwg.mxu0
      %v865 = vand.u32 %v351, 4294901760
      %v866 = vsub.f32 %v351, %v865
      %v867 = vand.u32 %v866, 4294901760
      %v868 = vsub.f32 %v866, %v867
      %v869 = vand.u32 %v868, 4294901760
      %870 = vmatpush.msra.mxu0 %v869
      %v871 = vand.u32 %v347, 4294901760
      %v872 = vsub.f32 %v347, %v871
      %v873 = vand.u32 %v872, 4294901760
      %v874 = vsub.f32 %v872, %v873
      %v875 = vand.u32 %v874, 4294901760
      %876 = vmatpush.msra.mxu0 %v875
      %v877 = vand.u32 %v343, 4294901760
      %v878 = vsub.f32 %v343, %v877
      %v879 = vand.u32 %v878, 4294901760
      %v880 = vsub.f32 %v878, %v879
      %v881 = vand.u32 %v880, 4294901760
      %882 = vmatpush.msra.mxu0 %v881
      %v883 = vand.u32 %v339, 4294901760
      %v884 = vsub.f32 %v339, %v883
      %v885 = vand.u32 %v884, 4294901760
      %v886 = vsub.f32 %v884, %v885
      %v887 = vand.u32 %v886, 4294901760
      %888 = vmatpush.msra.mxu0 %v887
      %v889 = vand.u32 %v335, 4294901760
      %v890 = vsub.f32 %v335, %v889
      %v891 = vand.u32 %v890, 4294901760
      %v892 = vsub.f32 %v890, %v891
      %v893 = vand.u32 %v892, 4294901760
      %894 = vmatpush.msra.mxu0 %v893
      %v895 = vand.u32 %v331, 4294901760
      %v896 = vsub.f32 %v331, %v895
      %v897 = vand.u32 %v896, 4294901760
      %v898 = vsub.f32 %v896, %v897
      %v899 = vand.u32 %v898, 4294901760
      %900 = vmatpush.msra.mxu0 %v899
      %v901 = vand.u32 %v327, 4294901760
      %v902 = vsub.f32 %v327, %v901
      %v903 = vand.u32 %v902, 4294901760
      %v904 = vsub.f32 %v902, %v903
      %v905 = vand.u32 %v904, 4294901760
      %906 = vmatpush.msra.mxu0 %v905
      %v907 = vand.u32 %v323, 4294901760
      %v908 = vsub.f32 %v323, %v907
      %v909 = vand.u32 %v908, 4294901760
      %v910 = vsub.f32 %v908, %v909
      %v911 = vand.u32 %v910, 4294901760
      %912 = vmatpush.msra.mxu0 %v911
      %v913 = vand.u32 %v319, 4294901760
      %v914 = vsub.f32 %v319, %v913
      %v915 = vand.u32 %v914, 4294901760
      %v916 = vsub.f32 %v914, %v915
      %v917 = vand.u32 %v916, 4294901760
      %918 = vmatpush.msra.mxu0 %v917
      %v919 = vand.u32 %v315, 4294901760
      %v920 = vsub.f32 %v315, %v919
      %v921 = vand.u32 %v920, 4294901760
      %v922 = vsub.f32 %v920, %v921
      %v923 = vand.u32 %v922, 4294901760
      %924 = vmatpush.msra.mxu0 %v923
      %v925 = vand.u32 %v311, 4294901760
      %v926 = vsub.f32 %v311, %v925
      %v927 = vand.u32 %v926, 4294901760
      %v928 = vsub.f32 %v926, %v927
      %v929 = vand.u32 %v928, 4294901760
      %930 = vmatpush.msra.mxu0 %v929
      %v931 = vand.u32 %v307, 4294901760
      %v932 = vsub.f32 %v307, %v931
      %v933 = vand.u32 %v932, 4294901760
      %v934 = vsub.f32 %v932, %v933
      %v935 = vand.u32 %v934, 4294901760
      %936 = vmatpush.msra.mxu0 %v935
      %v937 = vand.u32 %v303, 4294901760
      %v938 = vsub.f32 %v303, %v937
      %v939 = vand.u32 %v938, 4294901760
      %v940 = vsub.f32 %v938, %v939
      %v941 = vand.u32 %v940, 4294901760
      %942 = vmatpush.msra.mxu0 %v941
      %v943 = vand.u32 %v299, 4294901760
      %v944 = vsub.f32 %v299, %v943
      %v945 = vand.u32 %v944, 4294901760
      %v946 = vsub.f32 %v944, %v945
      %v947 = vand.u32 %v946, 4294901760
      %948 = vmatpush.msra.mxu0 %v947
      %v949 = vand.u32 %v295, 4294901760
      %v950 = vsub.f32 %v295, %v949
      %v951 = vand.u32 %v950, 4294901760
      %v952 = vsub.f32 %v950, %v951
      %v953 = vand.u32 %v952, 4294901760
      %954 = vmatpush.msra.mxu0 %v953
      %v955 = vand.u32 %v291, 4294901760
      %v956 = vsub.f32 %v291, %v955
      %v957 = vand.u32 %v956, 4294901760
      %v958 = vsub.f32 %v956, %v957
      %v959 = vand.u32 %v958, 4294901760
      %960 = vmatpush.msra.mxu0 %v959
      %v961 = vand.u32 %v224, 4294901760
      %962 = vmatmul.f32.gmra.mxu0 %v961
      %v963 = vpop.f32.mrf.mxu0
      %v964 = vadd.f32 %v863, %v963
      %965 = vdwg.mxu0
      %v966 = vand.u32 %v351, 4294901760
      %v967 = vsub.f32 %v351, %v966
      %968 = vmatpush.msra.mxu0 %v967
      %v969 = vand.u32 %v347, 4294901760
      %v970 = vsub.f32 %v347, %v969
      %971 = vmatpush.msra.mxu0 %v970
      %v972 = vand.u32 %v343, 4294901760
      %v973 = vsub.f32 %v343, %v972
      %974 = vmatpush.msra.mxu0 %v973
      %v975 = vand.u32 %v339, 4294901760
      %v976 = vsub.f32 %v339, %v975
      %977 = vmatpush.msra.mxu0 %v976
      %v978 = vand.u32 %v335, 4294901760
      %v979 = vsub.f32 %v335, %v978
      %980 = vmatpush.msra.mxu0 %v979
      %v981 = vand.u32 %v331, 4294901760
      %v982 = vsub.f32 %v331, %v981
      %983 = vmatpush.msra.mxu0 %v982
      %v984 = vand.u32 %v327, 4294901760
      %v985 = vsub.f32 %v327, %v984
      %986 = vmatpush.msra.mxu0 %v985
      %v987 = vand.u32 %v323, 4294901760
      %v988 = vsub.f32 %v323, %v987
      %989 = vmatpush.msra.mxu0 %v988
      %v990 = vand.u32 %v319, 4294901760
      %v991 = vsub.f32 %v319, %v990
      %992 = vmatpush.msra.mxu0 %v991
      %v993 = vand.u32 %v315, 4294901760
      %v994 = vsub.f32 %v315, %v993
      %995 = vmatpush.msra.mxu0 %v994
      %v996 = vand.u32 %v311, 4294901760
      %v997 = vsub.f32 %v311, %v996
      %998 = vmatpush.msra.mxu0 %v997
      %v999 = vand.u32 %v307, 4294901760
      %v1000 = vsub.f32 %v307, %v999
      %1001 = vmatpush.msra.mxu0 %v1000
      %v1002 = vand.u32 %v303, 4294901760
      %v1003 = vsub.f32 %v303, %v1002
      %1004 = vmatpush.msra.mxu0 %v1003
      %v1005 = vand.u32 %v299, 4294901760
      %v1006 = vsub.f32 %v299, %v1005
      %1007 = vmatpush.msra.mxu0 %v1006
      %v1008 = vand.u32 %v295, 4294901760
      %v1009 = vsub.f32 %v295, %v1008
      %1010 = vmatpush.msra.mxu0 %v1009
      %v1011 = vand.u32 %v291, 4294901760
      %v1012 = vsub.f32 %v291, %v1011
      %1013 = vmatpush.msra.mxu0 %v1012
      %v1014 = vand.u32 %v224, 4294901760
      %v1015 = vsub.f32 %v224, %v1014
      %1016 = vmatmul.f32.gmra.mxu0 %v1015
      %v1017 = vpop.f32.mrf.mxu0
      %v1018 = vadd.f32 %v964, %v1017
      %1019 = vdwg.mxu0
      %v1020 = vand.u32 %v351, 4294901760
      %1021 = vmatpush.msra.mxu0 %v1020
      %v1022 = vand.u32 %v347, 4294901760
      %1023 = vmatpush.msra.mxu0 %v1022
      %v1024 = vand.u32 %v343, 4294901760
      %1025 = vmatpush.msra.mxu0 %v1024
      %v1026 = vand.u32 %v339, 4294901760
      %1027 = vmatpush.msra.mxu0 %v1026
      %v1028 = vand.u32 %v335, 4294901760
      %1029 = vmatpush.msra.mxu0 %v1028
      %v1030 = vand.u32 %v331, 4294901760
      %1031 = vmatpush.msra.mxu0 %v1030
      %v1032 = vand.u32 %v327, 4294901760
      %1033 = vmatpush.msra.mxu0 %v1032
      %v1034 = vand.u32 %v323, 4294901760
      %1035 = vmatpush.msra.mxu0 %v1034
      %v1036 = vand.u32 %v319, 4294901760
      %1037 = vmatpush.msra.mxu0 %v1036
      %v1038 = vand.u32 %v315, 4294901760
      %1039 = vmatpush.msra.mxu0 %v1038
      %v1040 = vand.u32 %v311, 4294901760
      %1041 = vmatpush.msra.mxu0 %v1040
      %v1042 = vand.u32 %v307, 4294901760
      %1043 = vmatpush.msra.mxu0 %v1042
      %v1044 = vand.u32 %v303, 4294901760
      %1045 = vmatpush.msra.mxu0 %v1044
      %v1046 = vand.u32 %v299, 4294901760
      %1047 = vmatpush.msra.mxu0 %v1046
      %v1048 = vand.u32 %v295, 4294901760
      %1049 = vmatpush.msra.mxu0 %v1048
      %v1050 = vand.u32 %v291, 4294901760
      %1051 = vmatpush.msra.mxu0 %v1050
      %v1052 = vand.u32 %v224, 4294901760
      %v1053 = vsub.f32 %v224, %v1052
      %v1054 = vand.u32 %v1053, 4294901760
      %1055 = vmatmul.f32.gmra.mxu0 %v1054
      %v1056 = vpop.f32.mrf.mxu0
      %v1057 = vadd.f32 %v1018, %v1056
      %1058 = vdwg.mxu0
      %v1059 = vand.u32 %v351, 4294901760
      %v1060 = vsub.f32 %v351, %v1059
      %v1061 = vand.u32 %v1060, 4294901760
      %1062 = vmatpush.msra.mxu0 %v1061
      %v1063 = vand.u32 %v347, 4294901760
      %v1064 = vsub.f32 %v347, %v1063
      %v1065 = vand.u32 %v1064, 4294901760
      %1066 = vmatpush.msra.mxu0 %v1065
      %v1067 = vand.u32 %v343, 4294901760
      %v1068 = vsub.f32 %v343, %v1067
      %v1069 = vand.u32 %v1068, 4294901760
      %1070 = vmatpush.msra.mxu0 %v1069
      %v1071 = vand.u32 %v339, 4294901760
      %v1072 = vsub.f32 %v339, %v1071
      %v1073 = vand.u32 %v1072, 4294901760
      %1074 = vmatpush.msra.mxu0 %v1073
      %v1075 = vand.u32 %v335, 4294901760
      %v1076 = vsub.f32 %v335, %v1075
      %v1077 = vand.u32 %v1076, 4294901760
      %1078 = vmatpush.msra.mxu0 %v1077
      %v1079 = vand.u32 %v331, 4294901760
      %v1080 = vsub.f32 %v331, %v1079
      %v1081 = vand.u32 %v1080, 4294901760
      %1082 = vmatpush.msra.mxu0 %v1081
      %v1083 = vand.u32 %v327, 4294901760
      %v1084 = vsub.f32 %v327, %v1083
      %v1085 = vand.u32 %v1084, 4294901760
      %1086 = vmatpush.msra.mxu0 %v1085
      %v1087 = vand.u32 %v323, 4294901760
      %v1088 = vsub.f32 %v323, %v1087
      %v1089 = vand.u32 %v1088, 4294901760
      %1090 = vmatpush.msra.mxu0 %v1089
      %v1091 = vand.u32 %v319, 4294901760
      %v1092 = vsub.f32 %v319, %v1091
      %v1093 = vand.u32 %v1092, 4294901760
      %1094 = vmatpush.msra.mxu0 %v1093
      %v1095 = vand.u32 %v315, 4294901760
      %v1096 = vsub.f32 %v315, %v1095
      %v1097 = vand.u32 %v1096, 4294901760
      %1098 = vmatpush.msra.mxu0 %v1097
      %v1099 = vand.u32 %v311, 4294901760
      %v1100 = vsub.f32 %v311, %v1099
      %v1101 = vand.u32 %v1100, 4294901760
      %1102 = vmatpush.msra.mxu0 %v1101
      %v1103 = vand.u32 %v307, 4294901760
      %v1104 = vsub.f32 %v307, %v1103
      %v1105 = vand.u32 %v1104, 4294901760
      %1106 = vmatpush.msra.mxu0 %v1105
      %v1107 = vand.u32 %v303, 4294901760
      %v1108 = vsub.f32 %v303, %v1107
      %v1109 = vand.u32 %v1108, 4294901760
      %1110 = vmatpush.msra.mxu0 %v1109
      %v1111 = vand.u32 %v299, 4294901760
      %v1112 = vsub.f32 %v299, %v1111
      %v1113 = vand.u32 %v1112, 4294901760
      %1114 = vmatpush.msra.mxu0 %v1113
      %v1115 = vand.u32 %v295, 4294901760
      %v1116 = vsub.f32 %v295, %v1115
      %v1117 = vand.u32 %v1116, 4294901760
      %1118 = vmatpush.msra.mxu0 %v1117
      %v1119 = vand.u32 %v291, 4294901760
      %v1120 = vsub.f32 %v291, %v1119
      %v1121 = vand.u32 %v1120, 4294901760
      %1122 = vmatpush.msra.mxu0 %v1121
      %v1123 = vand.u32 %v224, 4294901760
      %1124 = vmatmul.f32.gmra.mxu0 %v1123
      %v1125 = vpop.f32.mrf.mxu0
      %v1126 = vadd.f32 %v1057, %v1125
      %1127 = vdwg.mxu0
      %v1128 = vand.u32 %v351, 4294901760
      %1129 = vmatpush.msra.mxu0 %v1128
      %v1130 = vand.u32 %v347, 4294901760
      %1131 = vmatpush.msra.mxu0 %v1130
      %v1132 = vand.u32 %v343, 4294901760
      %1133 = vmatpush.msra.mxu0 %v1132
      %v1134 = vand.u32 %v339, 4294901760
      %1135 = vmatpush.msra.mxu0 %v1134
      %v1136 = vand.u32 %v335, 4294901760
      %1137 = vmatpush.msra.mxu0 %v1136
      %v1138 = vand.u32 %v331, 4294901760
      %1139 = vmatpush.msra.mxu0 %v1138
      %v1140 = vand.u32 %v327, 4294901760
      %1141 = vmatpush.msra.mxu0 %v1140
      %v1142 = vand.u32 %v323, 4294901760
      %1143 = vmatpush.msra.mxu0 %v1142
      %v1144 = vand.u32 %v319, 4294901760
      %1145 = vmatpush.msra.mxu0 %v1144
      %v1146 = vand.u32 %v315, 4294901760
      %1147 = vmatpush.msra.mxu0 %v1146
      %v1148 = vand.u32 %v311, 4294901760
      %1149 = vmatpush.msra.mxu0 %v1148
      %v1150 = vand.u32 %v307, 4294901760
      %1151 = vmatpush.msra.mxu0 %v1150
      %v1152 = vand.u32 %v303, 4294901760
      %1153 = vmatpush.msra.mxu0 %v1152
      %v1154 = vand.u32 %v299, 4294901760
      %1155 = vmatpush.msra.mxu0 %v1154
      %v1156 = vand.u32 %v295, 4294901760
      %1157 = vmatpush.msra.mxu0 %v1156
      %v1158 = vand.u32 %v291, 4294901760
      %1159 = vmatpush.msra.mxu0 %v1158
      %v1160 = vand.u32 %v224, 4294901760
      %1161 = vmatmul.f32.gmra.mxu0 %v1160
      %v1162 = vpop.f32.mrf.mxu0
      %v1163 = vadd.f32 %v1126, %v1162
      %1164 = vdwg.mxu0
      %v1165 = vand.u32 %v415, 4294901760
      %1166 = vmatpush.msra.mxu0 %v1165
      %v1167 = vand.u32 %v411, 4294901760
      %1168 = vmatpush.msra.mxu0 %v1167
      %v1169 = vand.u32 %v407, 4294901760
      %1170 = vmatpush.msra.mxu0 %v1169
      %v1171 = vand.u32 %v403, 4294901760
      %1172 = vmatpush.msra.mxu0 %v1171
      %v1173 = vand.u32 %v399, 4294901760
      %1174 = vmatpush.msra.mxu0 %v1173
      %v1175 = vand.u32 %v395, 4294901760
      %1176 = vmatpush.msra.mxu0 %v1175
      %v1177 = vand.u32 %v391, 4294901760
      %1178 = vmatpush.msra.mxu0 %v1177
      %v1179 = vand.u32 %v387, 4294901760
      %1180 = vmatpush.msra.mxu0 %v1179
      %v1181 = vand.u32 %v383, 4294901760
      %1182 = vmatpush.msra.mxu0 %v1181
      %v1183 = vand.u32 %v379, 4294901760
      %1184 = vmatpush.msra.mxu0 %v1183
      %v1185 = vand.u32 %v375, 4294901760
      %1186 = vmatpush.msra.mxu0 %v1185
      %v1187 = vand.u32 %v371, 4294901760
      %1188 = vmatpush.msra.mxu0 %v1187
      %v1189 = vand.u32 %v367, 4294901760
      %1190 = vmatpush.msra.mxu0 %v1189
      %v1191 = vand.u32 %v363, 4294901760
      %1192 = vmatpush.msra.mxu0 %v1191
      %v1193 = vand.u32 %v359, 4294901760
      %1194 = vmatpush.msra.mxu0 %v1193
      %v1195 = vand.u32 %v355, 4294901760
      %1196 = vmatpush.msra.mxu0 %v1195
      %v1197 = vand.u32 %v225, 4294901760
      %v1198 = vsub.f32 %v225, %v1197
      %v1199 = vand.u32 %v1198, 4294901760
      %v1200 = vsub.f32 %v1198, %v1199
      %v1201 = vand.u32 %v1200, 4294901760
      %1202 = vmatmul.f32.gmra.mxu0 %v1201
      %v1203 = vpop.f32.mrf.mxu0
      %v1204 = vadd.f32 %v1163, %v1203
      %1205 = vdwg.mxu0
      %v1206 = vand.u32 %v415, 4294901760
      %v1207 = vsub.f32 %v415, %v1206
      %v1208 = vand.u32 %v1207, 4294901760
      %v1209 = vsub.f32 %v1207, %v1208
      %v1210 = vand.u32 %v1209, 4294901760
      %1211 = vmatpush.msra.mxu0 %v1210
      %v1212 = vand.u32 %v411, 4294901760
      %v1213 = vsub.f32 %v411, %v1212
      %v1214 = vand.u32 %v1213, 4294901760
      %v1215 = vsub.f32 %v1213, %v1214
      %v1216 = vand.u32 %v1215, 4294901760
      %1217 = vmatpush.msra.mxu0 %v1216
      %v1218 = vand.u32 %v407, 4294901760
      %v1219 = vsub.f32 %v407, %v1218
      %v1220 = vand.u32 %v1219, 4294901760
      %v1221 = vsub.f32 %v1219, %v1220
      %v1222 = vand.u32 %v1221, 4294901760
      %1223 = vmatpush.msra.mxu0 %v1222
      %v1224 = vand.u32 %v403, 4294901760
      %v1225 = vsub.f32 %v403, %v1224
      %v1226 = vand.u32 %v1225, 4294901760
      %v1227 = vsub.f32 %v1225, %v1226
      %v1228 = vand.u32 %v1227, 4294901760
      %1229 = vmatpush.msra.mxu0 %v1228
      %v1230 = vand.u32 %v399, 4294901760
      %v1231 = vsub.f32 %v399, %v1230
      %v1232 = vand.u32 %v1231, 4294901760
      %v1233 = vsub.f32 %v1231, %v1232
      %v1234 = vand.u32 %v1233, 4294901760
      %1235 = vmatpush.msra.mxu0 %v1234
      %v1236 = vand.u32 %v395, 4294901760
      %v1237 = vsub.f32 %v395, %v1236
      %v1238 = vand.u32 %v1237, 4294901760
      %v1239 = vsub.f32 %v1237, %v1238
      %v1240 = vand.u32 %v1239, 4294901760
      %1241 = vmatpush.msra.mxu0 %v1240
      %v1242 = vand.u32 %v391, 4294901760
      %v1243 = vsub.f32 %v391, %v1242
      %v1244 = vand.u32 %v1243, 4294901760
      %v1245 = vsub.f32 %v1243, %v1244
      %v1246 = vand.u32 %v1245, 4294901760
      %1247 = vmatpush.msra.mxu0 %v1246
      %v1248 = vand.u32 %v387, 4294901760
      %v1249 = vsub.f32 %v387, %v1248
      %v1250 = vand.u32 %v1249, 4294901760
      %v1251 = vsub.f32 %v1249, %v1250
      %v1252 = vand.u32 %v1251, 4294901760
      %1253 = vmatpush.msra.mxu0 %v1252
      %v1254 = vand.u32 %v383, 4294901760
      %v1255 = vsub.f32 %v383, %v1254
      %v1256 = vand.u32 %v1255, 4294901760
      %v1257 = vsub.f32 %v1255, %v1256
      %v1258 = vand.u32 %v1257, 4294901760
      %1259 = vmatpush.msra.mxu0 %v1258
      %v1260 = vand.u32 %v379, 4294901760
      %v1261 = vsub.f32 %v379, %v1260
      %v1262 = vand.u32 %v1261, 4294901760
      %v1263 = vsub.f32 %v1261, %v1262
      %v1264 = vand.u32 %v1263, 4294901760
      %1265 = vmatpush.msra.mxu0 %v1264
      %v1266 = vand.u32 %v375, 4294901760
      %v1267 = vsub.f32 %v375, %v1266
      %v1268 = vand.u32 %v1267, 4294901760
      %v1269 = vsub.f32 %v1267, %v1268
      %v1270 = vand.u32 %v1269, 4294901760
      %1271 = vmatpush.msra.mxu0 %v1270
      %v1272 = vand.u32 %v371, 4294901760
      %v1273 = vsub.f32 %v371, %v1272
      %v1274 = vand.u32 %v1273, 4294901760
      %v1275 = vsub.f32 %v1273, %v1274
      %v1276 = vand.u32 %v1275, 4294901760
      %1277 = vmatpush.msra.mxu0 %v1276
      %v1278 = vand.u32 %v367, 4294901760
      %v1279 = vsub.f32 %v367, %v1278
      %v1280 = vand.u32 %v1279, 4294901760
      %v1281 = vsub.f32 %v1279, %v1280
      %v1282 = vand.u32 %v1281, 4294901760
      %1283 = vmatpush.msra.mxu0 %v1282
      %v1284 = vand.u32 %v363, 4294901760
      %v1285 = vsub.f32 %v363, %v1284
      %v1286 = vand.u32 %v1285, 4294901760
      %v1287 = vsub.f32 %v1285, %v1286
      %v1288 = vand.u32 %v1287, 4294901760
      %1289 = vmatpush.msra.mxu0 %v1288
      %v1290 = vand.u32 %v359, 4294901760
      %v1291 = vsub.f32 %v359, %v1290
      %v1292 = vand.u32 %v1291, 4294901760
      %v1293 = vsub.f32 %v1291, %v1292
      %v1294 = vand.u32 %v1293, 4294901760
      %1295 = vmatpush.msra.mxu0 %v1294
      %v1296 = vand.u32 %v355, 4294901760
      %v1297 = vsub.f32 %v355, %v1296
      %v1298 = vand.u32 %v1297, 4294901760
      %v1299 = vsub.f32 %v1297, %v1298
      %v1300 = vand.u32 %v1299, 4294901760
      %1301 = vmatpush.msra.mxu0 %v1300
      %v1302 = vand.u32 %v225, 4294901760
      %1303 = vmatmul.f32.gmra.mxu0 %v1302
      %v1304 = vpop.f32.mrf.mxu0
      %v1305 = vadd.f32 %v1204, %v1304
      %1306 = vdwg.mxu0
      %v1307 = vand.u32 %v415, 4294901760
      %v1308 = vsub.f32 %v415, %v1307
      %1309 = vmatpush.msra.mxu0 %v1308
      %v1310 = vand.u32 %v411, 4294901760
      %v1311 = vsub.f32 %v411, %v1310
      %1312 = vmatpush.msra.mxu0 %v1311
      %v1313 = vand.u32 %v407, 4294901760
      %v1314 = vsub.f32 %v407, %v1313
      %1315 = vmatpush.msra.mxu0 %v1314
      %v1316 = vand.u32 %v403, 4294901760
      %v1317 = vsub.f32 %v403, %v1316
      %1318 = vmatpush.msra.mxu0 %v1317
      %v1319 = vand.u32 %v399, 4294901760
      %v1320 = vsub.f32 %v399, %v1319
      %1321 = vmatpush.msra.mxu0 %v1320
      %v1322 = vand.u32 %v395, 4294901760
      %v1323 = vsub.f32 %v395, %v1322
      %1324 = vmatpush.msra.mxu0 %v1323
      %v1325 = vand.u32 %v391, 4294901760
      %v1326 = vsub.f32 %v391, %v1325
      %1327 = vmatpush.msra.mxu0 %v1326
      %v1328 = vand.u32 %v387, 4294901760
      %v1329 = vsub.f32 %v387, %v1328
      %1330 = vmatpush.msra.mxu0 %v1329
      %v1331 = vand.u32 %v383, 4294901760
      %v1332 = vsub.f32 %v383, %v1331
      %1333 = vmatpush.msra.mxu0 %v1332
      %v1334 = vand.u32 %v379, 4294901760
      %v1335 = vsub.f32 %v379, %v1334
      %1336 = vmatpush.msra.mxu0 %v1335
      %v1337 = vand.u32 %v375, 4294901760
      %v1338 = vsub.f32 %v375, %v1337
      %1339 = vmatpush.msra.mxu0 %v1338
      %v1340 = vand.u32 %v371, 4294901760
      %v1341 = vsub.f32 %v371, %v1340
      %1342 = vmatpush.msra.mxu0 %v1341
      %v1343 = vand.u32 %v367, 4294901760
      %v1344 = vsub.f32 %v367, %v1343
      %1345 = vmatpush.msra.mxu0 %v1344
      %v1346 = vand.u32 %v363, 4294901760
      %v1347 = vsub.f32 %v363, %v1346
      %1348 = vmatpush.msra.mxu0 %v1347
      %v1349 = vand.u32 %v359, 4294901760
      %v1350 = vsub.f32 %v359, %v1349
      %1351 = vmatpush.msra.mxu0 %v1350
      %v1352 = vand.u32 %v355, 4294901760
      %v1353 = vsub.f32 %v355, %v1352
      %1354 = vmatpush.msra.mxu0 %v1353
      %v1355 = vand.u32 %v225, 4294901760
      %v1356 = vsub.f32 %v225, %v1355
      %1357 = vmatmul.f32.gmra.mxu0 %v1356
      %v1358 = vpop.f32.mrf.mxu0
      %v1359 = vadd.f32 %v1305, %v1358
      %1360 = vdwg.mxu0
      %v1361 = vand.u32 %v415, 4294901760
      %1362 = vmatpush.msra.mxu0 %v1361
      %v1363 = vand.u32 %v411, 4294901760
      %1364 = vmatpush.msra.mxu0 %v1363
      %v1365 = vand.u32 %v407, 4294901760
      %1366 = vmatpush.msra.mxu0 %v1365
      %v1367 = vand.u32 %v403, 4294901760
      %1368 = vmatpush.msra.mxu0 %v1367
      %v1369 = vand.u32 %v399, 4294901760
      %1370 = vmatpush.msra.mxu0 %v1369
      %v1371 = vand.u32 %v395, 4294901760
      %1372 = vmatpush.msra.mxu0 %v1371
      %v1373 = vand.u32 %v391, 4294901760
      %1374 = vmatpush.msra.mxu0 %v1373
      %v1375 = vand.u32 %v387, 4294901760
      %1376 = vmatpush.msra.mxu0 %v1375
      %v1377 = vand.u32 %v383, 4294901760
      %1378 = vmatpush.msra.mxu0 %v1377
      %v1379 = vand.u32 %v379, 4294901760
      %1380 = vmatpush.msra.mxu0 %v1379
      %v1381 = vand.u32 %v375, 4294901760
      %1382 = vmatpush.msra.mxu0 %v1381
      %v1383 = vand.u32 %v371, 4294901760
      %1384 = vmatpush.msra.mxu0 %v1383
      %v1385 = vand.u32 %v367, 4294901760
      %1386 = vmatpush.msra.mxu0 %v1385
      %v1387 = vand.u32 %v363, 4294901760
      %1388 = vmatpush.msra.mxu0 %v1387
      %v1389 = vand.u32 %v359, 4294901760
      %1390 = vmatpush.msra.mxu0 %v1389
      %v1391 = vand.u32 %v355, 4294901760
      %1392 = vmatpush.msra.mxu0 %v1391
      %v1393 = vand.u32 %v225, 4294901760
      %v1394 = vsub.f32 %v225, %v1393
      %v1395 = vand.u32 %v1394, 4294901760
      %1396 = vmatmul.f32.gmra.mxu0 %v1395
      %v1397 = vpop.f32.mrf.mxu0
      %v1398 = vadd.f32 %v1359, %v1397
      %1399 = vdwg.mxu0
      %v1400 = vand.u32 %v415, 4294901760
      %v1401 = vsub.f32 %v415, %v1400
      %v1402 = vand.u32 %v1401, 4294901760
      %1403 = vmatpush.msra.mxu0 %v1402
      %v1404 = vand.u32 %v411, 4294901760
      %v1405 = vsub.f32 %v411, %v1404
      %v1406 = vand.u32 %v1405, 4294901760
      %1407 = vmatpush.msra.mxu0 %v1406
      %v1408 = vand.u32 %v407, 4294901760
      %v1409 = vsub.f32 %v407, %v1408
      %v1410 = vand.u32 %v1409, 4294901760
      %1411 = vmatpush.msra.mxu0 %v1410
      %v1412 = vand.u32 %v403, 4294901760
      %v1413 = vsub.f32 %v403, %v1412
      %v1414 = vand.u32 %v1413, 4294901760
      %1415 = vmatpush.msra.mxu0 %v1414
      %v1416 = vand.u32 %v399, 4294901760
      %v1417 = vsub.f32 %v399, %v1416
      %v1418 = vand.u32 %v1417, 4294901760
      %1419 = vmatpush.msra.mxu0 %v1418
      %v1420 = vand.u32 %v395, 4294901760
      %v1421 = vsub.f32 %v395, %v1420
      %v1422 = vand.u32 %v1421, 4294901760
      %1423 = vmatpush.msra.mxu0 %v1422
      %v1424 = vand.u32 %v391, 4294901760
      %v1425 = vsub.f32 %v391, %v1424
      %v1426 = vand.u32 %v1425, 4294901760
      %1427 = vmatpush.msra.mxu0 %v1426
      %v1428 = vand.u32 %v387, 4294901760
      %v1429 = vsub.f32 %v387, %v1428
      %v1430 = vand.u32 %v1429, 4294901760
      %1431 = vmatpush.msra.mxu0 %v1430
      %v1432 = vand.u32 %v383, 4294901760
      %v1433 = vsub.f32 %v383, %v1432
      %v1434 = vand.u32 %v1433, 4294901760
      %1435 = vmatpush.msra.mxu0 %v1434
      %v1436 = vand.u32 %v379, 4294901760
      %v1437 = vsub.f32 %v379, %v1436
      %v1438 = vand.u32 %v1437, 4294901760
      %1439 = vmatpush.msra.mxu0 %v1438
      %v1440 = vand.u32 %v375, 4294901760
      %v1441 = vsub.f32 %v375, %v1440
      %v1442 = vand.u32 %v1441, 4294901760
      %1443 = vmatpush.msra.mxu0 %v1442
      %v1444 = vand.u32 %v371, 4294901760
      %v1445 = vsub.f32 %v371, %v1444
      %v1446 = vand.u32 %v1445, 4294901760
      %1447 = vmatpush.msra.mxu0 %v1446
      %v1448 = vand.u32 %v367, 4294901760
      %v1449 = vsub.f32 %v367, %v1448
      %v1450 = vand.u32 %v1449, 4294901760
      %1451 = vmatpush.msra.mxu0 %v1450
      %v1452 = vand.u32 %v363, 4294901760
      %v1453 = vsub.f32 %v363, %v1452
      %v1454 = vand.u32 %v1453, 4294901760
      %1455 = vmatpush.msra.mxu0 %v1454
      %v1456 = vand.u32 %v359, 4294901760
      %v1457 = vsub.f32 %v359, %v1456
      %v1458 = vand.u32 %v1457, 4294901760
      %1459 = vmatpush.msra.mxu0 %v1458
      %v1460 = vand.u32 %v355, 4294901760
      %v1461 = vsub.f32 %v355, %v1460
      %v1462 = vand.u32 %v1461, 4294901760
      %1463 = vmatpush.msra.mxu0 %v1462
      %v1464 = vand.u32 %v225, 4294901760
      %1465 = vmatmul.f32.gmra.mxu0 %v1464
      %v1466 = vpop.f32.mrf.mxu0
      %v1467 = vadd.f32 %v1398, %v1466
      %1468 = vdwg.mxu0
      %v1469 = vand.u32 %v415, 4294901760
      %1470 = vmatpush.msra.mxu0 %v1469
      %v1471 = vand.u32 %v411, 4294901760
      %1472 = vmatpush.msra.mxu0 %v1471
      %v1473 = vand.u32 %v407, 4294901760
      %1474 = vmatpush.msra.mxu0 %v1473
      %v1475 = vand.u32 %v403, 4294901760
      %1476 = vmatpush.msra.mxu0 %v1475
      %v1477 = vand.u32 %v399, 4294901760
      %1478 = vmatpush.msra.mxu0 %v1477
      %v1479 = vand.u32 %v395, 4294901760
      %1480 = vmatpush.msra.mxu0 %v1479
      %v1481 = vand.u32 %v391, 4294901760
      %1482 = vmatpush.msra.mxu0 %v1481
      %v1483 = vand.u32 %v387, 4294901760
      %1484 = vmatpush.msra.mxu0 %v1483
      %v1485 = vand.u32 %v383, 4294901760
      %1486 = vmatpush.msra.mxu0 %v1485
      %v1487 = vand.u32 %v379, 4294901760
      %1488 = vmatpush.msra.mxu0 %v1487
      %v1489 = vand.u32 %v375, 4294901760
      %1490 = vmatpush.msra.mxu0 %v1489
      %v1491 = vand.u32 %v371, 4294901760
      %1492 = vmatpush.msra.mxu0 %v1491
      %v1493 = vand.u32 %v367, 4294901760
      %1494 = vmatpush.msra.mxu0 %v1493
      %v1495 = vand.u32 %v363, 4294901760
      %1496 = vmatpush.msra.mxu0 %v1495
      %v1497 = vand.u32 %v359, 4294901760
      %1498 = vmatpush.msra.mxu0 %v1497
      %v1499 = vand.u32 %v355, 4294901760
      %1500 = vmatpush.msra.mxu0 %v1499
      %v1501 = vand.u32 %v225, 4294901760
      %1502 = vmatmul.f32.gmra.mxu0 %v1501
      %v1503 = vpop.f32.mrf.mxu0
      %v1504 = vadd.f32 %v1467, %v1503
      %1505 = vdwg.mxu0
      %v1506 = vand.u32 %v479, 4294901760
      %1507 = vmatpush.msra.mxu0 %v1506
      %v1508 = vand.u32 %v475, 4294901760
      %1509 = vmatpush.msra.mxu0 %v1508
      %v1510 = vand.u32 %v471, 4294901760
      %1511 = vmatpush.msra.mxu0 %v1510
      %v1512 = vand.u32 %v467, 4294901760
      %1513 = vmatpush.msra.mxu0 %v1512
      %v1514 = vand.u32 %v463, 4294901760
      %1515 = vmatpush.msra.mxu0 %v1514
      %v1516 = vand.u32 %v459, 4294901760
      %1517 = vmatpush.msra.mxu0 %v1516
      %v1518 = vand.u32 %v455, 4294901760
      %1519 = vmatpush.msra.mxu0 %v1518
      %v1520 = vand.u32 %v451, 4294901760
      %1521 = vmatpush.msra.mxu0 %v1520
      %v1522 = vand.u32 %v447, 4294901760
      %1523 = vmatpush.msra.mxu0 %v1522
      %v1524 = vand.u32 %v443, 4294901760
      %1525 = vmatpush.msra.mxu0 %v1524
      %v1526 = vand.u32 %v439, 4294901760
      %1527 = vmatpush.msra.mxu0 %v1526
      %v1528 = vand.u32 %v435, 4294901760
      %1529 = vmatpush.msra.mxu0 %v1528
      %v1530 = vand.u32 %v431, 4294901760
      %1531 = vmatpush.msra.mxu0 %v1530
      %v1532 = vand.u32 %v427, 4294901760
      %1533 = vmatpush.msra.mxu0 %v1532
      %v1534 = vand.u32 %v423, 4294901760
      %1535 = vmatpush.msra.mxu0 %v1534
      %v1536 = vand.u32 %v419, 4294901760
      %1537 = vmatpush.msra.mxu0 %v1536
      %v1538 = vand.u32 %v226, 4294901760
      %v1539 = vsub.f32 %v226, %v1538
      %v1540 = vand.u32 %v1539, 4294901760
      %v1541 = vsub.f32 %v1539, %v1540
      %v1542 = vand.u32 %v1541, 4294901760
      %1543 = vmatmul.f32.gmra.mxu0 %v1542
      %v1544 = vpop.f32.mrf.mxu0
      %v1545 = vadd.f32 %v1504, %v1544
      %1546 = vdwg.mxu0
      %v1547 = vand.u32 %v479, 4294901760
      %v1548 = vsub.f32 %v479, %v1547
      %v1549 = vand.u32 %v1548, 4294901760
      %v1550 = vsub.f32 %v1548, %v1549
      %v1551 = vand.u32 %v1550, 4294901760
      %1552 = vmatpush.msra.mxu0 %v1551
      %v1553 = vand.u32 %v475, 4294901760
      %v1554 = vsub.f32 %v475, %v1553
      %v1555 = vand.u32 %v1554, 4294901760
      %v1556 = vsub.f32 %v1554, %v1555
      %v1557 = vand.u32 %v1556, 4294901760
      %1558 = vmatpush.msra.mxu0 %v1557
      %v1559 = vand.u32 %v471, 4294901760
      %v1560 = vsub.f32 %v471, %v1559
      %v1561 = vand.u32 %v1560, 4294901760
      %v1562 = vsub.f32 %v1560, %v1561
      %v1563 = vand.u32 %v1562, 4294901760
      %1564 = vmatpush.msra.mxu0 %v1563
      %v1565 = vand.u32 %v467, 4294901760
      %v1566 = vsub.f32 %v467, %v1565
      %v1567 = vand.u32 %v1566, 4294901760
      %v1568 = vsub.f32 %v1566, %v1567
      %v1569 = vand.u32 %v1568, 4294901760
      %1570 = vmatpush.msra.mxu0 %v1569
      %v1571 = vand.u32 %v463, 4294901760
      %v1572 = vsub.f32 %v463, %v1571
      %v1573 = vand.u32 %v1572, 4294901760
      %v1574 = vsub.f32 %v1572, %v1573
      %v1575 = vand.u32 %v1574, 4294901760
      %1576 = vmatpush.msra.mxu0 %v1575
      %v1577 = vand.u32 %v459, 4294901760
      %v1578 = vsub.f32 %v459, %v1577
      %v1579 = vand.u32 %v1578, 4294901760
      %v1580 = vsub.f32 %v1578, %v1579
      %v1581 = vand.u32 %v1580, 4294901760
      %1582 = vmatpush.msra.mxu0 %v1581
      %v1583 = vand.u32 %v455, 4294901760
      %v1584 = vsub.f32 %v455, %v1583
      %v1585 = vand.u32 %v1584, 4294901760
      %v1586 = vsub.f32 %v1584, %v1585
      %v1587 = vand.u32 %v1586, 4294901760
      %1588 = vmatpush.msra.mxu0 %v1587
      %v1589 = vand.u32 %v451, 4294901760
      %v1590 = vsub.f32 %v451, %v1589
      %v1591 = vand.u32 %v1590, 4294901760
      %v1592 = vsub.f32 %v1590, %v1591
      %v1593 = vand.u32 %v1592, 4294901760
      %1594 = vmatpush.msra.mxu0 %v1593
      %v1595 = vand.u32 %v447, 4294901760
      %v1596 = vsub.f32 %v447, %v1595
      %v1597 = vand.u32 %v1596, 4294901760
      %v1598 = vsub.f32 %v1596, %v1597
      %v1599 = vand.u32 %v1598, 4294901760
      %1600 = vmatpush.msra.mxu0 %v1599
      %v1601 = vand.u32 %v443, 4294901760
      %v1602 = vsub.f32 %v443, %v1601
      %v1603 = vand.u32 %v1602, 4294901760
      %v1604 = vsub.f32 %v1602, %v1603
      %v1605 = vand.u32 %v1604, 4294901760
      %1606 = vmatpush.msra.mxu0 %v1605
      %v1607 = vand.u32 %v439, 4294901760
      %v1608 = vsub.f32 %v439, %v1607
      %v1609 = vand.u32 %v1608, 4294901760
      %v1610 = vsub.f32 %v1608, %v1609
      %v1611 = vand.u32 %v1610, 4294901760
      %1612 = vmatpush.msra.mxu0 %v1611
      %v1613 = vand.u32 %v435, 4294901760
      %v1614 = vsub.f32 %v435, %v1613
      %v1615 = vand.u32 %v1614, 4294901760
      %v1616 = vsub.f32 %v1614, %v1615
      %v1617 = vand.u32 %v1616, 4294901760
      %1618 = vmatpush.msra.mxu0 %v1617
      %v1619 = vand.u32 %v431, 4294901760
      %v1620 = vsub.f32 %v431, %v1619
      %v1621 = vand.u32 %v1620, 4294901760
      %v1622 = vsub.f32 %v1620, %v1621
      %v1623 = vand.u32 %v1622, 4294901760
      %1624 = vmatpush.msra.mxu0 %v1623
      %v1625 = vand.u32 %v427, 4294901760
      %v1626 = vsub.f32 %v427, %v1625
      %v1627 = vand.u32 %v1626, 4294901760
      %v1628 = vsub.f32 %v1626, %v1627
      %v1629 = vand.u32 %v1628, 4294901760
      %1630 = vmatpush.msra.mxu0 %v1629
      %v1631 = vand.u32 %v423, 4294901760
      %v1632 = vsub.f32 %v423, %v1631
      %v1633 = vand.u32 %v1632, 4294901760
      %v1634 = vsub.f32 %v1632, %v1633
      %v1635 = vand.u32 %v1634, 4294901760
      %1636 = vmatpush.msra.mxu0 %v1635
      %v1637 = vand.u32 %v419, 4294901760
      %v1638 = vsub.f32 %v419, %v1637
      %v1639 = vand.u32 %v1638, 4294901760
      %v1640 = vsub.f32 %v1638, %v1639
      %v1641 = vand.u32 %v1640, 4294901760
      %1642 = vmatpush.msra.mxu0 %v1641
      %v1643 = vand.u32 %v226, 4294901760
      %1644 = vmatmul.f32.gmra.mxu0 %v1643
      %v1645 = vpop.f32.mrf.mxu0
      %v1646 = vadd.f32 %v1545, %v1645
      %1647 = vdwg.mxu0
      %v1648 = vand.u32 %v479, 4294901760
      %v1649 = vsub.f32 %v479, %v1648
      %1650 = vmatpush.msra.mxu0 %v1649
      %v1651 = vand.u32 %v475, 4294901760
      %v1652 = vsub.f32 %v475, %v1651
      %1653 = vmatpush.msra.mxu0 %v1652
      %v1654 = vand.u32 %v471, 4294901760
      %v1655 = vsub.f32 %v471, %v1654
      %1656 = vmatpush.msra.mxu0 %v1655
      %v1657 = vand.u32 %v467, 4294901760
      %v1658 = vsub.f32 %v467, %v1657
      %1659 = vmatpush.msra.mxu0 %v1658
      %v1660 = vand.u32 %v463, 4294901760
      %v1661 = vsub.f32 %v463, %v1660
      %1662 = vmatpush.msra.mxu0 %v1661
      %v1663 = vand.u32 %v459, 4294901760
      %v1664 = vsub.f32 %v459, %v1663
      %1665 = vmatpush.msra.mxu0 %v1664
      %v1666 = vand.u32 %v455, 4294901760
      %v1667 = vsub.f32 %v455, %v1666
      %1668 = vmatpush.msra.mxu0 %v1667
      %v1669 = vand.u32 %v451, 4294901760
      %v1670 = vsub.f32 %v451, %v1669
      %1671 = vmatpush.msra.mxu0 %v1670
      %v1672 = vand.u32 %v447, 4294901760
      %v1673 = vsub.f32 %v447, %v1672
      %1674 = vmatpush.msra.mxu0 %v1673
      %v1675 = vand.u32 %v443, 4294901760
      %v1676 = vsub.f32 %v443, %v1675
      %1677 = vmatpush.msra.mxu0 %v1676
      %v1678 = vand.u32 %v439, 4294901760
      %v1679 = vsub.f32 %v439, %v1678
      %1680 = vmatpush.msra.mxu0 %v1679
      %v1681 = vand.u32 %v435, 4294901760
      %v1682 = vsub.f32 %v435, %v1681
      %1683 = vmatpush.msra.mxu0 %v1682
      %v1684 = vand.u32 %v431, 4294901760
      %v1685 = vsub.f32 %v431, %v1684
      %1686 = vmatpush.msra.mxu0 %v1685
      %v1687 = vand.u32 %v427, 4294901760
      %v1688 = vsub.f32 %v427, %v1687
      %1689 = vmatpush.msra.mxu0 %v1688
      %v1690 = vand.u32 %v423, 4294901760
      %v1691 = vsub.f32 %v423, %v1690
      %1692 = vmatpush.msra.mxu0 %v1691
      %v1693 = vand.u32 %v419, 4294901760
      %v1694 = vsub.f32 %v419, %v1693
      %1695 = vmatpush.msra.mxu0 %v1694
      %v1696 = vand.u32 %v226, 4294901760
      %v1697 = vsub.f32 %v226, %v1696
      %1698 = vmatmul.f32.gmra.mxu0 %v1697
      %v1699 = vpop.f32.mrf.mxu0
      %v1700 = vadd.f32 %v1646, %v1699
      %1701 = vdwg.mxu0
      %v1702 = vand.u32 %v479, 4294901760
      %1703 = vmatpush.msra.mxu0 %v1702
      %v1704 = vand.u32 %v475, 4294901760
      %1705 = vmatpush.msra.mxu0 %v1704
      %v1706 = vand.u32 %v471, 4294901760
      %1707 = vmatpush.msra.mxu0 %v1706
      %v1708 = vand.u32 %v467, 4294901760
      %1709 = vmatpush.msra.mxu0 %v1708
      %v1710 = vand.u32 %v463, 4294901760
      %1711 = vmatpush.msra.mxu0 %v1710
      %v1712 = vand.u32 %v459, 4294901760
      %1713 = vmatpush.msra.mxu0 %v1712
      %v1714 = vand.u32 %v455, 4294901760
      %1715 = vmatpush.msra.mxu0 %v1714
      %v1716 = vand.u32 %v451, 4294901760
      %1717 = vmatpush.msra.mxu0 %v1716
      %v1718 = vand.u32 %v447, 4294901760
      %1719 = vmatpush.msra.mxu0 %v1718
      %v1720 = vand.u32 %v443, 4294901760
      %1721 = vmatpush.msra.mxu0 %v1720
      %v1722 = vand.u32 %v439, 4294901760
      %1723 = vmatpush.msra.mxu0 %v1722
      %v1724 = vand.u32 %v435, 4294901760
      %1725 = vmatpush.msra.mxu0 %v1724
      %v1726 = vand.u32 %v431, 4294901760
      %1727 = vmatpush.msra.mxu0 %v1726
      %v1728 = vand.u32 %v427, 4294901760
      %1729 = vmatpush.msra.mxu0 %v1728
      %v1730 = vand.u32 %v423, 4294901760
      %1731 = vmatpush.msra.mxu0 %v1730
      %v1732 = vand.u32 %v419, 4294901760
      %1733 = vmatpush.msra.mxu0 %v1732
      %v1734 = vand.u32 %v226, 4294901760
      %v1735 = vsub.f32 %v226, %v1734
      %v1736 = vand.u32 %v1735, 4294901760
      %1737 = vmatmul.f32.gmra.mxu0 %v1736
      %v1738 = vpop.f32.mrf.mxu0
      %v1739 = vadd.f32 %v1700, %v1738
      %1740 = vdwg.mxu0
      %v1741 = vand.u32 %v479, 4294901760
      %v1742 = vsub.f32 %v479, %v1741
      %v1743 = vand.u32 %v1742, 4294901760
      %1744 = vmatpush.msra.mxu0 %v1743
      %v1745 = vand.u32 %v475, 4294901760
      %v1746 = vsub.f32 %v475, %v1745
      %v1747 = vand.u32 %v1746, 4294901760
      %1748 = vmatpush.msra.mxu0 %v1747
      %v1749 = vand.u32 %v471, 4294901760
      %v1750 = vsub.f32 %v471, %v1749
      %v1751 = vand.u32 %v1750, 4294901760
      %1752 = vmatpush.msra.mxu0 %v1751
      %v1753 = vand.u32 %v467, 4294901760
      %v1754 = vsub.f32 %v467, %v1753
      %v1755 = vand.u32 %v1754, 4294901760
      %1756 = vmatpush.msra.mxu0 %v1755
      %v1757 = vand.u32 %v463, 4294901760
      %v1758 = vsub.f32 %v463, %v1757
      %v1759 = vand.u32 %v1758, 4294901760
      %1760 = vmatpush.msra.mxu0 %v1759
      %v1761 = vand.u32 %v459, 4294901760
      %v1762 = vsub.f32 %v459, %v1761
      %v1763 = vand.u32 %v1762, 4294901760
      %1764 = vmatpush.msra.mxu0 %v1763
      %v1765 = vand.u32 %v455, 4294901760
      %v1766 = vsub.f32 %v455, %v1765
      %v1767 = vand.u32 %v1766, 4294901760
      %1768 = vmatpush.msra.mxu0 %v1767
      %v1769 = vand.u32 %v451, 4294901760
      %v1770 = vsub.f32 %v451, %v1769
      %v1771 = vand.u32 %v1770, 4294901760
      %1772 = vmatpush.msra.mxu0 %v1771
      %v1773 = vand.u32 %v447, 4294901760
      %v1774 = vsub.f32 %v447, %v1773
      %v1775 = vand.u32 %v1774, 4294901760
      %1776 = vmatpush.msra.mxu0 %v1775
      %v1777 = vand.u32 %v443, 4294901760
      %v1778 = vsub.f32 %v443, %v1777
      %v1779 = vand.u32 %v1778, 4294901760
      %1780 = vmatpush.msra.mxu0 %v1779
      %v1781 = vand.u32 %v439, 4294901760
      %v1782 = vsub.f32 %v439, %v1781
      %v1783 = vand.u32 %v1782, 4294901760
      %1784 = vmatpush.msra.mxu0 %v1783
      %v1785 = vand.u32 %v435, 4294901760
      %v1786 = vsub.f32 %v435, %v1785
      %v1787 = vand.u32 %v1786, 4294901760
      %1788 = vmatpush.msra.mxu0 %v1787
      %v1789 = vand.u32 %v431, 4294901760
      %v1790 = vsub.f32 %v431, %v1789
      %v1791 = vand.u32 %v1790, 4294901760
      %1792 = vmatpush.msra.mxu0 %v1791
      %v1793 = vand.u32 %v427, 4294901760
      %v1794 = vsub.f32 %v427, %v1793
      %v1795 = vand.u32 %v1794, 4294901760
      %1796 = vmatpush.msra.mxu0 %v1795
      %v1797 = vand.u32 %v423, 4294901760
      %v1798 = vsub.f32 %v423, %v1797
      %v1799 = vand.u32 %v1798, 4294901760
      %1800 = vmatpush.msra.mxu0 %v1799
      %v1801 = vand.u32 %v419, 4294901760
      %v1802 = vsub.f32 %v419, %v1801
      %v1803 = vand.u32 %v1802, 4294901760
      %1804 = vmatpush.msra.mxu0 %v1803
      %v1805 = vand.u32 %v226, 4294901760
      %1806 = vmatmul.f32.gmra.mxu0 %v1805
      %v1807 = vpop.f32.mrf.mxu0
      %v1808 = vadd.f32 %v1739, %v1807
      %1809 = vdwg.mxu0
      %v1810 = vand.u32 %v479, 4294901760
      %1811 = vmatpush.msra.mxu0 %v1810
      %v1812 = vand.u32 %v475, 4294901760
      %1813 = vmatpush.msra.mxu0 %v1812
      %v1814 = vand.u32 %v471, 4294901760
      %1815 = vmatpush.msra.mxu0 %v1814
      %v1816 = vand.u32 %v467, 4294901760
      %1817 = vmatpush.msra.mxu0 %v1816
      %v1818 = vand.u32 %v463, 4294901760
      %1819 = vmatpush.msra.mxu0 %v1818
      %v1820 = vand.u32 %v459, 4294901760
      %1821 = vmatpush.msra.mxu0 %v1820
      %v1822 = vand.u32 %v455, 4294901760
      %1823 = vmatpush.msra.mxu0 %v1822
      %v1824 = vand.u32 %v451, 4294901760
      %1825 = vmatpush.msra.mxu0 %v1824
      %v1826 = vand.u32 %v447, 4294901760
      %1827 = vmatpush.msra.mxu0 %v1826
      %v1828 = vand.u32 %v443, 4294901760
      %1829 = vmatpush.msra.mxu0 %v1828
      %v1830 = vand.u32 %v439, 4294901760
      %1831 = vmatpush.msra.mxu0 %v1830
      %v1832 = vand.u32 %v435, 4294901760
      %1833 = vmatpush.msra.mxu0 %v1832
      %v1834 = vand.u32 %v431, 4294901760
      %1835 = vmatpush.msra.mxu0 %v1834
      %v1836 = vand.u32 %v427, 4294901760
      %1837 = vmatpush.msra.mxu0 %v1836
      %v1838 = vand.u32 %v423, 4294901760
      %1839 = vmatpush.msra.mxu0 %v1838
      %v1840 = vand.u32 %v419, 4294901760
      %1841 = vmatpush.msra.mxu0 %v1840
      %v1842 = vand.u32 %v226, 4294901760
      %1843 = vmatmul.f32.gmra.mxu0 %v1842
      %v1844 = vpop.f32.mrf.mxu0
      %v1845 = vadd.f32 %v1808, %v1844
      %1846 = vdwg.mxu0
      %v1847 = vand.u32 %v288, 4294901760
      %1848 = vmatpush.msra.mxu0 %v1847
      %v1849 = vand.u32 %v284, 4294901760
      %1850 = vmatpush.msra.mxu0 %v1849
      %v1851 = vand.u32 %v280, 4294901760
      %1852 = vmatpush.msra.mxu0 %v1851
      %v1853 = vand.u32 %v276, 4294901760
      %1854 = vmatpush.msra.mxu0 %v1853
      %v1855 = vand.u32 %v272, 4294901760
      %1856 = vmatpush.msra.mxu0 %v1855
      %v1857 = vand.u32 %v268, 4294901760
      %1858 = vmatpush.msra.mxu0 %v1857
      %v1859 = vand.u32 %v264, 4294901760
      %1860 = vmatpush.msra.mxu0 %v1859
      %v1861 = vand.u32 %v260, 4294901760
      %1862 = vmatpush.msra.mxu0 %v1861
      %v1863 = vand.u32 %v256, 4294901760
      %1864 = vmatpush.msra.mxu0 %v1863
      %v1865 = vand.u32 %v252, 4294901760
      %1866 = vmatpush.msra.mxu0 %v1865
      %v1867 = vand.u32 %v248, 4294901760
      %1868 = vmatpush.msra.mxu0 %v1867
      %v1869 = vand.u32 %v244, 4294901760
      %1870 = vmatpush.msra.mxu0 %v1869
      %v1871 = vand.u32 %v240, 4294901760
      %1872 = vmatpush.msra.mxu0 %v1871
      %v1873 = vand.u32 %v236, 4294901760
      %1874 = vmatpush.msra.mxu0 %v1873
      %v1875 = vand.u32 %v232, 4294901760
      %1876 = vmatpush.msra.mxu0 %v1875
      %v1877 = vand.u32 %v228, 4294901760
      %1878 = vmatpush.msra.mxu0 %v1877
      %v1879 = vand.u32 %v223, 4294901760
      %v1880 = vsub.f32 %v223, %v1879
      %v1881 = vand.u32 %v1880, 4294901760
      %v1882 = vsub.f32 %v1880, %v1881
      %v1883 = vand.u32 %v1882, 4294901760
      %1884 = vmatmul.f32.gmra.mxu0 %v1883
      %v1885 = vpop.f32.mrf.mxu0
      %v1886 = vadd.f32 0.0, %v1885
      %1887 = vdwg.mxu0
      %v1888 = vand.u32 %v288, 4294901760
      %v1889 = vsub.f32 %v288, %v1888
      %v1890 = vand.u32 %v1889, 4294901760
      %v1891 = vsub.f32 %v1889, %v1890
      %v1892 = vand.u32 %v1891, 4294901760
      %1893 = vmatpush.msra.mxu0 %v1892
      %v1894 = vand.u32 %v284, 4294901760
      %v1895 = vsub.f32 %v284, %v1894
      %v1896 = vand.u32 %v1895, 4294901760
      %v1897 = vsub.f32 %v1895, %v1896
      %v1898 = vand.u32 %v1897, 4294901760
      %1899 = vmatpush.msra.mxu0 %v1898
      %v1900 = vand.u32 %v280, 4294901760
      %v1901 = vsub.f32 %v280, %v1900
      %v1902 = vand.u32 %v1901, 4294901760
      %v1903 = vsub.f32 %v1901, %v1902
      %v1904 = vand.u32 %v1903, 4294901760
      %1905 = vmatpush.msra.mxu0 %v1904
      %v1906 = vand.u32 %v276, 4294901760
      %v1907 = vsub.f32 %v276, %v1906
      %v1908 = vand.u32 %v1907, 4294901760
      %v1909 = vsub.f32 %v1907, %v1908
      %v1910 = vand.u32 %v1909, 4294901760
      %1911 = vmatpush.msra.mxu0 %v1910
      %v1912 = vand.u32 %v272, 4294901760
      %v1913 = vsub.f32 %v272, %v1912
      %v1914 = vand.u32 %v1913, 4294901760
      %v1915 = vsub.f32 %v1913, %v1914
      %v1916 = vand.u32 %v1915, 4294901760
      %1917 = vmatpush.msra.mxu0 %v1916
      %v1918 = vand.u32 %v268, 4294901760
      %v1919 = vsub.f32 %v268, %v1918
      %v1920 = vand.u32 %v1919, 4294901760
      %v1921 = vsub.f32 %v1919, %v1920
      %v1922 = vand.u32 %v1921, 4294901760
      %1923 = vmatpush.msra.mxu0 %v1922
      %v1924 = vand.u32 %v264, 4294901760
      %v1925 = vsub.f32 %v264, %v1924
      %v1926 = vand.u32 %v1925, 4294901760
      %v1927 = vsub.f32 %v1925, %v1926
      %v1928 = vand.u32 %v1927, 4294901760
      %1929 = vmatpush.msra.mxu0 %v1928
      %v1930 = vand.u32 %v260, 4294901760
      %v1931 = vsub.f32 %v260, %v1930
      %v1932 = vand.u32 %v1931, 4294901760
      %v1933 = vsub.f32 %v1931, %v1932
      %v1934 = vand.u32 %v1933, 4294901760
      %1935 = vmatpush.msra.mxu0 %v1934
      %v1936 = vand.u32 %v256, 4294901760
      %v1937 = vsub.f32 %v256, %v1936
      %v1938 = vand.u32 %v1937, 4294901760
      %v1939 = vsub.f32 %v1937, %v1938
      %v1940 = vand.u32 %v1939, 4294901760
      %1941 = vmatpush.msra.mxu0 %v1940
      %v1942 = vand.u32 %v252, 4294901760
      %v1943 = vsub.f32 %v252, %v1942
      %v1944 = vand.u32 %v1943, 4294901760
      %v1945 = vsub.f32 %v1943, %v1944
      %v1946 = vand.u32 %v1945, 4294901760
      %1947 = vmatpush.msra.mxu0 %v1946
      %v1948 = vand.u32 %v248, 4294901760
      %v1949 = vsub.f32 %v248, %v1948
      %v1950 = vand.u32 %v1949, 4294901760
      %v1951 = vsub.f32 %v1949, %v1950
      %v1952 = vand.u32 %v1951, 4294901760
      %1953 = vmatpush.msra.mxu0 %v1952
      %v1954 = vand.u32 %v244, 4294901760
      %v1955 = vsub.f32 %v244, %v1954
      %v1956 = vand.u32 %v1955, 4294901760
      %v1957 = vsub.f32 %v1955, %v1956
      %v1958 = vand.u32 %v1957, 4294901760
      %1959 = vmatpush.msra.mxu0 %v1958
      %v1960 = vand.u32 %v240, 4294901760
      %v1961 = vsub.f32 %v240, %v1960
      %v1962 = vand.u32 %v1961, 4294901760
      %v1963 = vsub.f32 %v1961, %v1962
      %v1964 = vand.u32 %v1963, 4294901760
      %1965 = vmatpush.msra.mxu0 %v1964
      %v1966 = vand.u32 %v236, 4294901760
      %v1967 = vsub.f32 %v236, %v1966
      %v1968 = vand.u32 %v1967, 4294901760
      %v1969 = vsub.f32 %v1967, %v1968
      %v1970 = vand.u32 %v1969, 4294901760
      %1971 = vmatpush.msra.mxu0 %v1970
      %v1972 = vand.u32 %v232, 4294901760
      %v1973 = vsub.f32 %v232, %v1972
      %v1974 = vand.u32 %v1973, 4294901760
      %v1975 = vsub.f32 %v1973, %v1974
      %v1976 = vand.u32 %v1975, 4294901760
      %1977 = vmatpush.msra.mxu0 %v1976
      %v1978 = vand.u32 %v228, 4294901760
      %v1979 = vsub.f32 %v228, %v1978
      %v1980 = vand.u32 %v1979, 4294901760
      %v1981 = vsub.f32 %v1979, %v1980
      %v1982 = vand.u32 %v1981, 4294901760
      %1983 = vmatpush.msra.mxu0 %v1982
      %v1984 = vand.u32 %v223, 4294901760
      %1985 = vmatmul.f32.gmra.mxu0 %v1984
      %v1986 = vpop.f32.mrf.mxu0
      %v1987 = vadd.f32 %v1886, %v1986
      %1988 = vdwg.mxu0
      %v1989 = vand.u32 %v288, 4294901760
      %v1990 = vsub.f32 %v288, %v1989
      %1991 = vmatpush.msra.mxu0 %v1990
      %v1992 = vand.u32 %v284, 4294901760
      %v1993 = vsub.f32 %v284, %v1992
      %1994 = vmatpush.msra.mxu0 %v1993
      %v1995 = vand.u32 %v280, 4294901760
      %v1996 = vsub.f32 %v280, %v1995
      %1997 = vmatpush.msra.mxu0 %v1996
      %v1998 = vand.u32 %v276, 4294901760
      %v1999 = vsub.f32 %v276, %v1998
      %2000 = vmatpush.msra.mxu0 %v1999
      %v2001 = vand.u32 %v272, 4294901760
      %v2002 = vsub.f32 %v272, %v2001
      %2003 = vmatpush.msra.mxu0 %v2002
      %v2004 = vand.u32 %v268, 4294901760
      %v2005 = vsub.f32 %v268, %v2004
      %2006 = vmatpush.msra.mxu0 %v2005
      %v2007 = vand.u32 %v264, 4294901760
      %v2008 = vsub.f32 %v264, %v2007
      %2009 = vmatpush.msra.mxu0 %v2008
      %v2010 = vand.u32 %v260, 4294901760
      %v2011 = vsub.f32 %v260, %v2010
      %2012 = vmatpush.msra.mxu0 %v2011
      %v2013 = vand.u32 %v256, 4294901760
      %v2014 = vsub.f32 %v256, %v2013
      %2015 = vmatpush.msra.mxu0 %v2014
      %v2016 = vand.u32 %v252, 4294901760
      %v2017 = vsub.f32 %v252, %v2016
      %2018 = vmatpush.msra.mxu0 %v2017
      %v2019 = vand.u32 %v248, 4294901760
      %v2020 = vsub.f32 %v248, %v2019
      %2021 = vmatpush.msra.mxu0 %v2020
      %v2022 = vand.u32 %v244, 4294901760
      %v2023 = vsub.f32 %v244, %v2022
      %2024 = vmatpush.msra.mxu0 %v2023
      %v2025 = vand.u32 %v240, 4294901760
      %v2026 = vsub.f32 %v240, %v2025
      %2027 = vmatpush.msra.mxu0 %v2026
      %v2028 = vand.u32 %v236, 4294901760
      %v2029 = vsub.f32 %v236, %v2028
      %2030 = vmatpush.msra.mxu0 %v2029
      %v2031 = vand.u32 %v232, 4294901760
      %v2032 = vsub.f32 %v232, %v2031
      %2033 = vmatpush.msra.mxu0 %v2032
      %v2034 = vand.u32 %v228, 4294901760
      %v2035 = vsub.f32 %v228, %v2034
      %2036 = vmatpush.msra.mxu0 %v2035
      %v2037 = vand.u32 %v223, 4294901760
      %v2038 = vsub.f32 %v223, %v2037
      %2039 = vmatmul.f32.gmra.mxu0 %v2038
      %v2040 = vpop.f32.mrf.mxu0
      %v2041 = vadd.f32 %v1987, %v2040
      %2042 = vdwg.mxu0
      %v2043 = vand.u32 %v288, 4294901760
      %2044 = vmatpush.msra.mxu0 %v2043
      %v2045 = vand.u32 %v284, 4294901760
      %2046 = vmatpush.msra.mxu0 %v2045
      %v2047 = vand.u32 %v280, 4294901760
      %2048 = vmatpush.msra.mxu0 %v2047
      %v2049 = vand.u32 %v276, 4294901760
      %2050 = vmatpush.msra.mxu0 %v2049
      %v2051 = vand.u32 %v272, 4294901760
      %2052 = vmatpush.msra.mxu0 %v2051
      %v2053 = vand.u32 %v268, 4294901760
      %2054 = vmatpush.msra.mxu0 %v2053
      %v2055 = vand.u32 %v264, 4294901760
      %2056 = vmatpush.msra.mxu0 %v2055
      %v2057 = vand.u32 %v260, 4294901760
      %2058 = vmatpush.msra.mxu0 %v2057
      %v2059 = vand.u32 %v256, 4294901760
      %2060 = vmatpush.msra.mxu0 %v2059
      %v2061 = vand.u32 %v252, 4294901760
      %2062 = vmatpush.msra.mxu0 %v2061
      %v2063 = vand.u32 %v248, 4294901760
      %2064 = vmatpush.msra.mxu0 %v2063
      %v2065 = vand.u32 %v244, 4294901760
      %2066 = vmatpush.msra.mxu0 %v2065
      %v2067 = vand.u32 %v240, 4294901760
      %2068 = vmatpush.msra.mxu0 %v2067
      %v2069 = vand.u32 %v236, 4294901760
      %2070 = vmatpush.msra.mxu0 %v2069
      %v2071 = vand.u32 %v232, 4294901760
      %2072 = vmatpush.msra.mxu0 %v2071
      %v2073 = vand.u32 %v228, 4294901760
      %2074 = vmatpush.msra.mxu0 %v2073
      %v2075 = vand.u32 %v223, 4294901760
      %v2076 = vsub.f32 %v223, %v2075
      %v2077 = vand.u32 %v2076, 4294901760
      %2078 = vmatmul.f32.gmra.mxu0 %v2077
      %v2079 = vpop.f32.mrf.mxu0
      %v2080 = vadd.f32 %v2041, %v2079
      %2081 = vdwg.mxu0
      %v2082 = vand.u32 %v288, 4294901760
      %v2083 = vsub.f32 %v288, %v2082
      %v2084 = vand.u32 %v2083, 4294901760
      %2085 = vmatpush.msra.mxu0 %v2084
      %v2086 = vand.u32 %v284, 4294901760
      %v2087 = vsub.f32 %v284, %v2086
      %v2088 = vand.u32 %v2087, 4294901760
      %2089 = vmatpush.msra.mxu0 %v2088
      %v2090 = vand.u32 %v280, 4294901760
      %v2091 = vsub.f32 %v280, %v2090
      %v2092 = vand.u32 %v2091, 4294901760
      %2093 = vmatpush.msra.mxu0 %v2092
      %v2094 = vand.u32 %v276, 4294901760
      %v2095 = vsub.f32 %v276, %v2094
      %v2096 = vand.u32 %v2095, 4294901760
      %2097 = vmatpush.msra.mxu0 %v2096
      %v2098 = vand.u32 %v272, 4294901760
      %v2099 = vsub.f32 %v272, %v2098
      %v2100 = vand.u32 %v2099, 4294901760
      %2101 = vmatpush.msra.mxu0 %v2100
      %v2102 = vand.u32 %v268, 4294901760
      %v2103 = vsub.f32 %v268, %v2102
      %v2104 = vand.u32 %v2103, 4294901760
      %2105 = vmatpush.msra.mxu0 %v2104
      %v2106 = vand.u32 %v264, 4294901760
      %v2107 = vsub.f32 %v264, %v2106
      %v2108 = vand.u32 %v2107, 4294901760
      %2109 = vmatpush.msra.mxu0 %v2108
      %v2110 = vand.u32 %v260, 4294901760
      %v2111 = vsub.f32 %v260, %v2110
      %v2112 = vand.u32 %v2111, 4294901760
      %2113 = vmatpush.msra.mxu0 %v2112
      %v2114 = vand.u32 %v256, 4294901760
      %v2115 = vsub.f32 %v256, %v2114
      %v2116 = vand.u32 %v2115, 4294901760
      %2117 = vmatpush.msra.mxu0 %v2116
      %v2118 = vand.u32 %v252, 4294901760
      %v2119 = vsub.f32 %v252, %v2118
      %v2120 = vand.u32 %v2119, 4294901760
      %2121 = vmatpush.msra.mxu0 %v2120
      %v2122 = vand.u32 %v248, 4294901760
      %v2123 = vsub.f32 %v248, %v2122
      %v2124 = vand.u32 %v2123, 4294901760
      %2125 = vmatpush.msra.mxu0 %v2124
      %v2126 = vand.u32 %v244, 4294901760
      %v2127 = vsub.f32 %v244, %v2126
      %v2128 = vand.u32 %v2127, 4294901760
      %2129 = vmatpush.msra.mxu0 %v2128
      %v2130 = vand.u32 %v240, 4294901760
      %v2131 = vsub.f32 %v240, %v2130
      %v2132 = vand.u32 %v2131, 4294901760
      %2133 = vmatpush.msra.mxu0 %v2132
      %v2134 = vand.u32 %v236, 4294901760
      %v2135 = vsub.f32 %v236, %v2134
      %v2136 = vand.u32 %v2135, 4294901760
      %2137 = vmatpush.msra.mxu0 %v2136
      %v2138 = vand.u32 %v232, 4294901760
      %v2139 = vsub.f32 %v232, %v2138
      %v2140 = vand.u32 %v2139, 4294901760
      %2141 = vmatpush.msra.mxu0 %v2140
      %v2142 = vand.u32 %v228, 4294901760
      %v2143 = vsub.f32 %v228, %v2142
      %v2144 = vand.u32 %v2143, 4294901760
      %2145 = vmatpush.msra.mxu0 %v2144
      %v2146 = vand.u32 %v223, 4294901760
      %2147 = vmatmul.f32.gmra.mxu0 %v2146
      %v2148 = vpop.f32.mrf.mxu0
      %v2149 = vadd.f32 %v2080, %v2148
      %2150 = vdwg.mxu0
      %v2151 = vand.u32 %v288, 4294901760
      %2152 = vmatpush.msra.mxu0 %v2151
      %v2153 = vand.u32 %v284, 4294901760
      %2154 = vmatpush.msra.mxu0 %v2153
      %v2155 = vand.u32 %v280, 4294901760
      %2156 = vmatpush.msra.mxu0 %v2155
      %v2157 = vand.u32 %v276, 4294901760
      %2158 = vmatpush.msra.mxu0 %v2157
      %v2159 = vand.u32 %v272, 4294901760
      %2160 = vmatpush.msra.mxu0 %v2159
      %v2161 = vand.u32 %v268, 4294901760
      %2162 = vmatpush.msra.mxu0 %v2161
      %v2163 = vand.u32 %v264, 4294901760
      %2164 = vmatpush.msra.mxu0 %v2163
      %v2165 = vand.u32 %v260, 4294901760
      %2166 = vmatpush.msra.mxu0 %v2165
      %v2167 = vand.u32 %v256, 4294901760
      %2168 = vmatpush.msra.mxu0 %v2167
      %v2169 = vand.u32 %v252, 4294901760
      %2170 = vmatpush.msra.mxu0 %v2169
      %v2171 = vand.u32 %v248, 4294901760
      %2172 = vmatpush.msra.mxu0 %v2171
      %v2173 = vand.u32 %v244, 4294901760
      %2174 = vmatpush.msra.mxu0 %v2173
      %v2175 = vand.u32 %v240, 4294901760
      %2176 = vmatpush.msra.mxu0 %v2175
      %v2177 = vand.u32 %v236, 4294901760
      %2178 = vmatpush.msra.mxu0 %v2177
      %v2179 = vand.u32 %v232, 4294901760
      %2180 = vmatpush.msra.mxu0 %v2179
      %v2181 = vand.u32 %v228, 4294901760
      %2182 = vmatpush.msra.mxu0 %v2181
      %v2183 = vand.u32 %v223, 4294901760
      %2184 = vmatmul.f32.gmra.mxu0 %v2183
      %v2185 = vpop.f32.mrf.mxu0
      %v2186 = vadd.f32 %v2149, %v2185
      %2187 = vdwg.mxu0
      %v2188 = vand.u32 %v352, 4294901760
      %2189 = vmatpush.msra.mxu0 %v2188
      %v2190 = vand.u32 %v348, 4294901760
      %2191 = vmatpush.msra.mxu0 %v2190
      %v2192 = vand.u32 %v344, 4294901760
      %2193 = vmatpush.msra.mxu0 %v2192
      %v2194 = vand.u32 %v340, 4294901760
      %2195 = vmatpush.msra.mxu0 %v2194
      %v2196 = vand.u32 %v336, 4294901760
      %2197 = vmatpush.msra.mxu0 %v2196
      %v2198 = vand.u32 %v332, 4294901760
      %2199 = vmatpush.msra.mxu0 %v2198
      %v2200 = vand.u32 %v328, 4294901760
      %2201 = vmatpush.msra.mxu0 %v2200
      %v2202 = vand.u32 %v324, 4294901760
      %2203 = vmatpush.msra.mxu0 %v2202
      %v2204 = vand.u32 %v320, 4294901760
      %2205 = vmatpush.msra.mxu0 %v2204
      %v2206 = vand.u32 %v316, 4294901760
      %2207 = vmatpush.msra.mxu0 %v2206
      %v2208 = vand.u32 %v312, 4294901760
      %2209 = vmatpush.msra.mxu0 %v2208
      %v2210 = vand.u32 %v308, 4294901760
      %2211 = vmatpush.msra.mxu0 %v2210
      %v2212 = vand.u32 %v304, 4294901760
      %2213 = vmatpush.msra.mxu0 %v2212
      %v2214 = vand.u32 %v300, 4294901760
      %2215 = vmatpush.msra.mxu0 %v2214
      %v2216 = vand.u32 %v296, 4294901760
      %2217 = vmatpush.msra.mxu0 %v2216
      %v2218 = vand.u32 %v292, 4294901760
      %2219 = vmatpush.msra.mxu0 %v2218
      %v2220 = vand.u32 %v224, 4294901760
      %v2221 = vsub.f32 %v224, %v2220
      %v2222 = vand.u32 %v2221, 4294901760
      %v2223 = vsub.f32 %v2221, %v2222
      %v2224 = vand.u32 %v2223, 4294901760
      %2225 = vmatmul.f32.gmra.mxu0 %v2224
      %v2226 = vpop.f32.mrf.mxu0
      %v2227 = vadd.f32 %v2186, %v2226
      %2228 = vdwg.mxu0
      %v2229 = vand.u32 %v352, 4294901760
      %v2230 = vsub.f32 %v352, %v2229
      %v2231 = vand.u32 %v2230, 4294901760
      %v2232 = vsub.f32 %v2230, %v2231
      %v2233 = vand.u32 %v2232, 4294901760
      %2234 = vmatpush.msra.mxu0 %v2233
      %v2235 = vand.u32 %v348, 4294901760
      %v2236 = vsub.f32 %v348, %v2235
      %v2237 = vand.u32 %v2236, 4294901760
      %v2238 = vsub.f32 %v2236, %v2237
      %v2239 = vand.u32 %v2238, 4294901760
      %2240 = vmatpush.msra.mxu0 %v2239
      %v2241 = vand.u32 %v344, 4294901760
      %v2242 = vsub.f32 %v344, %v2241
      %v2243 = vand.u32 %v2242, 4294901760
      %v2244 = vsub.f32 %v2242, %v2243
      %v2245 = vand.u32 %v2244, 4294901760
      %2246 = vmatpush.msra.mxu0 %v2245
      %v2247 = vand.u32 %v340, 4294901760
      %v2248 = vsub.f32 %v340, %v2247
      %v2249 = vand.u32 %v2248, 4294901760
      %v2250 = vsub.f32 %v2248, %v2249
      %v2251 = vand.u32 %v2250, 4294901760
      %2252 = vmatpush.msra.mxu0 %v2251
      %v2253 = vand.u32 %v336, 4294901760
      %v2254 = vsub.f32 %v336, %v2253
      %v2255 = vand.u32 %v2254, 4294901760
      %v2256 = vsub.f32 %v2254, %v2255
      %v2257 = vand.u32 %v2256, 4294901760
      %2258 = vmatpush.msra.mxu0 %v2257
      %v2259 = vand.u32 %v332, 4294901760
      %v2260 = vsub.f32 %v332, %v2259
      %v2261 = vand.u32 %v2260, 4294901760
      %v2262 = vsub.f32 %v2260, %v2261
      %v2263 = vand.u32 %v2262, 4294901760
      %2264 = vmatpush.msra.mxu0 %v2263
      %v2265 = vand.u32 %v328, 4294901760
      %v2266 = vsub.f32 %v328, %v2265
      %v2267 = vand.u32 %v2266, 4294901760
      %v2268 = vsub.f32 %v2266, %v2267
      %v2269 = vand.u32 %v2268, 4294901760
      %2270 = vmatpush.msra.mxu0 %v2269
      %v2271 = vand.u32 %v324, 4294901760
      %v2272 = vsub.f32 %v324, %v2271
      %v2273 = vand.u32 %v2272, 4294901760
      %v2274 = vsub.f32 %v2272, %v2273
      %v2275 = vand.u32 %v2274, 4294901760
      %2276 = vmatpush.msra.mxu0 %v2275
      %v2277 = vand.u32 %v320, 4294901760
      %v2278 = vsub.f32 %v320, %v2277
      %v2279 = vand.u32 %v2278, 4294901760
      %v2280 = vsub.f32 %v2278, %v2279
      %v2281 = vand.u32 %v2280, 4294901760
      %2282 = vmatpush.msra.mxu0 %v2281
      %v2283 = vand.u32 %v316, 4294901760
      %v2284 = vsub.f32 %v316, %v2283
      %v2285 = vand.u32 %v2284, 4294901760
      %v2286 = vsub.f32 %v2284, %v2285
      %v2287 = vand.u32 %v2286, 4294901760
      %2288 = vmatpush.msra.mxu0 %v2287
      %v2289 = vand.u32 %v312, 4294901760
      %v2290 = vsub.f32 %v312, %v2289
      %v2291 = vand.u32 %v2290, 4294901760
      %v2292 = vsub.f32 %v2290, %v2291
      %v2293 = vand.u32 %v2292, 4294901760
      %2294 = vmatpush.msra.mxu0 %v2293
      %v2295 = vand.u32 %v308, 4294901760
      %v2296 = vsub.f32 %v308, %v2295
      %v2297 = vand.u32 %v2296, 4294901760
      %v2298 = vsub.f32 %v2296, %v2297
      %v2299 = vand.u32 %v2298, 4294901760
      %2300 = vmatpush.msra.mxu0 %v2299
      %v2301 = vand.u32 %v304, 4294901760
      %v2302 = vsub.f32 %v304, %v2301
      %v2303 = vand.u32 %v2302, 4294901760
      %v2304 = vsub.f32 %v2302, %v2303
      %v2305 = vand.u32 %v2304, 4294901760
      %2306 = vmatpush.msra.mxu0 %v2305
      %v2307 = vand.u32 %v300, 4294901760
      %v2308 = vsub.f32 %v300, %v2307
      %v2309 = vand.u32 %v2308, 4294901760
      %v2310 = vsub.f32 %v2308, %v2309
      %v2311 = vand.u32 %v2310, 4294901760
      %2312 = vmatpush.msra.mxu0 %v2311
      %v2313 = vand.u32 %v296, 4294901760
      %v2314 = vsub.f32 %v296, %v2313
      %v2315 = vand.u32 %v2314, 4294901760
      %v2316 = vsub.f32 %v2314, %v2315
      %v2317 = vand.u32 %v2316, 4294901760
      %2318 = vmatpush.msra.mxu0 %v2317
      %v2319 = vand.u32 %v292, 4294901760
      %v2320 = vsub.f32 %v292, %v2319
      %v2321 = vand.u32 %v2320, 4294901760
      %v2322 = vsub.f32 %v2320, %v2321
      %v2323 = vand.u32 %v2322, 4294901760
      %2324 = vmatpush.msra.mxu0 %v2323
      %v2325 = vand.u32 %v224, 4294901760
      %2326 = vmatmul.f32.gmra.mxu0 %v2325
      %v2327 = vpop.f32.mrf.mxu0
      %v2328 = vadd.f32 %v2227, %v2327
      %2329 = vdwg.mxu0
      %v2330 = vand.u32 %v352, 4294901760
      %v2331 = vsub.f32 %v352, %v2330
      %2332 = vmatpush.msra.mxu0 %v2331
      %v2333 = vand.u32 %v348, 4294901760
      %v2334 = vsub.f32 %v348, %v2333
      %2335 = vmatpush.msra.mxu0 %v2334
      %v2336 = vand.u32 %v344, 4294901760
      %v2337 = vsub.f32 %v344, %v2336
      %2338 = vmatpush.msra.mxu0 %v2337
      %v2339 = vand.u32 %v340, 4294901760
      %v2340 = vsub.f32 %v340, %v2339
      %2341 = vmatpush.msra.mxu0 %v2340
      %v2342 = vand.u32 %v336, 4294901760
      %v2343 = vsub.f32 %v336, %v2342
      %2344 = vmatpush.msra.mxu0 %v2343
      %v2345 = vand.u32 %v332, 4294901760
      %v2346 = vsub.f32 %v332, %v2345
      %2347 = vmatpush.msra.mxu0 %v2346
      %v2348 = vand.u32 %v328, 4294901760
      %v2349 = vsub.f32 %v328, %v2348
      %2350 = vmatpush.msra.mxu0 %v2349
      %v2351 = vand.u32 %v324, 4294901760
      %v2352 = vsub.f32 %v324, %v2351
      %2353 = vmatpush.msra.mxu0 %v2352
      %v2354 = vand.u32 %v320, 4294901760
      %v2355 = vsub.f32 %v320, %v2354
      %2356 = vmatpush.msra.mxu0 %v2355
      %v2357 = vand.u32 %v316, 4294901760
      %v2358 = vsub.f32 %v316, %v2357
      %2359 = vmatpush.msra.mxu0 %v2358
      %v2360 = vand.u32 %v312, 4294901760
      %v2361 = vsub.f32 %v312, %v2360
      %2362 = vmatpush.msra.mxu0 %v2361
      %v2363 = vand.u32 %v308, 4294901760
      %v2364 = vsub.f32 %v308, %v2363
      %2365 = vmatpush.msra.mxu0 %v2364
      %v2366 = vand.u32 %v304, 4294901760
      %v2367 = vsub.f32 %v304, %v2366
      %2368 = vmatpush.msra.mxu0 %v2367
      %v2369 = vand.u32 %v300, 4294901760
      %v2370 = vsub.f32 %v300, %v2369
      %2371 = vmatpush.msra.mxu0 %v2370
      %v2372 = vand.u32 %v296, 4294901760
      %v2373 = vsub.f32 %v296, %v2372
      %2374 = vmatpush.msra.mxu0 %v2373
      %v2375 = vand.u32 %v292, 4294901760
      %v2376 = vsub.f32 %v292, %v2375
      %2377 = vmatpush.msra.mxu0 %v2376
      %v2378 = vand.u32 %v224, 4294901760
      %v2379 = vsub.f32 %v224, %v2378
      %2380 = vmatmul.f32.gmra.mxu0 %v2379
      %v2381 = vpop.f32.mrf.mxu0
      %v2382 = vadd.f32 %v2328, %v2381
      %2383 = vdwg.mxu0
      %v2384 = vand.u32 %v352, 4294901760
      %2385 = vmatpush.msra.mxu0 %v2384
      %v2386 = vand.u32 %v348, 4294901760
      %2387 = vmatpush.msra.mxu0 %v2386
      %v2388 = vand.u32 %v344, 4294901760
      %2389 = vmatpush.msra.mxu0 %v2388
      %v2390 = vand.u32 %v340, 4294901760
      %2391 = vmatpush.msra.mxu0 %v2390
      %v2392 = vand.u32 %v336, 4294901760
      %2393 = vmatpush.msra.mxu0 %v2392
      %v2394 = vand.u32 %v332, 4294901760
      %2395 = vmatpush.msra.mxu0 %v2394
      %v2396 = vand.u32 %v328, 4294901760
      %2397 = vmatpush.msra.mxu0 %v2396
      %v2398 = vand.u32 %v324, 4294901760
      %2399 = vmatpush.msra.mxu0 %v2398
      %v2400 = vand.u32 %v320, 4294901760
      %2401 = vmatpush.msra.mxu0 %v2400
      %v2402 = vand.u32 %v316, 4294901760
      %2403 = vmatpush.msra.mxu0 %v2402
      %v2404 = vand.u32 %v312, 4294901760
      %2405 = vmatpush.msra.mxu0 %v2404
      %v2406 = vand.u32 %v308, 4294901760
      %2407 = vmatpush.msra.mxu0 %v2406
      %v2408 = vand.u32 %v304, 4294901760
      %2409 = vmatpush.msra.mxu0 %v2408
      %v2410 = vand.u32 %v300, 4294901760
      %2411 = vmatpush.msra.mxu0 %v2410
      %v2412 = vand.u32 %v296, 4294901760
      %2413 = vmatpush.msra.mxu0 %v2412
      %v2414 = vand.u32 %v292, 4294901760
      %2415 = vmatpush.msra.mxu0 %v2414
      %v2416 = vand.u32 %v224, 4294901760
      %v2417 = vsub.f32 %v224, %v2416
      %v2418 = vand.u32 %v2417, 4294901760
      %2419 = vmatmul.f32.gmra.mxu0 %v2418
      %v2420 = vpop.f32.mrf.mxu0
      %v2421 = vadd.f32 %v2382, %v2420
      %2422 = vdwg.mxu0
      %v2423 = vand.u32 %v352, 4294901760
      %v2424 = vsub.f32 %v352, %v2423
      %v2425 = vand.u32 %v2424, 4294901760
      %2426 = vmatpush.msra.mxu0 %v2425
      %v2427 = vand.u32 %v348, 4294901760
      %v2428 = vsub.f32 %v348, %v2427
      %v2429 = vand.u32 %v2428, 4294901760
      %2430 = vmatpush.msra.mxu0 %v2429
      %v2431 = vand.u32 %v344, 4294901760
      %v2432 = vsub.f32 %v344, %v2431
      %v2433 = vand.u32 %v2432, 4294901760
      %2434 = vmatpush.msra.mxu0 %v2433
      %v2435 = vand.u32 %v340, 4294901760
      %v2436 = vsub.f32 %v340, %v2435
      %v2437 = vand.u32 %v2436, 4294901760
      %2438 = vmatpush.msra.mxu0 %v2437
      %v2439 = vand.u32 %v336, 4294901760
      %v2440 = vsub.f32 %v336, %v2439
      %v2441 = vand.u32 %v2440, 4294901760
      %2442 = vmatpush.msra.mxu0 %v2441
      %v2443 = vand.u32 %v332, 4294901760
      %v2444 = vsub.f32 %v332, %v2443
      %v2445 = vand.u32 %v2444, 4294901760
      %2446 = vmatpush.msra.mxu0 %v2445
      %v2447 = vand.u32 %v328, 4294901760
      %v2448 = vsub.f32 %v328, %v2447
      %v2449 = vand.u32 %v2448, 4294901760
      %2450 = vmatpush.msra.mxu0 %v2449
      %v2451 = vand.u32 %v324, 4294901760
      %v2452 = vsub.f32 %v324, %v2451
      %v2453 = vand.u32 %v2452, 4294901760
      %2454 = vmatpush.msra.mxu0 %v2453
      %v2455 = vand.u32 %v320, 4294901760
      %v2456 = vsub.f32 %v320, %v2455
      %v2457 = vand.u32 %v2456, 4294901760
      %2458 = vmatpush.msra.mxu0 %v2457
      %v2459 = vand.u32 %v316, 4294901760
      %v2460 = vsub.f32 %v316, %v2459
      %v2461 = vand.u32 %v2460, 4294901760
      %2462 = vmatpush.msra.mxu0 %v2461
      %v2463 = vand.u32 %v312, 4294901760
      %v2464 = vsub.f32 %v312, %v2463
      %v2465 = vand.u32 %v2464, 4294901760
      %2466 = vmatpush.msra.mxu0 %v2465
      %v2467 = vand.u32 %v308, 4294901760
      %v2468 = vsub.f32 %v308, %v2467
      %v2469 = vand.u32 %v2468, 4294901760
      %2470 = vmatpush.msra.mxu0 %v2469
      %v2471 = vand.u32 %v304, 4294901760
      %v2472 = vsub.f32 %v304, %v2471
      %v2473 = vand.u32 %v2472, 4294901760
      %2474 = vmatpush.msra.mxu0 %v2473
      %v2475 = vand.u32 %v300, 4294901760
      %v2476 = vsub.f32 %v300, %v2475
      %v2477 = vand.u32 %v2476, 4294901760
      %2478 = vmatpush.msra.mxu0 %v2477
      %v2479 = vand.u32 %v296, 4294901760
      %v2480 = vsub.f32 %v296, %v2479
      %v2481 = vand.u32 %v2480, 4294901760
      %2482 = vmatpush.msra.mxu0 %v2481
      %v2483 = vand.u32 %v292, 4294901760
      %v2484 = vsub.f32 %v292, %v2483
      %v2485 = vand.u32 %v2484, 4294901760
      %2486 = vmatpush.msra.mxu0 %v2485
      %v2487 = vand.u32 %v224, 4294901760
      %2488 = vmatmul.f32.gmra.mxu0 %v2487
      %v2489 = vpop.f32.mrf.mxu0
      %v2490 = vadd.f32 %v2421, %v2489
      %2491 = vdwg.mxu0
      %v2492 = vand.u32 %v352, 4294901760
      %2493 = vmatpush.msra.mxu0 %v2492
      %v2494 = vand.u32 %v348, 4294901760
      %2495 = vmatpush.msra.mxu0 %v2494
      %v2496 = vand.u32 %v344, 4294901760
      %2497 = vmatpush.msra.mxu0 %v2496
      %v2498 = vand.u32 %v340, 4294901760
      %2499 = vmatpush.msra.mxu0 %v2498
      %v2500 = vand.u32 %v336, 4294901760
      %2501 = vmatpush.msra.mxu0 %v2500
      %v2502 = vand.u32 %v332, 4294901760
      %2503 = vmatpush.msra.mxu0 %v2502
      %v2504 = vand.u32 %v328, 4294901760
      %2505 = vmatpush.msra.mxu0 %v2504
      %v2506 = vand.u32 %v324, 4294901760
      %2507 = vmatpush.msra.mxu0 %v2506
      %v2508 = vand.u32 %v320, 4294901760
      %2509 = vmatpush.msra.mxu0 %v2508
      %v2510 = vand.u32 %v316, 4294901760
      %2511 = vmatpush.msra.mxu0 %v2510
      %v2512 = vand.u32 %v312, 4294901760
      %2513 = vmatpush.msra.mxu0 %v2512
      %v2514 = vand.u32 %v308, 4294901760
      %2515 = vmatpush.msra.mxu0 %v2514
      %v2516 = vand.u32 %v304, 4294901760
      %2517 = vmatpush.msra.mxu0 %v2516
      %v2518 = vand.u32 %v300, 4294901760
      %2519 = vmatpush.msra.mxu0 %v2518
      %v2520 = vand.u32 %v296, 4294901760
      %2521 = vmatpush.msra.mxu0 %v2520
      %v2522 = vand.u32 %v292, 4294901760
      %2523 = vmatpush.msra.mxu0 %v2522
      %v2524 = vand.u32 %v224, 4294901760
      %2525 = vmatmul.f32.gmra.mxu0 %v2524
      %v2526 = vpop.f32.mrf.mxu0
      %v2527 = vadd.f32 %v2490, %v2526
      %2528 = vdwg.mxu0
      %v2529 = vand.u32 %v416, 4294901760
      %2530 = vmatpush.msra.mxu0 %v2529
      %v2531 = vand.u32 %v412, 4294901760
      %2532 = vmatpush.msra.mxu0 %v2531
      %v2533 = vand.u32 %v408, 4294901760
      %2534 = vmatpush.msra.mxu0 %v2533
      %v2535 = vand.u32 %v404, 4294901760
      %2536 = vmatpush.msra.mxu0 %v2535
      %v2537 = vand.u32 %v400, 4294901760
      %2538 = vmatpush.msra.mxu0 %v2537
      %v2539 = vand.u32 %v396, 4294901760
      %2540 = vmatpush.msra.mxu0 %v2539
      %v2541 = vand.u32 %v392, 4294901760
      %2542 = vmatpush.msra.mxu0 %v2541
      %v2543 = vand.u32 %v388, 4294901760
      %2544 = vmatpush.msra.mxu0 %v2543
      %v2545 = vand.u32 %v384, 4294901760
      %2546 = vmatpush.msra.mxu0 %v2545
      %v2547 = vand.u32 %v380, 4294901760
      %2548 = vmatpush.msra.mxu0 %v2547
      %v2549 = vand.u32 %v376, 4294901760
      %2550 = vmatpush.msra.mxu0 %v2549
      %v2551 = vand.u32 %v372, 4294901760
      %2552 = vmatpush.msra.mxu0 %v2551
      %v2553 = vand.u32 %v368, 4294901760
      %2554 = vmatpush.msra.mxu0 %v2553
      %v2555 = vand.u32 %v364, 4294901760
      %2556 = vmatpush.msra.mxu0 %v2555
      %v2557 = vand.u32 %v360, 4294901760
      %2558 = vmatpush.msra.mxu0 %v2557
      %v2559 = vand.u32 %v356, 4294901760
      %2560 = vmatpush.msra.mxu0 %v2559
      %v2561 = vand.u32 %v225, 4294901760
      %v2562 = vsub.f32 %v225, %v2561
      %v2563 = vand.u32 %v2562, 4294901760
      %v2564 = vsub.f32 %v2562, %v2563
      %v2565 = vand.u32 %v2564, 4294901760
      %2566 = vmatmul.f32.gmra.mxu0 %v2565
      %v2567 = vpop.f32.mrf.mxu0
      %v2568 = vadd.f32 %v2527, %v2567
      %2569 = vdwg.mxu0
      %v2570 = vand.u32 %v416, 4294901760
      %v2571 = vsub.f32 %v416, %v2570
      %v2572 = vand.u32 %v2571, 4294901760
      %v2573 = vsub.f32 %v2571, %v2572
      %v2574 = vand.u32 %v2573, 4294901760
      %2575 = vmatpush.msra.mxu0 %v2574
      %v2576 = vand.u32 %v412, 4294901760
      %v2577 = vsub.f32 %v412, %v2576
      %v2578 = vand.u32 %v2577, 4294901760
      %v2579 = vsub.f32 %v2577, %v2578
      %v2580 = vand.u32 %v2579, 4294901760
      %2581 = vmatpush.msra.mxu0 %v2580
      %v2582 = vand.u32 %v408, 4294901760
      %v2583 = vsub.f32 %v408, %v2582
      %v2584 = vand.u32 %v2583, 4294901760
      %v2585 = vsub.f32 %v2583, %v2584
      %v2586 = vand.u32 %v2585, 4294901760
      %2587 = vmatpush.msra.mxu0 %v2586
      %v2588 = vand.u32 %v404, 4294901760
      %v2589 = vsub.f32 %v404, %v2588
      %v2590 = vand.u32 %v2589, 4294901760
      %v2591 = vsub.f32 %v2589, %v2590
      %v2592 = vand.u32 %v2591, 4294901760
      %2593 = vmatpush.msra.mxu0 %v2592
      %v2594 = vand.u32 %v400, 4294901760
      %v2595 = vsub.f32 %v400, %v2594
      %v2596 = vand.u32 %v2595, 4294901760
      %v2597 = vsub.f32 %v2595, %v2596
      %v2598 = vand.u32 %v2597, 4294901760
      %2599 = vmatpush.msra.mxu0 %v2598
      %v2600 = vand.u32 %v396, 4294901760
      %v2601 = vsub.f32 %v396, %v2600
      %v2602 = vand.u32 %v2601, 4294901760
      %v2603 = vsub.f32 %v2601, %v2602
      %v2604 = vand.u32 %v2603, 4294901760
      %2605 = vmatpush.msra.mxu0 %v2604
      %v2606 = vand.u32 %v392, 4294901760
      %v2607 = vsub.f32 %v392, %v2606
      %v2608 = vand.u32 %v2607, 4294901760
      %v2609 = vsub.f32 %v2607, %v2608
      %v2610 = vand.u32 %v2609, 4294901760
      %2611 = vmatpush.msra.mxu0 %v2610
      %v2612 = vand.u32 %v388, 4294901760
      %v2613 = vsub.f32 %v388, %v2612
      %v2614 = vand.u32 %v2613, 4294901760
      %v2615 = vsub.f32 %v2613, %v2614
      %v2616 = vand.u32 %v2615, 4294901760
      %2617 = vmatpush.msra.mxu0 %v2616
      %v2618 = vand.u32 %v384, 4294901760
      %v2619 = vsub.f32 %v384, %v2618
      %v2620 = vand.u32 %v2619, 4294901760
      %v2621 = vsub.f32 %v2619, %v2620
      %v2622 = vand.u32 %v2621, 4294901760
      %2623 = vmatpush.msra.mxu0 %v2622
      %v2624 = vand.u32 %v380, 4294901760
      %v2625 = vsub.f32 %v380, %v2624
      %v2626 = vand.u32 %v2625, 4294901760
      %v2627 = vsub.f32 %v2625, %v2626
      %v2628 = vand.u32 %v2627, 4294901760
      %2629 = vmatpush.msra.mxu0 %v2628
      %v2630 = vand.u32 %v376, 4294901760
      %v2631 = vsub.f32 %v376, %v2630
      %v2632 = vand.u32 %v2631, 4294901760
      %v2633 = vsub.f32 %v2631, %v2632
      %v2634 = vand.u32 %v2633, 4294901760
      %2635 = vmatpush.msra.mxu0 %v2634
      %v2636 = vand.u32 %v372, 4294901760
      %v2637 = vsub.f32 %v372, %v2636
      %v2638 = vand.u32 %v2637, 4294901760
      %v2639 = vsub.f32 %v2637, %v2638
      %v2640 = vand.u32 %v2639, 4294901760
      %2641 = vmatpush.msra.mxu0 %v2640
      %v2642 = vand.u32 %v368, 4294901760
      %v2643 = vsub.f32 %v368, %v2642
      %v2644 = vand.u32 %v2643, 4294901760
      %v2645 = vsub.f32 %v2643, %v2644
      %v2646 = vand.u32 %v2645, 4294901760
      %2647 = vmatpush.msra.mxu0 %v2646
      %v2648 = vand.u32 %v364, 4294901760
      %v2649 = vsub.f32 %v364, %v2648
      %v2650 = vand.u32 %v2649, 4294901760
      %v2651 = vsub.f32 %v2649, %v2650
      %v2652 = vand.u32 %v2651, 4294901760
      %2653 = vmatpush.msra.mxu0 %v2652
      %v2654 = vand.u32 %v360, 4294901760
      %v2655 = vsub.f32 %v360, %v2654
      %v2656 = vand.u32 %v2655, 4294901760
      %v2657 = vsub.f32 %v2655, %v2656
      %v2658 = vand.u32 %v2657, 4294901760
      %2659 = vmatpush.msra.mxu0 %v2658
      %v2660 = vand.u32 %v356, 4294901760
      %v2661 = vsub.f32 %v356, %v2660
      %v2662 = vand.u32 %v2661, 4294901760
      %v2663 = vsub.f32 %v2661, %v2662
      %v2664 = vand.u32 %v2663, 4294901760
      %2665 = vmatpush.msra.mxu0 %v2664
      %v2666 = vand.u32 %v225, 4294901760
      %2667 = vmatmul.f32.gmra.mxu0 %v2666
      %v2668 = vpop.f32.mrf.mxu0
      %v2669 = vadd.f32 %v2568, %v2668
      %2670 = vdwg.mxu0
      %v2671 = vand.u32 %v416, 4294901760
      %v2672 = vsub.f32 %v416, %v2671
      %2673 = vmatpush.msra.mxu0 %v2672
      %v2674 = vand.u32 %v412, 4294901760
      %v2675 = vsub.f32 %v412, %v2674
      %2676 = vmatpush.msra.mxu0 %v2675
      %v2677 = vand.u32 %v408, 4294901760
      %v2678 = vsub.f32 %v408, %v2677
      %2679 = vmatpush.msra.mxu0 %v2678
      %v2680 = vand.u32 %v404, 4294901760
      %v2681 = vsub.f32 %v404, %v2680
      %2682 = vmatpush.msra.mxu0 %v2681
      %v2683 = vand.u32 %v400, 4294901760
      %v2684 = vsub.f32 %v400, %v2683
      %2685 = vmatpush.msra.mxu0 %v2684
      %v2686 = vand.u32 %v396, 4294901760
      %v2687 = vsub.f32 %v396, %v2686
      %2688 = vmatpush.msra.mxu0 %v2687
      %v2689 = vand.u32 %v392, 4294901760
      %v2690 = vsub.f32 %v392, %v2689
      %2691 = vmatpush.msra.mxu0 %v2690
      %v2692 = vand.u32 %v388, 4294901760
      %v2693 = vsub.f32 %v388, %v2692
      %2694 = vmatpush.msra.mxu0 %v2693
      %v2695 = vand.u32 %v384, 4294901760
      %v2696 = vsub.f32 %v384, %v2695
      %2697 = vmatpush.msra.mxu0 %v2696
      %v2698 = vand.u32 %v380, 4294901760
      %v2699 = vsub.f32 %v380, %v2698
      %2700 = vmatpush.msra.mxu0 %v2699
      %v2701 = vand.u32 %v376, 4294901760
      %v2702 = vsub.f32 %v376, %v2701
      %2703 = vmatpush.msra.mxu0 %v2702
      %v2704 = vand.u32 %v372, 4294901760
      %v2705 = vsub.f32 %v372, %v2704
      %2706 = vmatpush.msra.mxu0 %v2705
      %v2707 = vand.u32 %v368, 4294901760
      %v2708 = vsub.f32 %v368, %v2707
      %2709 = vmatpush.msra.mxu0 %v2708
      %v2710 = vand.u32 %v364, 4294901760
      %v2711 = vsub.f32 %v364, %v2710
      %2712 = vmatpush.msra.mxu0 %v2711
      %v2713 = vand.u32 %v360, 4294901760
      %v2714 = vsub.f32 %v360, %v2713
      %2715 = vmatpush.msra.mxu0 %v2714
      %v2716 = vand.u32 %v356, 4294901760
      %v2717 = vsub.f32 %v356, %v2716
      %2718 = vmatpush.msra.mxu0 %v2717
      %v2719 = vand.u32 %v225, 4294901760
      %v2720 = vsub.f32 %v225, %v2719
      %2721 = vmatmul.f32.gmra.mxu0 %v2720
      %v2722 = vpop.f32.mrf.mxu0
      %v2723 = vadd.f32 %v2669, %v2722
      %2724 = vdwg.mxu0
      %v2725 = vand.u32 %v416, 4294901760
      %2726 = vmatpush.msra.mxu0 %v2725
      %v2727 = vand.u32 %v412, 4294901760
      %2728 = vmatpush.msra.mxu0 %v2727
      %v2729 = vand.u32 %v408, 4294901760
      %2730 = vmatpush.msra.mxu0 %v2729
      %v2731 = vand.u32 %v404, 4294901760
      %2732 = vmatpush.msra.mxu0 %v2731
      %v2733 = vand.u32 %v400, 4294901760
      %2734 = vmatpush.msra.mxu0 %v2733
      %v2735 = vand.u32 %v396, 4294901760
      %2736 = vmatpush.msra.mxu0 %v2735
      %v2737 = vand.u32 %v392, 4294901760
      %2738 = vmatpush.msra.mxu0 %v2737
      %v2739 = vand.u32 %v388, 4294901760
      %2740 = vmatpush.msra.mxu0 %v2739
      %v2741 = vand.u32 %v384, 4294901760
      %2742 = vmatpush.msra.mxu0 %v2741
      %v2743 = vand.u32 %v380, 4294901760
      %2744 = vmatpush.msra.mxu0 %v2743
      %v2745 = vand.u32 %v376, 4294901760
      %2746 = vmatpush.msra.mxu0 %v2745
      %v2747 = vand.u32 %v372, 4294901760
      %2748 = vmatpush.msra.mxu0 %v2747
      %v2749 = vand.u32 %v368, 4294901760
      %2750 = vmatpush.msra.mxu0 %v2749
      %v2751 = vand.u32 %v364, 4294901760
      %2752 = vmatpush.msra.mxu0 %v2751
      %v2753 = vand.u32 %v360, 4294901760
      %2754 = vmatpush.msra.mxu0 %v2753
      %v2755 = vand.u32 %v356, 4294901760
      %2756 = vmatpush.msra.mxu0 %v2755
      %v2757 = vand.u32 %v225, 4294901760
      %v2758 = vsub.f32 %v225, %v2757
      %v2759 = vand.u32 %v2758, 4294901760
      %2760 = vmatmul.f32.gmra.mxu0 %v2759
      %v2761 = vpop.f32.mrf.mxu0
      %v2762 = vadd.f32 %v2723, %v2761
      %2763 = vdwg.mxu0
      %v2764 = vand.u32 %v416, 4294901760
      %v2765 = vsub.f32 %v416, %v2764
      %v2766 = vand.u32 %v2765, 4294901760
      %2767 = vmatpush.msra.mxu0 %v2766
      %v2768 = vand.u32 %v412, 4294901760
      %v2769 = vsub.f32 %v412, %v2768
      %v2770 = vand.u32 %v2769, 4294901760
      %2771 = vmatpush.msra.mxu0 %v2770
      %v2772 = vand.u32 %v408, 4294901760
      %v2773 = vsub.f32 %v408, %v2772
      %v2774 = vand.u32 %v2773, 4294901760
      %2775 = vmatpush.msra.mxu0 %v2774
      %v2776 = vand.u32 %v404, 4294901760
      %v2777 = vsub.f32 %v404, %v2776
      %v2778 = vand.u32 %v2777, 4294901760
      %2779 = vmatpush.msra.mxu0 %v2778
      %v2780 = vand.u32 %v400, 4294901760
      %v2781 = vsub.f32 %v400, %v2780
      %v2782 = vand.u32 %v2781, 4294901760
      %2783 = vmatpush.msra.mxu0 %v2782
      %v2784 = vand.u32 %v396, 4294901760
      %v2785 = vsub.f32 %v396, %v2784
      %v2786 = vand.u32 %v2785, 4294901760
      %2787 = vmatpush.msra.mxu0 %v2786
      %v2788 = vand.u32 %v392, 4294901760
      %v2789 = vsub.f32 %v392, %v2788
      %v2790 = vand.u32 %v2789, 4294901760
      %2791 = vmatpush.msra.mxu0 %v2790
      %v2792 = vand.u32 %v388, 4294901760
      %v2793 = vsub.f32 %v388, %v2792
      %v2794 = vand.u32 %v2793, 4294901760
      %2795 = vmatpush.msra.mxu0 %v2794
      %v2796 = vand.u32 %v384, 4294901760
      %v2797 = vsub.f32 %v384, %v2796
      %v2798 = vand.u32 %v2797, 4294901760
      %2799 = vmatpush.msra.mxu0 %v2798
      %v2800 = vand.u32 %v380, 4294901760
      %v2801 = vsub.f32 %v380, %v2800
      %v2802 = vand.u32 %v2801, 4294901760
      %2803 = vmatpush.msra.mxu0 %v2802
      %v2804 = vand.u32 %v376, 4294901760
      %v2805 = vsub.f32 %v376, %v2804
      %v2806 = vand.u32 %v2805, 4294901760
      %2807 = vmatpush.msra.mxu0 %v2806
      %v2808 = vand.u32 %v372, 4294901760
      %v2809 = vsub.f32 %v372, %v2808
      %v2810 = vand.u32 %v2809, 4294901760
      %2811 = vmatpush.msra.mxu0 %v2810
      %v2812 = vand.u32 %v368, 4294901760
      %v2813 = vsub.f32 %v368, %v2812
      %v2814 = vand.u32 %v2813, 4294901760
      %2815 = vmatpush.msra.mxu0 %v2814
      %v2816 = vand.u32 %v364, 4294901760
      %v2817 = vsub.f32 %v364, %v2816
      %v2818 = vand.u32 %v2817, 4294901760
      %2819 = vmatpush.msra.mxu0 %v2818
      %v2820 = vand.u32 %v360, 4294901760
      %v2821 = vsub.f32 %v360, %v2820
      %v2822 = vand.u32 %v2821, 4294901760
      %2823 = vmatpush.msra.mxu0 %v2822
      %v2824 = vand.u32 %v356, 4294901760
      %v2825 = vsub.f32 %v356, %v2824
      %v2826 = vand.u32 %v2825, 4294901760
      %2827 = vmatpush.msra.mxu0 %v2826
      %v2828 = vand.u32 %v225, 4294901760
      %2829 = vmatmul.f32.gmra.mxu0 %v2828
      %v2830 = vpop.f32.mrf.mxu0
      %v2831 = vadd.f32 %v2762, %v2830
      %2832 = vdwg.mxu0
      %v2833 = vand.u32 %v416, 4294901760
      %2834 = vmatpush.msra.mxu0 %v2833
      %v2835 = vand.u32 %v412, 4294901760
      %2836 = vmatpush.msra.mxu0 %v2835
      %v2837 = vand.u32 %v408, 4294901760
      %2838 = vmatpush.msra.mxu0 %v2837
      %v2839 = vand.u32 %v404, 4294901760
      %2840 = vmatpush.msra.mxu0 %v2839
      %v2841 = vand.u32 %v400, 4294901760
      %2842 = vmatpush.msra.mxu0 %v2841
      %v2843 = vand.u32 %v396, 4294901760
      %2844 = vmatpush.msra.mxu0 %v2843
      %v2845 = vand.u32 %v392, 4294901760
      %2846 = vmatpush.msra.mxu0 %v2845
      %v2847 = vand.u32 %v388, 4294901760
      %2848 = vmatpush.msra.mxu0 %v2847
      %v2849 = vand.u32 %v384, 4294901760
      %2850 = vmatpush.msra.mxu0 %v2849
      %v2851 = vand.u32 %v380, 4294901760
      %2852 = vmatpush.msra.mxu0 %v2851
      %v2853 = vand.u32 %v376, 4294901760
      %2854 = vmatpush.msra.mxu0 %v2853
      %v2855 = vand.u32 %v372, 4294901760
      %2856 = vmatpush.msra.mxu0 %v2855
      %v2857 = vand.u32 %v368, 4294901760
      %2858 = vmatpush.msra.mxu0 %v2857
      %v2859 = vand.u32 %v364, 4294901760
      %2860 = vmatpush.msra.mxu0 %v2859
      %v2861 = vand.u32 %v360, 4294901760
      %2862 = vmatpush.msra.mxu0 %v2861
      %v2863 = vand.u32 %v356, 4294901760
      %2864 = vmatpush.msra.mxu0 %v2863
      %v2865 = vand.u32 %v225, 4294901760
      %2866 = vmatmul.f32.gmra.mxu0 %v2865
      %v2867 = vpop.f32.mrf.mxu0
      %v2868 = vadd.f32 %v2831, %v2867
      %2869 = vdwg.mxu0
      %v2870 = vand.u32 %v480, 4294901760
      %2871 = vmatpush.msra.mxu0 %v2870
      %v2872 = vand.u32 %v476, 4294901760
      %2873 = vmatpush.msra.mxu0 %v2872
      %v2874 = vand.u32 %v472, 4294901760
      %2875 = vmatpush.msra.mxu0 %v2874
      %v2876 = vand.u32 %v468, 4294901760
      %2877 = vmatpush.msra.mxu0 %v2876
      %v2878 = vand.u32 %v464, 4294901760
      %2879 = vmatpush.msra.mxu0 %v2878
      %v2880 = vand.u32 %v460, 4294901760
      %2881 = vmatpush.msra.mxu0 %v2880
      %v2882 = vand.u32 %v456, 4294901760
      %2883 = vmatpush.msra.mxu0 %v2882
      %v2884 = vand.u32 %v452, 4294901760
      %2885 = vmatpush.msra.mxu0 %v2884
      %v2886 = vand.u32 %v448, 4294901760
      %2887 = vmatpush.msra.mxu0 %v2886
      %v2888 = vand.u32 %v444, 4294901760
      %2889 = vmatpush.msra.mxu0 %v2888
      %v2890 = vand.u32 %v440, 4294901760
      %2891 = vmatpush.msra.mxu0 %v2890
      %v2892 = vand.u32 %v436, 4294901760
      %2893 = vmatpush.msra.mxu0 %v2892
      %v2894 = vand.u32 %v432, 4294901760
      %2895 = vmatpush.msra.mxu0 %v2894
      %v2896 = vand.u32 %v428, 4294901760
      %2897 = vmatpush.msra.mxu0 %v2896
      %v2898 = vand.u32 %v424, 4294901760
      %2899 = vmatpush.msra.mxu0 %v2898
      %v2900 = vand.u32 %v420, 4294901760
      %2901 = vmatpush.msra.mxu0 %v2900
      %v2902 = vand.u32 %v226, 4294901760
      %v2903 = vsub.f32 %v226, %v2902
      %v2904 = vand.u32 %v2903, 4294901760
      %v2905 = vsub.f32 %v2903, %v2904
      %v2906 = vand.u32 %v2905, 4294901760
      %2907 = vmatmul.f32.gmra.mxu0 %v2906
      %v2908 = vpop.f32.mrf.mxu0
      %v2909 = vadd.f32 %v2868, %v2908
      %2910 = vdwg.mxu0
      %v2911 = vand.u32 %v480, 4294901760
      %v2912 = vsub.f32 %v480, %v2911
      %v2913 = vand.u32 %v2912, 4294901760
      %v2914 = vsub.f32 %v2912, %v2913
      %v2915 = vand.u32 %v2914, 4294901760
      %2916 = vmatpush.msra.mxu0 %v2915
      %v2917 = vand.u32 %v476, 4294901760
      %v2918 = vsub.f32 %v476, %v2917
      %v2919 = vand.u32 %v2918, 4294901760
      %v2920 = vsub.f32 %v2918, %v2919
      %v2921 = vand.u32 %v2920, 4294901760
      %2922 = vmatpush.msra.mxu0 %v2921
      %v2923 = vand.u32 %v472, 4294901760
      %v2924 = vsub.f32 %v472, %v2923
      %v2925 = vand.u32 %v2924, 4294901760
      %v2926 = vsub.f32 %v2924, %v2925
      %v2927 = vand.u32 %v2926, 4294901760
      %2928 = vmatpush.msra.mxu0 %v2927
      %v2929 = vand.u32 %v468, 4294901760
      %v2930 = vsub.f32 %v468, %v2929
      %v2931 = vand.u32 %v2930, 4294901760
      %v2932 = vsub.f32 %v2930, %v2931
      %v2933 = vand.u32 %v2932, 4294901760
      %2934 = vmatpush.msra.mxu0 %v2933
      %v2935 = vand.u32 %v464, 4294901760
      %v2936 = vsub.f32 %v464, %v2935
      %v2937 = vand.u32 %v2936, 4294901760
      %v2938 = vsub.f32 %v2936, %v2937
      %v2939 = vand.u32 %v2938, 4294901760
      %2940 = vmatpush.msra.mxu0 %v2939
      %v2941 = vand.u32 %v460, 4294901760
      %v2942 = vsub.f32 %v460, %v2941
      %v2943 = vand.u32 %v2942, 4294901760
      %v2944 = vsub.f32 %v2942, %v2943
      %v2945 = vand.u32 %v2944, 4294901760
      %2946 = vmatpush.msra.mxu0 %v2945
      %v2947 = vand.u32 %v456, 4294901760
      %v2948 = vsub.f32 %v456, %v2947
      %v2949 = vand.u32 %v2948, 4294901760
      %v2950 = vsub.f32 %v2948, %v2949
      %v2951 = vand.u32 %v2950, 4294901760
      %2952 = vmatpush.msra.mxu0 %v2951
      %v2953 = vand.u32 %v452, 4294901760
      %v2954 = vsub.f32 %v452, %v2953
      %v2955 = vand.u32 %v2954, 4294901760
      %v2956 = vsub.f32 %v2954, %v2955
      %v2957 = vand.u32 %v2956, 4294901760
      %2958 = vmatpush.msra.mxu0 %v2957
      %v2959 = vand.u32 %v448, 4294901760
      %v2960 = vsub.f32 %v448, %v2959
      %v2961 = vand.u32 %v2960, 4294901760
      %v2962 = vsub.f32 %v2960, %v2961
      %v2963 = vand.u32 %v2962, 4294901760
      %2964 = vmatpush.msra.mxu0 %v2963
      %v2965 = vand.u32 %v444, 4294901760
      %v2966 = vsub.f32 %v444, %v2965
      %v2967 = vand.u32 %v2966, 4294901760
      %v2968 = vsub.f32 %v2966, %v2967
      %v2969 = vand.u32 %v2968, 4294901760
      %2970 = vmatpush.msra.mxu0 %v2969
      %v2971 = vand.u32 %v440, 4294901760
      %v2972 = vsub.f32 %v440, %v2971
      %v2973 = vand.u32 %v2972, 4294901760
      %v2974 = vsub.f32 %v2972, %v2973
      %v2975 = vand.u32 %v2974, 4294901760
      %2976 = vmatpush.msra.mxu0 %v2975
      %v2977 = vand.u32 %v436, 4294901760
      %v2978 = vsub.f32 %v436, %v2977
      %v2979 = vand.u32 %v2978, 4294901760
      %v2980 = vsub.f32 %v2978, %v2979
      %v2981 = vand.u32 %v2980, 4294901760
      %2982 = vmatpush.msra.mxu0 %v2981
      %v2983 = vand.u32 %v432, 4294901760
      %v2984 = vsub.f32 %v432, %v2983
      %v2985 = vand.u32 %v2984, 4294901760
      %v2986 = vsub.f32 %v2984, %v2985
      %v2987 = vand.u32 %v2986, 4294901760
      %2988 = vmatpush.msra.mxu0 %v2987
      %v2989 = vand.u32 %v428, 4294901760
      %v2990 = vsub.f32 %v428, %v2989
      %v2991 = vand.u32 %v2990, 4294901760
      %v2992 = vsub.f32 %v2990, %v2991
      %v2993 = vand.u32 %v2992, 4294901760
      %2994 = vmatpush.msra.mxu0 %v2993
      %v2995 = vand.u32 %v424, 4294901760
      %v2996 = vsub.f32 %v424, %v2995
      %v2997 = vand.u32 %v2996, 4294901760
      %v2998 = vsub.f32 %v2996, %v2997
      %v2999 = vand.u32 %v2998, 4294901760
      %3000 = vmatpush.msra.mxu0 %v2999
      %v3001 = vand.u32 %v420, 4294901760
      %v3002 = vsub.f32 %v420, %v3001
      %v3003 = vand.u32 %v3002, 4294901760
      %v3004 = vsub.f32 %v3002, %v3003
      %v3005 = vand.u32 %v3004, 4294901760
      %3006 = vmatpush.msra.mxu0 %v3005
      %v3007 = vand.u32 %v226, 4294901760
      %3008 = vmatmul.f32.gmra.mxu0 %v3007
      %v3009 = vpop.f32.mrf.mxu0
      %v3010 = vadd.f32 %v2909, %v3009
      %3011 = vdwg.mxu0
      %v3012 = vand.u32 %v480, 4294901760
      %v3013 = vsub.f32 %v480, %v3012
      %3014 = vmatpush.msra.mxu0 %v3013
      %v3015 = vand.u32 %v476, 4294901760
      %v3016 = vsub.f32 %v476, %v3015
      %3017 = vmatpush.msra.mxu0 %v3016
      %v3018 = vand.u32 %v472, 4294901760
      %v3019 = vsub.f32 %v472, %v3018
      %3020 = vmatpush.msra.mxu0 %v3019
      %v3021 = vand.u32 %v468, 4294901760
      %v3022 = vsub.f32 %v468, %v3021
      %3023 = vmatpush.msra.mxu0 %v3022
      %v3024 = vand.u32 %v464, 4294901760
      %v3025 = vsub.f32 %v464, %v3024
      %3026 = vmatpush.msra.mxu0 %v3025
      %v3027 = vand.u32 %v460, 4294901760
      %v3028 = vsub.f32 %v460, %v3027
      %3029 = vmatpush.msra.mxu0 %v3028
      %v3030 = vand.u32 %v456, 4294901760
      %v3031 = vsub.f32 %v456, %v3030
      %3032 = vmatpush.msra.mxu0 %v3031
      %v3033 = vand.u32 %v452, 4294901760
      %v3034 = vsub.f32 %v452, %v3033
      %3035 = vmatpush.msra.mxu0 %v3034
      %v3036 = vand.u32 %v448, 4294901760
      %v3037 = vsub.f32 %v448, %v3036
      %3038 = vmatpush.msra.mxu0 %v3037
      %v3039 = vand.u32 %v444, 4294901760
      %v3040 = vsub.f32 %v444, %v3039
      %3041 = vmatpush.msra.mxu0 %v3040
      %v3042 = vand.u32 %v440, 4294901760
      %v3043 = vsub.f32 %v440, %v3042
      %3044 = vmatpush.msra.mxu0 %v3043
      %v3045 = vand.u32 %v436, 4294901760
      %v3046 = vsub.f32 %v436, %v3045
      %3047 = vmatpush.msra.mxu0 %v3046
      %v3048 = vand.u32 %v432, 4294901760
      %v3049 = vsub.f32 %v432, %v3048
      %3050 = vmatpush.msra.mxu0 %v3049
      %v3051 = vand.u32 %v428, 4294901760
      %v3052 = vsub.f32 %v428, %v3051
      %3053 = vmatpush.msra.mxu0 %v3052
      %v3054 = vand.u32 %v424, 4294901760
      %v3055 = vsub.f32 %v424, %v3054
      %3056 = vmatpush.msra.mxu0 %v3055
      %v3057 = vand.u32 %v420, 4294901760
      %v3058 = vsub.f32 %v420, %v3057
      %3059 = vmatpush.msra.mxu0 %v3058
      %v3060 = vand.u32 %v226, 4294901760
      %v3061 = vsub.f32 %v226, %v3060
      %3062 = vmatmul.f32.gmra.mxu0 %v3061
      %v3063 = vpop.f32.mrf.mxu0
      %v3064 = vadd.f32 %v3010, %v3063
      %3065 = vdwg.mxu0
      %v3066 = vand.u32 %v480, 4294901760
      %3067 = vmatpush.msra.mxu0 %v3066
      %v3068 = vand.u32 %v476, 4294901760
      %3069 = vmatpush.msra.mxu0 %v3068
      %v3070 = vand.u32 %v472, 4294901760
      %3071 = vmatpush.msra.mxu0 %v3070
      %v3072 = vand.u32 %v468, 4294901760
      %3073 = vmatpush.msra.mxu0 %v3072
      %v3074 = vand.u32 %v464, 4294901760
      %3075 = vmatpush.msra.mxu0 %v3074
      %v3076 = vand.u32 %v460, 4294901760
      %3077 = vmatpush.msra.mxu0 %v3076
      %v3078 = vand.u32 %v456, 4294901760
      %3079 = vmatpush.msra.mxu0 %v3078
      %v3080 = vand.u32 %v452, 4294901760
      %3081 = vmatpush.msra.mxu0 %v3080
      %v3082 = vand.u32 %v448, 4294901760
      %3083 = vmatpush.msra.mxu0 %v3082
      %v3084 = vand.u32 %v444, 4294901760
      %3085 = vmatpush.msra.mxu0 %v3084
      %v3086 = vand.u32 %v440, 4294901760
      %3087 = vmatpush.msra.mxu0 %v3086
      %v3088 = vand.u32 %v436, 4294901760
      %3089 = vmatpush.msra.mxu0 %v3088
      %v3090 = vand.u32 %v432, 4294901760
      %3091 = vmatpush.msra.mxu0 %v3090
      %v3092 = vand.u32 %v428, 4294901760
      %3093 = vmatpush.msra.mxu0 %v3092
      %v3094 = vand.u32 %v424, 4294901760
      %3095 = vmatpush.msra.mxu0 %v3094
      %v3096 = vand.u32 %v420, 4294901760
      %3097 = vmatpush.msra.mxu0 %v3096
      %v3098 = vand.u32 %v226, 4294901760
      %v3099 = vsub.f32 %v226, %v3098
      %v3100 = vand.u32 %v3099, 4294901760
      %3101 = vmatmul.f32.gmra.mxu0 %v3100
      %v3102 = vpop.f32.mrf.mxu0
      %v3103 = vadd.f32 %v3064, %v3102
      %3104 = vdwg.mxu0
      %v3105 = vand.u32 %v480, 4294901760
      %v3106 = vsub.f32 %v480, %v3105
      %v3107 = vand.u32 %v3106, 4294901760
      %3108 = vmatpush.msra.mxu0 %v3107
      %v3109 = vand.u32 %v476, 4294901760
      %v3110 = vsub.f32 %v476, %v3109
      %v3111 = vand.u32 %v3110, 4294901760
      %3112 = vmatpush.msra.mxu0 %v3111
      %v3113 = vand.u32 %v472, 4294901760
      %v3114 = vsub.f32 %v472, %v3113
      %v3115 = vand.u32 %v3114, 4294901760
      %3116 = vmatpush.msra.mxu0 %v3115
      %v3117 = vand.u32 %v468, 4294901760
      %v3118 = vsub.f32 %v468, %v3117
      %v3119 = vand.u32 %v3118, 4294901760
      %3120 = vmatpush.msra.mxu0 %v3119
      %v3121 = vand.u32 %v464, 4294901760
      %v3122 = vsub.f32 %v464, %v3121
      %v3123 = vand.u32 %v3122, 4294901760
      %3124 = vmatpush.msra.mxu0 %v3123
      %v3125 = vand.u32 %v460, 4294901760
      %v3126 = vsub.f32 %v460, %v3125
      %v3127 = vand.u32 %v3126, 4294901760
      %3128 = vmatpush.msra.mxu0 %v3127
      %v3129 = vand.u32 %v456, 4294901760
      %v3130 = vsub.f32 %v456, %v3129
      %v3131 = vand.u32 %v3130, 4294901760
      %3132 = vmatpush.msra.mxu0 %v3131
      %v3133 = vand.u32 %v452, 4294901760
      %v3134 = vsub.f32 %v452, %v3133
      %v3135 = vand.u32 %v3134, 4294901760
      %3136 = vmatpush.msra.mxu0 %v3135
      %v3137 = vand.u32 %v448, 4294901760
      %v3138 = vsub.f32 %v448, %v3137
      %v3139 = vand.u32 %v3138, 4294901760
      %3140 = vmatpush.msra.mxu0 %v3139
      %v3141 = vand.u32 %v444, 4294901760
      %v3142 = vsub.f32 %v444, %v3141
      %v3143 = vand.u32 %v3142, 4294901760
      %3144 = vmatpush.msra.mxu0 %v3143
      %v3145 = vand.u32 %v440, 4294901760
      %v3146 = vsub.f32 %v440, %v3145
      %v3147 = vand.u32 %v3146, 4294901760
      %3148 = vmatpush.msra.mxu0 %v3147
      %v3149 = vand.u32 %v436, 4294901760
      %v3150 = vsub.f32 %v436, %v3149
      %v3151 = vand.u32 %v3150, 4294901760
      %3152 = vmatpush.msra.mxu0 %v3151
      %v3153 = vand.u32 %v432, 4294901760
      %v3154 = vsub.f32 %v432, %v3153
      %v3155 = vand.u32 %v3154, 4294901760
      %3156 = vmatpush.msra.mxu0 %v3155
      %v3157 = vand.u32 %v428, 4294901760
      %v3158 = vsub.f32 %v428, %v3157
      %v3159 = vand.u32 %v3158, 4294901760
      %3160 = vmatpush.msra.mxu0 %v3159
      %v3161 = vand.u32 %v424, 4294901760
      %v3162 = vsub.f32 %v424, %v3161
      %v3163 = vand.u32 %v3162, 4294901760
      %3164 = vmatpush.msra.mxu0 %v3163
      %v3165 = vand.u32 %v420, 4294901760
      %v3166 = vsub.f32 %v420, %v3165
      %v3167 = vand.u32 %v3166, 4294901760
      %3168 = vmatpush.msra.mxu0 %v3167
      %v3169 = vand.u32 %v226, 4294901760
      %3170 = vmatmul.f32.gmra.mxu0 %v3169
      %v3171 = vpop.f32.mrf.mxu0
      %v3172 = vadd.f32 %v3103, %v3171
      %3173 = vdwg.mxu0
      %v3174 = vand.u32 %v480, 4294901760
      %3175 = vmatpush.msra.mxu0 %v3174
      %v3176 = vand.u32 %v476, 4294901760
      %3177 = vmatpush.msra.mxu0 %v3176
      %v3178 = vand.u32 %v472, 4294901760
      %3179 = vmatpush.msra.mxu0 %v3178
      %v3180 = vand.u32 %v468, 4294901760
      %3181 = vmatpush.msra.mxu0 %v3180
      %v3182 = vand.u32 %v464, 4294901760
      %3183 = vmatpush.msra.mxu0 %v3182
      %v3184 = vand.u32 %v460, 4294901760
      %3185 = vmatpush.msra.mxu0 %v3184
      %v3186 = vand.u32 %v456, 4294901760
      %3187 = vmatpush.msra.mxu0 %v3186
      %v3188 = vand.u32 %v452, 4294901760
      %3189 = vmatpush.msra.mxu0 %v3188
      %v3190 = vand.u32 %v448, 4294901760
      %3191 = vmatpush.msra.mxu0 %v3190
      %v3192 = vand.u32 %v444, 4294901760
      %3193 = vmatpush.msra.mxu0 %v3192
      %v3194 = vand.u32 %v440, 4294901760
      %3195 = vmatpush.msra.mxu0 %v3194
      %v3196 = vand.u32 %v436, 4294901760
      %3197 = vmatpush.msra.mxu0 %v3196
      %v3198 = vand.u32 %v432, 4294901760
      %3199 = vmatpush.msra.mxu0 %v3198
      %v3200 = vand.u32 %v428, 4294901760
      %3201 = vmatpush.msra.mxu0 %v3200
      %v3202 = vand.u32 %v424, 4294901760
      %3203 = vmatpush.msra.mxu0 %v3202
      %v3204 = vand.u32 %v420, 4294901760
      %3205 = vmatpush.msra.mxu0 %v3204
      %v3206 = vand.u32 %v226, 4294901760
      %3207 = vmatmul.f32.gmra.mxu0 %v3206
      %v3208 = vpop.f32.mrf.mxu0
      %v3209 = vadd.f32 %v3172, %v3208
      %3210 = vdwg.mxu0
      %v3211 = vand.u32 %v289, 4294901760
      %3212 = vmatpush.msra.mxu0 %v3211
      %v3213 = vand.u32 %v285, 4294901760
      %3214 = vmatpush.msra.mxu0 %v3213
      %v3215 = vand.u32 %v281, 4294901760
      %3216 = vmatpush.msra.mxu0 %v3215
      %v3217 = vand.u32 %v277, 4294901760
      %3218 = vmatpush.msra.mxu0 %v3217
      %v3219 = vand.u32 %v273, 4294901760
      %3220 = vmatpush.msra.mxu0 %v3219
      %v3221 = vand.u32 %v269, 4294901760
      %3222 = vmatpush.msra.mxu0 %v3221
      %v3223 = vand.u32 %v265, 4294901760
      %3224 = vmatpush.msra.mxu0 %v3223
      %v3225 = vand.u32 %v261, 4294901760
      %3226 = vmatpush.msra.mxu0 %v3225
      %v3227 = vand.u32 %v257, 4294901760
      %3228 = vmatpush.msra.mxu0 %v3227
      %v3229 = vand.u32 %v253, 4294901760
      %3230 = vmatpush.msra.mxu0 %v3229
      %v3231 = vand.u32 %v249, 4294901760
      %3232 = vmatpush.msra.mxu0 %v3231
      %v3233 = vand.u32 %v245, 4294901760
      %3234 = vmatpush.msra.mxu0 %v3233
      %v3235 = vand.u32 %v241, 4294901760
      %3236 = vmatpush.msra.mxu0 %v3235
      %v3237 = vand.u32 %v237, 4294901760
      %3238 = vmatpush.msra.mxu0 %v3237
      %v3239 = vand.u32 %v233, 4294901760
      %3240 = vmatpush.msra.mxu0 %v3239
      %v3241 = vand.u32 %v229, 4294901760
      %3242 = vmatpush.msra.mxu0 %v3241
      %v3243 = vand.u32 %v223, 4294901760
      %v3244 = vsub.f32 %v223, %v3243
      %v3245 = vand.u32 %v3244, 4294901760
      %v3246 = vsub.f32 %v3244, %v3245
      %v3247 = vand.u32 %v3246, 4294901760
      %3248 = vmatmul.f32.gmra.mxu0 %v3247
      %v3249 = vpop.f32.mrf.mxu0
      %v3250 = vadd.f32 0.0, %v3249
      %3251 = vdwg.mxu0
      %v3252 = vand.u32 %v289, 4294901760
      %v3253 = vsub.f32 %v289, %v3252
      %v3254 = vand.u32 %v3253, 4294901760
      %v3255 = vsub.f32 %v3253, %v3254
      %v3256 = vand.u32 %v3255, 4294901760
      %3257 = vmatpush.msra.mxu0 %v3256
      %v3258 = vand.u32 %v285, 4294901760
      %v3259 = vsub.f32 %v285, %v3258
      %v3260 = vand.u32 %v3259, 4294901760
      %v3261 = vsub.f32 %v3259, %v3260
      %v3262 = vand.u32 %v3261, 4294901760
      %3263 = vmatpush.msra.mxu0 %v3262
      %v3264 = vand.u32 %v281, 4294901760
      %v3265 = vsub.f32 %v281, %v3264
      %v3266 = vand.u32 %v3265, 4294901760
      %v3267 = vsub.f32 %v3265, %v3266
      %v3268 = vand.u32 %v3267, 4294901760
      %3269 = vmatpush.msra.mxu0 %v3268
      %v3270 = vand.u32 %v277, 4294901760
      %v3271 = vsub.f32 %v277, %v3270
      %v3272 = vand.u32 %v3271, 4294901760
      %v3273 = vsub.f32 %v3271, %v3272
      %v3274 = vand.u32 %v3273, 4294901760
      %3275 = vmatpush.msra.mxu0 %v3274
      %v3276 = vand.u32 %v273, 4294901760
      %v3277 = vsub.f32 %v273, %v3276
      %v3278 = vand.u32 %v3277, 4294901760
      %v3279 = vsub.f32 %v3277, %v3278
      %v3280 = vand.u32 %v3279, 4294901760
      %3281 = vmatpush.msra.mxu0 %v3280
      %v3282 = vand.u32 %v269, 4294901760
      %v3283 = vsub.f32 %v269, %v3282
      %v3284 = vand.u32 %v3283, 4294901760
      %v3285 = vsub.f32 %v3283, %v3284
      %v3286 = vand.u32 %v3285, 4294901760
      %3287 = vmatpush.msra.mxu0 %v3286
      %v3288 = vand.u32 %v265, 4294901760
      %v3289 = vsub.f32 %v265, %v3288
      %v3290 = vand.u32 %v3289, 4294901760
      %v3291 = vsub.f32 %v3289, %v3290
      %v3292 = vand.u32 %v3291, 4294901760
      %3293 = vmatpush.msra.mxu0 %v3292
      %v3294 = vand.u32 %v261, 4294901760
      %v3295 = vsub.f32 %v261, %v3294
      %v3296 = vand.u32 %v3295, 4294901760
      %v3297 = vsub.f32 %v3295, %v3296
      %v3298 = vand.u32 %v3297, 4294901760
      %3299 = vmatpush.msra.mxu0 %v3298
      %v3300 = vand.u32 %v257, 4294901760
      %v3301 = vsub.f32 %v257, %v3300
      %v3302 = vand.u32 %v3301, 4294901760
      %v3303 = vsub.f32 %v3301, %v3302
      %v3304 = vand.u32 %v3303, 4294901760
      %3305 = vmatpush.msra.mxu0 %v3304
      %v3306 = vand.u32 %v253, 4294901760
      %v3307 = vsub.f32 %v253, %v3306
      %v3308 = vand.u32 %v3307, 4294901760
      %v3309 = vsub.f32 %v3307, %v3308
      %v3310 = vand.u32 %v3309, 4294901760
      %3311 = vmatpush.msra.mxu0 %v3310
      %v3312 = vand.u32 %v249, 4294901760
      %v3313 = vsub.f32 %v249, %v3312
      %v3314 = vand.u32 %v3313, 4294901760
      %v3315 = vsub.f32 %v3313, %v3314
      %v3316 = vand.u32 %v3315, 4294901760
      %3317 = vmatpush.msra.mxu0 %v3316
      %v3318 = vand.u32 %v245, 4294901760
      %v3319 = vsub.f32 %v245, %v3318
      %v3320 = vand.u32 %v3319, 4294901760
      %v3321 = vsub.f32 %v3319, %v3320
      %v3322 = vand.u32 %v3321, 4294901760
      %3323 = vmatpush.msra.mxu0 %v3322
      %v3324 = vand.u32 %v241, 4294901760
      %v3325 = vsub.f32 %v241, %v3324
      %v3326 = vand.u32 %v3325, 4294901760
      %v3327 = vsub.f32 %v3325, %v3326
      %v3328 = vand.u32 %v3327, 4294901760
      %3329 = vmatpush.msra.mxu0 %v3328
      %v3330 = vand.u32 %v237, 4294901760
      %v3331 = vsub.f32 %v237, %v3330
      %v3332 = vand.u32 %v3331, 4294901760
      %v3333 = vsub.f32 %v3331, %v3332
      %v3334 = vand.u32 %v3333, 4294901760
      %3335 = vmatpush.msra.mxu0 %v3334
      %v3336 = vand.u32 %v233, 4294901760
      %v3337 = vsub.f32 %v233, %v3336
      %v3338 = vand.u32 %v3337, 4294901760
      %v3339 = vsub.f32 %v3337, %v3338
      %v3340 = vand.u32 %v3339, 4294901760
      %3341 = vmatpush.msra.mxu0 %v3340
      %v3342 = vand.u32 %v229, 4294901760
      %v3343 = vsub.f32 %v229, %v3342
      %v3344 = vand.u32 %v3343, 4294901760
      %v3345 = vsub.f32 %v3343, %v3344
      %v3346 = vand.u32 %v3345, 4294901760
      %3347 = vmatpush.msra.mxu0 %v3346
      %v3348 = vand.u32 %v223, 4294901760
      %3349 = vmatmul.f32.gmra.mxu0 %v3348
      %v3350 = vpop.f32.mrf.mxu0
      %v3351 = vadd.f32 %v3250, %v3350
      %3352 = vdwg.mxu0
      %v3353 = vand.u32 %v289, 4294901760
      %v3354 = vsub.f32 %v289, %v3353
      %3355 = vmatpush.msra.mxu0 %v3354
      %v3356 = vand.u32 %v285, 4294901760
      %v3357 = vsub.f32 %v285, %v3356
      %3358 = vmatpush.msra.mxu0 %v3357
      %v3359 = vand.u32 %v281, 4294901760
      %v3360 = vsub.f32 %v281, %v3359
      %3361 = vmatpush.msra.mxu0 %v3360
      %v3362 = vand.u32 %v277, 4294901760
      %v3363 = vsub.f32 %v277, %v3362
      %3364 = vmatpush.msra.mxu0 %v3363
      %v3365 = vand.u32 %v273, 4294901760
      %v3366 = vsub.f32 %v273, %v3365
      %3367 = vmatpush.msra.mxu0 %v3366
      %v3368 = vand.u32 %v269, 4294901760
      %v3369 = vsub.f32 %v269, %v3368
      %3370 = vmatpush.msra.mxu0 %v3369
      %v3371 = vand.u32 %v265, 4294901760
      %v3372 = vsub.f32 %v265, %v3371
      %3373 = vmatpush.msra.mxu0 %v3372
      %v3374 = vand.u32 %v261, 4294901760
      %v3375 = vsub.f32 %v261, %v3374
      %3376 = vmatpush.msra.mxu0 %v3375
      %v3377 = vand.u32 %v257, 4294901760
      %v3378 = vsub.f32 %v257, %v3377
      %3379 = vmatpush.msra.mxu0 %v3378
      %v3380 = vand.u32 %v253, 4294901760
      %v3381 = vsub.f32 %v253, %v3380
      %3382 = vmatpush.msra.mxu0 %v3381
      %v3383 = vand.u32 %v249, 4294901760
      %v3384 = vsub.f32 %v249, %v3383
      %3385 = vmatpush.msra.mxu0 %v3384
      %v3386 = vand.u32 %v245, 4294901760
      %v3387 = vsub.f32 %v245, %v3386
      %3388 = vmatpush.msra.mxu0 %v3387
      %v3389 = vand.u32 %v241, 4294901760
      %v3390 = vsub.f32 %v241, %v3389
      %3391 = vmatpush.msra.mxu0 %v3390
      %v3392 = vand.u32 %v237, 4294901760
      %v3393 = vsub.f32 %v237, %v3392
      %3394 = vmatpush.msra.mxu0 %v3393
      %v3395 = vand.u32 %v233, 4294901760
      %v3396 = vsub.f32 %v233, %v3395
      %3397 = vmatpush.msra.mxu0 %v3396
      %v3398 = vand.u32 %v229, 4294901760
      %v3399 = vsub.f32 %v229, %v3398
      %3400 = vmatpush.msra.mxu0 %v3399
      %v3401 = vand.u32 %v223, 4294901760
      %v3402 = vsub.f32 %v223, %v3401
      %3403 = vmatmul.f32.gmra.mxu0 %v3402
      %v3404 = vpop.f32.mrf.mxu0
      %v3405 = vadd.f32 %v3351, %v3404
      %3406 = vdwg.mxu0
      %v3407 = vand.u32 %v289, 4294901760
      %3408 = vmatpush.msra.mxu0 %v3407
      %v3409 = vand.u32 %v285, 4294901760
      %3410 = vmatpush.msra.mxu0 %v3409
      %v3411 = vand.u32 %v281, 4294901760
      %3412 = vmatpush.msra.mxu0 %v3411
      %v3413 = vand.u32 %v277, 4294901760
      %3414 = vmatpush.msra.mxu0 %v3413
      %v3415 = vand.u32 %v273, 4294901760
      %3416 = vmatpush.msra.mxu0 %v3415
      %v3417 = vand.u32 %v269, 4294901760
      %3418 = vmatpush.msra.mxu0 %v3417
      %v3419 = vand.u32 %v265, 4294901760
      %3420 = vmatpush.msra.mxu0 %v3419
      %v3421 = vand.u32 %v261, 4294901760
      %3422 = vmatpush.msra.mxu0 %v3421
      %v3423 = vand.u32 %v257, 4294901760
      %3424 = vmatpush.msra.mxu0 %v3423
      %v3425 = vand.u32 %v253, 4294901760
      %3426 = vmatpush.msra.mxu0 %v3425
      %v3427 = vand.u32 %v249, 4294901760
      %3428 = vmatpush.msra.mxu0 %v3427
      %v3429 = vand.u32 %v245, 4294901760
      %3430 = vmatpush.msra.mxu0 %v3429
      %v3431 = vand.u32 %v241, 4294901760
      %3432 = vmatpush.msra.mxu0 %v3431
      %v3433 = vand.u32 %v237, 4294901760
      %3434 = vmatpush.msra.mxu0 %v3433
      %v3435 = vand.u32 %v233, 4294901760
      %3436 = vmatpush.msra.mxu0 %v3435
      %v3437 = vand.u32 %v229, 4294901760
      %3438 = vmatpush.msra.mxu0 %v3437
      %v3439 = vand.u32 %v223, 4294901760
      %v3440 = vsub.f32 %v223, %v3439
      %v3441 = vand.u32 %v3440, 4294901760
      %3442 = vmatmul.f32.gmra.mxu0 %v3441
      %v3443 = vpop.f32.mrf.mxu0
      %v3444 = vadd.f32 %v3405, %v3443
      %3445 = vdwg.mxu0
      %v3446 = vand.u32 %v289, 4294901760
      %v3447 = vsub.f32 %v289, %v3446
      %v3448 = vand.u32 %v3447, 4294901760
      %3449 = vmatpush.msra.mxu0 %v3448
      %v3450 = vand.u32 %v285, 4294901760
      %v3451 = vsub.f32 %v285, %v3450
      %v3452 = vand.u32 %v3451, 4294901760
      %3453 = vmatpush.msra.mxu0 %v3452
      %v3454 = vand.u32 %v281, 4294901760
      %v3455 = vsub.f32 %v281, %v3454
      %v3456 = vand.u32 %v3455, 4294901760
      %3457 = vmatpush.msra.mxu0 %v3456
      %v3458 = vand.u32 %v277, 4294901760
      %v3459 = vsub.f32 %v277, %v3458
      %v3460 = vand.u32 %v3459, 4294901760
      %3461 = vmatpush.msra.mxu0 %v3460
      %v3462 = vand.u32 %v273, 4294901760
      %v3463 = vsub.f32 %v273, %v3462
      %v3464 = vand.u32 %v3463, 4294901760
      %3465 = vmatpush.msra.mxu0 %v3464
      %v3466 = vand.u32 %v269, 4294901760
      %v3467 = vsub.f32 %v269, %v3466
      %v3468 = vand.u32 %v3467, 4294901760
      %3469 = vmatpush.msra.mxu0 %v3468
      %v3470 = vand.u32 %v265, 4294901760
      %v3471 = vsub.f32 %v265, %v3470
      %v3472 = vand.u32 %v3471, 4294901760
      %3473 = vmatpush.msra.mxu0 %v3472
      %v3474 = vand.u32 %v261, 4294901760
      %v3475 = vsub.f32 %v261, %v3474
      %v3476 = vand.u32 %v3475, 4294901760
      %3477 = vmatpush.msra.mxu0 %v3476
      %v3478 = vand.u32 %v257, 4294901760
      %v3479 = vsub.f32 %v257, %v3478
      %v3480 = vand.u32 %v3479, 4294901760
      %3481 = vmatpush.msra.mxu0 %v3480
      %v3482 = vand.u32 %v253, 4294901760
      %v3483 = vsub.f32 %v253, %v3482
      %v3484 = vand.u32 %v3483, 4294901760
      %3485 = vmatpush.msra.mxu0 %v3484
      %v3486 = vand.u32 %v249, 4294901760
      %v3487 = vsub.f32 %v249, %v3486
      %v3488 = vand.u32 %v3487, 4294901760
      %3489 = vmatpush.msra.mxu0 %v3488
      %v3490 = vand.u32 %v245, 4294901760
      %v3491 = vsub.f32 %v245, %v3490
      %v3492 = vand.u32 %v3491, 4294901760
      %3493 = vmatpush.msra.mxu0 %v3492
      %v3494 = vand.u32 %v241, 4294901760
      %v3495 = vsub.f32 %v241, %v3494
      %v3496 = vand.u32 %v3495, 4294901760
      %3497 = vmatpush.msra.mxu0 %v3496
      %v3498 = vand.u32 %v237, 4294901760
      %v3499 = vsub.f32 %v237, %v3498
      %v3500 = vand.u32 %v3499, 4294901760
      %3501 = vmatpush.msra.mxu0 %v3500
      %v3502 = vand.u32 %v233, 4294901760
      %v3503 = vsub.f32 %v233, %v3502
      %v3504 = vand.u32 %v3503, 4294901760
      %3505 = vmatpush.msra.mxu0 %v3504
      %v3506 = vand.u32 %v229, 4294901760
      %v3507 = vsub.f32 %v229, %v3506
      %v3508 = vand.u32 %v3507, 4294901760
      %3509 = vmatpush.msra.mxu0 %v3508
      %v3510 = vand.u32 %v223, 4294901760
      %3511 = vmatmul.f32.gmra.mxu0 %v3510
      %v3512 = vpop.f32.mrf.mxu0
      %v3513 = vadd.f32 %v3444, %v3512
      %3514 = vdwg.mxu0
      %v3515 = vand.u32 %v289, 4294901760
      %3516 = vmatpush.msra.mxu0 %v3515
      %v3517 = vand.u32 %v285, 4294901760
      %3518 = vmatpush.msra.mxu0 %v3517
      %v3519 = vand.u32 %v281, 4294901760
      %3520 = vmatpush.msra.mxu0 %v3519
      %v3521 = vand.u32 %v277, 4294901760
      %3522 = vmatpush.msra.mxu0 %v3521
      %v3523 = vand.u32 %v273, 4294901760
      %3524 = vmatpush.msra.mxu0 %v3523
      %v3525 = vand.u32 %v269, 4294901760
      %3526 = vmatpush.msra.mxu0 %v3525
      %v3527 = vand.u32 %v265, 4294901760
      %3528 = vmatpush.msra.mxu0 %v3527
      %v3529 = vand.u32 %v261, 4294901760
      %3530 = vmatpush.msra.mxu0 %v3529
      %v3531 = vand.u32 %v257, 4294901760
      %3532 = vmatpush.msra.mxu0 %v3531
      %v3533 = vand.u32 %v253, 4294901760
      %3534 = vmatpush.msra.mxu0 %v3533
      %v3535 = vand.u32 %v249, 4294901760
      %3536 = vmatpush.msra.mxu0 %v3535
      %v3537 = vand.u32 %v245, 4294901760
      %3538 = vmatpush.msra.mxu0 %v3537
      %v3539 = vand.u32 %v241, 4294901760
      %3540 = vmatpush.msra.mxu0 %v3539
      %v3541 = vand.u32 %v237, 4294901760
      %3542 = vmatpush.msra.mxu0 %v3541
      %v3543 = vand.u32 %v233, 4294901760
      %3544 = vmatpush.msra.mxu0 %v3543
      %v3545 = vand.u32 %v229, 4294901760
      %3546 = vmatpush.msra.mxu0 %v3545
      %v3547 = vand.u32 %v223, 4294901760
      %3548 = vmatmul.f32.gmra.mxu0 %v3547
      %v3549 = vpop.f32.mrf.mxu0
      %v3550 = vadd.f32 %v3513, %v3549
      %3551 = vdwg.mxu0
      %v3552 = vand.u32 %v353, 4294901760
      %3553 = vmatpush.msra.mxu0 %v3552
      %v3554 = vand.u32 %v349, 4294901760
      %3555 = vmatpush.msra.mxu0 %v3554
      %v3556 = vand.u32 %v345, 4294901760
      %3557 = vmatpush.msra.mxu0 %v3556
      %v3558 = vand.u32 %v341, 4294901760
      %3559 = vmatpush.msra.mxu0 %v3558
      %v3560 = vand.u32 %v337, 4294901760
      %3561 = vmatpush.msra.mxu0 %v3560
      %v3562 = vand.u32 %v333, 4294901760
      %3563 = vmatpush.msra.mxu0 %v3562
      %v3564 = vand.u32 %v329, 4294901760
      %3565 = vmatpush.msra.mxu0 %v3564
      %v3566 = vand.u32 %v325, 4294901760
      %3567 = vmatpush.msra.mxu0 %v3566
      %v3568 = vand.u32 %v321, 4294901760
      %3569 = vmatpush.msra.mxu0 %v3568
      %v3570 = vand.u32 %v317, 4294901760
      %3571 = vmatpush.msra.mxu0 %v3570
      %v3572 = vand.u32 %v313, 4294901760
      %3573 = vmatpush.msra.mxu0 %v3572
      %v3574 = vand.u32 %v309, 4294901760
      %3575 = vmatpush.msra.mxu0 %v3574
      %v3576 = vand.u32 %v305, 4294901760
      %3577 = vmatpush.msra.mxu0 %v3576
      %v3578 = vand.u32 %v301, 4294901760
      %3579 = vmatpush.msra.mxu0 %v3578
      %v3580 = vand.u32 %v297, 4294901760
      %3581 = vmatpush.msra.mxu0 %v3580
      %v3582 = vand.u32 %v293, 4294901760
      %3583 = vmatpush.msra.mxu0 %v3582
      %v3584 = vand.u32 %v224, 4294901760
      %v3585 = vsub.f32 %v224, %v3584
      %v3586 = vand.u32 %v3585, 4294901760
      %v3587 = vsub.f32 %v3585, %v3586
      %v3588 = vand.u32 %v3587, 4294901760
      %3589 = vmatmul.f32.gmra.mxu0 %v3588
      %v3590 = vpop.f32.mrf.mxu0
      %v3591 = vadd.f32 %v3550, %v3590
      %3592 = vdwg.mxu0
      %v3593 = vand.u32 %v353, 4294901760
      %v3594 = vsub.f32 %v353, %v3593
      %v3595 = vand.u32 %v3594, 4294901760
      %v3596 = vsub.f32 %v3594, %v3595
      %v3597 = vand.u32 %v3596, 4294901760
      %3598 = vmatpush.msra.mxu0 %v3597
      %v3599 = vand.u32 %v349, 4294901760
      %v3600 = vsub.f32 %v349, %v3599
      %v3601 = vand.u32 %v3600, 4294901760
      %v3602 = vsub.f32 %v3600, %v3601
      %v3603 = vand.u32 %v3602, 4294901760
      %3604 = vmatpush.msra.mxu0 %v3603
      %v3605 = vand.u32 %v345, 4294901760
      %v3606 = vsub.f32 %v345, %v3605
      %v3607 = vand.u32 %v3606, 4294901760
      %v3608 = vsub.f32 %v3606, %v3607
      %v3609 = vand.u32 %v3608, 4294901760
      %3610 = vmatpush.msra.mxu0 %v3609
      %v3611 = vand.u32 %v341, 4294901760
      %v3612 = vsub.f32 %v341, %v3611
      %v3613 = vand.u32 %v3612, 4294901760
      %v3614 = vsub.f32 %v3612, %v3613
      %v3615 = vand.u32 %v3614, 4294901760
      %3616 = vmatpush.msra.mxu0 %v3615
      %v3617 = vand.u32 %v337, 4294901760
      %v3618 = vsub.f32 %v337, %v3617
      %v3619 = vand.u32 %v3618, 4294901760
      %v3620 = vsub.f32 %v3618, %v3619
      %v3621 = vand.u32 %v3620, 4294901760
      %3622 = vmatpush.msra.mxu0 %v3621
      %v3623 = vand.u32 %v333, 4294901760
      %v3624 = vsub.f32 %v333, %v3623
      %v3625 = vand.u32 %v3624, 4294901760
      %v3626 = vsub.f32 %v3624, %v3625
      %v3627 = vand.u32 %v3626, 4294901760
      %3628 = vmatpush.msra.mxu0 %v3627
      %v3629 = vand.u32 %v329, 4294901760
      %v3630 = vsub.f32 %v329, %v3629
      %v3631 = vand.u32 %v3630, 4294901760
      %v3632 = vsub.f32 %v3630, %v3631
      %v3633 = vand.u32 %v3632, 4294901760
      %3634 = vmatpush.msra.mxu0 %v3633
      %v3635 = vand.u32 %v325, 4294901760
      %v3636 = vsub.f32 %v325, %v3635
      %v3637 = vand.u32 %v3636, 4294901760
      %v3638 = vsub.f32 %v3636, %v3637
      %v3639 = vand.u32 %v3638, 4294901760
      %3640 = vmatpush.msra.mxu0 %v3639
      %v3641 = vand.u32 %v321, 4294901760
      %v3642 = vsub.f32 %v321, %v3641
      %v3643 = vand.u32 %v3642, 4294901760
      %v3644 = vsub.f32 %v3642, %v3643
      %v3645 = vand.u32 %v3644, 4294901760
      %3646 = vmatpush.msra.mxu0 %v3645
      %v3647 = vand.u32 %v317, 4294901760
      %v3648 = vsub.f32 %v317, %v3647
      %v3649 = vand.u32 %v3648, 4294901760
      %v3650 = vsub.f32 %v3648, %v3649
      %v3651 = vand.u32 %v3650, 4294901760
      %3652 = vmatpush.msra.mxu0 %v3651
      %v3653 = vand.u32 %v313, 4294901760
      %v3654 = vsub.f32 %v313, %v3653
      %v3655 = vand.u32 %v3654, 4294901760
      %v3656 = vsub.f32 %v3654, %v3655
      %v3657 = vand.u32 %v3656, 4294901760
      %3658 = vmatpush.msra.mxu0 %v3657
      %v3659 = vand.u32 %v309, 4294901760
      %v3660 = vsub.f32 %v309, %v3659
      %v3661 = vand.u32 %v3660, 4294901760
      %v3662 = vsub.f32 %v3660, %v3661
      %v3663 = vand.u32 %v3662, 4294901760
      %3664 = vmatpush.msra.mxu0 %v3663
      %v3665 = vand.u32 %v305, 4294901760
      %v3666 = vsub.f32 %v305, %v3665
      %v3667 = vand.u32 %v3666, 4294901760
      %v3668 = vsub.f32 %v3666, %v3667
      %v3669 = vand.u32 %v3668, 4294901760
      %3670 = vmatpush.msra.mxu0 %v3669
      %v3671 = vand.u32 %v301, 4294901760
      %v3672 = vsub.f32 %v301, %v3671
      %v3673 = vand.u32 %v3672, 4294901760
      %v3674 = vsub.f32 %v3672, %v3673
      %v3675 = vand.u32 %v3674, 4294901760
      %3676 = vmatpush.msra.mxu0 %v3675
      %v3677 = vand.u32 %v297, 4294901760
      %v3678 = vsub.f32 %v297, %v3677
      %v3679 = vand.u32 %v3678, 4294901760
      %v3680 = vsub.f32 %v3678, %v3679
      %v3681 = vand.u32 %v3680, 4294901760
      %3682 = vmatpush.msra.mxu0 %v3681
      %v3683 = vand.u32 %v293, 4294901760
      %v3684 = vsub.f32 %v293, %v3683
      %v3685 = vand.u32 %v3684, 4294901760
      %v3686 = vsub.f32 %v3684, %v3685
      %v3687 = vand.u32 %v3686, 4294901760
      %3688 = vmatpush.msra.mxu0 %v3687
      %v3689 = vand.u32 %v224, 4294901760
      %3690 = vmatmul.f32.gmra.mxu0 %v3689
      %v3691 = vpop.f32.mrf.mxu0
      %v3692 = vadd.f32 %v3591, %v3691
      %3693 = vdwg.mxu0
      %v3694 = vand.u32 %v353, 4294901760
      %v3695 = vsub.f32 %v353, %v3694
      %3696 = vmatpush.msra.mxu0 %v3695
      %v3697 = vand.u32 %v349, 4294901760
      %v3698 = vsub.f32 %v349, %v3697
      %3699 = vmatpush.msra.mxu0 %v3698
      %v3700 = vand.u32 %v345, 4294901760
      %v3701 = vsub.f32 %v345, %v3700
      %3702 = vmatpush.msra.mxu0 %v3701
      %v3703 = vand.u32 %v341, 4294901760
      %v3704 = vsub.f32 %v341, %v3703
      %3705 = vmatpush.msra.mxu0 %v3704
      %v3706 = vand.u32 %v337, 4294901760
      %v3707 = vsub.f32 %v337, %v3706
      %3708 = vmatpush.msra.mxu0 %v3707
      %v3709 = vand.u32 %v333, 4294901760
      %v3710 = vsub.f32 %v333, %v3709
      %3711 = vmatpush.msra.mxu0 %v3710
      %v3712 = vand.u32 %v329, 4294901760
      %v3713 = vsub.f32 %v329, %v3712
      %3714 = vmatpush.msra.mxu0 %v3713
      %v3715 = vand.u32 %v325, 4294901760
      %v3716 = vsub.f32 %v325, %v3715
      %3717 = vmatpush.msra.mxu0 %v3716
      %v3718 = vand.u32 %v321, 4294901760
      %v3719 = vsub.f32 %v321, %v3718
      %3720 = vmatpush.msra.mxu0 %v3719
      %v3721 = vand.u32 %v317, 4294901760
      %v3722 = vsub.f32 %v317, %v3721
      %3723 = vmatpush.msra.mxu0 %v3722
      %v3724 = vand.u32 %v313, 4294901760
      %v3725 = vsub.f32 %v313, %v3724
      %3726 = vmatpush.msra.mxu0 %v3725
      %v3727 = vand.u32 %v309, 4294901760
      %v3728 = vsub.f32 %v309, %v3727
      %3729 = vmatpush.msra.mxu0 %v3728
      %v3730 = vand.u32 %v305, 4294901760
      %v3731 = vsub.f32 %v305, %v3730
      %3732 = vmatpush.msra.mxu0 %v3731
      %v3733 = vand.u32 %v301, 4294901760
      %v3734 = vsub.f32 %v301, %v3733
      %3735 = vmatpush.msra.mxu0 %v3734
      %v3736 = vand.u32 %v297, 4294901760
      %v3737 = vsub.f32 %v297, %v3736
      %3738 = vmatpush.msra.mxu0 %v3737
      %v3739 = vand.u32 %v293, 4294901760
      %v3740 = vsub.f32 %v293, %v3739
      %3741 = vmatpush.msra.mxu0 %v3740
      %v3742 = vand.u32 %v224, 4294901760
      %v3743 = vsub.f32 %v224, %v3742
      %3744 = vmatmul.f32.gmra.mxu0 %v3743
      %v3745 = vpop.f32.mrf.mxu0
      %v3746 = vadd.f32 %v3692, %v3745
      %3747 = vdwg.mxu0
      %v3748 = vand.u32 %v353, 4294901760
      %3749 = vmatpush.msra.mxu0 %v3748
      %v3750 = vand.u32 %v349, 4294901760
      %3751 = vmatpush.msra.mxu0 %v3750
      %v3752 = vand.u32 %v345, 4294901760
      %3753 = vmatpush.msra.mxu0 %v3752
      %v3754 = vand.u32 %v341, 4294901760
      %3755 = vmatpush.msra.mxu0 %v3754
      %v3756 = vand.u32 %v337, 4294901760
      %3757 = vmatpush.msra.mxu0 %v3756
      %v3758 = vand.u32 %v333, 4294901760
      %3759 = vmatpush.msra.mxu0 %v3758
      %v3760 = vand.u32 %v329, 4294901760
      %3761 = vmatpush.msra.mxu0 %v3760
      %v3762 = vand.u32 %v325, 4294901760
      %3763 = vmatpush.msra.mxu0 %v3762
      %v3764 = vand.u32 %v321, 4294901760
      %3765 = vmatpush.msra.mxu0 %v3764
      %v3766 = vand.u32 %v317, 4294901760
      %3767 = vmatpush.msra.mxu0 %v3766
      %v3768 = vand.u32 %v313, 4294901760
      %3769 = vmatpush.msra.mxu0 %v3768
      %v3770 = vand.u32 %v309, 4294901760
      %3771 = vmatpush.msra.mxu0 %v3770
      %v3772 = vand.u32 %v305, 4294901760
      %3773 = vmatpush.msra.mxu0 %v3772
      %v3774 = vand.u32 %v301, 4294901760
      %3775 = vmatpush.msra.mxu0 %v3774
      %v3776 = vand.u32 %v297, 4294901760
      %3777 = vmatpush.msra.mxu0 %v3776
      %v3778 = vand.u32 %v293, 4294901760
      %3779 = vmatpush.msra.mxu0 %v3778
      %v3780 = vand.u32 %v224, 4294901760
      %v3781 = vsub.f32 %v224, %v3780
      %v3782 = vand.u32 %v3781, 4294901760
      %3783 = vmatmul.f32.gmra.mxu0 %v3782
      %v3784 = vpop.f32.mrf.mxu0
      %v3785 = vadd.f32 %v3746, %v3784
      %3786 = vdwg.mxu0
      %v3787 = vand.u32 %v353, 4294901760
      %v3788 = vsub.f32 %v353, %v3787
      %v3789 = vand.u32 %v3788, 4294901760
      %3790 = vmatpush.msra.mxu0 %v3789
      %v3791 = vand.u32 %v349, 4294901760
      %v3792 = vsub.f32 %v349, %v3791
      %v3793 = vand.u32 %v3792, 4294901760
      %3794 = vmatpush.msra.mxu0 %v3793
      %v3795 = vand.u32 %v345, 4294901760
      %v3796 = vsub.f32 %v345, %v3795
      %v3797 = vand.u32 %v3796, 4294901760
      %3798 = vmatpush.msra.mxu0 %v3797
      %v3799 = vand.u32 %v341, 4294901760
      %v3800 = vsub.f32 %v341, %v3799
      %v3801 = vand.u32 %v3800, 4294901760
      %3802 = vmatpush.msra.mxu0 %v3801
      %v3803 = vand.u32 %v337, 4294901760
      %v3804 = vsub.f32 %v337, %v3803
      %v3805 = vand.u32 %v3804, 4294901760
      %3806 = vmatpush.msra.mxu0 %v3805
      %v3807 = vand.u32 %v333, 4294901760
      %v3808 = vsub.f32 %v333, %v3807
      %v3809 = vand.u32 %v3808, 4294901760
      %3810 = vmatpush.msra.mxu0 %v3809
      %v3811 = vand.u32 %v329, 4294901760
      %v3812 = vsub.f32 %v329, %v3811
      %v3813 = vand.u32 %v3812, 4294901760
      %3814 = vmatpush.msra.mxu0 %v3813
      %v3815 = vand.u32 %v325, 4294901760
      %v3816 = vsub.f32 %v325, %v3815
      %v3817 = vand.u32 %v3816, 4294901760
      %3818 = vmatpush.msra.mxu0 %v3817
      %v3819 = vand.u32 %v321, 4294901760
      %v3820 = vsub.f32 %v321, %v3819
      %v3821 = vand.u32 %v3820, 4294901760
      %3822 = vmatpush.msra.mxu0 %v3821
      %v3823 = vand.u32 %v317, 4294901760
      %v3824 = vsub.f32 %v317, %v3823
      %v3825 = vand.u32 %v3824, 4294901760
      %3826 = vmatpush.msra.mxu0 %v3825
      %v3827 = vand.u32 %v313, 4294901760
      %v3828 = vsub.f32 %v313, %v3827
      %v3829 = vand.u32 %v3828, 4294901760
      %3830 = vmatpush.msra.mxu0 %v3829
      %v3831 = vand.u32 %v309, 4294901760
      %v3832 = vsub.f32 %v309, %v3831
      %v3833 = vand.u32 %v3832, 4294901760
      %3834 = vmatpush.msra.mxu0 %v3833
      %v3835 = vand.u32 %v305, 4294901760
      %v3836 = vsub.f32 %v305, %v3835
      %v3837 = vand.u32 %v3836, 4294901760
      %3838 = vmatpush.msra.mxu0 %v3837
      %v3839 = vand.u32 %v301, 4294901760
      %v3840 = vsub.f32 %v301, %v3839
      %v3841 = vand.u32 %v3840, 4294901760
      %3842 = vmatpush.msra.mxu0 %v3841
      %v3843 = vand.u32 %v297, 4294901760
      %v3844 = vsub.f32 %v297, %v3843
      %v3845 = vand.u32 %v3844, 4294901760
      %3846 = vmatpush.msra.mxu0 %v3845
      %v3847 = vand.u32 %v293, 4294901760
      %v3848 = vsub.f32 %v293, %v3847
      %v3849 = vand.u32 %v3848, 4294901760
      %3850 = vmatpush.msra.mxu0 %v3849
      %v3851 = vand.u32 %v224, 4294901760
      %3852 = vmatmul.f32.gmra.mxu0 %v3851
      %v3853 = vpop.f32.mrf.mxu0
      %v3854 = vadd.f32 %v3785, %v3853
      %3855 = vdwg.mxu0
      %v3856 = vand.u32 %v353, 4294901760
      %3857 = vmatpush.msra.mxu0 %v3856
      %v3858 = vand.u32 %v349, 4294901760
      %3859 = vmatpush.msra.mxu0 %v3858
      %v3860 = vand.u32 %v345, 4294901760
      %3861 = vmatpush.msra.mxu0 %v3860
      %v3862 = vand.u32 %v341, 4294901760
      %3863 = vmatpush.msra.mxu0 %v3862
      %v3864 = vand.u32 %v337, 4294901760
      %3865 = vmatpush.msra.mxu0 %v3864
      %v3866 = vand.u32 %v333, 4294901760
      %3867 = vmatpush.msra.mxu0 %v3866
      %v3868 = vand.u32 %v329, 4294901760
      %3869 = vmatpush.msra.mxu0 %v3868
      %v3870 = vand.u32 %v325, 4294901760
      %3871 = vmatpush.msra.mxu0 %v3870
      %v3872 = vand.u32 %v321, 4294901760
      %3873 = vmatpush.msra.mxu0 %v3872
      %v3874 = vand.u32 %v317, 4294901760
      %3875 = vmatpush.msra.mxu0 %v3874
      %v3876 = vand.u32 %v313, 4294901760
      %3877 = vmatpush.msra.mxu0 %v3876
      %v3878 = vand.u32 %v309, 4294901760
      %3879 = vmatpush.msra.mxu0 %v3878
      %v3880 = vand.u32 %v305, 4294901760
      %3881 = vmatpush.msra.mxu0 %v3880
      %v3882 = vand.u32 %v301, 4294901760
      %3883 = vmatpush.msra.mxu0 %v3882
      %v3884 = vand.u32 %v297, 4294901760
      %3885 = vmatpush.msra.mxu0 %v3884
      %v3886 = vand.u32 %v293, 4294901760
      %3887 = vmatpush.msra.mxu0 %v3886
      %v3888 = vand.u32 %v224, 4294901760
      %3889 = vmatmul.f32.gmra.mxu0 %v3888
      %v3890 = vpop.f32.mrf.mxu0
      %v3891 = vadd.f32 %v3854, %v3890
      %3892 = vdwg.mxu0
      %v3893 = vand.u32 %v417, 4294901760
      %3894 = vmatpush.msra.mxu0 %v3893
      %v3895 = vand.u32 %v413, 4294901760
      %3896 = vmatpush.msra.mxu0 %v3895
      %v3897 = vand.u32 %v409, 4294901760
      %3898 = vmatpush.msra.mxu0 %v3897
      %v3899 = vand.u32 %v405, 4294901760
      %3900 = vmatpush.msra.mxu0 %v3899
      %v3901 = vand.u32 %v401, 4294901760
      %3902 = vmatpush.msra.mxu0 %v3901
      %v3903 = vand.u32 %v397, 4294901760
      %3904 = vmatpush.msra.mxu0 %v3903
      %v3905 = vand.u32 %v393, 4294901760
      %3906 = vmatpush.msra.mxu0 %v3905
      %v3907 = vand.u32 %v389, 4294901760
      %3908 = vmatpush.msra.mxu0 %v3907
      %v3909 = vand.u32 %v385, 4294901760
      %3910 = vmatpush.msra.mxu0 %v3909
      %v3911 = vand.u32 %v381, 4294901760
      %3912 = vmatpush.msra.mxu0 %v3911
      %v3913 = vand.u32 %v377, 4294901760
      %3914 = vmatpush.msra.mxu0 %v3913
      %v3915 = vand.u32 %v373, 4294901760
      %3916 = vmatpush.msra.mxu0 %v3915
      %v3917 = vand.u32 %v369, 4294901760
      %3918 = vmatpush.msra.mxu0 %v3917
      %v3919 = vand.u32 %v365, 4294901760
      %3920 = vmatpush.msra.mxu0 %v3919
      %v3921 = vand.u32 %v361, 4294901760
      %3922 = vmatpush.msra.mxu0 %v3921
      %v3923 = vand.u32 %v357, 4294901760
      %3924 = vmatpush.msra.mxu0 %v3923
      %v3925 = vand.u32 %v225, 4294901760
      %v3926 = vsub.f32 %v225, %v3925
      %v3927 = vand.u32 %v3926, 4294901760
      %v3928 = vsub.f32 %v3926, %v3927
      %v3929 = vand.u32 %v3928, 4294901760
      %3930 = vmatmul.f32.gmra.mxu0 %v3929
      %v3931 = vpop.f32.mrf.mxu0
      %v3932 = vadd.f32 %v3891, %v3931
      %3933 = vdwg.mxu0
      %v3934 = vand.u32 %v417, 4294901760
      %v3935 = vsub.f32 %v417, %v3934
      %v3936 = vand.u32 %v3935, 4294901760
      %v3937 = vsub.f32 %v3935, %v3936
      %v3938 = vand.u32 %v3937, 4294901760
      %3939 = vmatpush.msra.mxu0 %v3938
      %v3940 = vand.u32 %v413, 4294901760
      %v3941 = vsub.f32 %v413, %v3940
      %v3942 = vand.u32 %v3941, 4294901760
      %v3943 = vsub.f32 %v3941, %v3942
      %v3944 = vand.u32 %v3943, 4294901760
      %3945 = vmatpush.msra.mxu0 %v3944
      %v3946 = vand.u32 %v409, 4294901760
      %v3947 = vsub.f32 %v409, %v3946
      %v3948 = vand.u32 %v3947, 4294901760
      %v3949 = vsub.f32 %v3947, %v3948
      %v3950 = vand.u32 %v3949, 4294901760
      %3951 = vmatpush.msra.mxu0 %v3950
      %v3952 = vand.u32 %v405, 4294901760
      %v3953 = vsub.f32 %v405, %v3952
      %v3954 = vand.u32 %v3953, 4294901760
      %v3955 = vsub.f32 %v3953, %v3954
      %v3956 = vand.u32 %v3955, 4294901760
      %3957 = vmatpush.msra.mxu0 %v3956
      %v3958 = vand.u32 %v401, 4294901760
      %v3959 = vsub.f32 %v401, %v3958
      %v3960 = vand.u32 %v3959, 4294901760
      %v3961 = vsub.f32 %v3959, %v3960
      %v3962 = vand.u32 %v3961, 4294901760
      %3963 = vmatpush.msra.mxu0 %v3962
      %v3964 = vand.u32 %v397, 4294901760
      %v3965 = vsub.f32 %v397, %v3964
      %v3966 = vand.u32 %v3965, 4294901760
      %v3967 = vsub.f32 %v3965, %v3966
      %v3968 = vand.u32 %v3967, 4294901760
      %3969 = vmatpush.msra.mxu0 %v3968
      %v3970 = vand.u32 %v393, 4294901760
      %v3971 = vsub.f32 %v393, %v3970
      %v3972 = vand.u32 %v3971, 4294901760
      %v3973 = vsub.f32 %v3971, %v3972
      %v3974 = vand.u32 %v3973, 4294901760
      %3975 = vmatpush.msra.mxu0 %v3974
      %v3976 = vand.u32 %v389, 4294901760
      %v3977 = vsub.f32 %v389, %v3976
      %v3978 = vand.u32 %v3977, 4294901760
      %v3979 = vsub.f32 %v3977, %v3978
      %v3980 = vand.u32 %v3979, 4294901760
      %3981 = vmatpush.msra.mxu0 %v3980
      %v3982 = vand.u32 %v385, 4294901760
      %v3983 = vsub.f32 %v385, %v3982
      %v3984 = vand.u32 %v3983, 4294901760
      %v3985 = vsub.f32 %v3983, %v3984
      %v3986 = vand.u32 %v3985, 4294901760
      %3987 = vmatpush.msra.mxu0 %v3986
      %v3988 = vand.u32 %v381, 4294901760
      %v3989 = vsub.f32 %v381, %v3988
      %v3990 = vand.u32 %v3989, 4294901760
      %v3991 = vsub.f32 %v3989, %v3990
      %v3992 = vand.u32 %v3991, 4294901760
      %3993 = vmatpush.msra.mxu0 %v3992
      %v3994 = vand.u32 %v377, 4294901760
      %v3995 = vsub.f32 %v377, %v3994
      %v3996 = vand.u32 %v3995, 4294901760
      %v3997 = vsub.f32 %v3995, %v3996
      %v3998 = vand.u32 %v3997, 4294901760
      %3999 = vmatpush.msra.mxu0 %v3998
      %v4000 = vand.u32 %v373, 4294901760
      %v4001 = vsub.f32 %v373, %v4000
      %v4002 = vand.u32 %v4001, 4294901760
      %v4003 = vsub.f32 %v4001, %v4002
      %v4004 = vand.u32 %v4003, 4294901760
      %4005 = vmatpush.msra.mxu0 %v4004
      %v4006 = vand.u32 %v369, 4294901760
      %v4007 = vsub.f32 %v369, %v4006
      %v4008 = vand.u32 %v4007, 4294901760
      %v4009 = vsub.f32 %v4007, %v4008
      %v4010 = vand.u32 %v4009, 4294901760
      %4011 = vmatpush.msra.mxu0 %v4010
      %v4012 = vand.u32 %v365, 4294901760
      %v4013 = vsub.f32 %v365, %v4012
      %v4014 = vand.u32 %v4013, 4294901760
      %v4015 = vsub.f32 %v4013, %v4014
      %v4016 = vand.u32 %v4015, 4294901760
      %4017 = vmatpush.msra.mxu0 %v4016
      %v4018 = vand.u32 %v361, 4294901760
      %v4019 = vsub.f32 %v361, %v4018
      %v4020 = vand.u32 %v4019, 4294901760
      %v4021 = vsub.f32 %v4019, %v4020
      %v4022 = vand.u32 %v4021, 4294901760
      %4023 = vmatpush.msra.mxu0 %v4022
      %v4024 = vand.u32 %v357, 4294901760
      %v4025 = vsub.f32 %v357, %v4024
      %v4026 = vand.u32 %v4025, 4294901760
      %v4027 = vsub.f32 %v4025, %v4026
      %v4028 = vand.u32 %v4027, 4294901760
      %4029 = vmatpush.msra.mxu0 %v4028
      %v4030 = vand.u32 %v225, 4294901760
      %4031 = vmatmul.f32.gmra.mxu0 %v4030
      %v4032 = vpop.f32.mrf.mxu0
      %v4033 = vadd.f32 %v3932, %v4032
      %4034 = vdwg.mxu0
      %v4035 = vand.u32 %v417, 4294901760
      %v4036 = vsub.f32 %v417, %v4035
      %4037 = vmatpush.msra.mxu0 %v4036
      %v4038 = vand.u32 %v413, 4294901760
      %v4039 = vsub.f32 %v413, %v4038
      %4040 = vmatpush.msra.mxu0 %v4039
      %v4041 = vand.u32 %v409, 4294901760
      %v4042 = vsub.f32 %v409, %v4041
      %4043 = vmatpush.msra.mxu0 %v4042
      %v4044 = vand.u32 %v405, 4294901760
      %v4045 = vsub.f32 %v405, %v4044
      %4046 = vmatpush.msra.mxu0 %v4045
      %v4047 = vand.u32 %v401, 4294901760
      %v4048 = vsub.f32 %v401, %v4047
      %4049 = vmatpush.msra.mxu0 %v4048
      %v4050 = vand.u32 %v397, 4294901760
      %v4051 = vsub.f32 %v397, %v4050
      %4052 = vmatpush.msra.mxu0 %v4051
      %v4053 = vand.u32 %v393, 4294901760
      %v4054 = vsub.f32 %v393, %v4053
      %4055 = vmatpush.msra.mxu0 %v4054
      %v4056 = vand.u32 %v389, 4294901760
      %v4057 = vsub.f32 %v389, %v4056
      %4058 = vmatpush.msra.mxu0 %v4057
      %v4059 = vand.u32 %v385, 4294901760
      %v4060 = vsub.f32 %v385, %v4059
      %4061 = vmatpush.msra.mxu0 %v4060
      %v4062 = vand.u32 %v381, 4294901760
      %v4063 = vsub.f32 %v381, %v4062
      %4064 = vmatpush.msra.mxu0 %v4063
      %v4065 = vand.u32 %v377, 4294901760
      %v4066 = vsub.f32 %v377, %v4065
      %4067 = vmatpush.msra.mxu0 %v4066
      %v4068 = vand.u32 %v373, 4294901760
      %v4069 = vsub.f32 %v373, %v4068
      %4070 = vmatpush.msra.mxu0 %v4069
      %v4071 = vand.u32 %v369, 4294901760
      %v4072 = vsub.f32 %v369, %v4071
      %4073 = vmatpush.msra.mxu0 %v4072
      %v4074 = vand.u32 %v365, 4294901760
      %v4075 = vsub.f32 %v365, %v4074
      %4076 = vmatpush.msra.mxu0 %v4075
      %v4077 = vand.u32 %v361, 4294901760
      %v4078 = vsub.f32 %v361, %v4077
      %4079 = vmatpush.msra.mxu0 %v4078
      %v4080 = vand.u32 %v357, 4294901760
      %v4081 = vsub.f32 %v357, %v4080
      %4082 = vmatpush.msra.mxu0 %v4081
      %v4083 = vand.u32 %v225, 4294901760
      %v4084 = vsub.f32 %v225, %v4083
      %4085 = vmatmul.f32.gmra.mxu0 %v4084
      %v4086 = vpop.f32.mrf.mxu0
      %v4087 = vadd.f32 %v4033, %v4086
      %4088 = vdwg.mxu0
      %v4089 = vand.u32 %v417, 4294901760
      %4090 = vmatpush.msra.mxu0 %v4089
      %v4091 = vand.u32 %v413, 4294901760
      %4092 = vmatpush.msra.mxu0 %v4091
      %v4093 = vand.u32 %v409, 4294901760
      %4094 = vmatpush.msra.mxu0 %v4093
      %v4095 = vand.u32 %v405, 4294901760
      %4096 = vmatpush.msra.mxu0 %v4095
      %v4097 = vand.u32 %v401, 4294901760
      %4098 = vmatpush.msra.mxu0 %v4097
      %v4099 = vand.u32 %v397, 4294901760
      %4100 = vmatpush.msra.mxu0 %v4099
      %v4101 = vand.u32 %v393, 4294901760
      %4102 = vmatpush.msra.mxu0 %v4101
      %v4103 = vand.u32 %v389, 4294901760
      %4104 = vmatpush.msra.mxu0 %v4103
      %v4105 = vand.u32 %v385, 4294901760
      %4106 = vmatpush.msra.mxu0 %v4105
      %v4107 = vand.u32 %v381, 4294901760
      %4108 = vmatpush.msra.mxu0 %v4107
      %v4109 = vand.u32 %v377, 4294901760
      %4110 = vmatpush.msra.mxu0 %v4109
      %v4111 = vand.u32 %v373, 4294901760
      %4112 = vmatpush.msra.mxu0 %v4111
      %v4113 = vand.u32 %v369, 4294901760
      %4114 = vmatpush.msra.mxu0 %v4113
      %v4115 = vand.u32 %v365, 4294901760
      %4116 = vmatpush.msra.mxu0 %v4115
      %v4117 = vand.u32 %v361, 4294901760
      %4118 = vmatpush.msra.mxu0 %v4117
      %v4119 = vand.u32 %v357, 4294901760
      %4120 = vmatpush.msra.mxu0 %v4119
      %v4121 = vand.u32 %v225, 4294901760
      %v4122 = vsub.f32 %v225, %v4121
      %v4123 = vand.u32 %v4122, 4294901760
      %4124 = vmatmul.f32.gmra.mxu0 %v4123
      %v4125 = vpop.f32.mrf.mxu0
      %v4126 = vadd.f32 %v4087, %v4125
      %4127 = vdwg.mxu0
      %v4128 = vand.u32 %v417, 4294901760
      %v4129 = vsub.f32 %v417, %v4128
      %v4130 = vand.u32 %v4129, 4294901760
      %4131 = vmatpush.msra.mxu0 %v4130
      %v4132 = vand.u32 %v413, 4294901760
      %v4133 = vsub.f32 %v413, %v4132
      %v4134 = vand.u32 %v4133, 4294901760
      %4135 = vmatpush.msra.mxu0 %v4134
      %v4136 = vand.u32 %v409, 4294901760
      %v4137 = vsub.f32 %v409, %v4136
      %v4138 = vand.u32 %v4137, 4294901760
      %4139 = vmatpush.msra.mxu0 %v4138
      %v4140 = vand.u32 %v405, 4294901760
      %v4141 = vsub.f32 %v405, %v4140
      %v4142 = vand.u32 %v4141, 4294901760
      %4143 = vmatpush.msra.mxu0 %v4142
      %v4144 = vand.u32 %v401, 4294901760
      %v4145 = vsub.f32 %v401, %v4144
      %v4146 = vand.u32 %v4145, 4294901760
      %4147 = vmatpush.msra.mxu0 %v4146
      %v4148 = vand.u32 %v397, 4294901760
      %v4149 = vsub.f32 %v397, %v4148
      %v4150 = vand.u32 %v4149, 4294901760
      %4151 = vmatpush.msra.mxu0 %v4150
      %v4152 = vand.u32 %v393, 4294901760
      %v4153 = vsub.f32 %v393, %v4152
      %v4154 = vand.u32 %v4153, 4294901760
      %4155 = vmatpush.msra.mxu0 %v4154
      %v4156 = vand.u32 %v389, 4294901760
      %v4157 = vsub.f32 %v389, %v4156
      %v4158 = vand.u32 %v4157, 4294901760
      %4159 = vmatpush.msra.mxu0 %v4158
      %v4160 = vand.u32 %v385, 4294901760
      %v4161 = vsub.f32 %v385, %v4160
      %v4162 = vand.u32 %v4161, 4294901760
      %4163 = vmatpush.msra.mxu0 %v4162
      %v4164 = vand.u32 %v381, 4294901760
      %v4165 = vsub.f32 %v381, %v4164
      %v4166 = vand.u32 %v4165, 4294901760
      %4167 = vmatpush.msra.mxu0 %v4166
      %v4168 = vand.u32 %v377, 4294901760
      %v4169 = vsub.f32 %v377, %v4168
      %v4170 = vand.u32 %v4169, 4294901760
      %4171 = vmatpush.msra.mxu0 %v4170
      %v4172 = vand.u32 %v373, 4294901760
      %v4173 = vsub.f32 %v373, %v4172
      %v4174 = vand.u32 %v4173, 4294901760
      %4175 = vmatpush.msra.mxu0 %v4174
      %v4176 = vand.u32 %v369, 4294901760
      %v4177 = vsub.f32 %v369, %v4176
      %v4178 = vand.u32 %v4177, 4294901760
      %4179 = vmatpush.msra.mxu0 %v4178
      %v4180 = vand.u32 %v365, 4294901760
      %v4181 = vsub.f32 %v365, %v4180
      %v4182 = vand.u32 %v4181, 4294901760
      %4183 = vmatpush.msra.mxu0 %v4182
      %v4184 = vand.u32 %v361, 4294901760
      %v4185 = vsub.f32 %v361, %v4184
      %v4186 = vand.u32 %v4185, 4294901760
      %4187 = vmatpush.msra.mxu0 %v4186
      %v4188 = vand.u32 %v357, 4294901760
      %v4189 = vsub.f32 %v357, %v4188
      %v4190 = vand.u32 %v4189, 4294901760
      %4191 = vmatpush.msra.mxu0 %v4190
      %v4192 = vand.u32 %v225, 4294901760
      %4193 = vmatmul.f32.gmra.mxu0 %v4192
      %v4194 = vpop.f32.mrf.mxu0
      %v4195 = vadd.f32 %v4126, %v4194
      %4196 = vdwg.mxu0
      %v4197 = vand.u32 %v417, 4294901760
      %4198 = vmatpush.msra.mxu0 %v4197
      %v4199 = vand.u32 %v413, 4294901760
      %4200 = vmatpush.msra.mxu0 %v4199
      %v4201 = vand.u32 %v409, 4294901760
      %4202 = vmatpush.msra.mxu0 %v4201
      %v4203 = vand.u32 %v405, 4294901760
      %4204 = vmatpush.msra.mxu0 %v4203
      %v4205 = vand.u32 %v401, 4294901760
      %4206 = vmatpush.msra.mxu0 %v4205
      %v4207 = vand.u32 %v397, 4294901760
      %4208 = vmatpush.msra.mxu0 %v4207
      %v4209 = vand.u32 %v393, 4294901760
      %4210 = vmatpush.msra.mxu0 %v4209
      %v4211 = vand.u32 %v389, 4294901760
      %4212 = vmatpush.msra.mxu0 %v4211
      %v4213 = vand.u32 %v385, 4294901760
      %4214 = vmatpush.msra.mxu0 %v4213
      %v4215 = vand.u32 %v381, 4294901760
      %4216 = vmatpush.msra.mxu0 %v4215
      %v4217 = vand.u32 %v377, 4294901760
      %4218 = vmatpush.msra.mxu0 %v4217
      %v4219 = vand.u32 %v373, 4294901760
      %4220 = vmatpush.msra.mxu0 %v4219
      %v4221 = vand.u32 %v369, 4294901760
      %4222 = vmatpush.msra.mxu0 %v4221
      %v4223 = vand.u32 %v365, 4294901760
      %4224 = vmatpush.msra.mxu0 %v4223
      %v4225 = vand.u32 %v361, 4294901760
      %4226 = vmatpush.msra.mxu0 %v4225
      %v4227 = vand.u32 %v357, 4294901760
      %4228 = vmatpush.msra.mxu0 %v4227
      %v4229 = vand.u32 %v225, 4294901760
      %4230 = vmatmul.f32.gmra.mxu0 %v4229
      %v4231 = vpop.f32.mrf.mxu0
      %v4232 = vadd.f32 %v4195, %v4231
      %4233 = vdwg.mxu0
      %v4234 = vand.u32 %v481, 4294901760
      %4235 = vmatpush.msra.mxu0 %v4234
      %v4236 = vand.u32 %v477, 4294901760
      %4237 = vmatpush.msra.mxu0 %v4236
      %v4238 = vand.u32 %v473, 4294901760
      %4239 = vmatpush.msra.mxu0 %v4238
      %v4240 = vand.u32 %v469, 4294901760
      %4241 = vmatpush.msra.mxu0 %v4240
      %v4242 = vand.u32 %v465, 4294901760
      %4243 = vmatpush.msra.mxu0 %v4242
      %v4244 = vand.u32 %v461, 4294901760
      %4245 = vmatpush.msra.mxu0 %v4244
      %v4246 = vand.u32 %v457, 4294901760
      %4247 = vmatpush.msra.mxu0 %v4246
      %v4248 = vand.u32 %v453, 4294901760
      %4249 = vmatpush.msra.mxu0 %v4248
      %v4250 = vand.u32 %v449, 4294901760
      %4251 = vmatpush.msra.mxu0 %v4250
      %v4252 = vand.u32 %v445, 4294901760
      %4253 = vmatpush.msra.mxu0 %v4252
      %v4254 = vand.u32 %v441, 4294901760
      %4255 = vmatpush.msra.mxu0 %v4254
      %v4256 = vand.u32 %v437, 4294901760
      %4257 = vmatpush.msra.mxu0 %v4256
      %v4258 = vand.u32 %v433, 4294901760
      %4259 = vmatpush.msra.mxu0 %v4258
      %v4260 = vand.u32 %v429, 4294901760
      %4261 = vmatpush.msra.mxu0 %v4260
      %v4262 = vand.u32 %v425, 4294901760
      %4263 = vmatpush.msra.mxu0 %v4262
      %v4264 = vand.u32 %v421, 4294901760
      %4265 = vmatpush.msra.mxu0 %v4264
      %v4266 = vand.u32 %v226, 4294901760
      %v4267 = vsub.f32 %v226, %v4266
      %v4268 = vand.u32 %v4267, 4294901760
      %v4269 = vsub.f32 %v4267, %v4268
      %v4270 = vand.u32 %v4269, 4294901760
      %4271 = vmatmul.f32.gmra.mxu0 %v4270
      %v4272 = vpop.f32.mrf.mxu0
      %v4273 = vadd.f32 %v4232, %v4272
      %4274 = vdwg.mxu0
      %v4275 = vand.u32 %v481, 4294901760
      %v4276 = vsub.f32 %v481, %v4275
      %v4277 = vand.u32 %v4276, 4294901760
      %v4278 = vsub.f32 %v4276, %v4277
      %v4279 = vand.u32 %v4278, 4294901760
      %4280 = vmatpush.msra.mxu0 %v4279
      %v4281 = vand.u32 %v477, 4294901760
      %v4282 = vsub.f32 %v477, %v4281
      %v4283 = vand.u32 %v4282, 4294901760
      %v4284 = vsub.f32 %v4282, %v4283
      %v4285 = vand.u32 %v4284, 4294901760
      %4286 = vmatpush.msra.mxu0 %v4285
      %v4287 = vand.u32 %v473, 4294901760
      %v4288 = vsub.f32 %v473, %v4287
      %v4289 = vand.u32 %v4288, 4294901760
      %v4290 = vsub.f32 %v4288, %v4289
      %v4291 = vand.u32 %v4290, 4294901760
      %4292 = vmatpush.msra.mxu0 %v4291
      %v4293 = vand.u32 %v469, 4294901760
      %v4294 = vsub.f32 %v469, %v4293
      %v4295 = vand.u32 %v4294, 4294901760
      %v4296 = vsub.f32 %v4294, %v4295
      %v4297 = vand.u32 %v4296, 4294901760
      %4298 = vmatpush.msra.mxu0 %v4297
      %v4299 = vand.u32 %v465, 4294901760
      %v4300 = vsub.f32 %v465, %v4299
      %v4301 = vand.u32 %v4300, 4294901760
      %v4302 = vsub.f32 %v4300, %v4301
      %v4303 = vand.u32 %v4302, 4294901760
      %4304 = vmatpush.msra.mxu0 %v4303
      %v4305 = vand.u32 %v461, 4294901760
      %v4306 = vsub.f32 %v461, %v4305
      %v4307 = vand.u32 %v4306, 4294901760
      %v4308 = vsub.f32 %v4306, %v4307
      %v4309 = vand.u32 %v4308, 4294901760
      %4310 = vmatpush.msra.mxu0 %v4309
      %v4311 = vand.u32 %v457, 4294901760
      %v4312 = vsub.f32 %v457, %v4311
      %v4313 = vand.u32 %v4312, 4294901760
      %v4314 = vsub.f32 %v4312, %v4313
      %v4315 = vand.u32 %v4314, 4294901760
      %4316 = vmatpush.msra.mxu0 %v4315
      %v4317 = vand.u32 %v453, 4294901760
      %v4318 = vsub.f32 %v453, %v4317
      %v4319 = vand.u32 %v4318, 4294901760
      %v4320 = vsub.f32 %v4318, %v4319
      %v4321 = vand.u32 %v4320, 4294901760
      %4322 = vmatpush.msra.mxu0 %v4321
      %v4323 = vand.u32 %v449, 4294901760
      %v4324 = vsub.f32 %v449, %v4323
      %v4325 = vand.u32 %v4324, 4294901760
      %v4326 = vsub.f32 %v4324, %v4325
      %v4327 = vand.u32 %v4326, 4294901760
      %4328 = vmatpush.msra.mxu0 %v4327
      %v4329 = vand.u32 %v445, 4294901760
      %v4330 = vsub.f32 %v445, %v4329
      %v4331 = vand.u32 %v4330, 4294901760
      %v4332 = vsub.f32 %v4330, %v4331
      %v4333 = vand.u32 %v4332, 4294901760
      %4334 = vmatpush.msra.mxu0 %v4333
      %v4335 = vand.u32 %v441, 4294901760
      %v4336 = vsub.f32 %v441, %v4335
      %v4337 = vand.u32 %v4336, 4294901760
      %v4338 = vsub.f32 %v4336, %v4337
      %v4339 = vand.u32 %v4338, 4294901760
      %4340 = vmatpush.msra.mxu0 %v4339
      %v4341 = vand.u32 %v437, 4294901760
      %v4342 = vsub.f32 %v437, %v4341
      %v4343 = vand.u32 %v4342, 4294901760
      %v4344 = vsub.f32 %v4342, %v4343
      %v4345 = vand.u32 %v4344, 4294901760
      %4346 = vmatpush.msra.mxu0 %v4345
      %v4347 = vand.u32 %v433, 4294901760
      %v4348 = vsub.f32 %v433, %v4347
      %v4349 = vand.u32 %v4348, 4294901760
      %v4350 = vsub.f32 %v4348, %v4349
      %v4351 = vand.u32 %v4350, 4294901760
      %4352 = vmatpush.msra.mxu0 %v4351
      %v4353 = vand.u32 %v429, 4294901760
      %v4354 = vsub.f32 %v429, %v4353
      %v4355 = vand.u32 %v4354, 4294901760
      %v4356 = vsub.f32 %v4354, %v4355
      %v4357 = vand.u32 %v4356, 4294901760
      %4358 = vmatpush.msra.mxu0 %v4357
      %v4359 = vand.u32 %v425, 4294901760
      %v4360 = vsub.f32 %v425, %v4359
      %v4361 = vand.u32 %v4360, 4294901760
      %v4362 = vsub.f32 %v4360, %v4361
      %v4363 = vand.u32 %v4362, 4294901760
      %4364 = vmatpush.msra.mxu0 %v4363
      %v4365 = vand.u32 %v421, 4294901760
      %v4366 = vsub.f32 %v421, %v4365
      %v4367 = vand.u32 %v4366, 4294901760
      %v4368 = vsub.f32 %v4366, %v4367
      %v4369 = vand.u32 %v4368, 4294901760
      %4370 = vmatpush.msra.mxu0 %v4369
      %v4371 = vand.u32 %v226, 4294901760
      %4372 = vmatmul.f32.gmra.mxu0 %v4371
      %v4373 = vpop.f32.mrf.mxu0
      %v4374 = vadd.f32 %v4273, %v4373
      %4375 = vdwg.mxu0
      %v4376 = vand.u32 %v481, 4294901760
      %v4377 = vsub.f32 %v481, %v4376
      %4378 = vmatpush.msra.mxu0 %v4377
      %v4379 = vand.u32 %v477, 4294901760
      %v4380 = vsub.f32 %v477, %v4379
      %4381 = vmatpush.msra.mxu0 %v4380
      %v4382 = vand.u32 %v473, 4294901760
      %v4383 = vsub.f32 %v473, %v4382
      %4384 = vmatpush.msra.mxu0 %v4383
      %v4385 = vand.u32 %v469, 4294901760
      %v4386 = vsub.f32 %v469, %v4385
      %4387 = vmatpush.msra.mxu0 %v4386
      %v4388 = vand.u32 %v465, 4294901760
      %v4389 = vsub.f32 %v465, %v4388
      %4390 = vmatpush.msra.mxu0 %v4389
      %v4391 = vand.u32 %v461, 4294901760
      %v4392 = vsub.f32 %v461, %v4391
      %4393 = vmatpush.msra.mxu0 %v4392
      %v4394 = vand.u32 %v457, 4294901760
      %v4395 = vsub.f32 %v457, %v4394
      %4396 = vmatpush.msra.mxu0 %v4395
      %v4397 = vand.u32 %v453, 4294901760
      %v4398 = vsub.f32 %v453, %v4397
      %4399 = vmatpush.msra.mxu0 %v4398
      %v4400 = vand.u32 %v449, 4294901760
      %v4401 = vsub.f32 %v449, %v4400
      %4402 = vmatpush.msra.mxu0 %v4401
      %v4403 = vand.u32 %v445, 4294901760
      %v4404 = vsub.f32 %v445, %v4403
      %4405 = vmatpush.msra.mxu0 %v4404
      %v4406 = vand.u32 %v441, 4294901760
      %v4407 = vsub.f32 %v441, %v4406
      %4408 = vmatpush.msra.mxu0 %v4407
      %v4409 = vand.u32 %v437, 4294901760
      %v4410 = vsub.f32 %v437, %v4409
      %4411 = vmatpush.msra.mxu0 %v4410
      %v4412 = vand.u32 %v433, 4294901760
      %v4413 = vsub.f32 %v433, %v4412
      %4414 = vmatpush.msra.mxu0 %v4413
      %v4415 = vand.u32 %v429, 4294901760
      %v4416 = vsub.f32 %v429, %v4415
      %4417 = vmatpush.msra.mxu0 %v4416
      %v4418 = vand.u32 %v425, 4294901760
      %v4419 = vsub.f32 %v425, %v4418
      %4420 = vmatpush.msra.mxu0 %v4419
      %v4421 = vand.u32 %v421, 4294901760
      %v4422 = vsub.f32 %v421, %v4421
      %4423 = vmatpush.msra.mxu0 %v4422
      %v4424 = vand.u32 %v226, 4294901760
      %v4425 = vsub.f32 %v226, %v4424
      %4426 = vmatmul.f32.gmra.mxu0 %v4425
      %v4427 = vpop.f32.mrf.mxu0
      %v4428 = vadd.f32 %v4374, %v4427
      %4429 = vdwg.mxu0
      %v4430 = vand.u32 %v481, 4294901760
      %4431 = vmatpush.msra.mxu0 %v4430
      %v4432 = vand.u32 %v477, 4294901760
      %4433 = vmatpush.msra.mxu0 %v4432
      %v4434 = vand.u32 %v473, 4294901760
      %4435 = vmatpush.msra.mxu0 %v4434
      %v4436 = vand.u32 %v469, 4294901760
      %4437 = vmatpush.msra.mxu0 %v4436
      %v4438 = vand.u32 %v465, 4294901760
      %4439 = vmatpush.msra.mxu0 %v4438
      %v4440 = vand.u32 %v461, 4294901760
      %4441 = vmatpush.msra.mxu0 %v4440
      %v4442 = vand.u32 %v457, 4294901760
      %4443 = vmatpush.msra.mxu0 %v4442
      %v4444 = vand.u32 %v453, 4294901760
      %4445 = vmatpush.msra.mxu0 %v4444
      %v4446 = vand.u32 %v449, 4294901760
      %4447 = vmatpush.msra.mxu0 %v4446
      %v4448 = vand.u32 %v445, 4294901760
      %4449 = vmatpush.msra.mxu0 %v4448
      %v4450 = vand.u32 %v441, 4294901760
      %4451 = vmatpush.msra.mxu0 %v4450
      %v4452 = vand.u32 %v437, 4294901760
      %4453 = vmatpush.msra.mxu0 %v4452
      %v4454 = vand.u32 %v433, 4294901760
      %4455 = vmatpush.msra.mxu0 %v4454
      %v4456 = vand.u32 %v429, 4294901760
      %4457 = vmatpush.msra.mxu0 %v4456
      %v4458 = vand.u32 %v425, 4294901760
      %4459 = vmatpush.msra.mxu0 %v4458
      %v4460 = vand.u32 %v421, 4294901760
      %4461 = vmatpush.msra.mxu0 %v4460
      %v4462 = vand.u32 %v226, 4294901760
      %v4463 = vsub.f32 %v226, %v4462
      %v4464 = vand.u32 %v4463, 4294901760
      %4465 = vmatmul.f32.gmra.mxu0 %v4464
      %v4466 = vpop.f32.mrf.mxu0
      %v4467 = vadd.f32 %v4428, %v4466
      %4468 = vdwg.mxu0
      %v4469 = vand.u32 %v481, 4294901760
      %v4470 = vsub.f32 %v481, %v4469
      %v4471 = vand.u32 %v4470, 4294901760
      %4472 = vmatpush.msra.mxu0 %v4471
      %v4473 = vand.u32 %v477, 4294901760
      %v4474 = vsub.f32 %v477, %v4473
      %v4475 = vand.u32 %v4474, 4294901760
      %4476 = vmatpush.msra.mxu0 %v4475
      %v4477 = vand.u32 %v473, 4294901760
      %v4478 = vsub.f32 %v473, %v4477
      %v4479 = vand.u32 %v4478, 4294901760
      %4480 = vmatpush.msra.mxu0 %v4479
      %v4481 = vand.u32 %v469, 4294901760
      %v4482 = vsub.f32 %v469, %v4481
      %v4483 = vand.u32 %v4482, 4294901760
      %4484 = vmatpush.msra.mxu0 %v4483
      %v4485 = vand.u32 %v465, 4294901760
      %v4486 = vsub.f32 %v465, %v4485
      %v4487 = vand.u32 %v4486, 4294901760
      %4488 = vmatpush.msra.mxu0 %v4487
      %v4489 = vand.u32 %v461, 4294901760
      %v4490 = vsub.f32 %v461, %v4489
      %v4491 = vand.u32 %v4490, 4294901760
      %4492 = vmatpush.msra.mxu0 %v4491
      %v4493 = vand.u32 %v457, 4294901760
      %v4494 = vsub.f32 %v457, %v4493
      %v4495 = vand.u32 %v4494, 4294901760
      %4496 = vmatpush.msra.mxu0 %v4495
      %v4497 = vand.u32 %v453, 4294901760
      %v4498 = vsub.f32 %v453, %v4497
      %v4499 = vand.u32 %v4498, 4294901760
      %4500 = vmatpush.msra.mxu0 %v4499
      %v4501 = vand.u32 %v449, 4294901760
      %v4502 = vsub.f32 %v449, %v4501
      %v4503 = vand.u32 %v4502, 4294901760
      %4504 = vmatpush.msra.mxu0 %v4503
      %v4505 = vand.u32 %v445, 4294901760
      %v4506 = vsub.f32 %v445, %v4505
      %v4507 = vand.u32 %v4506, 4294901760
      %4508 = vmatpush.msra.mxu0 %v4507
      %v4509 = vand.u32 %v441, 4294901760
      %v4510 = vsub.f32 %v441, %v4509
      %v4511 = vand.u32 %v4510, 4294901760
      %4512 = vmatpush.msra.mxu0 %v4511
      %v4513 = vand.u32 %v437, 4294901760
      %v4514 = vsub.f32 %v437, %v4513
      %v4515 = vand.u32 %v4514, 4294901760
      %4516 = vmatpush.msra.mxu0 %v4515
      %v4517 = vand.u32 %v433, 4294901760
      %v4518 = vsub.f32 %v433, %v4517
      %v4519 = vand.u32 %v4518, 4294901760
      %4520 = vmatpush.msra.mxu0 %v4519
      %v4521 = vand.u32 %v429, 4294901760
      %v4522 = vsub.f32 %v429, %v4521
      %v4523 = vand.u32 %v4522, 4294901760
      %4524 = vmatpush.msra.mxu0 %v4523
      %v4525 = vand.u32 %v425, 4294901760
      %v4526 = vsub.f32 %v425, %v4525
      %v4527 = vand.u32 %v4526, 4294901760
      %4528 = vmatpush.msra.mxu0 %v4527
      %v4529 = vand.u32 %v421, 4294901760
      %v4530 = vsub.f32 %v421, %v4529
      %v4531 = vand.u32 %v4530, 4294901760
      %4532 = vmatpush.msra.mxu0 %v4531
      %v4533 = vand.u32 %v226, 4294901760
      %4534 = vmatmul.f32.gmra.mxu0 %v4533
      %v4535 = vpop.f32.mrf.mxu0
      %v4536 = vadd.f32 %v4467, %v4535
      %4537 = vdwg.mxu0
      %v4538 = vand.u32 %v481, 4294901760
      %4539 = vmatpush.msra.mxu0 %v4538
      %v4540 = vand.u32 %v477, 4294901760
      %4541 = vmatpush.msra.mxu0 %v4540
      %v4542 = vand.u32 %v473, 4294901760
      %4543 = vmatpush.msra.mxu0 %v4542
      %v4544 = vand.u32 %v469, 4294901760
      %4545 = vmatpush.msra.mxu0 %v4544
      %v4546 = vand.u32 %v465, 4294901760
      %4547 = vmatpush.msra.mxu0 %v4546
      %v4548 = vand.u32 %v461, 4294901760
      %4549 = vmatpush.msra.mxu0 %v4548
      %v4550 = vand.u32 %v457, 4294901760
      %4551 = vmatpush.msra.mxu0 %v4550
      %v4552 = vand.u32 %v453, 4294901760
      %4553 = vmatpush.msra.mxu0 %v4552
      %v4554 = vand.u32 %v449, 4294901760
      %4555 = vmatpush.msra.mxu0 %v4554
      %v4556 = vand.u32 %v445, 4294901760
      %4557 = vmatpush.msra.mxu0 %v4556
      %v4558 = vand.u32 %v441, 4294901760
      %4559 = vmatpush.msra.mxu0 %v4558
      %v4560 = vand.u32 %v437, 4294901760
      %4561 = vmatpush.msra.mxu0 %v4560
      %v4562 = vand.u32 %v433, 4294901760
      %4563 = vmatpush.msra.mxu0 %v4562
      %v4564 = vand.u32 %v429, 4294901760
      %4565 = vmatpush.msra.mxu0 %v4564
      %v4566 = vand.u32 %v425, 4294901760
      %4567 = vmatpush.msra.mxu0 %v4566
      %v4568 = vand.u32 %v421, 4294901760
      %4569 = vmatpush.msra.mxu0 %v4568
      %v4570 = vand.u32 %v226, 4294901760
      %4571 = vmatmul.f32.gmra.mxu0 %v4570
      %v4572 = vpop.f32.mrf.mxu0
      %v4573 = vadd.f32 %v4536, %v4572
      %4574 = vdwg.mxu0
      %v4575 = vand.u32 %v290, 4294901760
      %4576 = vmatpush.msra.mxu0 %v4575
      %v4577 = vand.u32 %v286, 4294901760
      %4578 = vmatpush.msra.mxu0 %v4577
      %v4579 = vand.u32 %v282, 4294901760
      %4580 = vmatpush.msra.mxu0 %v4579
      %v4581 = vand.u32 %v278, 4294901760
      %4582 = vmatpush.msra.mxu0 %v4581
      %v4583 = vand.u32 %v274, 4294901760
      %4584 = vmatpush.msra.mxu0 %v4583
      %v4585 = vand.u32 %v270, 4294901760
      %4586 = vmatpush.msra.mxu0 %v4585
      %v4587 = vand.u32 %v266, 4294901760
      %4588 = vmatpush.msra.mxu0 %v4587
      %v4589 = vand.u32 %v262, 4294901760
      %4590 = vmatpush.msra.mxu0 %v4589
      %v4591 = vand.u32 %v258, 4294901760
      %4592 = vmatpush.msra.mxu0 %v4591
      %v4593 = vand.u32 %v254, 4294901760
      %4594 = vmatpush.msra.mxu0 %v4593
      %v4595 = vand.u32 %v250, 4294901760
      %4596 = vmatpush.msra.mxu0 %v4595
      %v4597 = vand.u32 %v246, 4294901760
      %4598 = vmatpush.msra.mxu0 %v4597
      %v4599 = vand.u32 %v242, 4294901760
      %4600 = vmatpush.msra.mxu0 %v4599
      %v4601 = vand.u32 %v238, 4294901760
      %4602 = vmatpush.msra.mxu0 %v4601
      %v4603 = vand.u32 %v234, 4294901760
      %4604 = vmatpush.msra.mxu0 %v4603
      %v4605 = vand.u32 %v230, 4294901760
      %4606 = vmatpush.msra.mxu0 %v4605
      %v4607 = vand.u32 %v223, 4294901760
      %v4608 = vsub.f32 %v223, %v4607
      %v4609 = vand.u32 %v4608, 4294901760
      %v4610 = vsub.f32 %v4608, %v4609
      %v4611 = vand.u32 %v4610, 4294901760
      %4612 = vmatmul.f32.gmra.mxu0 %v4611
      %v4613 = vpop.f32.mrf.mxu0
      %v4614 = vadd.f32 0.0, %v4613
      %4615 = vdwg.mxu0
      %v4616 = vand.u32 %v290, 4294901760
      %v4617 = vsub.f32 %v290, %v4616
      %v4618 = vand.u32 %v4617, 4294901760
      %v4619 = vsub.f32 %v4617, %v4618
      %v4620 = vand.u32 %v4619, 4294901760
      %4621 = vmatpush.msra.mxu0 %v4620
      %v4622 = vand.u32 %v286, 4294901760
      %v4623 = vsub.f32 %v286, %v4622
      %v4624 = vand.u32 %v4623, 4294901760
      %v4625 = vsub.f32 %v4623, %v4624
      %v4626 = vand.u32 %v4625, 4294901760
      %4627 = vmatpush.msra.mxu0 %v4626
      %v4628 = vand.u32 %v282, 4294901760
      %v4629 = vsub.f32 %v282, %v4628
      %v4630 = vand.u32 %v4629, 4294901760
      %v4631 = vsub.f32 %v4629, %v4630
      %v4632 = vand.u32 %v4631, 4294901760
      %4633 = vmatpush.msra.mxu0 %v4632
      %v4634 = vand.u32 %v278, 4294901760
      %v4635 = vsub.f32 %v278, %v4634
      %v4636 = vand.u32 %v4635, 4294901760
      %v4637 = vsub.f32 %v4635, %v4636
      %v4638 = vand.u32 %v4637, 4294901760
      %4639 = vmatpush.msra.mxu0 %v4638
      %v4640 = vand.u32 %v274, 4294901760
      %v4641 = vsub.f32 %v274, %v4640
      %v4642 = vand.u32 %v4641, 4294901760
      %v4643 = vsub.f32 %v4641, %v4642
      %v4644 = vand.u32 %v4643, 4294901760
      %4645 = vmatpush.msra.mxu0 %v4644
      %v4646 = vand.u32 %v270, 4294901760
      %v4647 = vsub.f32 %v270, %v4646
      %v4648 = vand.u32 %v4647, 4294901760
      %v4649 = vsub.f32 %v4647, %v4648
      %v4650 = vand.u32 %v4649, 4294901760
      %4651 = vmatpush.msra.mxu0 %v4650
      %v4652 = vand.u32 %v266, 4294901760
      %v4653 = vsub.f32 %v266, %v4652
      %v4654 = vand.u32 %v4653, 4294901760
      %v4655 = vsub.f32 %v4653, %v4654
      %v4656 = vand.u32 %v4655, 4294901760
      %4657 = vmatpush.msra.mxu0 %v4656
      %v4658 = vand.u32 %v262, 4294901760
      %v4659 = vsub.f32 %v262, %v4658
      %v4660 = vand.u32 %v4659, 4294901760
      %v4661 = vsub.f32 %v4659, %v4660
      %v4662 = vand.u32 %v4661, 4294901760
      %4663 = vmatpush.msra.mxu0 %v4662
      %v4664 = vand.u32 %v258, 4294901760
      %v4665 = vsub.f32 %v258, %v4664
      %v4666 = vand.u32 %v4665, 4294901760
      %v4667 = vsub.f32 %v4665, %v4666
      %v4668 = vand.u32 %v4667, 4294901760
      %4669 = vmatpush.msra.mxu0 %v4668
      %v4670 = vand.u32 %v254, 4294901760
      %v4671 = vsub.f32 %v254, %v4670
      %v4672 = vand.u32 %v4671, 4294901760
      %v4673 = vsub.f32 %v4671, %v4672
      %v4674 = vand.u32 %v4673, 4294901760
      %4675 = vmatpush.msra.mxu0 %v4674
      %v4676 = vand.u32 %v250, 4294901760
      %v4677 = vsub.f32 %v250, %v4676
      %v4678 = vand.u32 %v4677, 4294901760
      %v4679 = vsub.f32 %v4677, %v4678
      %v4680 = vand.u32 %v4679, 4294901760
      %4681 = vmatpush.msra.mxu0 %v4680
      %v4682 = vand.u32 %v246, 4294901760
      %v4683 = vsub.f32 %v246, %v4682
      %v4684 = vand.u32 %v4683, 4294901760
      %v4685 = vsub.f32 %v4683, %v4684
      %v4686 = vand.u32 %v4685, 4294901760
      %4687 = vmatpush.msra.mxu0 %v4686
      %v4688 = vand.u32 %v242, 4294901760
      %v4689 = vsub.f32 %v242, %v4688
      %v4690 = vand.u32 %v4689, 4294901760
      %v4691 = vsub.f32 %v4689, %v4690
      %v4692 = vand.u32 %v4691, 4294901760
      %4693 = vmatpush.msra.mxu0 %v4692
      %v4694 = vand.u32 %v238, 4294901760
      %v4695 = vsub.f32 %v238, %v4694
      %v4696 = vand.u32 %v4695, 4294901760
      %v4697 = vsub.f32 %v4695, %v4696
      %v4698 = vand.u32 %v4697, 4294901760
      %4699 = vmatpush.msra.mxu0 %v4698
      %v4700 = vand.u32 %v234, 4294901760
      %v4701 = vsub.f32 %v234, %v4700
      %v4702 = vand.u32 %v4701, 4294901760
      %v4703 = vsub.f32 %v4701, %v4702
      %v4704 = vand.u32 %v4703, 4294901760
      %4705 = vmatpush.msra.mxu0 %v4704
      %v4706 = vand.u32 %v230, 4294901760
      %v4707 = vsub.f32 %v230, %v4706
      %v4708 = vand.u32 %v4707, 4294901760
      %v4709 = vsub.f32 %v4707, %v4708
      %v4710 = vand.u32 %v4709, 4294901760
      %4711 = vmatpush.msra.mxu0 %v4710
      %v4712 = vand.u32 %v223, 4294901760
      %4713 = vmatmul.f32.gmra.mxu0 %v4712
      %v4714 = vpop.f32.mrf.mxu0
      %v4715 = vadd.f32 %v4614, %v4714
      %4716 = vdwg.mxu0
      %v4717 = vand.u32 %v290, 4294901760
      %v4718 = vsub.f32 %v290, %v4717
      %4719 = vmatpush.msra.mxu0 %v4718
      %v4720 = vand.u32 %v286, 4294901760
      %v4721 = vsub.f32 %v286, %v4720
      %4722 = vmatpush.msra.mxu0 %v4721
      %v4723 = vand.u32 %v282, 4294901760
      %v4724 = vsub.f32 %v282, %v4723
      %4725 = vmatpush.msra.mxu0 %v4724
      %v4726 = vand.u32 %v278, 4294901760
      %v4727 = vsub.f32 %v278, %v4726
      %4728 = vmatpush.msra.mxu0 %v4727
      %v4729 = vand.u32 %v274, 4294901760
      %v4730 = vsub.f32 %v274, %v4729
      %4731 = vmatpush.msra.mxu0 %v4730
      %v4732 = vand.u32 %v270, 4294901760
      %v4733 = vsub.f32 %v270, %v4732
      %4734 = vmatpush.msra.mxu0 %v4733
      %v4735 = vand.u32 %v266, 4294901760
      %v4736 = vsub.f32 %v266, %v4735
      %4737 = vmatpush.msra.mxu0 %v4736
      %v4738 = vand.u32 %v262, 4294901760
      %v4739 = vsub.f32 %v262, %v4738
      %4740 = vmatpush.msra.mxu0 %v4739
      %v4741 = vand.u32 %v258, 4294901760
      %v4742 = vsub.f32 %v258, %v4741
      %4743 = vmatpush.msra.mxu0 %v4742
      %v4744 = vand.u32 %v254, 4294901760
      %v4745 = vsub.f32 %v254, %v4744
      %4746 = vmatpush.msra.mxu0 %v4745
      %v4747 = vand.u32 %v250, 4294901760
      %v4748 = vsub.f32 %v250, %v4747
      %4749 = vmatpush.msra.mxu0 %v4748
      %v4750 = vand.u32 %v246, 4294901760
      %v4751 = vsub.f32 %v246, %v4750
      %4752 = vmatpush.msra.mxu0 %v4751
      %v4753 = vand.u32 %v242, 4294901760
      %v4754 = vsub.f32 %v242, %v4753
      %4755 = vmatpush.msra.mxu0 %v4754
      %v4756 = vand.u32 %v238, 4294901760
      %v4757 = vsub.f32 %v238, %v4756
      %4758 = vmatpush.msra.mxu0 %v4757
      %v4759 = vand.u32 %v234, 4294901760
      %v4760 = vsub.f32 %v234, %v4759
      %4761 = vmatpush.msra.mxu0 %v4760
      %v4762 = vand.u32 %v230, 4294901760
      %v4763 = vsub.f32 %v230, %v4762
      %4764 = vmatpush.msra.mxu0 %v4763
      %v4765 = vand.u32 %v223, 4294901760
      %v4766 = vsub.f32 %v223, %v4765
      %4767 = vmatmul.f32.gmra.mxu0 %v4766
      %v4768 = vpop.f32.mrf.mxu0
      %v4769 = vadd.f32 %v4715, %v4768
      %4770 = vdwg.mxu0
      %v4771 = vand.u32 %v290, 4294901760
      %4772 = vmatpush.msra.mxu0 %v4771
      %v4773 = vand.u32 %v286, 4294901760
      %4774 = vmatpush.msra.mxu0 %v4773
      %v4775 = vand.u32 %v282, 4294901760
      %4776 = vmatpush.msra.mxu0 %v4775
      %v4777 = vand.u32 %v278, 4294901760
      %4778 = vmatpush.msra.mxu0 %v4777
      %v4779 = vand.u32 %v274, 4294901760
      %4780 = vmatpush.msra.mxu0 %v4779
      %v4781 = vand.u32 %v270, 4294901760
      %4782 = vmatpush.msra.mxu0 %v4781
      %v4783 = vand.u32 %v266, 4294901760
      %4784 = vmatpush.msra.mxu0 %v4783
      %v4785 = vand.u32 %v262, 4294901760
      %4786 = vmatpush.msra.mxu0 %v4785
      %v4787 = vand.u32 %v258, 4294901760
      %4788 = vmatpush.msra.mxu0 %v4787
      %v4789 = vand.u32 %v254, 4294901760
      %4790 = vmatpush.msra.mxu0 %v4789
      %v4791 = vand.u32 %v250, 4294901760
      %4792 = vmatpush.msra.mxu0 %v4791
      %v4793 = vand.u32 %v246, 4294901760
      %4794 = vmatpush.msra.mxu0 %v4793
      %v4795 = vand.u32 %v242, 4294901760
      %4796 = vmatpush.msra.mxu0 %v4795
      %v4797 = vand.u32 %v238, 4294901760
      %4798 = vmatpush.msra.mxu0 %v4797
      %v4799 = vand.u32 %v234, 4294901760
      %4800 = vmatpush.msra.mxu0 %v4799
      %v4801 = vand.u32 %v230, 4294901760
      %4802 = vmatpush.msra.mxu0 %v4801
      %v4803 = vand.u32 %v223, 4294901760
      %v4804 = vsub.f32 %v223, %v4803
      %v4805 = vand.u32 %v4804, 4294901760
      %4806 = vmatmul.f32.gmra.mxu0 %v4805
      %v4807 = vpop.f32.mrf.mxu0
      %v4808 = vadd.f32 %v4769, %v4807
      %4809 = vdwg.mxu0
      %v4810 = vand.u32 %v290, 4294901760
      %v4811 = vsub.f32 %v290, %v4810
      %v4812 = vand.u32 %v4811, 4294901760
      %4813 = vmatpush.msra.mxu0 %v4812
      %v4814 = vand.u32 %v286, 4294901760
      %v4815 = vsub.f32 %v286, %v4814
      %v4816 = vand.u32 %v4815, 4294901760
      %4817 = vmatpush.msra.mxu0 %v4816
      %v4818 = vand.u32 %v282, 4294901760
      %v4819 = vsub.f32 %v282, %v4818
      %v4820 = vand.u32 %v4819, 4294901760
      %4821 = vmatpush.msra.mxu0 %v4820
      %v4822 = vand.u32 %v278, 4294901760
      %v4823 = vsub.f32 %v278, %v4822
      %v4824 = vand.u32 %v4823, 4294901760
      %4825 = vmatpush.msra.mxu0 %v4824
      %v4826 = vand.u32 %v274, 4294901760
      %v4827 = vsub.f32 %v274, %v4826
      %v4828 = vand.u32 %v4827, 4294901760
      %4829 = vmatpush.msra.mxu0 %v4828
      %v4830 = vand.u32 %v270, 4294901760
      %v4831 = vsub.f32 %v270, %v4830
      %v4832 = vand.u32 %v4831, 4294901760
      %4833 = vmatpush.msra.mxu0 %v4832
      %v4834 = vand.u32 %v266, 4294901760
      %v4835 = vsub.f32 %v266, %v4834
      %v4836 = vand.u32 %v4835, 4294901760
      %4837 = vmatpush.msra.mxu0 %v4836
      %v4838 = vand.u32 %v262, 4294901760
      %v4839 = vsub.f32 %v262, %v4838
      %v4840 = vand.u32 %v4839, 4294901760
      %4841 = vmatpush.msra.mxu0 %v4840
      %v4842 = vand.u32 %v258, 4294901760
      %v4843 = vsub.f32 %v258, %v4842
      %v4844 = vand.u32 %v4843, 4294901760
      %4845 = vmatpush.msra.mxu0 %v4844
      %v4846 = vand.u32 %v254, 4294901760
      %v4847 = vsub.f32 %v254, %v4846
      %v4848 = vand.u32 %v4847, 4294901760
      %4849 = vmatpush.msra.mxu0 %v4848
      %v4850 = vand.u32 %v250, 4294901760
      %v4851 = vsub.f32 %v250, %v4850
      %v4852 = vand.u32 %v4851, 4294901760
      %4853 = vmatpush.msra.mxu0 %v4852
      %v4854 = vand.u32 %v246, 4294901760
      %v4855 = vsub.f32 %v246, %v4854
      %v4856 = vand.u32 %v4855, 4294901760
      %4857 = vmatpush.msra.mxu0 %v4856
      %v4858 = vand.u32 %v242, 4294901760
      %v4859 = vsub.f32 %v242, %v4858
      %v4860 = vand.u32 %v4859, 4294901760
      %4861 = vmatpush.msra.mxu0 %v4860
      %v4862 = vand.u32 %v238, 4294901760
      %v4863 = vsub.f32 %v238, %v4862
      %v4864 = vand.u32 %v4863, 4294901760
      %4865 = vmatpush.msra.mxu0 %v4864
      %v4866 = vand.u32 %v234, 4294901760
      %v4867 = vsub.f32 %v234, %v4866
      %v4868 = vand.u32 %v4867, 4294901760
      %4869 = vmatpush.msra.mxu0 %v4868
      %v4870 = vand.u32 %v230, 4294901760
      %v4871 = vsub.f32 %v230, %v4870
      %v4872 = vand.u32 %v4871, 4294901760
      %4873 = vmatpush.msra.mxu0 %v4872
      %v4874 = vand.u32 %v223, 4294901760
      %4875 = vmatmul.f32.gmra.mxu0 %v4874
      %v4876 = vpop.f32.mrf.mxu0
      %v4877 = vadd.f32 %v4808, %v4876
      %4878 = vdwg.mxu0
      %v4879 = vand.u32 %v290, 4294901760
      %4880 = vmatpush.msra.mxu0 %v4879
      %v4881 = vand.u32 %v286, 4294901760
      %4882 = vmatpush.msra.mxu0 %v4881
      %v4883 = vand.u32 %v282, 4294901760
      %4884 = vmatpush.msra.mxu0 %v4883
      %v4885 = vand.u32 %v278, 4294901760
      %4886 = vmatpush.msra.mxu0 %v4885
      %v4887 = vand.u32 %v274, 4294901760
      %4888 = vmatpush.msra.mxu0 %v4887
      %v4889 = vand.u32 %v270, 4294901760
      %4890 = vmatpush.msra.mxu0 %v4889
      %v4891 = vand.u32 %v266, 4294901760
      %4892 = vmatpush.msra.mxu0 %v4891
      %v4893 = vand.u32 %v262, 4294901760
      %4894 = vmatpush.msra.mxu0 %v4893
      %v4895 = vand.u32 %v258, 4294901760
      %4896 = vmatpush.msra.mxu0 %v4895
      %v4897 = vand.u32 %v254, 4294901760
      %4898 = vmatpush.msra.mxu0 %v4897
      %v4899 = vand.u32 %v250, 4294901760
      %4900 = vmatpush.msra.mxu0 %v4899
      %v4901 = vand.u32 %v246, 4294901760
      %4902 = vmatpush.msra.mxu0 %v4901
      %v4903 = vand.u32 %v242, 4294901760
      %4904 = vmatpush.msra.mxu0 %v4903
      %v4905 = vand.u32 %v238, 4294901760
      %4906 = vmatpush.msra.mxu0 %v4905
      %v4907 = vand.u32 %v234, 4294901760
      %4908 = vmatpush.msra.mxu0 %v4907
      %v4909 = vand.u32 %v230, 4294901760
      %4910 = vmatpush.msra.mxu0 %v4909
      %v4911 = vand.u32 %v223, 4294901760
      %4912 = vmatmul.f32.gmra.mxu0 %v4911
      %v4913 = vpop.f32.mrf.mxu0
      %v4914 = vadd.f32 %v4877, %v4913
      %4915 = vdwg.mxu0
      %v4916 = vand.u32 %v354, 4294901760
      %4917 = vmatpush.msra.mxu0 %v4916
      %v4918 = vand.u32 %v350, 4294901760
      %4919 = vmatpush.msra.mxu0 %v4918
      %v4920 = vand.u32 %v346, 4294901760
      %4921 = vmatpush.msra.mxu0 %v4920
      %v4922 = vand.u32 %v342, 4294901760
      %4923 = vmatpush.msra.mxu0 %v4922
      %v4924 = vand.u32 %v338, 4294901760
      %4925 = vmatpush.msra.mxu0 %v4924
      %v4926 = vand.u32 %v334, 4294901760
      %4927 = vmatpush.msra.mxu0 %v4926
      %v4928 = vand.u32 %v330, 4294901760
      %4929 = vmatpush.msra.mxu0 %v4928
      %v4930 = vand.u32 %v326, 4294901760
      %4931 = vmatpush.msra.mxu0 %v4930
      %v4932 = vand.u32 %v322, 4294901760
      %4933 = vmatpush.msra.mxu0 %v4932
      %v4934 = vand.u32 %v318, 4294901760
      %4935 = vmatpush.msra.mxu0 %v4934
      %v4936 = vand.u32 %v314, 4294901760
      %4937 = vmatpush.msra.mxu0 %v4936
      %v4938 = vand.u32 %v310, 4294901760
      %4939 = vmatpush.msra.mxu0 %v4938
      %v4940 = vand.u32 %v306, 4294901760
      %4941 = vmatpush.msra.mxu0 %v4940
      %v4942 = vand.u32 %v302, 4294901760
      %4943 = vmatpush.msra.mxu0 %v4942
      %v4944 = vand.u32 %v298, 4294901760
      %4945 = vmatpush.msra.mxu0 %v4944
      %v4946 = vand.u32 %v294, 4294901760
      %4947 = vmatpush.msra.mxu0 %v4946
      %v4948 = vand.u32 %v224, 4294901760
      %v4949 = vsub.f32 %v224, %v4948
      %v4950 = vand.u32 %v4949, 4294901760
      %v4951 = vsub.f32 %v4949, %v4950
      %v4952 = vand.u32 %v4951, 4294901760
      %4953 = vmatmul.f32.gmra.mxu0 %v4952
      %v4954 = vpop.f32.mrf.mxu0
      %v4955 = vadd.f32 %v4914, %v4954
      %4956 = vdwg.mxu0
      %v4957 = vand.u32 %v354, 4294901760
      %v4958 = vsub.f32 %v354, %v4957
      %v4959 = vand.u32 %v4958, 4294901760
      %v4960 = vsub.f32 %v4958, %v4959
      %v4961 = vand.u32 %v4960, 4294901760
      %4962 = vmatpush.msra.mxu0 %v4961
      %v4963 = vand.u32 %v350, 4294901760
      %v4964 = vsub.f32 %v350, %v4963
      %v4965 = vand.u32 %v4964, 4294901760
      %v4966 = vsub.f32 %v4964, %v4965
      %v4967 = vand.u32 %v4966, 4294901760
      %4968 = vmatpush.msra.mxu0 %v4967
      %v4969 = vand.u32 %v346, 4294901760
      %v4970 = vsub.f32 %v346, %v4969
      %v4971 = vand.u32 %v4970, 4294901760
      %v4972 = vsub.f32 %v4970, %v4971
      %v4973 = vand.u32 %v4972, 4294901760
      %4974 = vmatpush.msra.mxu0 %v4973
      %v4975 = vand.u32 %v342, 4294901760
      %v4976 = vsub.f32 %v342, %v4975
      %v4977 = vand.u32 %v4976, 4294901760
      %v4978 = vsub.f32 %v4976, %v4977
      %v4979 = vand.u32 %v4978, 4294901760
      %4980 = vmatpush.msra.mxu0 %v4979
      %v4981 = vand.u32 %v338, 4294901760
      %v4982 = vsub.f32 %v338, %v4981
      %v4983 = vand.u32 %v4982, 4294901760
      %v4984 = vsub.f32 %v4982, %v4983
      %v4985 = vand.u32 %v4984, 4294901760
      %4986 = vmatpush.msra.mxu0 %v4985
      %v4987 = vand.u32 %v334, 4294901760
      %v4988 = vsub.f32 %v334, %v4987
      %v4989 = vand.u32 %v4988, 4294901760
      %v4990 = vsub.f32 %v4988, %v4989
      %v4991 = vand.u32 %v4990, 4294901760
      %4992 = vmatpush.msra.mxu0 %v4991
      %v4993 = vand.u32 %v330, 4294901760
      %v4994 = vsub.f32 %v330, %v4993
      %v4995 = vand.u32 %v4994, 4294901760
      %v4996 = vsub.f32 %v4994, %v4995
      %v4997 = vand.u32 %v4996, 4294901760
      %4998 = vmatpush.msra.mxu0 %v4997
      %v4999 = vand.u32 %v326, 4294901760
      %v5000 = vsub.f32 %v326, %v4999
      %v5001 = vand.u32 %v5000, 4294901760
      %v5002 = vsub.f32 %v5000, %v5001
      %v5003 = vand.u32 %v5002, 4294901760
      %5004 = vmatpush.msra.mxu0 %v5003
      %v5005 = vand.u32 %v322, 4294901760
      %v5006 = vsub.f32 %v322, %v5005
      %v5007 = vand.u32 %v5006, 4294901760
      %v5008 = vsub.f32 %v5006, %v5007
      %v5009 = vand.u32 %v5008, 4294901760
      %5010 = vmatpush.msra.mxu0 %v5009
      %v5011 = vand.u32 %v318, 4294901760
      %v5012 = vsub.f32 %v318, %v5011
      %v5013 = vand.u32 %v5012, 4294901760
      %v5014 = vsub.f32 %v5012, %v5013
      %v5015 = vand.u32 %v5014, 4294901760
      %5016 = vmatpush.msra.mxu0 %v5015
      %v5017 = vand.u32 %v314, 4294901760
      %v5018 = vsub.f32 %v314, %v5017
      %v5019 = vand.u32 %v5018, 4294901760
      %v5020 = vsub.f32 %v5018, %v5019
      %v5021 = vand.u32 %v5020, 4294901760
      %5022 = vmatpush.msra.mxu0 %v5021
      %v5023 = vand.u32 %v310, 4294901760
      %v5024 = vsub.f32 %v310, %v5023
      %v5025 = vand.u32 %v5024, 4294901760
      %v5026 = vsub.f32 %v5024, %v5025
      %v5027 = vand.u32 %v5026, 4294901760
      %5028 = vmatpush.msra.mxu0 %v5027
      %v5029 = vand.u32 %v306, 4294901760
      %v5030 = vsub.f32 %v306, %v5029
      %v5031 = vand.u32 %v5030, 4294901760
      %v5032 = vsub.f32 %v5030, %v5031
      %v5033 = vand.u32 %v5032, 4294901760
      %5034 = vmatpush.msra.mxu0 %v5033
      %v5035 = vand.u32 %v302, 4294901760
      %v5036 = vsub.f32 %v302, %v5035
      %v5037 = vand.u32 %v5036, 4294901760
      %v5038 = vsub.f32 %v5036, %v5037
      %v5039 = vand.u32 %v5038, 4294901760
      %5040 = vmatpush.msra.mxu0 %v5039
      %v5041 = vand.u32 %v298, 4294901760
      %v5042 = vsub.f32 %v298, %v5041
      %v5043 = vand.u32 %v5042, 4294901760
      %v5044 = vsub.f32 %v5042, %v5043
      %v5045 = vand.u32 %v5044, 4294901760
      %5046 = vmatpush.msra.mxu0 %v5045
      %v5047 = vand.u32 %v294, 4294901760
      %v5048 = vsub.f32 %v294, %v5047
      %v5049 = vand.u32 %v5048, 4294901760
      %v5050 = vsub.f32 %v5048, %v5049
      %v5051 = vand.u32 %v5050, 4294901760
      %5052 = vmatpush.msra.mxu0 %v5051
      %v5053 = vand.u32 %v224, 4294901760
      %5054 = vmatmul.f32.gmra.mxu0 %v5053
      %v5055 = vpop.f32.mrf.mxu0
      %v5056 = vadd.f32 %v4955, %v5055
      %5057 = vdwg.mxu0
      %v5058 = vand.u32 %v354, 4294901760
      %v5059 = vsub.f32 %v354, %v5058
      %5060 = vmatpush.msra.mxu0 %v5059
      %v5061 = vand.u32 %v350, 4294901760
      %v5062 = vsub.f32 %v350, %v5061
      %5063 = vmatpush.msra.mxu0 %v5062
      %v5064 = vand.u32 %v346, 4294901760
      %v5065 = vsub.f32 %v346, %v5064
      %5066 = vmatpush.msra.mxu0 %v5065
      %v5067 = vand.u32 %v342, 4294901760
      %v5068 = vsub.f32 %v342, %v5067
      %5069 = vmatpush.msra.mxu0 %v5068
      %v5070 = vand.u32 %v338, 4294901760
      %v5071 = vsub.f32 %v338, %v5070
      %5072 = vmatpush.msra.mxu0 %v5071
      %v5073 = vand.u32 %v334, 4294901760
      %v5074 = vsub.f32 %v334, %v5073
      %5075 = vmatpush.msra.mxu0 %v5074
      %v5076 = vand.u32 %v330, 4294901760
      %v5077 = vsub.f32 %v330, %v5076
      %5078 = vmatpush.msra.mxu0 %v5077
      %v5079 = vand.u32 %v326, 4294901760
      %v5080 = vsub.f32 %v326, %v5079
      %5081 = vmatpush.msra.mxu0 %v5080
      %v5082 = vand.u32 %v322, 4294901760
      %v5083 = vsub.f32 %v322, %v5082
      %5084 = vmatpush.msra.mxu0 %v5083
      %v5085 = vand.u32 %v318, 4294901760
      %v5086 = vsub.f32 %v318, %v5085
      %5087 = vmatpush.msra.mxu0 %v5086
      %v5088 = vand.u32 %v314, 4294901760
      %v5089 = vsub.f32 %v314, %v5088
      %5090 = vmatpush.msra.mxu0 %v5089
      %v5091 = vand.u32 %v310, 4294901760
      %v5092 = vsub.f32 %v310, %v5091
      %5093 = vmatpush.msra.mxu0 %v5092
      %v5094 = vand.u32 %v306, 4294901760
      %v5095 = vsub.f32 %v306, %v5094
      %5096 = vmatpush.msra.mxu0 %v5095
      %v5097 = vand.u32 %v302, 4294901760
      %v5098 = vsub.f32 %v302, %v5097
      %5099 = vmatpush.msra.mxu0 %v5098
      %v5100 = vand.u32 %v298, 4294901760
      %v5101 = vsub.f32 %v298, %v5100
      %5102 = vmatpush.msra.mxu0 %v5101
      %v5103 = vand.u32 %v294, 4294901760
      %v5104 = vsub.f32 %v294, %v5103
      %5105 = vmatpush.msra.mxu0 %v5104
      %v5106 = vand.u32 %v224, 4294901760
      %v5107 = vsub.f32 %v224, %v5106
      %5108 = vmatmul.f32.gmra.mxu0 %v5107
      %v5109 = vpop.f32.mrf.mxu0
      %v5110 = vadd.f32 %v5056, %v5109
      %5111 = vdwg.mxu0
      %v5112 = vand.u32 %v354, 4294901760
      %5113 = vmatpush.msra.mxu0 %v5112
      %v5114 = vand.u32 %v350, 4294901760
      %5115 = vmatpush.msra.mxu0 %v5114
      %v5116 = vand.u32 %v346, 4294901760
      %5117 = vmatpush.msra.mxu0 %v5116
      %v5118 = vand.u32 %v342, 4294901760
      %5119 = vmatpush.msra.mxu0 %v5118
      %v5120 = vand.u32 %v338, 4294901760
      %5121 = vmatpush.msra.mxu0 %v5120
      %v5122 = vand.u32 %v334, 4294901760
      %5123 = vmatpush.msra.mxu0 %v5122
      %v5124 = vand.u32 %v330, 4294901760
      %5125 = vmatpush.msra.mxu0 %v5124
      %v5126 = vand.u32 %v326, 4294901760
      %5127 = vmatpush.msra.mxu0 %v5126
      %v5128 = vand.u32 %v322, 4294901760
      %5129 = vmatpush.msra.mxu0 %v5128
      %v5130 = vand.u32 %v318, 4294901760
      %5131 = vmatpush.msra.mxu0 %v5130
      %v5132 = vand.u32 %v314, 4294901760
      %5133 = vmatpush.msra.mxu0 %v5132
      %v5134 = vand.u32 %v310, 4294901760
      %5135 = vmatpush.msra.mxu0 %v5134
      %v5136 = vand.u32 %v306, 4294901760
      %5137 = vmatpush.msra.mxu0 %v5136
      %v5138 = vand.u32 %v302, 4294901760
      %5139 = vmatpush.msra.mxu0 %v5138
      %v5140 = vand.u32 %v298, 4294901760
      %5141 = vmatpush.msra.mxu0 %v5140
      %v5142 = vand.u32 %v294, 4294901760
      %5143 = vmatpush.msra.mxu0 %v5142
      %v5144 = vand.u32 %v224, 4294901760
      %v5145 = vsub.f32 %v224, %v5144
      %v5146 = vand.u32 %v5145, 4294901760
      %5147 = vmatmul.f32.gmra.mxu0 %v5146
      %v5148 = vpop.f32.mrf.mxu0
      %v5149 = vadd.f32 %v5110, %v5148
      %5150 = vdwg.mxu0
      %v5151 = vand.u32 %v354, 4294901760
      %v5152 = vsub.f32 %v354, %v5151
      %v5153 = vand.u32 %v5152, 4294901760
      %5154 = vmatpush.msra.mxu0 %v5153
      %v5155 = vand.u32 %v350, 4294901760
      %v5156 = vsub.f32 %v350, %v5155
      %v5157 = vand.u32 %v5156, 4294901760
      %5158 = vmatpush.msra.mxu0 %v5157
      %v5159 = vand.u32 %v346, 4294901760
      %v5160 = vsub.f32 %v346, %v5159
      %v5161 = vand.u32 %v5160, 4294901760
      %5162 = vmatpush.msra.mxu0 %v5161
      %v5163 = vand.u32 %v342, 4294901760
      %v5164 = vsub.f32 %v342, %v5163
      %v5165 = vand.u32 %v5164, 4294901760
      %5166 = vmatpush.msra.mxu0 %v5165
      %v5167 = vand.u32 %v338, 4294901760
      %v5168 = vsub.f32 %v338, %v5167
      %v5169 = vand.u32 %v5168, 4294901760
      %5170 = vmatpush.msra.mxu0 %v5169
      %v5171 = vand.u32 %v334, 4294901760
      %v5172 = vsub.f32 %v334, %v5171
      %v5173 = vand.u32 %v5172, 4294901760
      %5174 = vmatpush.msra.mxu0 %v5173
      %v5175 = vand.u32 %v330, 4294901760
      %v5176 = vsub.f32 %v330, %v5175
      %v5177 = vand.u32 %v5176, 4294901760
      %5178 = vmatpush.msra.mxu0 %v5177
      %v5179 = vand.u32 %v326, 4294901760
      %v5180 = vsub.f32 %v326, %v5179
      %v5181 = vand.u32 %v5180, 4294901760
      %5182 = vmatpush.msra.mxu0 %v5181
      %v5183 = vand.u32 %v322, 4294901760
      %v5184 = vsub.f32 %v322, %v5183
      %v5185 = vand.u32 %v5184, 4294901760
      %5186 = vmatpush.msra.mxu0 %v5185
      %v5187 = vand.u32 %v318, 4294901760
      %v5188 = vsub.f32 %v318, %v5187
      %v5189 = vand.u32 %v5188, 4294901760
      %5190 = vmatpush.msra.mxu0 %v5189
      %v5191 = vand.u32 %v314, 4294901760
      %v5192 = vsub.f32 %v314, %v5191
      %v5193 = vand.u32 %v5192, 4294901760
      %5194 = vmatpush.msra.mxu0 %v5193
      %v5195 = vand.u32 %v310, 4294901760
      %v5196 = vsub.f32 %v310, %v5195
      %v5197 = vand.u32 %v5196, 4294901760
      %5198 = vmatpush.msra.mxu0 %v5197
      %v5199 = vand.u32 %v306, 4294901760
      %v5200 = vsub.f32 %v306, %v5199
      %v5201 = vand.u32 %v5200, 4294901760
      %5202 = vmatpush.msra.mxu0 %v5201
      %v5203 = vand.u32 %v302, 4294901760
      %v5204 = vsub.f32 %v302, %v5203
      %v5205 = vand.u32 %v5204, 4294901760
      %5206 = vmatpush.msra.mxu0 %v5205
      %v5207 = vand.u32 %v298, 4294901760
      %v5208 = vsub.f32 %v298, %v5207
      %v5209 = vand.u32 %v5208, 4294901760
      %5210 = vmatpush.msra.mxu0 %v5209
      %v5211 = vand.u32 %v294, 4294901760
      %v5212 = vsub.f32 %v294, %v5211
      %v5213 = vand.u32 %v5212, 4294901760
      %5214 = vmatpush.msra.mxu0 %v5213
      %v5215 = vand.u32 %v224, 4294901760
      %5216 = vmatmul.f32.gmra.mxu0 %v5215
      %v5217 = vpop.f32.mrf.mxu0
      %v5218 = vadd.f32 %v5149, %v5217
      %5219 = vdwg.mxu0
      %v5220 = vand.u32 %v354, 4294901760
      %5221 = vmatpush.msra.mxu0 %v5220
      %v5222 = vand.u32 %v350, 4294901760
      %5223 = vmatpush.msra.mxu0 %v5222
      %v5224 = vand.u32 %v346, 4294901760
      %5225 = vmatpush.msra.mxu0 %v5224
      %v5226 = vand.u32 %v342, 4294901760
      %5227 = vmatpush.msra.mxu0 %v5226
      %v5228 = vand.u32 %v338, 4294901760
      %5229 = vmatpush.msra.mxu0 %v5228
      %v5230 = vand.u32 %v334, 4294901760
      %5231 = vmatpush.msra.mxu0 %v5230
      %v5232 = vand.u32 %v330, 4294901760
      %5233 = vmatpush.msra.mxu0 %v5232
      %v5234 = vand.u32 %v326, 4294901760
      %5235 = vmatpush.msra.mxu0 %v5234
      %v5236 = vand.u32 %v322, 4294901760
      %5237 = vmatpush.msra.mxu0 %v5236
      %v5238 = vand.u32 %v318, 4294901760
      %5239 = vmatpush.msra.mxu0 %v5238
      %v5240 = vand.u32 %v314, 4294901760
      %5241 = vmatpush.msra.mxu0 %v5240
      %v5242 = vand.u32 %v310, 4294901760
      %5243 = vmatpush.msra.mxu0 %v5242
      %v5244 = vand.u32 %v306, 4294901760
      %5245 = vmatpush.msra.mxu0 %v5244
      %v5246 = vand.u32 %v302, 4294901760
      %5247 = vmatpush.msra.mxu0 %v5246
      %v5248 = vand.u32 %v298, 4294901760
      %5249 = vmatpush.msra.mxu0 %v5248
      %v5250 = vand.u32 %v294, 4294901760
      %5251 = vmatpush.msra.mxu0 %v5250
      %v5252 = vand.u32 %v224, 4294901760
      %5253 = vmatmul.f32.gmra.mxu0 %v5252
      %v5254 = vpop.f32.mrf.mxu0
      %v5255 = vadd.f32 %v5218, %v5254
      %5256 = vdwg.mxu0
      %v5257 = vand.u32 %v418, 4294901760
      %5258 = vmatpush.msra.mxu0 %v5257
      %v5259 = vand.u32 %v414, 4294901760
      %5260 = vmatpush.msra.mxu0 %v5259
      %v5261 = vand.u32 %v410, 4294901760
      %5262 = vmatpush.msra.mxu0 %v5261
      %v5263 = vand.u32 %v406, 4294901760
      %5264 = vmatpush.msra.mxu0 %v5263
      %v5265 = vand.u32 %v402, 4294901760
      %5266 = vmatpush.msra.mxu0 %v5265
      %v5267 = vand.u32 %v398, 4294901760
      %5268 = vmatpush.msra.mxu0 %v5267
      %v5269 = vand.u32 %v394, 4294901760
      %5270 = vmatpush.msra.mxu0 %v5269
      %v5271 = vand.u32 %v390, 4294901760
      %5272 = vmatpush.msra.mxu0 %v5271
      %v5273 = vand.u32 %v386, 4294901760
      %5274 = vmatpush.msra.mxu0 %v5273
      %v5275 = vand.u32 %v382, 4294901760
      %5276 = vmatpush.msra.mxu0 %v5275
      %v5277 = vand.u32 %v378, 4294901760
      %5278 = vmatpush.msra.mxu0 %v5277
      %v5279 = vand.u32 %v374, 4294901760
      %5280 = vmatpush.msra.mxu0 %v5279
      %v5281 = vand.u32 %v370, 4294901760
      %5282 = vmatpush.msra.mxu0 %v5281
      %v5283 = vand.u32 %v366, 4294901760
      %5284 = vmatpush.msra.mxu0 %v5283
      %v5285 = vand.u32 %v362, 4294901760
      %5286 = vmatpush.msra.mxu0 %v5285
      %v5287 = vand.u32 %v358, 4294901760
      %5288 = vmatpush.msra.mxu0 %v5287
      %v5289 = vand.u32 %v225, 4294901760
      %v5290 = vsub.f32 %v225, %v5289
      %v5291 = vand.u32 %v5290, 4294901760
      %v5292 = vsub.f32 %v5290, %v5291
      %v5293 = vand.u32 %v5292, 4294901760
      %5294 = vmatmul.f32.gmra.mxu0 %v5293
      %v5295 = vpop.f32.mrf.mxu0
      %v5296 = vadd.f32 %v5255, %v5295
      %5297 = vdwg.mxu0
      %v5298 = vand.u32 %v418, 4294901760
      %v5299 = vsub.f32 %v418, %v5298
      %v5300 = vand.u32 %v5299, 4294901760
      %v5301 = vsub.f32 %v5299, %v5300
      %v5302 = vand.u32 %v5301, 4294901760
      %5303 = vmatpush.msra.mxu0 %v5302
      %v5304 = vand.u32 %v414, 4294901760
      %v5305 = vsub.f32 %v414, %v5304
      %v5306 = vand.u32 %v5305, 4294901760
      %v5307 = vsub.f32 %v5305, %v5306
      %v5308 = vand.u32 %v5307, 4294901760
      %5309 = vmatpush.msra.mxu0 %v5308
      %v5310 = vand.u32 %v410, 4294901760
      %v5311 = vsub.f32 %v410, %v5310
      %v5312 = vand.u32 %v5311, 4294901760
      %v5313 = vsub.f32 %v5311, %v5312
      %v5314 = vand.u32 %v5313, 4294901760
      %5315 = vmatpush.msra.mxu0 %v5314
      %v5316 = vand.u32 %v406, 4294901760
      %v5317 = vsub.f32 %v406, %v5316
      %v5318 = vand.u32 %v5317, 4294901760
      %v5319 = vsub.f32 %v5317, %v5318
      %v5320 = vand.u32 %v5319, 4294901760
      %5321 = vmatpush.msra.mxu0 %v5320
      %v5322 = vand.u32 %v402, 4294901760
      %v5323 = vsub.f32 %v402, %v5322
      %v5324 = vand.u32 %v5323, 4294901760
      %v5325 = vsub.f32 %v5323, %v5324
      %v5326 = vand.u32 %v5325, 4294901760
      %5327 = vmatpush.msra.mxu0 %v5326
      %v5328 = vand.u32 %v398, 4294901760
      %v5329 = vsub.f32 %v398, %v5328
      %v5330 = vand.u32 %v5329, 4294901760
      %v5331 = vsub.f32 %v5329, %v5330
      %v5332 = vand.u32 %v5331, 4294901760
      %5333 = vmatpush.msra.mxu0 %v5332
      %v5334 = vand.u32 %v394, 4294901760
      %v5335 = vsub.f32 %v394, %v5334
      %v5336 = vand.u32 %v5335, 4294901760
      %v5337 = vsub.f32 %v5335, %v5336
      %v5338 = vand.u32 %v5337, 4294901760
      %5339 = vmatpush.msra.mxu0 %v5338
      %v5340 = vand.u32 %v390, 4294901760
      %v5341 = vsub.f32 %v390, %v5340
      %v5342 = vand.u32 %v5341, 4294901760
      %v5343 = vsub.f32 %v5341, %v5342
      %v5344 = vand.u32 %v5343, 4294901760
      %5345 = vmatpush.msra.mxu0 %v5344
      %v5346 = vand.u32 %v386, 4294901760
      %v5347 = vsub.f32 %v386, %v5346
      %v5348 = vand.u32 %v5347, 4294901760
      %v5349 = vsub.f32 %v5347, %v5348
      %v5350 = vand.u32 %v5349, 4294901760
      %5351 = vmatpush.msra.mxu0 %v5350
      %v5352 = vand.u32 %v382, 4294901760
      %v5353 = vsub.f32 %v382, %v5352
      %v5354 = vand.u32 %v5353, 4294901760
      %v5355 = vsub.f32 %v5353, %v5354
      %v5356 = vand.u32 %v5355, 4294901760
      %5357 = vmatpush.msra.mxu0 %v5356
      %v5358 = vand.u32 %v378, 4294901760
      %v5359 = vsub.f32 %v378, %v5358
      %v5360 = vand.u32 %v5359, 4294901760
      %v5361 = vsub.f32 %v5359, %v5360
      %v5362 = vand.u32 %v5361, 4294901760
      %5363 = vmatpush.msra.mxu0 %v5362
      %v5364 = vand.u32 %v374, 4294901760
      %v5365 = vsub.f32 %v374, %v5364
      %v5366 = vand.u32 %v5365, 4294901760
      %v5367 = vsub.f32 %v5365, %v5366
      %v5368 = vand.u32 %v5367, 4294901760
      %5369 = vmatpush.msra.mxu0 %v5368
      %v5370 = vand.u32 %v370, 4294901760
      %v5371 = vsub.f32 %v370, %v5370
      %v5372 = vand.u32 %v5371, 4294901760
      %v5373 = vsub.f32 %v5371, %v5372
      %v5374 = vand.u32 %v5373, 4294901760
      %5375 = vmatpush.msra.mxu0 %v5374
      %v5376 = vand.u32 %v366, 4294901760
      %v5377 = vsub.f32 %v366, %v5376
      %v5378 = vand.u32 %v5377, 4294901760
      %v5379 = vsub.f32 %v5377, %v5378
      %v5380 = vand.u32 %v5379, 4294901760
      %5381 = vmatpush.msra.mxu0 %v5380
      %v5382 = vand.u32 %v362, 4294901760
      %v5383 = vsub.f32 %v362, %v5382
      %v5384 = vand.u32 %v5383, 4294901760
      %v5385 = vsub.f32 %v5383, %v5384
      %v5386 = vand.u32 %v5385, 4294901760
      %5387 = vmatpush.msra.mxu0 %v5386
      %v5388 = vand.u32 %v358, 4294901760
      %v5389 = vsub.f32 %v358, %v5388
      %v5390 = vand.u32 %v5389, 4294901760
      %v5391 = vsub.f32 %v5389, %v5390
      %v5392 = vand.u32 %v5391, 4294901760
      %5393 = vmatpush.msra.mxu0 %v5392
      %v5394 = vand.u32 %v225, 4294901760
      %5395 = vmatmul.f32.gmra.mxu0 %v5394
      %v5396 = vpop.f32.mrf.mxu0
      %v5397 = vadd.f32 %v5296, %v5396
      %5398 = vdwg.mxu0
      %v5399 = vand.u32 %v418, 4294901760
      %v5400 = vsub.f32 %v418, %v5399
      %5401 = vmatpush.msra.mxu0 %v5400
      %v5402 = vand.u32 %v414, 4294901760
      %v5403 = vsub.f32 %v414, %v5402
      %5404 = vmatpush.msra.mxu0 %v5403
      %v5405 = vand.u32 %v410, 4294901760
      %v5406 = vsub.f32 %v410, %v5405
      %5407 = vmatpush.msra.mxu0 %v5406
      %v5408 = vand.u32 %v406, 4294901760
      %v5409 = vsub.f32 %v406, %v5408
      %5410 = vmatpush.msra.mxu0 %v5409
      %v5411 = vand.u32 %v402, 4294901760
      %v5412 = vsub.f32 %v402, %v5411
      %5413 = vmatpush.msra.mxu0 %v5412
      %v5414 = vand.u32 %v398, 4294901760
      %v5415 = vsub.f32 %v398, %v5414
      %5416 = vmatpush.msra.mxu0 %v5415
      %v5417 = vand.u32 %v394, 4294901760
      %v5418 = vsub.f32 %v394, %v5417
      %5419 = vmatpush.msra.mxu0 %v5418
      %v5420 = vand.u32 %v390, 4294901760
      %v5421 = vsub.f32 %v390, %v5420
      %5422 = vmatpush.msra.mxu0 %v5421
      %v5423 = vand.u32 %v386, 4294901760
      %v5424 = vsub.f32 %v386, %v5423
      %5425 = vmatpush.msra.mxu0 %v5424
      %v5426 = vand.u32 %v382, 4294901760
      %v5427 = vsub.f32 %v382, %v5426
      %5428 = vmatpush.msra.mxu0 %v5427
      %v5429 = vand.u32 %v378, 4294901760
      %v5430 = vsub.f32 %v378, %v5429
      %5431 = vmatpush.msra.mxu0 %v5430
      %v5432 = vand.u32 %v374, 4294901760
      %v5433 = vsub.f32 %v374, %v5432
      %5434 = vmatpush.msra.mxu0 %v5433
      %v5435 = vand.u32 %v370, 4294901760
      %v5436 = vsub.f32 %v370, %v5435
      %5437 = vmatpush.msra.mxu0 %v5436
      %v5438 = vand.u32 %v366, 4294901760
      %v5439 = vsub.f32 %v366, %v5438
      %5440 = vmatpush.msra.mxu0 %v5439
      %v5441 = vand.u32 %v362, 4294901760
      %v5442 = vsub.f32 %v362, %v5441
      %5443 = vmatpush.msra.mxu0 %v5442
      %v5444 = vand.u32 %v358, 4294901760
      %v5445 = vsub.f32 %v358, %v5444
      %5446 = vmatpush.msra.mxu0 %v5445
      %v5447 = vand.u32 %v225, 4294901760
      %v5448 = vsub.f32 %v225, %v5447
      %5449 = vmatmul.f32.gmra.mxu0 %v5448
      %v5450 = vpop.f32.mrf.mxu0
      %v5451 = vadd.f32 %v5397, %v5450
      %5452 = vdwg.mxu0
      %v5453 = vand.u32 %v418, 4294901760
      %5454 = vmatpush.msra.mxu0 %v5453
      %v5455 = vand.u32 %v414, 4294901760
      %5456 = vmatpush.msra.mxu0 %v5455
      %v5457 = vand.u32 %v410, 4294901760
      %5458 = vmatpush.msra.mxu0 %v5457
      %v5459 = vand.u32 %v406, 4294901760
      %5460 = vmatpush.msra.mxu0 %v5459
      %v5461 = vand.u32 %v402, 4294901760
      %5462 = vmatpush.msra.mxu0 %v5461
      %v5463 = vand.u32 %v398, 4294901760
      %5464 = vmatpush.msra.mxu0 %v5463
      %v5465 = vand.u32 %v394, 4294901760
      %5466 = vmatpush.msra.mxu0 %v5465
      %v5467 = vand.u32 %v390, 4294901760
      %5468 = vmatpush.msra.mxu0 %v5467
      %v5469 = vand.u32 %v386, 4294901760
      %5470 = vmatpush.msra.mxu0 %v5469
      %v5471 = vand.u32 %v382, 4294901760
      %5472 = vmatpush.msra.mxu0 %v5471
      %v5473 = vand.u32 %v378, 4294901760
      %5474 = vmatpush.msra.mxu0 %v5473
      %v5475 = vand.u32 %v374, 4294901760
      %5476 = vmatpush.msra.mxu0 %v5475
      %v5477 = vand.u32 %v370, 4294901760
      %5478 = vmatpush.msra.mxu0 %v5477
      %v5479 = vand.u32 %v366, 4294901760
      %5480 = vmatpush.msra.mxu0 %v5479
      %v5481 = vand.u32 %v362, 4294901760
      %5482 = vmatpush.msra.mxu0 %v5481
      %v5483 = vand.u32 %v358, 4294901760
      %5484 = vmatpush.msra.mxu0 %v5483
      %v5485 = vand.u32 %v225, 4294901760
      %v5486 = vsub.f32 %v225, %v5485
      %v5487 = vand.u32 %v5486, 4294901760
      %5488 = vmatmul.f32.gmra.mxu0 %v5487
      %v5489 = vpop.f32.mrf.mxu0
      %v5490 = vadd.f32 %v5451, %v5489
      %5491 = vdwg.mxu0
      %v5492 = vand.u32 %v418, 4294901760
      %v5493 = vsub.f32 %v418, %v5492
      %v5494 = vand.u32 %v5493, 4294901760
      %5495 = vmatpush.msra.mxu0 %v5494
      %v5496 = vand.u32 %v414, 4294901760
      %v5497 = vsub.f32 %v414, %v5496
      %v5498 = vand.u32 %v5497, 4294901760
      %5499 = vmatpush.msra.mxu0 %v5498
      %v5500 = vand.u32 %v410, 4294901760
      %v5501 = vsub.f32 %v410, %v5500
      %v5502 = vand.u32 %v5501, 4294901760
      %5503 = vmatpush.msra.mxu0 %v5502
      %v5504 = vand.u32 %v406, 4294901760
      %v5505 = vsub.f32 %v406, %v5504
      %v5506 = vand.u32 %v5505, 4294901760
      %5507 = vmatpush.msra.mxu0 %v5506
      %v5508 = vand.u32 %v402, 4294901760
      %v5509 = vsub.f32 %v402, %v5508
      %v5510 = vand.u32 %v5509, 4294901760
      %5511 = vmatpush.msra.mxu0 %v5510
      %v5512 = vand.u32 %v398, 4294901760
      %v5513 = vsub.f32 %v398, %v5512
      %v5514 = vand.u32 %v5513, 4294901760
      %5515 = vmatpush.msra.mxu0 %v5514
      %v5516 = vand.u32 %v394, 4294901760
      %v5517 = vsub.f32 %v394, %v5516
      %v5518 = vand.u32 %v5517, 4294901760
      %5519 = vmatpush.msra.mxu0 %v5518
      %v5520 = vand.u32 %v390, 4294901760
      %v5521 = vsub.f32 %v390, %v5520
      %v5522 = vand.u32 %v5521, 4294901760
      %5523 = vmatpush.msra.mxu0 %v5522
      %v5524 = vand.u32 %v386, 4294901760
      %v5525 = vsub.f32 %v386, %v5524
      %v5526 = vand.u32 %v5525, 4294901760
      %5527 = vmatpush.msra.mxu0 %v5526
      %v5528 = vand.u32 %v382, 4294901760
      %v5529 = vsub.f32 %v382, %v5528
      %v5530 = vand.u32 %v5529, 4294901760
      %5531 = vmatpush.msra.mxu0 %v5530
      %v5532 = vand.u32 %v378, 4294901760
      %v5533 = vsub.f32 %v378, %v5532
      %v5534 = vand.u32 %v5533, 4294901760
      %5535 = vmatpush.msra.mxu0 %v5534
      %v5536 = vand.u32 %v374, 4294901760
      %v5537 = vsub.f32 %v374, %v5536
      %v5538 = vand.u32 %v5537, 4294901760
      %5539 = vmatpush.msra.mxu0 %v5538
      %v5540 = vand.u32 %v370, 4294901760
      %v5541 = vsub.f32 %v370, %v5540
      %v5542 = vand.u32 %v5541, 4294901760
      %5543 = vmatpush.msra.mxu0 %v5542
      %v5544 = vand.u32 %v366, 4294901760
      %v5545 = vsub.f32 %v366, %v5544
      %v5546 = vand.u32 %v5545, 4294901760
      %5547 = vmatpush.msra.mxu0 %v5546
      %v5548 = vand.u32 %v362, 4294901760
      %v5549 = vsub.f32 %v362, %v5548
      %v5550 = vand.u32 %v5549, 4294901760
      %5551 = vmatpush.msra.mxu0 %v5550
      %v5552 = vand.u32 %v358, 4294901760
      %v5553 = vsub.f32 %v358, %v5552
      %v5554 = vand.u32 %v5553, 4294901760
      %5555 = vmatpush.msra.mxu0 %v5554
      %v5556 = vand.u32 %v225, 4294901760
      %5557 = vmatmul.f32.gmra.mxu0 %v5556
      %v5558 = vpop.f32.mrf.mxu0
      %v5559 = vadd.f32 %v5490, %v5558
      %5560 = vdwg.mxu0
      %v5561 = vand.u32 %v418, 4294901760
      %5562 = vmatpush.msra.mxu0 %v5561
      %v5563 = vand.u32 %v414, 4294901760
      %5564 = vmatpush.msra.mxu0 %v5563
      %v5565 = vand.u32 %v410, 4294901760
      %5566 = vmatpush.msra.mxu0 %v5565
      %v5567 = vand.u32 %v406, 4294901760
      %5568 = vmatpush.msra.mxu0 %v5567
      %v5569 = vand.u32 %v402, 4294901760
      %5570 = vmatpush.msra.mxu0 %v5569
      %v5571 = vand.u32 %v398, 4294901760
      %5572 = vmatpush.msra.mxu0 %v5571
      %v5573 = vand.u32 %v394, 4294901760
      %5574 = vmatpush.msra.mxu0 %v5573
      %v5575 = vand.u32 %v390, 4294901760
      %5576 = vmatpush.msra.mxu0 %v5575
      %v5577 = vand.u32 %v386, 4294901760
      %5578 = vmatpush.msra.mxu0 %v5577
      %v5579 = vand.u32 %v382, 4294901760
      %5580 = vmatpush.msra.mxu0 %v5579
      %v5581 = vand.u32 %v378, 4294901760
      %5582 = vmatpush.msra.mxu0 %v5581
      %v5583 = vand.u32 %v374, 4294901760
      %5584 = vmatpush.msra.mxu0 %v5583
      %v5585 = vand.u32 %v370, 4294901760
      %5586 = vmatpush.msra.mxu0 %v5585
      %v5587 = vand.u32 %v366, 4294901760
      %5588 = vmatpush.msra.mxu0 %v5587
      %v5589 = vand.u32 %v362, 4294901760
      %5590 = vmatpush.msra.mxu0 %v5589
      %v5591 = vand.u32 %v358, 4294901760
      %5592 = vmatpush.msra.mxu0 %v5591
      %v5593 = vand.u32 %v225, 4294901760
      %5594 = vmatmul.f32.gmra.mxu0 %v5593
      %v5595 = vpop.f32.mrf.mxu0
      %v5596 = vadd.f32 %v5559, %v5595
      %5597 = vdwg.mxu0
      %v5598 = vand.u32 %v482, 4294901760
      %5599 = vmatpush.msra.mxu0 %v5598
      %v5600 = vand.u32 %v478, 4294901760
      %5601 = vmatpush.msra.mxu0 %v5600
      %v5602 = vand.u32 %v474, 4294901760
      %5603 = vmatpush.msra.mxu0 %v5602
      %v5604 = vand.u32 %v470, 4294901760
      %5605 = vmatpush.msra.mxu0 %v5604
      %v5606 = vand.u32 %v466, 4294901760
      %5607 = vmatpush.msra.mxu0 %v5606
      %v5608 = vand.u32 %v462, 4294901760
      %5609 = vmatpush.msra.mxu0 %v5608
      %v5610 = vand.u32 %v458, 4294901760
      %5611 = vmatpush.msra.mxu0 %v5610
      %v5612 = vand.u32 %v454, 4294901760
      %5613 = vmatpush.msra.mxu0 %v5612
      %v5614 = vand.u32 %v450, 4294901760
      %5615 = vmatpush.msra.mxu0 %v5614
      %v5616 = vand.u32 %v446, 4294901760
      %5617 = vmatpush.msra.mxu0 %v5616
      %v5618 = vand.u32 %v442, 4294901760
      %5619 = vmatpush.msra.mxu0 %v5618
      %v5620 = vand.u32 %v438, 4294901760
      %5621 = vmatpush.msra.mxu0 %v5620
      %v5622 = vand.u32 %v434, 4294901760
      %5623 = vmatpush.msra.mxu0 %v5622
      %v5624 = vand.u32 %v430, 4294901760
      %5625 = vmatpush.msra.mxu0 %v5624
      %v5626 = vand.u32 %v426, 4294901760
      %5627 = vmatpush.msra.mxu0 %v5626
      %v5628 = vand.u32 %v422, 4294901760
      %5629 = vmatpush.msra.mxu0 %v5628
      %v5630 = vand.u32 %v226, 4294901760
      %v5631 = vsub.f32 %v226, %v5630
      %v5632 = vand.u32 %v5631, 4294901760
      %v5633 = vsub.f32 %v5631, %v5632
      %v5634 = vand.u32 %v5633, 4294901760
      %5635 = vmatmul.f32.gmra.mxu0 %v5634
      %v5636 = vpop.f32.mrf.mxu0
      %v5637 = vadd.f32 %v5596, %v5636
      %5638 = vdwg.mxu0
      %v5639 = vand.u32 %v482, 4294901760
      %v5640 = vsub.f32 %v482, %v5639
      %v5641 = vand.u32 %v5640, 4294901760
      %v5642 = vsub.f32 %v5640, %v5641
      %v5643 = vand.u32 %v5642, 4294901760
      %5644 = vmatpush.msra.mxu0 %v5643
      %v5645 = vand.u32 %v478, 4294901760
      %v5646 = vsub.f32 %v478, %v5645
      %v5647 = vand.u32 %v5646, 4294901760
      %v5648 = vsub.f32 %v5646, %v5647
      %v5649 = vand.u32 %v5648, 4294901760
      %5650 = vmatpush.msra.mxu0 %v5649
      %v5651 = vand.u32 %v474, 4294901760
      %v5652 = vsub.f32 %v474, %v5651
      %v5653 = vand.u32 %v5652, 4294901760
      %v5654 = vsub.f32 %v5652, %v5653
      %v5655 = vand.u32 %v5654, 4294901760
      %5656 = vmatpush.msra.mxu0 %v5655
      %v5657 = vand.u32 %v470, 4294901760
      %v5658 = vsub.f32 %v470, %v5657
      %v5659 = vand.u32 %v5658, 4294901760
      %v5660 = vsub.f32 %v5658, %v5659
      %v5661 = vand.u32 %v5660, 4294901760
      %5662 = vmatpush.msra.mxu0 %v5661
      %v5663 = vand.u32 %v466, 4294901760
      %v5664 = vsub.f32 %v466, %v5663
      %v5665 = vand.u32 %v5664, 4294901760
      %v5666 = vsub.f32 %v5664, %v5665
      %v5667 = vand.u32 %v5666, 4294901760
      %5668 = vmatpush.msra.mxu0 %v5667
      %v5669 = vand.u32 %v462, 4294901760
      %v5670 = vsub.f32 %v462, %v5669
      %v5671 = vand.u32 %v5670, 4294901760
      %v5672 = vsub.f32 %v5670, %v5671
      %v5673 = vand.u32 %v5672, 4294901760
      %5674 = vmatpush.msra.mxu0 %v5673
      %v5675 = vand.u32 %v458, 4294901760
      %v5676 = vsub.f32 %v458, %v5675
      %v5677 = vand.u32 %v5676, 4294901760
      %v5678 = vsub.f32 %v5676, %v5677
      %v5679 = vand.u32 %v5678, 4294901760
      %5680 = vmatpush.msra.mxu0 %v5679
      %v5681 = vand.u32 %v454, 4294901760
      %v5682 = vsub.f32 %v454, %v5681
      %v5683 = vand.u32 %v5682, 4294901760
      %v5684 = vsub.f32 %v5682, %v5683
      %v5685 = vand.u32 %v5684, 4294901760
      %5686 = vmatpush.msra.mxu0 %v5685
      %v5687 = vand.u32 %v450, 4294901760
      %v5688 = vsub.f32 %v450, %v5687
      %v5689 = vand.u32 %v5688, 4294901760
      %v5690 = vsub.f32 %v5688, %v5689
      %v5691 = vand.u32 %v5690, 4294901760
      %5692 = vmatpush.msra.mxu0 %v5691
      %v5693 = vand.u32 %v446, 4294901760
      %v5694 = vsub.f32 %v446, %v5693
      %v5695 = vand.u32 %v5694, 4294901760
      %v5696 = vsub.f32 %v5694, %v5695
      %v5697 = vand.u32 %v5696, 4294901760
      %5698 = vmatpush.msra.mxu0 %v5697
      %v5699 = vand.u32 %v442, 4294901760
      %v5700 = vsub.f32 %v442, %v5699
      %v5701 = vand.u32 %v5700, 4294901760
      %v5702 = vsub.f32 %v5700, %v5701
      %v5703 = vand.u32 %v5702, 4294901760
      %5704 = vmatpush.msra.mxu0 %v5703
      %v5705 = vand.u32 %v438, 4294901760
      %v5706 = vsub.f32 %v438, %v5705
      %v5707 = vand.u32 %v5706, 4294901760
      %v5708 = vsub.f32 %v5706, %v5707
      %v5709 = vand.u32 %v5708, 4294901760
      %5710 = vmatpush.msra.mxu0 %v5709
      %v5711 = vand.u32 %v434, 4294901760
      %v5712 = vsub.f32 %v434, %v5711
      %v5713 = vand.u32 %v5712, 4294901760
      %v5714 = vsub.f32 %v5712, %v5713
      %v5715 = vand.u32 %v5714, 4294901760
      %5716 = vmatpush.msra.mxu0 %v5715
      %v5717 = vand.u32 %v430, 4294901760
      %v5718 = vsub.f32 %v430, %v5717
      %v5719 = vand.u32 %v5718, 4294901760
      %v5720 = vsub.f32 %v5718, %v5719
      %v5721 = vand.u32 %v5720, 4294901760
      %5722 = vmatpush.msra.mxu0 %v5721
      %v5723 = vand.u32 %v426, 4294901760
      %v5724 = vsub.f32 %v426, %v5723
      %v5725 = vand.u32 %v5724, 4294901760
      %v5726 = vsub.f32 %v5724, %v5725
      %v5727 = vand.u32 %v5726, 4294901760
      %5728 = vmatpush.msra.mxu0 %v5727
      %v5729 = vand.u32 %v422, 4294901760
      %v5730 = vsub.f32 %v422, %v5729
      %v5731 = vand.u32 %v5730, 4294901760
      %v5732 = vsub.f32 %v5730, %v5731
      %v5733 = vand.u32 %v5732, 4294901760
      %5734 = vmatpush.msra.mxu0 %v5733
      %v5735 = vand.u32 %v226, 4294901760
      %5736 = vmatmul.f32.gmra.mxu0 %v5735
      %v5737 = vpop.f32.mrf.mxu0
      %v5738 = vadd.f32 %v5637, %v5737
      %5739 = vdwg.mxu0
      %v5740 = vand.u32 %v482, 4294901760
      %v5741 = vsub.f32 %v482, %v5740
      %5742 = vmatpush.msra.mxu0 %v5741
      %v5743 = vand.u32 %v478, 4294901760
      %v5744 = vsub.f32 %v478, %v5743
      %5745 = vmatpush.msra.mxu0 %v5744
      %v5746 = vand.u32 %v474, 4294901760
      %v5747 = vsub.f32 %v474, %v5746
      %5748 = vmatpush.msra.mxu0 %v5747
      %v5749 = vand.u32 %v470, 4294901760
      %v5750 = vsub.f32 %v470, %v5749
      %5751 = vmatpush.msra.mxu0 %v5750
      %v5752 = vand.u32 %v466, 4294901760
      %v5753 = vsub.f32 %v466, %v5752
      %5754 = vmatpush.msra.mxu0 %v5753
      %v5755 = vand.u32 %v462, 4294901760
      %v5756 = vsub.f32 %v462, %v5755
      %5757 = vmatpush.msra.mxu0 %v5756
      %v5758 = vand.u32 %v458, 4294901760
      %v5759 = vsub.f32 %v458, %v5758
      %5760 = vmatpush.msra.mxu0 %v5759
      %v5761 = vand.u32 %v454, 4294901760
      %v5762 = vsub.f32 %v454, %v5761
      %5763 = vmatpush.msra.mxu0 %v5762
      %v5764 = vand.u32 %v450, 4294901760
      %v5765 = vsub.f32 %v450, %v5764
      %5766 = vmatpush.msra.mxu0 %v5765
      %v5767 = vand.u32 %v446, 4294901760
      %v5768 = vsub.f32 %v446, %v5767
      %5769 = vmatpush.msra.mxu0 %v5768
      %v5770 = vand.u32 %v442, 4294901760
      %v5771 = vsub.f32 %v442, %v5770
      %5772 = vmatpush.msra.mxu0 %v5771
      %v5773 = vand.u32 %v438, 4294901760
      %v5774 = vsub.f32 %v438, %v5773
      %5775 = vmatpush.msra.mxu0 %v5774
      %v5776 = vand.u32 %v434, 4294901760
      %v5777 = vsub.f32 %v434, %v5776
      %5778 = vmatpush.msra.mxu0 %v5777
      %v5779 = vand.u32 %v430, 4294901760
      %v5780 = vsub.f32 %v430, %v5779
      %5781 = vmatpush.msra.mxu0 %v5780
      %v5782 = vand.u32 %v426, 4294901760
      %v5783 = vsub.f32 %v426, %v5782
      %5784 = vmatpush.msra.mxu0 %v5783
      %v5785 = vand.u32 %v422, 4294901760
      %v5786 = vsub.f32 %v422, %v5785
      %5787 = vmatpush.msra.mxu0 %v5786
      %v5788 = vand.u32 %v226, 4294901760
      %v5789 = vsub.f32 %v226, %v5788
      %5790 = vmatmul.f32.gmra.mxu0 %v5789
      %v5791 = vpop.f32.mrf.mxu0
      %v5792 = vadd.f32 %v5738, %v5791
      %5793 = vdwg.mxu0
      %v5794 = vand.u32 %v482, 4294901760
      %5795 = vmatpush.msra.mxu0 %v5794
      %v5796 = vand.u32 %v478, 4294901760
      %5797 = vmatpush.msra.mxu0 %v5796
      %v5798 = vand.u32 %v474, 4294901760
      %5799 = vmatpush.msra.mxu0 %v5798
      %v5800 = vand.u32 %v470, 4294901760
      %5801 = vmatpush.msra.mxu0 %v5800
      %v5802 = vand.u32 %v466, 4294901760
      %5803 = vmatpush.msra.mxu0 %v5802
      %v5804 = vand.u32 %v462, 4294901760
      %5805 = vmatpush.msra.mxu0 %v5804
      %v5806 = vand.u32 %v458, 4294901760
      %5807 = vmatpush.msra.mxu0 %v5806
      %v5808 = vand.u32 %v454, 4294901760
      %5809 = vmatpush.msra.mxu0 %v5808
      %v5810 = vand.u32 %v450, 4294901760
      %5811 = vmatpush.msra.mxu0 %v5810
      %v5812 = vand.u32 %v446, 4294901760
      %5813 = vmatpush.msra.mxu0 %v5812
      %v5814 = vand.u32 %v442, 4294901760
      %5815 = vmatpush.msra.mxu0 %v5814
      %v5816 = vand.u32 %v438, 4294901760
      %5817 = vmatpush.msra.mxu0 %v5816
      %v5818 = vand.u32 %v434, 4294901760
      %5819 = vmatpush.msra.mxu0 %v5818
      %v5820 = vand.u32 %v430, 4294901760
      %5821 = vmatpush.msra.mxu0 %v5820
      %v5822 = vand.u32 %v426, 4294901760
      %5823 = vmatpush.msra.mxu0 %v5822
      %v5824 = vand.u32 %v422, 4294901760
      %5825 = vmatpush.msra.mxu0 %v5824
      %v5826 = vand.u32 %v226, 4294901760
      %v5827 = vsub.f32 %v226, %v5826
      %v5828 = vand.u32 %v5827, 4294901760
      %5829 = vmatmul.f32.gmra.mxu0 %v5828
      %v5830 = vpop.f32.mrf.mxu0
      %v5831 = vadd.f32 %v5792, %v5830
      %5832 = vdwg.mxu0
      %v5833 = vand.u32 %v482, 4294901760
      %v5834 = vsub.f32 %v482, %v5833
      %v5835 = vand.u32 %v5834, 4294901760
      %5836 = vmatpush.msra.mxu0 %v5835
      %v5837 = vand.u32 %v478, 4294901760
      %v5838 = vsub.f32 %v478, %v5837
      %v5839 = vand.u32 %v5838, 4294901760
      %5840 = vmatpush.msra.mxu0 %v5839
      %v5841 = vand.u32 %v474, 4294901760
      %v5842 = vsub.f32 %v474, %v5841
      %v5843 = vand.u32 %v5842, 4294901760
      %5844 = vmatpush.msra.mxu0 %v5843
      %v5845 = vand.u32 %v470, 4294901760
      %v5846 = vsub.f32 %v470, %v5845
      %v5847 = vand.u32 %v5846, 4294901760
      %5848 = vmatpush.msra.mxu0 %v5847
      %v5849 = vand.u32 %v466, 4294901760
      %v5850 = vsub.f32 %v466, %v5849
      %v5851 = vand.u32 %v5850, 4294901760
      %5852 = vmatpush.msra.mxu0 %v5851
      %v5853 = vand.u32 %v462, 4294901760
      %v5854 = vsub.f32 %v462, %v5853
      %v5855 = vand.u32 %v5854, 4294901760
      %5856 = vmatpush.msra.mxu0 %v5855
      %v5857 = vand.u32 %v458, 4294901760
      %v5858 = vsub.f32 %v458, %v5857
      %v5859 = vand.u32 %v5858, 4294901760
      %5860 = vmatpush.msra.mxu0 %v5859
      %v5861 = vand.u32 %v454, 4294901760
      %v5862 = vsub.f32 %v454, %v5861
      %v5863 = vand.u32 %v5862, 4294901760
      %5864 = vmatpush.msra.mxu0 %v5863
      %v5865 = vand.u32 %v450, 4294901760
      %v5866 = vsub.f32 %v450, %v5865
      %v5867 = vand.u32 %v5866, 4294901760
      %5868 = vmatpush.msra.mxu0 %v5867
      %v5869 = vand.u32 %v446, 4294901760
      %v5870 = vsub.f32 %v446, %v5869
      %v5871 = vand.u32 %v5870, 4294901760
      %5872 = vmatpush.msra.mxu0 %v5871
      %v5873 = vand.u32 %v442, 4294901760
      %v5874 = vsub.f32 %v442, %v5873
      %v5875 = vand.u32 %v5874, 4294901760
      %5876 = vmatpush.msra.mxu0 %v5875
      %v5877 = vand.u32 %v438, 4294901760
      %v5878 = vsub.f32 %v438, %v5877
      %v5879 = vand.u32 %v5878, 4294901760
      %5880 = vmatpush.msra.mxu0 %v5879
      %v5881 = vand.u32 %v434, 4294901760
      %v5882 = vsub.f32 %v434, %v5881
      %v5883 = vand.u32 %v5882, 4294901760
      %5884 = vmatpush.msra.mxu0 %v5883
      %v5885 = vand.u32 %v430, 4294901760
      %v5886 = vsub.f32 %v430, %v5885
      %v5887 = vand.u32 %v5886, 4294901760
      %5888 = vmatpush.msra.mxu0 %v5887
      %v5889 = vand.u32 %v426, 4294901760
      %v5890 = vsub.f32 %v426, %v5889
      %v5891 = vand.u32 %v5890, 4294901760
      %5892 = vmatpush.msra.mxu0 %v5891
      %v5893 = vand.u32 %v422, 4294901760
      %v5894 = vsub.f32 %v422, %v5893
      %v5895 = vand.u32 %v5894, 4294901760
      %5896 = vmatpush.msra.mxu0 %v5895
      %v5897 = vand.u32 %v226, 4294901760
      %5898 = vmatmul.f32.gmra.mxu0 %v5897
      %v5899 = vpop.f32.mrf.mxu0
      %v5900 = vadd.f32 %v5831, %v5899
      %5901 = vdwg.mxu0
      %v5902 = vand.u32 %v482, 4294901760
      %5903 = vmatpush.msra.mxu0 %v5902
      %v5904 = vand.u32 %v478, 4294901760
      %5905 = vmatpush.msra.mxu0 %v5904
      %v5906 = vand.u32 %v474, 4294901760
      %5907 = vmatpush.msra.mxu0 %v5906
      %v5908 = vand.u32 %v470, 4294901760
      %5909 = vmatpush.msra.mxu0 %v5908
      %v5910 = vand.u32 %v466, 4294901760
      %5911 = vmatpush.msra.mxu0 %v5910
      %v5912 = vand.u32 %v462, 4294901760
      %5913 = vmatpush.msra.mxu0 %v5912
      %v5914 = vand.u32 %v458, 4294901760
      %5915 = vmatpush.msra.mxu0 %v5914
      %v5916 = vand.u32 %v454, 4294901760
      %5917 = vmatpush.msra.mxu0 %v5916
      %v5918 = vand.u32 %v450, 4294901760
      %5919 = vmatpush.msra.mxu0 %v5918
      %v5920 = vand.u32 %v446, 4294901760
      %5921 = vmatpush.msra.mxu0 %v5920
      %v5922 = vand.u32 %v442, 4294901760
      %5923 = vmatpush.msra.mxu0 %v5922
      %v5924 = vand.u32 %v438, 4294901760
      %5925 = vmatpush.msra.mxu0 %v5924
      %v5926 = vand.u32 %v434, 4294901760
      %5927 = vmatpush.msra.mxu0 %v5926
      %v5928 = vand.u32 %v430, 4294901760
      %5929 = vmatpush.msra.mxu0 %v5928
      %v5930 = vand.u32 %v426, 4294901760
      %5931 = vmatpush.msra.mxu0 %v5930
      %v5932 = vand.u32 %v422, 4294901760
      %5933 = vmatpush.msra.mxu0 %v5932
      %v5934 = vand.u32 %v226, 4294901760
      %5935 = vmatmul.f32.gmra.mxu0 %v5934
      %v5936 = vpop.f32.mrf.mxu0
      %v5937 = vadd.f32 %v5900, %v5936
      %5938 = vdwg.mxu0
      %v5939 = vmax.f32 %v1845, %v4573
      %v5940 = vmax.f32 %v3209, %v5937
      %v5941 = vld [vmem:[%s2] sm:$0xff]
      %v5942 = vld [vmem:[%s2 + $0x8] sm:$0xff]
      %v5943 = vld [vmem:[%s2 + $0x10] sm:$0xff]
      %v5944 = vld [vmem:[%s2 + $0x18] sm:$0xff]
      %v5945 = vld [vmem:[%s2 + $0x20] sm:$0xff]
      %v5946 = vld [vmem:[%s2 + $0x28] sm:$0xff]
      %v5947 = vld [vmem:[%s2 + $0x30] sm:$0xff]
      %v5948 = vld [vmem:[%s2 + $0x38] sm:$0xff]
      %v5949 = vld [vmem:[%s2 + $0x40] sm:$0xff]
      %v5950 = vld [vmem:[%s2 + $0x48] sm:$0xff]
      %v5951 = vld [vmem:[%s2 + $0x50] sm:$0xff]
      %v5952 = vld [vmem:[%s2 + $0x58] sm:$0xff]
      %v5953 = vld [vmem:[%s2 + $0x60] sm:$0xff]
      %v5954 = vld [vmem:[%s2 + $0x68] sm:$0xff]
      %v5955 = vld [vmem:[%s2 + $0x70] sm:$0xff]
      %v5956 = vld [vmem:[%s2 + $0x78] sm:$0xff]
      %v5957 = vld [vmem:[%s2 + $0x80] sm:$0xff]
      %v5958 = vld [vmem:[%s2 + $0x88] sm:$0xff]
      %v5959 = vld [vmem:[%s2 + $0x90] sm:$0xff]
      %v5960 = vld [vmem:[%s2 + $0x98] sm:$0xff]
      %v5961 = vld [vmem:[%s2 + $0xa0] sm:$0xff]
      %v5962 = vld [vmem:[%s2 + $0xa8] sm:$0xff]
      %v5963 = vld [vmem:[%s2 + $0xb0] sm:$0xff]
      %v5964 = vld [vmem:[%s2 + $0xb8] sm:$0xff]
      %v5965 = vld [vmem:[%s2 + $0xc0] sm:$0xff]
      %v5966 = vld [vmem:[%s2 + $0xc8] sm:$0xff]
      %v5967 = vld [vmem:[%s2 + $0xd0] sm:$0xff]
      %v5968 = vld [vmem:[%s2 + $0xd8] sm:$0xff]
      %v5969 = vld [vmem:[%s2 + $0xe0] sm:$0xff]
      %v5970 = vld [vmem:[%s2 + $0xe8] sm:$0xff]
      %v5971 = vld [vmem:[%s2 + $0xf0] sm:$0xff]
      %v5972 = vld [vmem:[%s2 + $0xf8] sm:$0xff]
      %v5973 = vand.u32 %v5956, 4294901760
      %5974 = vmatpush.msra.mxu0 %v5973
      %v5975 = vand.u32 %v5955, 4294901760
      %5976 = vmatpush.msra.mxu0 %v5975
      %v5977 = vand.u32 %v5954, 4294901760
      %5978 = vmatpush.msra.mxu0 %v5977
      %v5979 = vand.u32 %v5953, 4294901760
      %5980 = vmatpush.msra.mxu0 %v5979
      %v5981 = vand.u32 %v5952, 4294901760
      %5982 = vmatpush.msra.mxu0 %v5981
      %v5983 = vand.u32 %v5951, 4294901760
      %5984 = vmatpush.msra.mxu0 %v5983
      %v5985 = vand.u32 %v5950, 4294901760
      %5986 = vmatpush.msra.mxu0 %v5985
      %v5987 = vand.u32 %v5949, 4294901760
      %5988 = vmatpush.msra.mxu0 %v5987
      %v5989 = vand.u32 %v5948, 4294901760
      %5990 = vmatpush.msra.mxu0 %v5989
      %v5991 = vand.u32 %v5947, 4294901760
      %5992 = vmatpush.msra.mxu0 %v5991
      %v5993 = vand.u32 %v5946, 4294901760
      %5994 = vmatpush.msra.mxu0 %v5993
      %v5995 = vand.u32 %v5945, 4294901760
      %5996 = vmatpush.msra.mxu0 %v5995
      %v5997 = vand.u32 %v5944, 4294901760
      %5998 = vmatpush.msra.mxu0 %v5997
      %v5999 = vand.u32 %v5943, 4294901760
      %6000 = vmatpush.msra.mxu0 %v5999
      %v6001 = vand.u32 %v5942, 4294901760
      %6002 = vmatpush.msra.mxu0 %v6001
      %v6003 = vand.u32 %v5941, 4294901760
      %6004 = vmatpush.msra.mxu0 %v6003
      %v6005 = vand.u32 %v5939, 4294901760
      %v6006 = vsub.f32 %v5939, %v6005
      %v6007 = vand.u32 %v6006, 4294901760
      %v6008 = vsub.f32 %v6006, %v6007
      %v6009 = vand.u32 %v6008, 4294901760
      %6010 = vmatmul.f32.gmra.mxu0 %v6009
      %v6011 = vpop.f32.mrf.mxu0
      %v6012 = vadd.f32 0.0, %v6011
      %6013 = vdwg.mxu0
      %v6014 = vand.u32 %v5956, 4294901760
      %v6015 = vsub.f32 %v5956, %v6014
      %v6016 = vand.u32 %v6015, 4294901760
      %v6017 = vsub.f32 %v6015, %v6016
      %v6018 = vand.u32 %v6017, 4294901760
      %6019 = vmatpush.msra.mxu0 %v6018
      %v6020 = vand.u32 %v5955, 4294901760
      %v6021 = vsub.f32 %v5955, %v6020
      %v6022 = vand.u32 %v6021, 4294901760
      %v6023 = vsub.f32 %v6021, %v6022
      %v6024 = vand.u32 %v6023, 4294901760
      %6025 = vmatpush.msra.mxu0 %v6024
      %v6026 = vand.u32 %v5954, 4294901760
      %v6027 = vsub.f32 %v5954, %v6026
      %v6028 = vand.u32 %v6027, 4294901760
      %v6029 = vsub.f32 %v6027, %v6028
      %v6030 = vand.u32 %v6029, 4294901760
      %6031 = vmatpush.msra.mxu0 %v6030
      %v6032 = vand.u32 %v5953, 4294901760
      %v6033 = vsub.f32 %v5953, %v6032
      %v6034 = vand.u32 %v6033, 4294901760
      %v6035 = vsub.f32 %v6033, %v6034
      %v6036 = vand.u32 %v6035, 4294901760
      %6037 = vmatpush.msra.mxu0 %v6036
      %v6038 = vand.u32 %v5952, 4294901760
      %v6039 = vsub.f32 %v5952, %v6038
      %v6040 = vand.u32 %v6039, 4294901760
      %v6041 = vsub.f32 %v6039, %v6040
      %v6042 = vand.u32 %v6041, 4294901760
      %6043 = vmatpush.msra.mxu0 %v6042
      %v6044 = vand.u32 %v5951, 4294901760
      %v6045 = vsub.f32 %v5951, %v6044
      %v6046 = vand.u32 %v6045, 4294901760
      %v6047 = vsub.f32 %v6045, %v6046
      %v6048 = vand.u32 %v6047, 4294901760
      %6049 = vmatpush.msra.mxu0 %v6048
      %v6050 = vand.u32 %v5950, 4294901760
      %v6051 = vsub.f32 %v5950, %v6050
      %v6052 = vand.u32 %v6051, 4294901760
      %v6053 = vsub.f32 %v6051, %v6052
      %v6054 = vand.u32 %v6053, 4294901760
      %6055 = vmatpush.msra.mxu0 %v6054
      %v6056 = vand.u32 %v5949, 4294901760
      %v6057 = vsub.f32 %v5949, %v6056
      %v6058 = vand.u32 %v6057, 4294901760
      %v6059 = vsub.f32 %v6057, %v6058
      %v6060 = vand.u32 %v6059, 4294901760
      %6061 = vmatpush.msra.mxu0 %v6060
      %v6062 = vand.u32 %v5948, 4294901760
      %v6063 = vsub.f32 %v5948, %v6062
      %v6064 = vand.u32 %v6063, 4294901760
      %v6065 = vsub.f32 %v6063, %v6064
      %v6066 = vand.u32 %v6065, 4294901760
      %6067 = vmatpush.msra.mxu0 %v6066
      %v6068 = vand.u32 %v5947, 4294901760
      %v6069 = vsub.f32 %v5947, %v6068
      %v6070 = vand.u32 %v6069, 4294901760
      %v6071 = vsub.f32 %v6069, %v6070
      %v6072 = vand.u32 %v6071, 4294901760
      %6073 = vmatpush.msra.mxu0 %v6072
      %v6074 = vand.u32 %v5946, 4294901760
      %v6075 = vsub.f32 %v5946, %v6074
      %v6076 = vand.u32 %v6075, 4294901760
      %v6077 = vsub.f32 %v6075, %v6076
      %v6078 = vand.u32 %v6077, 4294901760
      %6079 = vmatpush.msra.mxu0 %v6078
      %v6080 = vand.u32 %v5945, 4294901760
      %v6081 = vsub.f32 %v5945, %v6080
      %v6082 = vand.u32 %v6081, 4294901760
      %v6083 = vsub.f32 %v6081, %v6082
      %v6084 = vand.u32 %v6083, 4294901760
      %6085 = vmatpush.msra.mxu0 %v6084
      %v6086 = vand.u32 %v5944, 4294901760
      %v6087 = vsub.f32 %v5944, %v6086
      %v6088 = vand.u32 %v6087, 4294901760
      %v6089 = vsub.f32 %v6087, %v6088
      %v6090 = vand.u32 %v6089, 4294901760
      %6091 = vmatpush.msra.mxu0 %v6090
      %v6092 = vand.u32 %v5943, 4294901760
      %v6093 = vsub.f32 %v5943, %v6092
      %v6094 = vand.u32 %v6093, 4294901760
      %v6095 = vsub.f32 %v6093, %v6094
      %v6096 = vand.u32 %v6095, 4294901760
      %6097 = vmatpush.msra.mxu0 %v6096
      %v6098 = vand.u32 %v5942, 4294901760
      %v6099 = vsub.f32 %v5942, %v6098
      %v6100 = vand.u32 %v6099, 4294901760
      %v6101 = vsub.f32 %v6099, %v6100
      %v6102 = vand.u32 %v6101, 4294901760
      %6103 = vmatpush.msra.mxu0 %v6102
      %v6104 = vand.u32 %v5941, 4294901760
      %v6105 = vsub.f32 %v5941, %v6104
      %v6106 = vand.u32 %v6105, 4294901760
      %v6107 = vsub.f32 %v6105, %v6106
      %v6108 = vand.u32 %v6107, 4294901760
      %6109 = vmatpush.msra.mxu0 %v6108
      %v6110 = vand.u32 %v5939, 4294901760
      %6111 = vmatmul.f32.gmra.mxu0 %v6110
      %v6112 = vpop.f32.mrf.mxu0
      %v6113 = vadd.f32 %v6012, %v6112
      %6114 = vdwg.mxu0
      %v6115 = vand.u32 %v5956, 4294901760
      %v6116 = vsub.f32 %v5956, %v6115
      %6117 = vmatpush.msra.mxu0 %v6116
      %v6118 = vand.u32 %v5955, 4294901760
      %v6119 = vsub.f32 %v5955, %v6118
      %6120 = vmatpush.msra.mxu0 %v6119
      %v6121 = vand.u32 %v5954, 4294901760
      %v6122 = vsub.f32 %v5954, %v6121
      %6123 = vmatpush.msra.mxu0 %v6122
      %v6124 = vand.u32 %v5953, 4294901760
      %v6125 = vsub.f32 %v5953, %v6124
      %6126 = vmatpush.msra.mxu0 %v6125
      %v6127 = vand.u32 %v5952, 4294901760
      %v6128 = vsub.f32 %v5952, %v6127
      %6129 = vmatpush.msra.mxu0 %v6128
      %v6130 = vand.u32 %v5951, 4294901760
      %v6131 = vsub.f32 %v5951, %v6130
      %6132 = vmatpush.msra.mxu0 %v6131
      %v6133 = vand.u32 %v5950, 4294901760
      %v6134 = vsub.f32 %v5950, %v6133
      %6135 = vmatpush.msra.mxu0 %v6134
      %v6136 = vand.u32 %v5949, 4294901760
      %v6137 = vsub.f32 %v5949, %v6136
      %6138 = vmatpush.msra.mxu0 %v6137
      %v6139 = vand.u32 %v5948, 4294901760
      %v6140 = vsub.f32 %v5948, %v6139
      %6141 = vmatpush.msra.mxu0 %v6140
      %v6142 = vand.u32 %v5947, 4294901760
      %v6143 = vsub.f32 %v5947, %v6142
      %6144 = vmatpush.msra.mxu0 %v6143
      %v6145 = vand.u32 %v5946, 4294901760
      %v6146 = vsub.f32 %v5946, %v6145
      %6147 = vmatpush.msra.mxu0 %v6146
      %v6148 = vand.u32 %v5945, 4294901760
      %v6149 = vsub.f32 %v5945, %v6148
      %6150 = vmatpush.msra.mxu0 %v6149
      %v6151 = vand.u32 %v5944, 4294901760
      %v6152 = vsub.f32 %v5944, %v6151
      %6153 = vmatpush.msra.mxu0 %v6152
      %v6154 = vand.u32 %v5943, 4294901760
      %v6155 = vsub.f32 %v5943, %v6154
      %6156 = vmatpush.msra.mxu0 %v6155
      %v6157 = vand.u32 %v5942, 4294901760
      %v6158 = vsub.f32 %v5942, %v6157
      %6159 = vmatpush.msra.mxu0 %v6158
      %v6160 = vand.u32 %v5941, 4294901760
      %v6161 = vsub.f32 %v5941, %v6160
      %6162 = vmatpush.msra.mxu0 %v6161
      %v6163 = vand.u32 %v5939, 4294901760
      %v6164 = vsub.f32 %v5939, %v6163
      %6165 = vmatmul.f32.gmra.mxu0 %v6164
      %v6166 = vpop.f32.mrf.mxu0
      %v6167 = vadd.f32 %v6113, %v6166
      %6168 = vdwg.mxu0
      %v6169 = vand.u32 %v5956, 4294901760
      %6170 = vmatpush.msra.mxu0 %v6169
      %v6171 = vand.u32 %v5955, 4294901760
      %6172 = vmatpush.msra.mxu0 %v6171
      %v6173 = vand.u32 %v5954, 4294901760
      %6174 = vmatpush.msra.mxu0 %v6173
      %v6175 = vand.u32 %v5953, 4294901760
      %6176 = vmatpush.msra.mxu0 %v6175
      %v6177 = vand.u32 %v5952, 4294901760
      %6178 = vmatpush.msra.mxu0 %v6177
      %v6179 = vand.u32 %v5951, 4294901760
      %6180 = vmatpush.msra.mxu0 %v6179
      %v6181 = vand.u32 %v5950, 4294901760
      %6182 = vmatpush.msra.mxu0 %v6181
      %v6183 = vand.u32 %v5949, 4294901760
      %6184 = vmatpush.msra.mxu0 %v6183
      %v6185 = vand.u32 %v5948, 4294901760
      %6186 = vmatpush.msra.mxu0 %v6185
      %v6187 = vand.u32 %v5947, 4294901760
      %6188 = vmatpush.msra.mxu0 %v6187
      %v6189 = vand.u32 %v5946, 4294901760
      %6190 = vmatpush.msra.mxu0 %v6189
      %v6191 = vand.u32 %v5945, 4294901760
      %6192 = vmatpush.msra.mxu0 %v6191
      %v6193 = vand.u32 %v5944, 4294901760
      %6194 = vmatpush.msra.mxu0 %v6193
      %v6195 = vand.u32 %v5943, 4294901760
      %6196 = vmatpush.msra.mxu0 %v6195
      %v6197 = vand.u32 %v5942, 4294901760
      %6198 = vmatpush.msra.mxu0 %v6197
      %v6199 = vand.u32 %v5941, 4294901760
      %6200 = vmatpush.msra.mxu0 %v6199
      %v6201 = vand.u32 %v5939, 4294901760
      %v6202 = vsub.f32 %v5939, %v6201
      %v6203 = vand.u32 %v6202, 4294901760
      %6204 = vmatmul.f32.gmra.mxu0 %v6203
      %v6205 = vpop.f32.mrf.mxu0
      %v6206 = vadd.f32 %v6167, %v6205
      %6207 = vdwg.mxu0
      %v6208 = vand.u32 %v5956, 4294901760
      %v6209 = vsub.f32 %v5956, %v6208
      %v6210 = vand.u32 %v6209, 4294901760
      %6211 = vmatpush.msra.mxu0 %v6210
      %v6212 = vand.u32 %v5955, 4294901760
      %v6213 = vsub.f32 %v5955, %v6212
      %v6214 = vand.u32 %v6213, 4294901760
      %6215 = vmatpush.msra.mxu0 %v6214
      %v6216 = vand.u32 %v5954, 4294901760
      %v6217 = vsub.f32 %v5954, %v6216
      %v6218 = vand.u32 %v6217, 4294901760
      %6219 = vmatpush.msra.mxu0 %v6218
      %v6220 = vand.u32 %v5953, 4294901760
      %v6221 = vsub.f32 %v5953, %v6220
      %v6222 = vand.u32 %v6221, 4294901760
      %6223 = vmatpush.msra.mxu0 %v6222
      %v6224 = vand.u32 %v5952, 4294901760
      %v6225 = vsub.f32 %v5952, %v6224
      %v6226 = vand.u32 %v6225, 4294901760
      %6227 = vmatpush.msra.mxu0 %v6226
      %v6228 = vand.u32 %v5951, 4294901760
      %v6229 = vsub.f32 %v5951, %v6228
      %v6230 = vand.u32 %v6229, 4294901760
      %6231 = vmatpush.msra.mxu0 %v6230
      %v6232 = vand.u32 %v5950, 4294901760
      %v6233 = vsub.f32 %v5950, %v6232
      %v6234 = vand.u32 %v6233, 4294901760
      %6235 = vmatpush.msra.mxu0 %v6234
      %v6236 = vand.u32 %v5949, 4294901760
      %v6237 = vsub.f32 %v5949, %v6236
      %v6238 = vand.u32 %v6237, 4294901760
      %6239 = vmatpush.msra.mxu0 %v6238
      %v6240 = vand.u32 %v5948, 4294901760
      %v6241 = vsub.f32 %v5948, %v6240
      %v6242 = vand.u32 %v6241, 4294901760
      %6243 = vmatpush.msra.mxu0 %v6242
      %v6244 = vand.u32 %v5947, 4294901760
      %v6245 = vsub.f32 %v5947, %v6244
      %v6246 = vand.u32 %v6245, 4294901760
      %6247 = vmatpush.msra.mxu0 %v6246
      %v6248 = vand.u32 %v5946, 4294901760
      %v6249 = vsub.f32 %v5946, %v6248
      %v6250 = vand.u32 %v6249, 4294901760
      %6251 = vmatpush.msra.mxu0 %v6250
      %v6252 = vand.u32 %v5945, 4294901760
      %v6253 = vsub.f32 %v5945, %v6252
      %v6254 = vand.u32 %v6253, 4294901760
      %6255 = vmatpush.msra.mxu0 %v6254
      %v6256 = vand.u32 %v5944, 4294901760
      %v6257 = vsub.f32 %v5944, %v6256
      %v6258 = vand.u32 %v6257, 4294901760
      %6259 = vmatpush.msra.mxu0 %v6258
      %v6260 = vand.u32 %v5943, 4294901760
      %v6261 = vsub.f32 %v5943, %v6260
      %v6262 = vand.u32 %v6261, 4294901760
      %6263 = vmatpush.msra.mxu0 %v6262
      %v6264 = vand.u32 %v5942, 4294901760
      %v6265 = vsub.f32 %v5942, %v6264
      %v6266 = vand.u32 %v6265, 4294901760
      %6267 = vmatpush.msra.mxu0 %v6266
      %v6268 = vand.u32 %v5941, 4294901760
      %v6269 = vsub.f32 %v5941, %v6268
      %v6270 = vand.u32 %v6269, 4294901760
      %6271 = vmatpush.msra.mxu0 %v6270
      %v6272 = vand.u32 %v5939, 4294901760
      %6273 = vmatmul.f32.gmra.mxu0 %v6272
      %v6274 = vpop.f32.mrf.mxu0
      %v6275 = vadd.f32 %v6206, %v6274
      %6276 = vdwg.mxu0
      %v6277 = vand.u32 %v5956, 4294901760
      %6278 = vmatpush.msra.mxu0 %v6277
      %v6279 = vand.u32 %v5955, 4294901760
      %6280 = vmatpush.msra.mxu0 %v6279
      %v6281 = vand.u32 %v5954, 4294901760
      %6282 = vmatpush.msra.mxu0 %v6281
      %v6283 = vand.u32 %v5953, 4294901760
      %6284 = vmatpush.msra.mxu0 %v6283
      %v6285 = vand.u32 %v5952, 4294901760
      %6286 = vmatpush.msra.mxu0 %v6285
      %v6287 = vand.u32 %v5951, 4294901760
      %6288 = vmatpush.msra.mxu0 %v6287
      %v6289 = vand.u32 %v5950, 4294901760
      %6290 = vmatpush.msra.mxu0 %v6289
      %v6291 = vand.u32 %v5949, 4294901760
      %6292 = vmatpush.msra.mxu0 %v6291
      %v6293 = vand.u32 %v5948, 4294901760
      %6294 = vmatpush.msra.mxu0 %v6293
      %v6295 = vand.u32 %v5947, 4294901760
      %6296 = vmatpush.msra.mxu0 %v6295
      %v6297 = vand.u32 %v5946, 4294901760
      %6298 = vmatpush.msra.mxu0 %v6297
      %v6299 = vand.u32 %v5945, 4294901760
      %6300 = vmatpush.msra.mxu0 %v6299
      %v6301 = vand.u32 %v5944, 4294901760
      %6302 = vmatpush.msra.mxu0 %v6301
      %v6303 = vand.u32 %v5943, 4294901760
      %6304 = vmatpush.msra.mxu0 %v6303
      %v6305 = vand.u32 %v5942, 4294901760
      %6306 = vmatpush.msra.mxu0 %v6305
      %v6307 = vand.u32 %v5941, 4294901760
      %6308 = vmatpush.msra.mxu0 %v6307
      %v6309 = vand.u32 %v5939, 4294901760
      %6310 = vmatmul.f32.gmra.mxu0 %v6309
      %v6311 = vpop.f32.mrf.mxu0
      %v6312 = vadd.f32 %v6275, %v6311
      %6313 = vdwg.mxu0
      %v6314 = vand.u32 %v5972, 4294901760
      %6315 = vmatpush.msra.mxu0 %v6314
      %v6316 = vand.u32 %v5971, 4294901760
      %6317 = vmatpush.msra.mxu0 %v6316
      %v6318 = vand.u32 %v5970, 4294901760
      %6319 = vmatpush.msra.mxu0 %v6318
      %v6320 = vand.u32 %v5969, 4294901760
      %6321 = vmatpush.msra.mxu0 %v6320
      %v6322 = vand.u32 %v5968, 4294901760
      %6323 = vmatpush.msra.mxu0 %v6322
      %v6324 = vand.u32 %v5967, 4294901760
      %6325 = vmatpush.msra.mxu0 %v6324
      %v6326 = vand.u32 %v5966, 4294901760
      %6327 = vmatpush.msra.mxu0 %v6326
      %v6328 = vand.u32 %v5965, 4294901760
      %6329 = vmatpush.msra.mxu0 %v6328
      %v6330 = vand.u32 %v5964, 4294901760
      %6331 = vmatpush.msra.mxu0 %v6330
      %v6332 = vand.u32 %v5963, 4294901760
      %6333 = vmatpush.msra.mxu0 %v6332
      %v6334 = vand.u32 %v5962, 4294901760
      %6335 = vmatpush.msra.mxu0 %v6334
      %v6336 = vand.u32 %v5961, 4294901760
      %6337 = vmatpush.msra.mxu0 %v6336
      %v6338 = vand.u32 %v5960, 4294901760
      %6339 = vmatpush.msra.mxu0 %v6338
      %v6340 = vand.u32 %v5959, 4294901760
      %6341 = vmatpush.msra.mxu0 %v6340
      %v6342 = vand.u32 %v5958, 4294901760
      %6343 = vmatpush.msra.mxu0 %v6342
      %v6344 = vand.u32 %v5957, 4294901760
      %6345 = vmatpush.msra.mxu0 %v6344
      %v6346 = vand.u32 %v5940, 4294901760
      %v6347 = vsub.f32 %v5940, %v6346
      %v6348 = vand.u32 %v6347, 4294901760
      %v6349 = vsub.f32 %v6347, %v6348
      %v6350 = vand.u32 %v6349, 4294901760
      %6351 = vmatmul.f32.gmra.mxu0 %v6350
      %v6352 = vpop.f32.mrf.mxu0
      %v6353 = vadd.f32 %v6312, %v6352
      %6354 = vdwg.mxu0
      %v6355 = vand.u32 %v5972, 4294901760
      %v6356 = vsub.f32 %v5972, %v6355
      %v6357 = vand.u32 %v6356, 4294901760
      %v6358 = vsub.f32 %v6356, %v6357
      %v6359 = vand.u32 %v6358, 4294901760
      %6360 = vmatpush.msra.mxu0 %v6359
      %v6361 = vand.u32 %v5971, 4294901760
      %v6362 = vsub.f32 %v5971, %v6361
      %v6363 = vand.u32 %v6362, 4294901760
      %v6364 = vsub.f32 %v6362, %v6363
      %v6365 = vand.u32 %v6364, 4294901760
      %6366 = vmatpush.msra.mxu0 %v6365
      %v6367 = vand.u32 %v5970, 4294901760
      %v6368 = vsub.f32 %v5970, %v6367
      %v6369 = vand.u32 %v6368, 4294901760
      %v6370 = vsub.f32 %v6368, %v6369
      %v6371 = vand.u32 %v6370, 4294901760
      %6372 = vmatpush.msra.mxu0 %v6371
      %v6373 = vand.u32 %v5969, 4294901760
      %v6374 = vsub.f32 %v5969, %v6373
      %v6375 = vand.u32 %v6374, 4294901760
      %v6376 = vsub.f32 %v6374, %v6375
      %v6377 = vand.u32 %v6376, 4294901760
      %6378 = vmatpush.msra.mxu0 %v6377
      %v6379 = vand.u32 %v5968, 4294901760
      %v6380 = vsub.f32 %v5968, %v6379
      %v6381 = vand.u32 %v6380, 4294901760
      %v6382 = vsub.f32 %v6380, %v6381
      %v6383 = vand.u32 %v6382, 4294901760
      %6384 = vmatpush.msra.mxu0 %v6383
      %v6385 = vand.u32 %v5967, 4294901760
      %v6386 = vsub.f32 %v5967, %v6385
      %v6387 = vand.u32 %v6386, 4294901760
      %v6388 = vsub.f32 %v6386, %v6387
      %v6389 = vand.u32 %v6388, 4294901760
      %6390 = vmatpush.msra.mxu0 %v6389
      %v6391 = vand.u32 %v5966, 4294901760
      %v6392 = vsub.f32 %v5966, %v6391
      %v6393 = vand.u32 %v6392, 4294901760
      %v6394 = vsub.f32 %v6392, %v6393
      %v6395 = vand.u32 %v6394, 4294901760
      %6396 = vmatpush.msra.mxu0 %v6395
      %v6397 = vand.u32 %v5965, 4294901760
      %v6398 = vsub.f32 %v5965, %v6397
      %v6399 = vand.u32 %v6398, 4294901760
      %v6400 = vsub.f32 %v6398, %v6399
      %v6401 = vand.u32 %v6400, 4294901760
      %6402 = vmatpush.msra.mxu0 %v6401
      %v6403 = vand.u32 %v5964, 4294901760
      %v6404 = vsub.f32 %v5964, %v6403
      %v6405 = vand.u32 %v6404, 4294901760
      %v6406 = vsub.f32 %v6404, %v6405
      %v6407 = vand.u32 %v6406, 4294901760
      %6408 = vmatpush.msra.mxu0 %v6407
      %v6409 = vand.u32 %v5963, 4294901760
      %v6410 = vsub.f32 %v5963, %v6409
      %v6411 = vand.u32 %v6410, 4294901760
      %v6412 = vsub.f32 %v6410, %v6411
      %v6413 = vand.u32 %v6412, 4294901760
      %6414 = vmatpush.msra.mxu0 %v6413
      %v6415 = vand.u32 %v5962, 4294901760
      %v6416 = vsub.f32 %v5962, %v6415
      %v6417 = vand.u32 %v6416, 4294901760
      %v6418 = vsub.f32 %v6416, %v6417
      %v6419 = vand.u32 %v6418, 4294901760
      %6420 = vmatpush.msra.mxu0 %v6419
      %v6421 = vand.u32 %v5961, 4294901760
      %v6422 = vsub.f32 %v5961, %v6421
      %v6423 = vand.u32 %v6422, 4294901760
      %v6424 = vsub.f32 %v6422, %v6423
      %v6425 = vand.u32 %v6424, 4294901760
      %6426 = vmatpush.msra.mxu0 %v6425
      %v6427 = vand.u32 %v5960, 4294901760
      %v6428 = vsub.f32 %v5960, %v6427
      %v6429 = vand.u32 %v6428, 4294901760
      %v6430 = vsub.f32 %v6428, %v6429
      %v6431 = vand.u32 %v6430, 4294901760
      %6432 = vmatpush.msra.mxu0 %v6431
      %v6433 = vand.u32 %v5959, 4294901760
      %v6434 = vsub.f32 %v5959, %v6433
      %v6435 = vand.u32 %v6434, 4294901760
      %v6436 = vsub.f32 %v6434, %v6435
      %v6437 = vand.u32 %v6436, 4294901760
      %6438 = vmatpush.msra.mxu0 %v6437
      %v6439 = vand.u32 %v5958, 4294901760
      %v6440 = vsub.f32 %v5958, %v6439
      %v6441 = vand.u32 %v6440, 4294901760
      %v6442 = vsub.f32 %v6440, %v6441
      %v6443 = vand.u32 %v6442, 4294901760
      %6444 = vmatpush.msra.mxu0 %v6443
      %v6445 = vand.u32 %v5957, 4294901760
      %v6446 = vsub.f32 %v5957, %v6445
      %v6447 = vand.u32 %v6446, 4294901760
      %v6448 = vsub.f32 %v6446, %v6447
      %v6449 = vand.u32 %v6448, 4294901760
      %6450 = vmatpush.msra.mxu0 %v6449
      %v6451 = vand.u32 %v5940, 4294901760
      %6452 = vmatmul.f32.gmra.mxu0 %v6451
      %v6453 = vpop.f32.mrf.mxu0
      %v6454 = vadd.f32 %v6353, %v6453
      %6455 = vdwg.mxu0
      %v6456 = vand.u32 %v5972, 4294901760
      %v6457 = vsub.f32 %v5972, %v6456
      %6458 = vmatpush.msra.mxu0 %v6457
      %v6459 = vand.u32 %v5971, 4294901760
      %v6460 = vsub.f32 %v5971, %v6459
      %6461 = vmatpush.msra.mxu0 %v6460
      %v6462 = vand.u32 %v5970, 4294901760
      %v6463 = vsub.f32 %v5970, %v6462
      %6464 = vmatpush.msra.mxu0 %v6463
      %v6465 = vand.u32 %v5969, 4294901760
      %v6466 = vsub.f32 %v5969, %v6465
      %6467 = vmatpush.msra.mxu0 %v6466
      %v6468 = vand.u32 %v5968, 4294901760
      %v6469 = vsub.f32 %v5968, %v6468
      %6470 = vmatpush.msra.mxu0 %v6469
      %v6471 = vand.u32 %v5967, 4294901760
      %v6472 = vsub.f32 %v5967, %v6471
      %6473 = vmatpush.msra.mxu0 %v6472
      %v6474 = vand.u32 %v5966, 4294901760
      %v6475 = vsub.f32 %v5966, %v6474
      %6476 = vmatpush.msra.mxu0 %v6475
      %v6477 = vand.u32 %v5965, 4294901760
      %v6478 = vsub.f32 %v5965, %v6477
      %6479 = vmatpush.msra.mxu0 %v6478
      %v6480 = vand.u32 %v5964, 4294901760
      %v6481 = vsub.f32 %v5964, %v6480
      %6482 = vmatpush.msra.mxu0 %v6481
      %v6483 = vand.u32 %v5963, 4294901760
      %v6484 = vsub.f32 %v5963, %v6483
      %6485 = vmatpush.msra.mxu0 %v6484
      %v6486 = vand.u32 %v5962, 4294901760
      %v6487 = vsub.f32 %v5962, %v6486
      %6488 = vmatpush.msra.mxu0 %v6487
      %v6489 = vand.u32 %v5961, 4294901760
      %v6490 = vsub.f32 %v5961, %v6489
      %6491 = vmatpush.msra.mxu0 %v6490
      %v6492 = vand.u32 %v5960, 4294901760
      %v6493 = vsub.f32 %v5960, %v6492
      %6494 = vmatpush.msra.mxu0 %v6493
      %v6495 = vand.u32 %v5959, 4294901760
      %v6496 = vsub.f32 %v5959, %v6495
      %6497 = vmatpush.msra.mxu0 %v6496
      %v6498 = vand.u32 %v5958, 4294901760
      %v6499 = vsub.f32 %v5958, %v6498
      %6500 = vmatpush.msra.mxu0 %v6499
      %v6501 = vand.u32 %v5957, 4294901760
      %v6502 = vsub.f32 %v5957, %v6501
      %6503 = vmatpush.msra.mxu0 %v6502
      %v6504 = vand.u32 %v5940, 4294901760
      %v6505 = vsub.f32 %v5940, %v6504
      %6506 = vmatmul.f32.gmra.mxu0 %v6505
      %v6507 = vpop.f32.mrf.mxu0
      %v6508 = vadd.f32 %v6454, %v6507
      %6509 = vdwg.mxu0
      %v6510 = vand.u32 %v5972, 4294901760
      %6511 = vmatpush.msra.mxu0 %v6510
      %v6512 = vand.u32 %v5971, 4294901760
      %6513 = vmatpush.msra.mxu0 %v6512
      %v6514 = vand.u32 %v5970, 4294901760
      %6515 = vmatpush.msra.mxu0 %v6514
      %v6516 = vand.u32 %v5969, 4294901760
      %6517 = vmatpush.msra.mxu0 %v6516
      %v6518 = vand.u32 %v5968, 4294901760
      %6519 = vmatpush.msra.mxu0 %v6518
      %v6520 = vand.u32 %v5967, 4294901760
      %6521 = vmatpush.msra.mxu0 %v6520
      %v6522 = vand.u32 %v5966, 4294901760
      %6523 = vmatpush.msra.mxu0 %v6522
      %v6524 = vand.u32 %v5965, 4294901760
      %6525 = vmatpush.msra.mxu0 %v6524
      %v6526 = vand.u32 %v5964, 4294901760
      %6527 = vmatpush.msra.mxu0 %v6526
      %v6528 = vand.u32 %v5963, 4294901760
      %6529 = vmatpush.msra.mxu0 %v6528
      %v6530 = vand.u32 %v5962, 4294901760
      %6531 = vmatpush.msra.mxu0 %v6530
      %v6532 = vand.u32 %v5961, 4294901760
      %6533 = vmatpush.msra.mxu0 %v6532
      %v6534 = vand.u32 %v5960, 4294901760
      %6535 = vmatpush.msra.mxu0 %v6534
      %v6536 = vand.u32 %v5959, 4294901760
      %6537 = vmatpush.msra.mxu0 %v6536
      %v6538 = vand.u32 %v5958, 4294901760
      %6539 = vmatpush.msra.mxu0 %v6538
      %v6540 = vand.u32 %v5957, 4294901760
      %6541 = vmatpush.msra.mxu0 %v6540
      %v6542 = vand.u32 %v5940, 4294901760
      %v6543 = vsub.f32 %v5940, %v6542
      %v6544 = vand.u32 %v6543, 4294901760
      %6545 = vmatmul.f32.gmra.mxu0 %v6544
      %v6546 = vpop.f32.mrf.mxu0
      %v6547 = vadd.f32 %v6508, %v6546
      %6548 = vdwg.mxu0
      %v6549 = vand.u32 %v5972, 4294901760
      %v6550 = vsub.f32 %v5972, %v6549
      %v6551 = vand.u32 %v6550, 4294901760
      %6552 = vmatpush.msra.mxu0 %v6551
      %v6553 = vand.u32 %v5971, 4294901760
      %v6554 = vsub.f32 %v5971, %v6553
      %v6555 = vand.u32 %v6554, 4294901760
      %6556 = vmatpush.msra.mxu0 %v6555
      %v6557 = vand.u32 %v5970, 4294901760
      %v6558 = vsub.f32 %v5970, %v6557
      %v6559 = vand.u32 %v6558, 4294901760
      %6560 = vmatpush.msra.mxu0 %v6559
      %v6561 = vand.u32 %v5969, 4294901760
      %v6562 = vsub.f32 %v5969, %v6561
      %v6563 = vand.u32 %v6562, 4294901760
      %6564 = vmatpush.msra.mxu0 %v6563
      %v6565 = vand.u32 %v5968, 4294901760
      %v6566 = vsub.f32 %v5968, %v6565
      %v6567 = vand.u32 %v6566, 4294901760
      %6568 = vmatpush.msra.mxu0 %v6567
      %v6569 = vand.u32 %v5967, 4294901760
      %v6570 = vsub.f32 %v5967, %v6569
      %v6571 = vand.u32 %v6570, 4294901760
      %6572 = vmatpush.msra.mxu0 %v6571
      %v6573 = vand.u32 %v5966, 4294901760
      %v6574 = vsub.f32 %v5966, %v6573
      %v6575 = vand.u32 %v6574, 4294901760
      %6576 = vmatpush.msra.mxu0 %v6575
      %v6577 = vand.u32 %v5965, 4294901760
      %v6578 = vsub.f32 %v5965, %v6577
      %v6579 = vand.u32 %v6578, 4294901760
      %6580 = vmatpush.msra.mxu0 %v6579
      %v6581 = vand.u32 %v5964, 4294901760
      %v6582 = vsub.f32 %v5964, %v6581
      %v6583 = vand.u32 %v6582, 4294901760
      %6584 = vmatpush.msra.mxu0 %v6583
      %v6585 = vand.u32 %v5963, 4294901760
      %v6586 = vsub.f32 %v5963, %v6585
      %v6587 = vand.u32 %v6586, 4294901760
      %6588 = vmatpush.msra.mxu0 %v6587
      %v6589 = vand.u32 %v5962, 4294901760
      %v6590 = vsub.f32 %v5962, %v6589
      %v6591 = vand.u32 %v6590, 4294901760
      %6592 = vmatpush.msra.mxu0 %v6591
      %v6593 = vand.u32 %v5961, 4294901760
      %v6594 = vsub.f32 %v5961, %v6593
      %v6595 = vand.u32 %v6594, 4294901760
      %6596 = vmatpush.msra.mxu0 %v6595
      %v6597 = vand.u32 %v5960, 4294901760
      %v6598 = vsub.f32 %v5960, %v6597
      %v6599 = vand.u32 %v6598, 4294901760
      %6600 = vmatpush.msra.mxu0 %v6599
      %v6601 = vand.u32 %v5959, 4294901760
      %v6602 = vsub.f32 %v5959, %v6601
      %v6603 = vand.u32 %v6602, 4294901760
      %6604 = vmatpush.msra.mxu0 %v6603
      %v6605 = vand.u32 %v5958, 4294901760
      %v6606 = vsub.f32 %v5958, %v6605
      %v6607 = vand.u32 %v6606, 4294901760
      %6608 = vmatpush.msra.mxu0 %v6607
      %v6609 = vand.u32 %v5957, 4294901760
      %v6610 = vsub.f32 %v5957, %v6609
      %v6611 = vand.u32 %v6610, 4294901760
      %6612 = vmatpush.msra.mxu0 %v6611
      %v6613 = vand.u32 %v5940, 4294901760
      %6614 = vmatmul.f32.gmra.mxu0 %v6613
      %v6615 = vpop.f32.mrf.mxu0
      %v6616 = vadd.f32 %v6547, %v6615
      %6617 = vdwg.mxu0
      %v6618 = vand.u32 %v5972, 4294901760
      %6619 = vmatpush.msra.mxu0 %v6618
      %v6620 = vand.u32 %v5971, 4294901760
      %6621 = vmatpush.msra.mxu0 %v6620
      %v6622 = vand.u32 %v5970, 4294901760
      %6623 = vmatpush.msra.mxu0 %v6622
      %v6624 = vand.u32 %v5969, 4294901760
      %6625 = vmatpush.msra.mxu0 %v6624
      %v6626 = vand.u32 %v5968, 4294901760
      %6627 = vmatpush.msra.mxu0 %v6626
      %v6628 = vand.u32 %v5967, 4294901760
      %6629 = vmatpush.msra.mxu0 %v6628
      %v6630 = vand.u32 %v5966, 4294901760
      %6631 = vmatpush.msra.mxu0 %v6630
      %v6632 = vand.u32 %v5965, 4294901760
      %6633 = vmatpush.msra.mxu0 %v6632
      %v6634 = vand.u32 %v5964, 4294901760
      %6635 = vmatpush.msra.mxu0 %v6634
      %v6636 = vand.u32 %v5963, 4294901760
      %6637 = vmatpush.msra.mxu0 %v6636
      %v6638 = vand.u32 %v5962, 4294901760
      %6639 = vmatpush.msra.mxu0 %v6638
      %v6640 = vand.u32 %v5961, 4294901760
      %6641 = vmatpush.msra.mxu0 %v6640
      %v6642 = vand.u32 %v5960, 4294901760
      %6643 = vmatpush.msra.mxu0 %v6642
      %v6644 = vand.u32 %v5959, 4294901760
      %6645 = vmatpush.msra.mxu0 %v6644
      %v6646 = vand.u32 %v5958, 4294901760
      %6647 = vmatpush.msra.mxu0 %v6646
      %v6648 = vand.u32 %v5957, 4294901760
      %6649 = vmatpush.msra.mxu0 %v6648
      %v6650 = vand.u32 %v5940, 4294901760
      %6651 = vmatmul.f32.gmra.mxu0 %v6650
      %v6652 = vpop.f32.mrf.mxu0
      %v6653 = vadd.f32 %v6616, %v6652
      %6654 = vdwg.mxu0
      %6656 = vrot.lane.b32.xlu0 %v6653, 120
      %v6657 = vpop.permute.xlu0 %6656
      %v6659 = vmax.f32 %v6653, %v6657
      %v6660 = vld [vmem:[%s3] sm:$0xff]
      %v6661 = vld [vmem:[%s4] sm:$0x1]
      %v6663 = vperm.slane %v6661, 0
      %vm6665 = vcmask 64512
      %v6667 = vsel %vm6665, %v6659, 0
      %6669 = vmatpush.msra.mxu0 0.0
      %6670 = vmatpush.msra.mxu0 0.0
      %6671 = vmatpush.msra.mxu0 0.0
      %6672 = vmatpush.msra.mxu0 0.0
      %6673 = vmatpush.msra.mxu0 0.0
      %6674 = vmatpush.msra.mxu0 0.0
      %6675 = vmatpush.msra.mxu0 0.0
      %6676 = vmatpush.msra.mxu0 0.0
      %6677 = vmatpush.msra.mxu0 0.0
      %6678 = vmatpush.msra.mxu0 0.0
      %6679 = vmatpush.msra.mxu0 0.0
      %6680 = vmatpush.msra.mxu0 0.0
      %6681 = vmatpush.msra.mxu0 0.0
      %6682 = vmatpush.msra.mxu0 0.0
      %6683 = vmatpush.msra.mxu0 0.0
      %v6684 = vand.u32 %v6660, 4294901760
      %6685 = vmatpush.msra.mxu0 %v6684
      %v6686 = vand.u32 %v6667, 4294901760
      %v6687 = vsub.f32 %v6667, %v6686
      %v6688 = vand.u32 %v6687, 4294901760
      %v6689 = vsub.f32 %v6687, %v6688
      %v6690 = vand.u32 %v6689, 4294901760
      %6691 = vmatmul.f32.gmra.mxu0 %v6690
      %v6692 = vpop.f32.mrf.mxu0
      %v6693 = vadd.f32 %v6663, %v6692
      %6694 = vdwg.mxu0
      %6695 = vmatpush.msra.mxu0 0.0
      %6696 = vmatpush.msra.mxu0 0.0
      %6697 = vmatpush.msra.mxu0 0.0
      %6698 = vmatpush.msra.mxu0 0.0
      %6699 = vmatpush.msra.mxu0 0.0
      %6700 = vmatpush.msra.mxu0 0.0
      %6701 = vmatpush.msra.mxu0 0.0
      %6702 = vmatpush.msra.mxu0 0.0
      %6703 = vmatpush.msra.mxu0 0.0
      %6704 = vmatpush.msra.mxu0 0.0
      %6705 = vmatpush.msra.mxu0 0.0
      %6706 = vmatpush.msra.mxu0 0.0
      %6707 = vmatpush.msra.mxu0 0.0
      %6708 = vmatpush.msra.mxu0 0.0
      %6709 = vmatpush.msra.mxu0 0.0
      %v6710 = vand.u32 %v6660, 4294901760
      %v6711 = vsub.f32 %v6660, %v6710
      %v6712 = vand.u32 %v6711, 4294901760
      %v6713 = vsub.f32 %v6711, %v6712
      %v6714 = vand.u32 %v6713, 4294901760
      %6715 = vmatpush.msra.mxu0 %v6714
      %v6716 = vand.u32 %v6667, 4294901760
      %6717 = vmatmul.f32.gmra.mxu0 %v6716
      %v6718 = vpop.f32.mrf.mxu0
      %v6719 = vadd.f32 %v6693, %v6718
      %6720 = vdwg.mxu0
      %6721 = vmatpush.msra.mxu0 0.0
      %6722 = vmatpush.msra.mxu0 0.0
      %6723 = vmatpush.msra.mxu0 0.0
      %6724 = vmatpush.msra.mxu0 0.0
      %6725 = vmatpush.msra.mxu0 0.0
      %6726 = vmatpush.msra.mxu0 0.0
      %6727 = vmatpush.msra.mxu0 0.0
      %6728 = vmatpush.msra.mxu0 0.0
      %6729 = vmatpush.msra.mxu0 0.0
      %6730 = vmatpush.msra.mxu0 0.0
      %6731 = vmatpush.msra.mxu0 0.0
      %6732 = vmatpush.msra.mxu0 0.0
      %6733 = vmatpush.msra.mxu0 0.0
      %6734 = vmatpush.msra.mxu0 0.0
      %6735 = vmatpush.msra.mxu0 0.0
      %v6736 = vand.u32 %v6660, 4294901760
      %v6737 = vsub.f32 %v6660, %v6736
      %6738 = vmatpush.msra.mxu0 %v6737
      %v6739 = vand.u32 %v6667, 4294901760
      %v6740 = vsub.f32 %v6667, %v6739
      %6741 = vmatmul.f32.gmra.mxu0 %v6740
      %v6742 = vpop.f32.mrf.mxu0
      %v6743 = vadd.f32 %v6719, %v6742
      %6744 = vdwg.mxu0
      %6745 = vmatpush.msra.mxu0 0.0
      %6746 = vmatpush.msra.mxu0 0.0
      %6747 = vmatpush.msra.mxu0 0.0
      %6748 = vmatpush.msra.mxu0 0.0
      %6749 = vmatpush.msra.mxu0 0.0
      %6750 = vmatpush.msra.mxu0 0.0
      %6751 = vmatpush.msra.mxu0 0.0
      %6752 = vmatpush.msra.mxu0 0.0
      %6753 = vmatpush.msra.mxu0 0.0
      %6754 = vmatpush.msra.mxu0 0.0
      %6755 = vmatpush.msra.mxu0 0.0
      %6756 = vmatpush.msra.mxu0 0.0
      %6757 = vmatpush.msra.mxu0 0.0
      %6758 = vmatpush.msra.mxu0 0.0
      %6759 = vmatpush.msra.mxu0 0.0
      %v6760 = vand.u32 %v6660, 4294901760
      %6761 = vmatpush.msra.mxu0 %v6760
      %v6762 = vand.u32 %v6667, 4294901760
      %v6763 = vsub.f32 %v6667, %v6762
      %v6764 = vand.u32 %v6763, 4294901760
      %6765 = vmatmul.f32.gmra.mxu0 %v6764
      %v6766 = vpop.f32.mrf.mxu0
      %v6767 = vadd.f32 %v6743, %v6766
      %6768 = vdwg.mxu0
      %6769 = vmatpush.msra.mxu0 0.0
      %6770 = vmatpush.msra.mxu0 0.0
      %6771 = vmatpush.msra.mxu0 0.0
      %6772 = vmatpush.msra.mxu0 0.0
      %6773 = vmatpush.msra.mxu0 0.0
      %6774 = vmatpush.msra.mxu0 0.0
      %6775 = vmatpush.msra.mxu0 0.0
      %6776 = vmatpush.msra.mxu0 0.0
      %6777 = vmatpush.msra.mxu0 0.0
      %6778 = vmatpush.msra.mxu0 0.0
      %6779 = vmatpush.msra.mxu0 0.0
      %6780 = vmatpush.msra.mxu0 0.0
      %6781 = vmatpush.msra.mxu0 0.0
      %6782 = vmatpush.msra.mxu0 0.0
      %6783 = vmatpush.msra.mxu0 0.0
      %v6784 = vand.u32 %v6660, 4294901760
      %v6785 = vsub.f32 %v6660, %v6784
      %v6786 = vand.u32 %v6785, 4294901760
      %6787 = vmatpush.msra.mxu0 %v6786
      %v6788 = vand.u32 %v6667, 4294901760
      %6789 = vmatmul.f32.gmra.mxu0 %v6788
      %v6790 = vpop.f32.mrf.mxu0
      %v6791 = vadd.f32 %v6767, %v6790
      %6792 = vdwg.mxu0
      %6793 = vmatpush.msra.mxu0 0.0
      %6794 = vmatpush.msra.mxu0 0.0
      %6795 = vmatpush.msra.mxu0 0.0
      %6796 = vmatpush.msra.mxu0 0.0
      %6797 = vmatpush.msra.mxu0 0.0
      %6798 = vmatpush.msra.mxu0 0.0
      %6799 = vmatpush.msra.mxu0 0.0
      %6800 = vmatpush.msra.mxu0 0.0
      %6801 = vmatpush.msra.mxu0 0.0
      %6802 = vmatpush.msra.mxu0 0.0
      %6803 = vmatpush.msra.mxu0 0.0
      %6804 = vmatpush.msra.mxu0 0.0
      %6805 = vmatpush.msra.mxu0 0.0
      %6806 = vmatpush.msra.mxu0 0.0
      %6807 = vmatpush.msra.mxu0 0.0
      %v6808 = vand.u32 %v6660, 4294901760
      %6809 = vmatpush.msra.mxu0 %v6808
      %v6810 = vand.u32 %v6667, 4294901760
      %6811 = vmatmul.f32.gmra.mxu0 %v6810
      %v6812 = vpop.f32.mrf.mxu0
      %v6813 = vadd.f32 %v6791, %v6812
      %6814 = vdwg.mxu0
      %v6815 = vxor.u32 %v6813, 2147483648
      %v6816 = vmul.f32 %v6815, 1.442695
      %v6817 = vpow.pop %v6816
      %v6818 = vadd.f32 %v6817, 1.0
      %v6819 = vrcp.pop %v6818
      %v6820 = vmul.f32 %v6818, %v6819
      %v6821 = vsub.f32 1.0, %v6820
      %v6822 = vmul.f32 %v6819, %v6821
      %v6823 = vadd.f32 %v6819, %v6822
      %vm6824 = vweird.f32 %v6818
      %vm6825 = vweird.f32 %v6819
      %vm6826 = vmor %vm6824, %vm6825
      %v6827 = vsel %vm6826, %v6819, %v6823
      %v6828 = vand.u32 2147483647, %v6818
      %vm6829 = vcmp.eq.f32.partialorder %v6828, 8.507059e+37
      %v6830 = vand.u32 %v6818, 2147483648
      %v6831 = vor.u32 1.1754944e-38, %v6830
      %v6832 = vsel %vm6829, %v6831, %v6827
      %v6833 = vmul.f32 1.0, %v6832
      %6834 = vst.msk [vmem:[%s222] sm:$0xff] %vm6665, %v6833
      %p6835 = scmp.lt.s32.totalorder %s16, 1
      %s6836 = scalar_select %p6835, %s16, 1
      %s6837 = smul.addr %s6836, 8
      %s6838 = scalar_lea.vmem %s5, %s6837
      // Predicated region
      $region41: #{conv_network.1} parent=39 // pred_check
        %p6839 = pneg %p144
      $region42: #{conv_network.1} parent=39 // pred_check_branch
        %6841 = sbr.rel (%p6839) target = $region44
      $region43: #{conv_network.1} parent=39 // pred_region
        _
      $region44: #{conv_network.1} parent=39 // pred_fallthru
        _
    $region40: #{conv_network.1} parent=5 // pred_fallthru
      _
    %p6842 = scmp.le.s32.totalorder 2, %s11
    // Predicated region
    $region45: #{conv_network.1} parent=5 // pred_check
      %p6843 = pneg %p6842
    $region46: #{conv_network.1} parent=5 // pred_check_branch
      %6845 = sbr.rel (%p6843) target = $region48
    $region47: #{conv_network.1} parent=5 // pred_region
      %s6846 = ssub.s32 %s11, 2
      // Predicated region
      $region49: #{conv_network.1} parent=47 // pred_check
        %p6847 = pneg %p150
      $region50: #{conv_network.1} parent=47 // pred_check_branch
        %6849 = sbr.rel (%p6847) target = $region52
      $region51: #{conv_network.1} parent=47 // pred_region
        %p6850 = scmp.lt.s32.totalorder %s17, 1
        %s6851 = scalar_select %p6850, %s17, 1
        %s6852 = smul.addr %s6851, 8
        %s6853 = scalar_lea.vmem %s5, %s6852
      $region52: #{conv_network.1} parent=47 // pred_fallthru
        _
    $region48: #{conv_network.1} parent=5 // pred_fallthru
      _
  $region6: #{conv_network.1} parent=0 // loop_footer
    %s15 = sadd.s32 1, %s11
  $region7: #{conv_network.1} parent=0 // loop_footer_branch
    %10 = sbr.rel target = $region3
  $region8: #{conv_network.1} parent=0 // loop_exit
    _

</llo_original>
